<compile_context>
chip_gen: v5e
topology: v5e:2x2
jax: 0.10.0
libtpu: 0.0.40
codegen_flags: <defaults>
</compile_context>

<pallas_src>
import functools

import jax
import jax.numpy as jnp
import numpy as np
from jax import lax
from jax.experimental import pallas as pl
from jax.experimental.pallas import tpu as pltpu


def _multibox_kernel(loc8_ref, cls_p_ref, t_row_ref, out_ref, *, alpha, gamma):
    t_row = t_row_ref[...]                        # (1, TN) int32, pad rows = -1
    pos = t_row > 0                               # positive anchors
    valid = t_row > -1                            # non-ignored anchors
    npos = jnp.sum(pos.astype(jnp.float32))

    # ---- smooth-L1 localization loss over positive anchors ------------------
    # loc8 rows 0..3 = preds, rows 4..7 = targets.  Rolling by 4 sublanes (XLU,
    # free slot) puts preds-targets on rows 0..3 and its negation on rows 4..7;
    # smooth-L1 is even, so summing all 8 rows double-counts exactly.
    loc8 = loc8_ref[...].astype(jnp.float32)      # (8, TN)
    diff = loc8 - pltpu.roll(loc8, shift=4, axis=0)
    ad = jnp.abs(diff)
    sl1 = jnp.where(ad < 1.0, 0.5 * diff * diff, ad - 0.5)
    loc_sum = 0.5 * jnp.sum(jnp.where(pos, sl1, 0.0))

    # ---- focal loss (alpha-weighted BCE-with-logits) over valid anchors -----
    tn, num_c = cls_p_ref.shape
    x_nc = cls_p_ref[...].astype(jnp.float32)     # (TN, C): lanes padded C -> 128
    # Relayout to class-major (C, TN) so every following element-wise op runs on
    # fully lane-dense vregs.  Exact identity contraction on the idle MXU
    # (HIGHEST precision => bit-exact f32 copy of x_nc.T).
    eye = (lax.broadcasted_iota(jnp.int32, (num_c, num_c), 0) ==
           lax.broadcasted_iota(jnp.int32, (num_c, num_c), 1)).astype(jnp.float32)
    x = lax.dot_general(eye, x_nc, (((1,), (1,)), ((), ())),
                        precision=lax.Precision.HIGHEST,
                        preferred_element_type=jnp.float32)      # (C, TN)

    # one_hot_embedding(t, 1 + C)[:, 1:]  ==  (class_index == t - 1); never
    # materialized as f32 (t <= 0 rows have no hot class).
    cls_idx = lax.broadcasted_iota(jnp.int32, (num_c, tn), 0)
    is_hot = cls_idx == (t_row - 1)

    # Signed logit s = is_hot ? x : -x:
    #   BCE(x, onehot) = softplus(-s) = max(-s, 0) + log1p(exp(-|x|))
    #   (1 - pt)^gamma = sigmoid(-s)^gamma = exp(-gamma * softplus(s))
    neg_x = -x
    s = jnp.where(is_hot, x, neg_x)
    neg_s = jnp.where(is_hot, neg_x, x)
    e = jnp.exp(-jnp.abs(x))                      # exp(-|s|), single EUP exp
    lg = jnp.log1p(e)                             # shared by both softplus terms
    bce = jnp.maximum(neg_s, 0.0) + lg
    w = jnp.where(is_hot, alpha, 1.0 - alpha)
    if gamma != 0.0:                              # static specialization
        w = w * jnp.exp((-gamma) * (jnp.maximum(s, 0.0) + lg))

    # Reduce over classes first, then apply the row-constant validity mask once
    # per anchor (a select, so garbage rows of a ragged last tile stay out).
    per_anchor = jnp.sum(w * bce, axis=0, keepdims=True)          # (1, TN)
    cls_sum = jnp.sum(jnp.where(valid, per_anchor, 0.0))

    # ---- pack the three per-tile partial sums into one (8, 128) block -------
    sub = lax.broadcasted_iota(jnp.int32, (8, 128), 0)
    lane = lax.broadcasted_iota(jnp.int32, (8, 128), 1)
    row0 = sub == 0
    blk = jnp.where(row0 & (lane == 0), loc_sum, 0.0)
    blk = jnp.where(row0 & (lane == 1), cls_sum, blk)
    blk = jnp.where(row0 & (lane == 2), npos, blk)
    out_ref[...] = blk[None].astype(out_ref.dtype)


def multibox_loss(loc_preds, loc_targets, cls_preds, cls_targets, *,
                  alpha=0.25, gamma=2, num_classes=80, tile_n=2048):
    B, A, _ = loc_preds.shape
    C = cls_preds.shape[-1]
    assert C == num_classes
    assert tile_n % 128 == 0, "tile_n must be lane-aligned (multiple of 128)"
    N = B * A
    G = pl.cdiv(N, tile_n)
    Np = G * tile_n

    # Dominant tensor: neither padded nor transposed in the wrapper (no extra
    # HBM pass); the ragged last tile is masked inside the kernel.
    cls_p = cls_preds.reshape(N, C)

    # Small tensors.  loc preds + targets packed into one (8, N) slab -> a
    # single full-sublane DMA per grid step.  Targets padded with -1 (ignore)
    # so the ragged tail of the last tile contributes nothing.
    loc8 = jnp.concatenate(
        [loc_preds.reshape(N, 4).T, loc_targets.reshape(N, 4).T], axis=0)
    t_row = jnp.pad(cls_targets.reshape(N).astype(jnp.int32), (0, Np - N),
                    constant_values=-1).reshape(1, Np)

    kernel = functools.partial(_multibox_kernel,
                               alpha=float(alpha), gamma=float(gamma))

    partials = pl.pallas_call(
        kernel,
        out_shape=jax.ShapeDtypeStruct((G, 8, 128), jnp.float32),
        grid_spec=pltpu.PrefetchScalarGridSpec(
            num_scalar_prefetch=0,
            grid=(G,),
            in_specs=[
                pl.BlockSpec((8, tile_n), lambda i: (0, i)),    # packed loc slab
                pl.BlockSpec((tile_n, C), lambda i: (i, 0)),    # class logits
                pl.BlockSpec((1, tile_n), lambda i: (0, i)),    # target row
            ],
            out_specs=pl.BlockSpec((1, 8, 128), lambda i: (i, 0, 0)),
        ),
        compiler_params=pltpu.CompilerParams(
            dimension_semantics=("parallel",),         # megacore-shardable (v7x)
            vmem_limit_bytes=32 * 1024 * 1024),        # explicit: v5e default is 16 MiB
    )(loc8, cls_p, t_row)

    flat = partials.reshape(G, 8 * 128)
    loc_sum = jnp.sum(flat[:, 0])
    cls_sum = jnp.sum(flat[:, 1])
    num_pos = jnp.sum(flat[:, 2])
    # Matches the PyTorch module exactly: the division is unguarded, so a batch
    # with zero positive anchors yields NaN/Inf just like the reference.
    return loc_sum / num_pos, cls_sum / num_pos


def _reference(loc_preds, loc_targets, cls_preds, cls_targets,
               alpha=0.25, gamma=2, num_classes=80):
    """Pure-JAX reference matching the PyTorch semantics."""
    pos = cls_targets > 0
    num_pos = jnp.sum(pos.astype(jnp.float32))

    diff = loc_preds - loc_targets
    ad = jnp.abs(diff)
    sl1 = jnp.where(ad < 1.0, 0.5 * diff * diff, ad - 0.5)
    loc_loss = jnp.sum(jnp.where(pos[..., None], sl1, 0.0))

    pos_neg = cls_targets > -1
    t = cls_targets[..., None]
    col = jnp.arange(num_classes)[None, None, :]
    onehot = (col == (t - 1)).astype(jnp.float32)
    x = cls_preds
    prob = jax.nn.sigmoid(x)
    pt = prob * onehot + (1 - prob) * (1 - onehot)
    w = alpha * onehot + (1 - alpha) * (1 - onehot)
    w = w * (1 - pt) ** gamma
    bce = jnp.maximum(x, 0.0) - x * onehot + jnp.log1p(jnp.exp(-jnp.abs(x)))
    cls_loss = jnp.sum(jnp.where(pos_neg[..., None], w * bce, 0.0))

    return loc_loss / num_pos, cls_loss / num_pos


if __name__ == "__main__":
    # MultiBoxLoss has no learnable parameters; alpha/gamma/num_classes are fixed.
    B, A, C = 2, 1000, 80  # N = 2000 anchors
    key = jax.random.PRNGKey(0)
    k1, k2, k3, k4 = jax.random.split(key, 4)

    loc_preds = jax.random.normal(k1, (B, A, 4), dtype=jnp.float32)
    loc_targets = jax.random.normal(k2, (B, A, 4), dtype=jnp.float32)
    cls_preds = jax.random.normal(k3, (B, A, C), dtype=jnp.float32)
    # targets in [-1, C]: -1 = ignore, 0 = background, >0 = class id
    cls_targets = jax.random.randint(k4, (B, A), -1, C + 1, dtype=jnp.int32)

    # tile_n=1024 -> grid of 2 tiles, with a ragged (masked) tail in the last one.
    loc_loss, cls_loss = multibox_loss(
        loc_preds, loc_targets, cls_preds, cls_targets,
        alpha=0.25, gamma=2, num_classes=C, tile_n=1024)
    jax.block_until_ready((loc_loss, cls_loss))

    ref_loc, ref_cls = _reference(loc_preds, loc_targets, cls_preds, cls_targets,
                                  alpha=0.25, gamma=2, num_classes=C)
    # Slightly relaxed rtol only to absorb f32 partial-sum reordering differences.
    np.testing.assert_allclose(np.asarray(loc_loss), np.asarray(ref_loc),
                               rtol=2e-4, atol=2e-4)
    np.testing.assert_allclose(np.asarray(cls_loss), np.asarray(ref_cls),
                               rtol=2e-4, atol=2e-4)

    print("KERNEL_OK")
</pallas_src>

<mosaic_0001>
module attributes {stable_mosaic.version = 11 : i64} {
  func.func @_multibox_kernel(%arg0: i32, %arg1: memref<8x1024xf32, #tpu.memory_space<vmem>>, %arg2: memref<1024x80xf32, #tpu.memory_space<vmem>>, %arg3: memref<1x1024xi32, #tpu.memory_space<vmem>>, %arg4: memref<1x8x128xf32, #tpu.memory_space<vmem>>) attributes {dimension_semantics = [#tpu.dimension_semantics<parallel>], iteration_bounds = array<i64: 2>, scalar_prefetch = 0 : i64, scratch_operands = 0 : i64, tpu.core_type = #tpu.core_type<tc>, window_params = [{transform_indices = @transform_0, window_bounds = array<i64: 8, 1024>}, {transform_indices = @transform_1, window_bounds = array<i64: 1024, 80>}, {transform_indices = @transform_2, window_bounds = array<i64: 1, 1024>}, {transform_indices = @transform_3, window_bounds = array<i64: 1, 8, 128>}]} {
    %c0 = arith.constant 0 : index
    %c0_0 = arith.constant 0 : index
    %0 = vector.load %arg3[%c0, %c0_0] : memref<1x1024xi32, #tpu.memory_space<vmem>>, vector<1x1024xi32>
    %c0_i32 = arith.constant 0 : i32
    %1 = vector.broadcast %c0_i32 : i32 to vector<1x1024xi32>
    %2 = arith.cmpi sgt, %0, %1 : vector<1x1024xi32>
    %c-1_i32 = arith.constant -1 : i32
    %3 = vector.broadcast %c-1_i32 : i32 to vector<1x1024xi32>
    %4 = arith.cmpi sgt, %0, %3 : vector<1x1024xi32>
    %5 = arith.extui %2 : vector<1x1024xi1> to vector<1x1024xi32>
    %6 = arith.sitofp %5 : vector<1x1024xi32> to vector<1x1024xf32>
    %7 = vector.shape_cast %6 : vector<1x1024xf32> to vector<1x1x1024xf32>
    %cst = arith.constant dense<0.000000e+00> : vector<1xf32>
    %8 = vector.multi_reduction <add>, %7, %cst [1, 2] : vector<1x1x1024xf32> to vector<1xf32>
    %9 = vector.shape_cast %8 : vector<1xf32> to vector<1x1x1xf32>
    %10 = vector.extract %9[0, 0, 0] : f32 from vector<1x1x1xf32>
    %c0_1 = arith.constant 0 : index
    %c0_2 = arith.constant 0 : index
    %11 = vector.load %arg1[%c0_1, %c0_2] : memref<8x1024xf32, #tpu.memory_space<vmem>>, vector<8x1024xf32>
    %c4_i32 = arith.constant 4 : i32
    %12 = tpu.dynamic_rotate %11 by %c4_i32 dim 0 : vector<8x1024xf32>, i32 -> vector<8x1024xf32>
    %13 = arith.subf %11, %12 : vector<8x1024xf32>
    %14 = math.absf %13 : vector<8x1024xf32>
    %cst_3 = arith.constant 1.000000e+00 : f32
    %15 = vector.broadcast %cst_3 : f32 to vector<8x1024xf32>
    %16 = arith.cmpf olt, %14, %15 : vector<8x1024xf32>
    %cst_4 = arith.constant 5.000000e-01 : f32
    %17 = vector.broadcast %cst_4 : f32 to vector<8x1024xf32>
    %18 = arith.mulf %17, %13 : vector<8x1024xf32>
    %19 = arith.mulf %18, %13 : vector<8x1024xf32>
    %cst_5 = arith.constant 5.000000e-01 : f32
    %20 = vector.broadcast %cst_5 : f32 to vector<8x1024xf32>
    %21 = arith.subf %14, %20 : vector<8x1024xf32>
    %22 = arith.select %16, %19, %21 : vector<8x1024xi1>, vector<8x1024xf32>
    %cst_6 = arith.constant 0.000000e+00 : f32
    %23 = vector.shape_cast %2 : vector<1x1024xi1> to vector<1x1024xi1>
    %24 = vector.broadcast %23 : vector<1x1024xi1> to vector<8x1024xi1>
    %25 = vector.broadcast %cst_6 : f32 to vector<8x1024xf32>
    %26 = arith.select %24, %22, %25 : vector<8x1024xi1>, vector<8x1024xf32>
    %27 = vector.shape_cast %26 : vector<8x1024xf32> to vector<1x8x1024xf32>
    %cst_7 = arith.constant dense<0.000000e+00> : vector<1xf32>
    %28 = vector.multi_reduction <add>, %27, %cst_7 [1, 2] : vector<1x8x1024xf32> to vector<1xf32>
    %29 = vector.shape_cast %28 : vector<1xf32> to vector<1x1x1xf32>
    %30 = vector.extract %29[0, 0, 0] : f32 from vector<1x1x1xf32>
    %cst_8 = arith.constant 5.000000e-01 : f32
    %31 = arith.mulf %cst_8, %30 : f32
    %c0_9 = arith.constant 0 : index
    %c0_10 = arith.constant 0 : index
    %32 = vector.load %arg2[%c0_9, %c0_10] : memref<1024x80xf32, #tpu.memory_space<vmem>>, vector<1024x80xf32>
    %33 = tpu.iota {dimensions = array<i32: 0>} : vector<80x80xi32>
    %34 = tpu.iota {dimensions = array<i32: 1>} : vector<80x80xi32>
    %35 = arith.cmpi eq, %33, %34 : vector<80x80xi32>
    %36 = arith.extui %35 : vector<80x80xi1> to vector<80x80xi32>
    %37 = arith.sitofp %36 : vector<80x80xi32> to vector<80x80xf32>
    %cst_11 = arith.constant dense<0.000000e+00> : vector<80x1024xf32>
    %38 = tpu.matmul %37, %32, %cst_11 {dimension_numbers = #tpu.dot_dimension_numbers<[1], [1], [0], [0], [0, 0, 1, 0], [], []>, precision = #tpu.contract_precision<fp32>} : vector<80x80xf32>, vector<1024x80xf32>, vector<80x1024xf32> -> vector<80x1024xf32>
    %39 = tpu.iota {dimensions = array<i32: 0>} : vector<80x1024xi32>
    %c1_i32 = arith.constant 1 : i32
    %40 = vector.broadcast %c1_i32 : i32 to vector<1x1024xi32>
    %41 = arith.subi %0, %40 : vector<1x1024xi32>
    %42 = vector.broadcast %41 : vector<1x1024xi32> to vector<80x1024xi32>
    %43 = arith.cmpi eq, %39, %42 : vector<80x1024xi32>
    %cst_12 = arith.constant 0.000000e+00 : f32
    %44 = vector.broadcast %cst_12 : f32 to vector<80x1024xf32>
    %45 = arith.subf %44, %38 : vector<80x1024xf32>
    %46 = arith.select %43, %38, %45 : vector<80x1024xi1>, vector<80x1024xf32>
    %47 = arith.select %43, %45, %38 : vector<80x1024xi1>, vector<80x1024xf32>
    %48 = math.absf %38 : vector<80x1024xf32>
    %cst_13 = arith.constant 0.000000e+00 : f32
    %49 = vector.broadcast %cst_13 : f32 to vector<80x1024xf32>
    %50 = arith.subf %49, %48 : vector<80x1024xf32>
    %51 = math.exp %50 : vector<80x1024xf32>
    %52 = math.log1p %51 : vector<80x1024xf32>
    %cst_14 = arith.constant 0.000000e+00 : f32
    %53 = vector.broadcast %cst_14 : f32 to vector<80x1024xf32>
    %54 = arith.maximumf %47, %53 : vector<80x1024xf32>
    %55 = arith.addf %54, %52 : vector<80x1024xf32>
    %cst_15 = arith.constant 2.500000e-01 : f32
    %cst_16 = arith.constant 7.500000e-01 : f32
    %56 = vector.broadcast %cst_15 : f32 to vector<80x1024xf32>
    %57 = vector.broadcast %cst_16 : f32 to vector<80x1024xf32>
    %58 = arith.select %43, %56, %57 : vector<80x1024xi1>, vector<80x1024xf32>
    %cst_17 = arith.constant 0.000000e+00 : f32
    %59 = vector.broadcast %cst_17 : f32 to vector<80x1024xf32>
    %60 = arith.maximumf %46, %59 : vector<80x1024xf32>
    %61 = arith.addf %60, %52 : vector<80x1024xf32>
    %cst_18 = arith.constant -2.000000e+00 : f32
    %62 = vector.broadcast %cst_18 : f32 to vector<80x1024xf32>
    %63 = arith.mulf %62, %61 : vector<80x1024xf32>
    %64 = math.exp %63 : vector<80x1024xf32>
    %65 = arith.mulf %58, %64 : vector<80x1024xf32>
    %66 = arith.mulf %65, %55 : vector<80x1024xf32>
    %cst_19 = arith.constant dense<0.000000e+00> : vector<1024xf32>
    %67 = vector.multi_reduction <add>, %66, %cst_19 [0] : vector<80x1024xf32> to vector<1024xf32>
    %68 = vector.shape_cast %67 : vector<1024xf32> to vector<1x1024xf32>
    %cst_20 = arith.constant 0.000000e+00 : f32
    %69 = vector.broadcast %cst_20 : f32 to vector<1x1024xf32>
    %70 = arith.select %4, %68, %69 : vector<1x1024xi1>, vector<1x1024xf32>
    %71 = vector.shape_cast %70 : vector<1x1024xf32> to vector<1x1x1024xf32>
    %cst_21 = arith.constant dense<0.000000e+00> : vector<1xf32>
    %72 = vector.multi_reduction <add>, %71, %cst_21 [1, 2] : vector<1x1x1024xf32> to vector<1xf32>
    %73 = vector.shape_cast %72 : vector<1xf32> to vector<1x1x1xf32>
    %74 = vector.extract %73[0, 0, 0] : f32 from vector<1x1x1xf32>
    %75 = tpu.iota {dimensions = array<i32: 0>} : vector<8x128xi32>
    %76 = tpu.iota {dimensions = array<i32: 1>} : vector<8x128xi32>
    %c0_i32_22 = arith.constant 0 : i32
    %77 = vector.broadcast %c0_i32_22 : i32 to vector<8x128xi32>
    %78 = arith.cmpi eq, %75, %77 : vector<8x128xi32>
    %c0_i32_23 = arith.constant 0 : i32
    %79 = vector.broadcast %c0_i32_23 : i32 to vector<8x128xi32>
    %80 = arith.cmpi eq, %76, %79 : vector<8x128xi32>
    %81 = arith.andi %78, %80 : vector<8x128xi1>
    %cst_24 = arith.constant 0.000000e+00 : f32
    %82 = vector.broadcast %31 : f32 to vector<8x128xf32>
    %83 = vector.broadcast %cst_24 : f32 to vector<8x128xf32>
    %84 = arith.select %81, %82, %83 : vector<8x128xi1>, vector<8x128xf32>
    %c1_i32_25 = arith.constant 1 : i32
    %85 = vector.broadcast %c1_i32_25 : i32 to vector<8x128xi32>
    %86 = arith.cmpi eq, %76, %85 : vector<8x128xi32>
    %87 = arith.andi %78, %86 : vector<8x128xi1>
    %88 = vector.broadcast %74 : f32 to vector<8x128xf32>
    %89 = arith.select %87, %88, %84 : vector<8x128xi1>, vector<8x128xf32>
    %c2_i32 = arith.constant 2 : i32
    %90 = vector.broadcast %c2_i32 : i32 to vector<8x128xi32>
    %91 = arith.cmpi eq, %76, %90 : vector<8x128xi32>
    %92 = arith.andi %78, %91 : vector<8x128xi1>
    %93 = vector.broadcast %10 : f32 to vector<8x128xf32>
    %94 = arith.select %92, %93, %89 : vector<8x128xi1>, vector<8x128xf32>
    %95 = vector.shape_cast %94 : vector<8x128xf32> to vector<1x8x128xf32>
    %c0_26 = arith.constant 0 : index
    %c0_27 = arith.constant 0 : index
    %c0_28 = arith.constant 0 : index
    %96 = vector.load %arg4[%c0_26, %c0_27, %c0_28] : memref<1x8x128xf32, #tpu.memory_space<vmem>>, vector<1x8x128xf32>
    tpu.vector_store %arg4[%c0_26, %c0_27, %c0_28], %95 {strides = array<i32>} : memref<1x8x128xf32, #tpu.memory_space<vmem>>, vector<1x8x128xf32>,
    return
  }
  func.func @transform_0(%arg0: i32) -> (i32, i32) {
    %c0_i32 = arith.constant 0 : i32
    %c0_i32_0 = arith.constant 0 : i32
    return %c0_i32, %arg0 : i32, i32
  }
  func.func @transform_1(%arg0: i32) -> (i32, i32) {
    %c0_i32 = arith.constant 0 : i32
    %c0_i32_0 = arith.constant 0 : i32
    return %arg0, %c0_i32 : i32, i32
  }
  func.func @transform_2(%arg0: i32) -> (i32, i32) {
    %c0_i32 = arith.constant 0 : i32
    %c0_i32_0 = arith.constant 0 : i32
    return %c0_i32, %arg0 : i32, i32
  }
  func.func @transform_3(%arg0: i32) -> (i32, i32, i32) {
    %c0_i32 = arith.constant 0 : i32
    %c0_i32_0 = arith.constant 0 : i32
    %c0_i32_1 = arith.constant 0 : i32
    return %arg0, %c0_i32, %c0_i32_0 : i32, i32, i32
  }
}

</mosaic_0001>

<llo_original>
// kernel: tpu_custom_call.1
$region0: #{tpu_custom_call.1}
  #allocation0 [shape = 'u32[]', space=smem, size = 0x4, offset = 0x4, fixed_abs, tag = 'smem constant byte address 0x4 - core index']
  #allocation1 [shape = 'u32[72,128]{1,0:T(1,128)}', space=vmem, size = 0x9000, scoped, tag = 'internal scratch']
  %s0 = inlined_call_operand.vmem [shape: f32[8,2000], index: 0, kind: input, shape index: {}]
  %s1 = inlined_call_operand.vmem [shape: f32[2000,80], index: 1, kind: input, shape index: {}]
  %s2 = inlined_call_operand.vmem [shape: s32[1,2048], index: 2, kind: input, shape index: {}]
  %s3 = inlined_call_operand.hbm [shape: f32[2,8,128], index: 3, kind: output, shape index: {}]
  %s4 = sld [smem:[#allocation0]]
  $region45: #{tpu_custom_call.1} parent=0
    _
  %s6 = ssub.s32 1, %s4
  %s7 = scalar_select 0, %s6, %s4
  $region1: #{tpu_custom_call.1} parent=0
    #allocation2 [shape = 'u8[8192]{0}', space=vmem, size = 0x2000, scoped, tag = 'output window, operand 0']
    #allocation3 [shape = 's32[2]{0}', space=sflag, size = 0x8, scoped, tag = 'scoped memory for tpu_custom_call.1']
    %8 = vsyncpa [#allocation3], 0
    %s9 = scalar_lea.sflag [#allocation3], 1
    %10 = vsyncpa %s9, 0
    loop: start=0, step=1, limit=4
    $region2: #{tpu_custom_call.1} parent=1 // loop_pre_header
      _
    $region3: #{tpu_custom_call.1} parent=1 // loop_header
      %s12 = sphi 0, %s16
      %p13 = scmp.ge.s32.totalorder %s12, 4
      %s22 = sphi 0, %s24
      %s25 = sphi 0, %s22
      %s26 = sphi 0, %s25
      %s42 = sphi 0, %s26
      %s48 = sphi 0, %s50
      %s51 = sphi 0, %s48
      %s52 = sphi 0, %s51
      %s68 = sphi 0, %s52
      %s74 = sphi 0, %s76
      %s77 = sphi 0, %s74
      %s78 = sphi 0, %s77
      %s94 = sphi 0, %s78
      %s100 = sphi 0, %s102
      %s103 = sphi 0, %s100
      %s104 = sphi 0, %s103
      %s120 = sphi 0, %s104
    $region4: #{tpu_custom_call.1} parent=1 // loop_header_branch
      %15 = sbr.rel (%p13) target = $region8
    $region5: #{tpu_custom_call.1} parent=1 // loop_body
      %s17 = ssub.s32 %s12, 1
      %s18 = ssub.s32 %s12, 2
      %s19 = sadd.s32 %s12, 1
      %s20 = ssub.s32 %s12, %s19
      %p21 = scmp.eq.s32.totalorder %s20, 0
      %s23 = sadd.s32 %s22, 1
      %s24 = scalar_select %p21, %s22, %s23
      %p27 = pneg %p21
      %p28 = scmp.eq.s32.totalorder %s12, 1
      %p29 = por %p27, %p28
      %p30 = scmp.ne.s32.totalorder %s22, %s25
      %p31 = scmp.eq.s32.totalorder %s12, 0
      %p32 = por %p30, %p31
      %p33 = scmp.ne.s32.totalorder %s22, %s25
      %p34 = scmp.eq.s32.totalorder %s17, 1
      %p35 = por %p33, %p34
      %p36 = scmp.ne.s32.totalorder %s25, %s26
      %p37 = scmp.eq.s32.totalorder %s17, 0
      %p38 = por %p36, %p37
      %p39 = scmp.ne.s32.totalorder %s25, %s26
      %p40 = scmp.eq.s32.totalorder %s18, 1
      %p41 = por %p39, %p40
      %p43 = scmp.ne.s32.totalorder %s26, %s42
      %p44 = scmp.eq.s32.totalorder %s18, 0
      %p45 = por %p43, %p44
      %s46 = ssub.s32 %s12, %s19
      %p47 = scmp.eq.s32.totalorder %s46, 0
      %s49 = sadd.s32 %s48, 1
      %s50 = scalar_select %p47, %s48, %s49
      %p53 = pneg %p47
      %p54 = scmp.eq.s32.totalorder %s12, 1
      %p55 = por %p53, %p54
      %p56 = scmp.ne.s32.totalorder %s48, %s51
      %p57 = scmp.eq.s32.totalorder %s12, 0
      %p58 = por %p56, %p57
      %p59 = scmp.ne.s32.totalorder %s48, %s51
      %p60 = scmp.eq.s32.totalorder %s17, 1
      %p61 = por %p59, %p60
      %p62 = scmp.ne.s32.totalorder %s51, %s52
      %p63 = scmp.eq.s32.totalorder %s17, 0
      %p64 = por %p62, %p63
      %p65 = scmp.ne.s32.totalorder %s51, %s52
      %p66 = scmp.eq.s32.totalorder %s18, 1
      %p67 = por %p65, %p66
      %p69 = scmp.ne.s32.totalorder %s52, %s68
      %p70 = scmp.eq.s32.totalorder %s18, 0
      %p71 = por %p69, %p70
      %s72 = ssub.s32 %s12, %s19
      %p73 = scmp.eq.s32.totalorder %s72, 0
      %s75 = sadd.s32 %s74, 1
      %s76 = scalar_select %p73, %s74, %s75
      %p79 = pneg %p73
      %p80 = scmp.eq.s32.totalorder %s12, 1
      %p81 = por %p79, %p80
      %p82 = scmp.ne.s32.totalorder %s74, %s77
      %p83 = scmp.eq.s32.totalorder %s12, 0
      %p84 = por %p82, %p83
      %p85 = scmp.ne.s32.totalorder %s74, %s77
      %p86 = scmp.eq.s32.totalorder %s17, 1
      %p87 = por %p85, %p86
      %p88 = scmp.ne.s32.totalorder %s77, %s78
      %p89 = scmp.eq.s32.totalorder %s17, 0
      %p90 = por %p88, %p89
      %p91 = scmp.ne.s32.totalorder %s77, %s78
      %p92 = scmp.eq.s32.totalorder %s18, 1
      %p93 = por %p91, %p92
      %p95 = scmp.ne.s32.totalorder %s78, %s94
      %p96 = scmp.eq.s32.totalorder %s18, 0
      %p97 = por %p95, %p96
      %s98 = ssub.s32 %s12, %s19
      %p99 = scmp.eq.s32.totalorder %s98, 0
      %s101 = sadd.s32 %s100, 1
      %s102 = scalar_select %p99, %s100, %s101
      %p105 = pneg %p99
      %p106 = scmp.eq.s32.totalorder %s12, 1
      %p107 = por %p105, %p106
      %p108 = scmp.ne.s32.totalorder %s100, %s103
      %p109 = scmp.eq.s32.totalorder %s12, 0
      %p110 = por %p108, %p109
      %p111 = scmp.ne.s32.totalorder %s100, %s103
      %p112 = scmp.eq.s32.totalorder %s17, 1
      %p113 = por %p111, %p112
      %p114 = scmp.ne.s32.totalorder %s103, %s104
      %p115 = scmp.eq.s32.totalorder %s17, 0
      %p116 = por %p114, %p115
      %p117 = scmp.ne.s32.totalorder %s103, %s104
      %p118 = scmp.eq.s32.totalorder %s18, 1
      %p119 = por %p117, %p118
      %p121 = scmp.ne.s32.totalorder %s104, %s120
      %p122 = scmp.eq.s32.totalorder %s18, 0
      %p123 = por %p121, %p122
      %p124 = scmp.le.s32.totalorder 1, %s12
      %p125 = scmp.lt.s32.totalorder %s12, 3
      %p126 = pnand %p124, %p125
      %p127 = pneg %p126
      // Predicated region
      $region9: #{tpu_custom_call.1} parent=5 // pred_check
        _
      $region10: #{tpu_custom_call.1} parent=5 // pred_check_branch
        %129 = sbr.rel (%p126) target = $region12
      $region11: #{tpu_custom_call.1} parent=5 // pred_region
        %s130 = ssub.s32 %s12, 1
      $region12: #{tpu_custom_call.1} parent=5 // pred_fallthru
        _
      %p131 = scmp.lt.s32.totalorder %s12, 2
      // Predicated region
      $region13: #{tpu_custom_call.1} parent=5 // pred_check
        %p132 = pneg %p131
      $region14: #{tpu_custom_call.1} parent=5 // pred_check_branch
        %134 = sbr.rel (%p132) target = $region16
      $region15: #{tpu_custom_call.1} parent=5 // pred_region
        // Predicated region
        $region17: #{tpu_custom_call.1} parent=15 // pred_check
          %p135 = pneg %p32
        $region18: #{tpu_custom_call.1} parent=15 // pred_check_branch
          %137 = sbr.rel (%p135) target = $region20
        $region19: #{tpu_custom_call.1} parent=15 // pred_region
          %s138 = smul.u32 8, %s12
          %p139 = scmp.lt.s32.totalorder %s138, 15
          %s140 = scalar_select %p139, %s138, 15
          %s141 = smul.addr %s140, 8
          %s142 = scalar_lea.vmem %s0, %s141
          %s143 = smul.u32 8, %s12
        $region20: #{tpu_custom_call.1} parent=15 // pred_fallthru
          _
        // Predicated region
        $region21: #{tpu_custom_call.1} parent=15 // pred_check
          %p144 = pneg %p58
        $region22: #{tpu_custom_call.1} parent=15 // pred_check_branch
          %146 = sbr.rel (%p144) target = $region24
        $region23: #{tpu_custom_call.1} parent=15 // pred_region
          %s147 = smul.u32 128, %s12
          %s148 = ssub.s32 250, %s147
          %p149 = scmp.lt.s32.totalorder %s148, 128
          %s150 = scalar_select %p149, %s148, 128
          %s151 = smul.u32 8, %s150
          %p152 = scmp.lt.s32.totalorder %s147, 249
          %s153 = scalar_select %p152, %s147, 249
          %s154 = smul.addr %s153, 8
          %s155 = scalar_lea.vmem %s1, %s154
          %s156 = smul.u32 128, %s12
          %s157 = ssub.s32 250, %s156
          %p158 = scmp.lt.s32.totalorder %s157, 128
          %s159 = scalar_select %p158, %s157, 128
          %s160 = smul.u32 8, %s159
        $region24: #{tpu_custom_call.1} parent=15 // pred_fallthru
          _
        // Predicated region
        $region25: #{tpu_custom_call.1} parent=15 // pred_check
          %p161 = pneg %p84
        $region26: #{tpu_custom_call.1} parent=15 // pred_check_branch
          %163 = sbr.rel (%p161) target = $region28
        $region27: #{tpu_custom_call.1} parent=15 // pred_region
          %s164 = smul.u32 8, %s12
          %p165 = scmp.lt.s32.totalorder %s164, 15
          %s166 = scalar_select %p165, %s164, 15
          %s167 = scalar_lea.vmem %s2, %s166
          %s168 = smul.u32 8, %s12
        $region28: #{tpu_custom_call.1} parent=15 // pred_fallthru
          _
      $region16: #{tpu_custom_call.1} parent=5 // pred_fallthru
        _
      %p169 = scmp.le.s32.totalorder 1, %s12
      %p170 = scmp.lt.s32.totalorder %s12, 3
      %p171 = pnand %p169, %p170
      %p172 = pneg %p171
      // Predicated region
      $region29: #{tpu_custom_call.1} parent=5 // pred_check
        _
      $region30: #{tpu_custom_call.1} parent=5 // pred_check_branch
        %174 = sbr.rel (%p171) target = $region32
      $region31: #{tpu_custom_call.1} parent=5 // pred_region
        %s175 = ssub.s32 %s12, 1
        %s176 = smul.u32 8, %s17
        %p177 = scmp.lt.s32.totalorder %s176, 15
        %s178 = scalar_select %p177, %s176, 15
        %s179 = smul.addr %s178, 8
        %s180 = scalar_lea.vmem %s0, %s179
        %p181 = pneg %p38
        %p182 = pneg %p35
        %s183 = smul.u32 128, %s17
        %s184 = ssub.s32 250, %s183
        %p185 = scmp.lt.s32.totalorder %s184, 128
        %s186 = scalar_select %p185, %s184, 128
        %s187 = smul.u32 8, %s186
        %p188 = scmp.lt.s32.totalorder %s183, 249
        %s189 = scalar_select %p188, %s183, 249
        %s190 = smul.addr %s189, 8
        %s191 = scalar_lea.vmem %s1, %s190
        %p192 = pneg %p64
        %p193 = pneg %p61
        %s194 = smul.u32 8, %s17
        %p195 = scmp.lt.s32.totalorder %s194, 15
        %s196 = scalar_select %p195, %s194, 15
        %s197 = scalar_lea.vmem %s2, %s196
        %p198 = pneg %p90
        %p199 = pneg %p87
        %p200 = pneg %p116
        %p201 = pneg %p113
        %s202 = sand.u32 %s103, 1
        %s203 = scalar_lea.sflag [#allocation3], %s202
        %s204 = sand.u32 %s103, 1
        %s205 = smul.addr %s204, 8
        %s206 = scalar_lea.vmem [#allocation2], %s205
        %s207 = smul.u32 8, %s17
        %p208 = scmp.lt.s32.totalorder %s207, 15
        %s209 = scalar_select %p208, %s207, 15
        %s210 = smul.addr %s209, 8
        %s211 = scalar_lea.vmem %s0, %s210
        %s212 = smul.u32 8, %s17
        %s213 = smul.u32 128, %s17
        %s214 = ssub.s32 250, %s213
        %p215 = scmp.lt.s32.totalorder %s214, 128
        %s216 = scalar_select %p215, %s214, 128
        %s217 = smul.u32 8, %s216
        %p218 = scmp.lt.s32.totalorder %s213, 249
        %s219 = scalar_select %p218, %s213, 249
        %s220 = smul.addr %s219, 8
        %s221 = scalar_lea.vmem %s1, %s220
        %s222 = smul.u32 128, %s17
        %s223 = ssub.s32 250, %s222
        %p224 = scmp.lt.s32.totalorder %s223, 128
        %s225 = scalar_select %p224, %s223, 128
        %s226 = smul.u32 8, %s225
        %s227 = smul.u32 8, %s17
        %p228 = scmp.lt.s32.totalorder %s227, 15
        %s229 = scalar_select %p228, %s227, 15
        %s230 = scalar_lea.vmem %s2, %s229
        %s231 = smul.u32 8, %s17
        %v232 = vld [vmem:[%s230] sm:$0xff]
        %vm233 = vcmp.gt.s32.totalorder %v232, 0
        %vm234 = vcmp.gt.s32.totalorder %v232, 4294967295
        %v235 = vsel %vm233, 1, 0
        %v236 = vcvt.s32.f32 %v235
        %v238 = vperm.slane %v236, 0
        %v239 = vperm.slane %v236, 1
        %v240 = vperm.slane %v236, 2
        %v241 = vperm.slane %v236, 3
        %v242 = vperm.slane %v236, 4
        %v243 = vperm.slane %v236, 5
        %v244 = vperm.slane %v236, 6
        %v245 = vperm.slane %v236, 7
        %vm254 = vcmask 1040384
        %v255 = vsel %vm254, %v238, 0.0
        %v256 = vsel %vm254, %v239, 0.0
        %v257 = vadd.f32 %v255, %v256
        %v258 = vsel %vm254, %v240, 0.0
        %v259 = vadd.f32 %v257, %v258
        %v260 = vsel %vm254, %v241, 0.0
        %v261 = vadd.f32 %v259, %v260
        %v262 = vsel %vm254, %v242, 0.0
        %v263 = vadd.f32 %v261, %v262
        %v264 = vsel %vm254, %v243, 0.0
        %v265 = vadd.f32 %v263, %v264
        %v266 = vsel %vm254, %v244, 0.0
        %v267 = vadd.f32 %v265, %v266
        %v268 = vsel %vm254, %v245, 0.0
        %v269 = vadd.f32 %v267, %v268
        %270 = vadd.xlane.f32.xlu0 %v269
        %v271 = vpop.xlane.xlu0 %270
        %v272 = vrot.slane %v271, 4
        %v273 = vadd.f32 %v271, %v272
        %v274 = vrot.slane %v273, 2
        %v275 = vadd.f32 %v273, %v274
        %v276 = vrot.slane %v275, 1
        %v277 = vadd.f32 %v275, %v276
        %s278 = vtos %v277
        %v279 = vld [vmem:[%s211] sm:$0xff]
        %v280 = vld [vmem:[%s211 + $0x8] sm:$0xff]
        %v281 = vld [vmem:[%s211 + $0x10] sm:$0xff]
        %v282 = vld [vmem:[%s211 + $0x18] sm:$0xff]
        %v283 = vld [vmem:[%s211 + $0x20] sm:$0xff]
        %v284 = vld [vmem:[%s211 + $0x28] sm:$0xff]
        %v285 = vld [vmem:[%s211 + $0x30] sm:$0xff]
        %v286 = vld [vmem:[%s211 + $0x38] sm:$0xff]
        %v287 = vrot.slane %v279, 4
        %v288 = vrot.slane %v280, 4
        %v289 = vrot.slane %v281, 4
        %v290 = vrot.slane %v282, 4
        %v291 = vrot.slane %v283, 4
        %v292 = vrot.slane %v284, 4
        %v293 = vrot.slane %v285, 4
        %v294 = vrot.slane %v286, 4
        %v295 = vsub.f32 %v279, %v287
        %v296 = vsub.f32 %v280, %v288
        %v297 = vsub.f32 %v281, %v289
        %v298 = vsub.f32 %v282, %v290
        %v299 = vsub.f32 %v283, %v291
        %v300 = vsub.f32 %v284, %v292
        %v301 = vsub.f32 %v285, %v293
        %v302 = vsub.f32 %v286, %v294
        %v303 = vand.u32 2147483647, %v295
        %v304 = vand.u32 2147483647, %v296
        %v305 = vand.u32 2147483647, %v297
        %v306 = vand.u32 2147483647, %v298
        %v307 = vand.u32 2147483647, %v299
        %v308 = vand.u32 2147483647, %v300
        %v309 = vand.u32 2147483647, %v301
        %v310 = vand.u32 2147483647, %v302
        %vm311 = vcmp.lt.f32.partialorder %v303, 1.0
        %vm312 = vcmp.lt.f32.partialorder %v304, 1.0
        %vm313 = vcmp.lt.f32.partialorder %v305, 1.0
        %vm314 = vcmp.lt.f32.partialorder %v306, 1.0
        %vm315 = vcmp.lt.f32.partialorder %v307, 1.0
        %vm316 = vcmp.lt.f32.partialorder %v308, 1.0
        %vm317 = vcmp.lt.f32.partialorder %v309, 1.0
        %vm318 = vcmp.lt.f32.partialorder %v310, 1.0
        %v319 = vmul.f32 %v295, 0.5
        %v320 = vmul.f32 %v296, 0.5
        %v321 = vmul.f32 %v297, 0.5
        %v322 = vmul.f32 %v298, 0.5
        %v323 = vmul.f32 %v299, 0.5
        %v324 = vmul.f32 %v300, 0.5
        %v325 = vmul.f32 %v301, 0.5
        %v326 = vmul.f32 %v302, 0.5
        %v327 = vmul.f32 %v319, %v295
        %v328 = vmul.f32 %v320, %v296
        %v329 = vmul.f32 %v321, %v297
        %v330 = vmul.f32 %v322, %v298
        %v331 = vmul.f32 %v323, %v299
        %v332 = vmul.f32 %v324, %v300
        %v333 = vmul.f32 %v325, %v301
        %v334 = vmul.f32 %v326, %v302
        %v335 = vsub.f32 %v303, 0.5
        %v336 = vsub.f32 %v304, 0.5
        %v337 = vsub.f32 %v305, 0.5
        %v338 = vsub.f32 %v306, 0.5
        %v339 = vsub.f32 %v307, 0.5
        %v340 = vsub.f32 %v308, 0.5
        %v341 = vsub.f32 %v309, 0.5
        %v342 = vsub.f32 %v310, 0.5
        %v343 = vsel %vm311, %v327, %v335
        %v344 = vsel %vm312, %v328, %v336
        %v345 = vsel %vm313, %v329, %v337
        %v346 = vsel %vm314, %v330, %v338
        %v347 = vsel %vm315, %v331, %v339
        %v348 = vsel %vm316, %v332, %v340
        %v349 = vsel %vm317, %v333, %v341
        %v350 = vsel %vm318, %v334, %v342
        %v351 = vperm.slane %v235, 0
        %v352 = vperm.slane %v235, 1
        %v353 = vperm.slane %v235, 2
        %v354 = vperm.slane %v235, 3
        %v355 = vperm.slane %v235, 4
        %v356 = vperm.slane %v235, 5
        %v357 = vperm.slane %v235, 6
        %v358 = vperm.slane %v235, 7
        %vm359 = vcmp.eq.s32.totalorder %v351, 1
        %vm360 = vcmp.eq.s32.totalorder %v352, 1
        %vm361 = vcmp.eq.s32.totalorder %v353, 1
        %vm362 = vcmp.eq.s32.totalorder %v354, 1
        %vm363 = vcmp.eq.s32.totalorder %v355, 1
        %vm364 = vcmp.eq.s32.totalorder %v356, 1
        %vm365 = vcmp.eq.s32.totalorder %v357, 1
        %vm366 = vcmp.eq.s32.totalorder %v358, 1
        %v367 = vsel %vm359, %v343, 0.0
        %v368 = vsel %vm360, %v344, 0.0
        %v369 = vsel %vm361, %v345, 0.0
        %v370 = vsel %vm362, %v346, 0.0
        %v371 = vsel %vm363, %v347, 0.0
        %v372 = vsel %vm364, %v348, 0.0
        %v373 = vsel %vm365, %v349, 0.0
        %v374 = vsel %vm366, %v350, 0.0
        %v375 = vadd.f32 %v367, %v368
        %v376 = vadd.f32 %v375, %v369
        %v377 = vadd.f32 %v376, %v370
        %v378 = vadd.f32 %v377, %v371
        %v379 = vadd.f32 %v378, %v372
        %v380 = vadd.f32 %v379, %v373
        %v381 = vadd.f32 %v380, %v374
        %382 = vadd.xlane.f32.xlu0 %v381
        %v383 = vpop.xlane.xlu0 %382
        %v384 = vrot.slane %v383, 4
        %v385 = vadd.f32 %v383, %v384
        %v386 = vrot.slane %v385, 2
        %v387 = vadd.f32 %v385, %v386
        %v388 = vrot.slane %v387, 1
        %v389 = vadd.f32 %v387, %v388
        %s390 = vtos %v389
        %s391 = smul.f32 %s390, 0.5
        %v392 = vld [vmem:[%s221] sm:$0xff]
        %v393 = vld [vmem:[%s221 + $0x8] sm:$0xff]
        %v394 = vld [vmem:[%s221 + $0x10] sm:$0xff]
        %v395 = vld [vmem:[%s221 + $0x18] sm:$0xff]
        %v396 = vld [vmem:[%s221 + $0x20] sm:$0xff]
        %v397 = vld [vmem:[%s221 + $0x28] sm:$0xff]
        %v398 = vld [vmem:[%s221 + $0x30] sm:$0xff]
        %v399 = vld [vmem:[%s221 + $0x38] sm:$0xff]
        %v400 = vld [vmem:[%s221 + $0x40] sm:$0xff]
        %v401 = vld [vmem:[%s221 + $0x48] sm:$0xff]
        %v402 = vld [vmem:[%s221 + $0x50] sm:$0xff]
        %v403 = vld [vmem:[%s221 + $0x58] sm:$0xff]
        %v404 = vld [vmem:[%s221 + $0x60] sm:$0xff]
        %v405 = vld [vmem:[%s221 + $0x68] sm:$0xff]
        %v406 = vld [vmem:[%s221 + $0x70] sm:$0xff]
        %v407 = vld [vmem:[%s221 + $0x78] sm:$0xff]
        %v408 = vld [vmem:[%s221 + $0x80] sm:$0xff]
        %v409 = vld [vmem:[%s221 + $0x88] sm:$0xff]
        %v410 = vld [vmem:[%s221 + $0x90] sm:$0xff]
        %v411 = vld [vmem:[%s221 + $0x98] sm:$0xff]
        %v412 = vld [vmem:[%s221 + $0xa0] sm:$0xff]
        %v413 = vld [vmem:[%s221 + $0xa8] sm:$0xff]
        %v414 = vld [vmem:[%s221 + $0xb0] sm:$0xff]
        %v415 = vld [vmem:[%s221 + $0xb8] sm:$0xff]
        %v416 = vld [vmem:[%s221 + $0xc0] sm:$0xff]
        %v417 = vld [vmem:[%s221 + $0xc8] sm:$0xff]
        %v418 = vld [vmem:[%s221 + $0xd0] sm:$0xff]
        %v419 = vld [vmem:[%s221 + $0xd8] sm:$0xff]
        %v420 = vld [vmem:[%s221 + $0xe0] sm:$0xff]
        %v421 = vld [vmem:[%s221 + $0xe8] sm:$0xff]
        %v422 = vld [vmem:[%s221 + $0xf0] sm:$0xff]
        %v423 = vld [vmem:[%s221 + $0xf8] sm:$0xff]
        %v424 = vld [vmem:[%s221 + $0x100] sm:$0xff]
        %v425 = vld [vmem:[%s221 + $0x108] sm:$0xff]
        %v426 = vld [vmem:[%s221 + $0x110] sm:$0xff]
        %v427 = vld [vmem:[%s221 + $0x118] sm:$0xff]
        %v428 = vld [vmem:[%s221 + $0x120] sm:$0xff]
        %v429 = vld [vmem:[%s221 + $0x128] sm:$0xff]
        %v430 = vld [vmem:[%s221 + $0x130] sm:$0xff]
        %v431 = vld [vmem:[%s221 + $0x138] sm:$0xff]
        %v432 = vld [vmem:[%s221 + $0x140] sm:$0xff]
        %v433 = vld [vmem:[%s221 + $0x148] sm:$0xff]
        %v434 = vld [vmem:[%s221 + $0x150] sm:$0xff]
        %v435 = vld [vmem:[%s221 + $0x158] sm:$0xff]
        %v436 = vld [vmem:[%s221 + $0x160] sm:$0xff]
        %v437 = vld [vmem:[%s221 + $0x168] sm:$0xff]
        %v438 = vld [vmem:[%s221 + $0x170] sm:$0xff]
        %v439 = vld [vmem:[%s221 + $0x178] sm:$0xff]
        %v440 = vld [vmem:[%s221 + $0x180] sm:$0xff]
        %v441 = vld [vmem:[%s221 + $0x188] sm:$0xff]
        %v442 = vld [vmem:[%s221 + $0x190] sm:$0xff]
        %v443 = vld [vmem:[%s221 + $0x198] sm:$0xff]
        %v444 = vld [vmem:[%s221 + $0x1a0] sm:$0xff]
        %v445 = vld [vmem:[%s221 + $0x1a8] sm:$0xff]
        %v446 = vld [vmem:[%s221 + $0x1b0] sm:$0xff]
        %v447 = vld [vmem:[%s221 + $0x1b8] sm:$0xff]
        %v448 = vld [vmem:[%s221 + $0x1c0] sm:$0xff]
        %v449 = vld [vmem:[%s221 + $0x1c8] sm:$0xff]
        %v450 = vld [vmem:[%s221 + $0x1d0] sm:$0xff]
        %v451 = vld [vmem:[%s221 + $0x1d8] sm:$0xff]
        %v452 = vld [vmem:[%s221 + $0x1e0] sm:$0xff]
        %v453 = vld [vmem:[%s221 + $0x1e8] sm:$0xff]
        %v454 = vld [vmem:[%s221 + $0x1f0] sm:$0xff]
        %v455 = vld [vmem:[%s221 + $0x1f8] sm:$0xff]
        %v456 = vld [vmem:[%s221 + $0x200] sm:$0xff]
        %v457 = vld [vmem:[%s221 + $0x208] sm:$0xff]
        %v458 = vld [vmem:[%s221 + $0x210] sm:$0xff]
        %v459 = vld [vmem:[%s221 + $0x218] sm:$0xff]
        %v460 = vld [vmem:[%s221 + $0x220] sm:$0xff]
        %v461 = vld [vmem:[%s221 + $0x228] sm:$0xff]
        %v462 = vld [vmem:[%s221 + $0x230] sm:$0xff]
        %v463 = vld [vmem:[%s221 + $0x238] sm:$0xff]
        %v464 = vld [vmem:[%s221 + $0x240] sm:$0xff]
        %v465 = vld [vmem:[%s221 + $0x248] sm:$0xff]
        %v466 = vld [vmem:[%s221 + $0x250] sm:$0xff]
        %v467 = vld [vmem:[%s221 + $0x258] sm:$0xff]
        %v468 = vld [vmem:[%s221 + $0x260] sm:$0xff]
        %v469 = vld [vmem:[%s221 + $0x268] sm:$0xff]
        %v470 = vld [vmem:[%s221 + $0x270] sm:$0xff]
        %v471 = vld [vmem:[%s221 + $0x278] sm:$0xff]
        %v472 = vld [vmem:[%s221 + $0x280] sm:$0xff]
        %v473 = vld [vmem:[%s221 + $0x288] sm:$0xff]
        %v474 = vld [vmem:[%s221 + $0x290] sm:$0xff]
        %v475 = vld [vmem:[%s221 + $0x298] sm:$0xff]
        %v476 = vld [vmem:[%s221 + $0x2a0] sm:$0xff]
        %v477 = vld [vmem:[%s221 + $0x2a8] sm:$0xff]
        %v478 = vld [vmem:[%s221 + $0x2b0] sm:$0xff]
        %v479 = vld [vmem:[%s221 + $0x2b8] sm:$0xff]
        %v480 = vld [vmem:[%s221 + $0x2c0] sm:$0xff]
        %v481 = vld [vmem:[%s221 + $0x2c8] sm:$0xff]
        %v482 = vld [vmem:[%s221 + $0x2d0] sm:$0xff]
        %v483 = vld [vmem:[%s221 + $0x2d8] sm:$0xff]
        %v484 = vld [vmem:[%s221 + $0x2e0] sm:$0xff]
        %v485 = vld [vmem:[%s221 + $0x2e8] sm:$0xff]
        %v486 = vld [vmem:[%s221 + $0x2f0] sm:$0xff]
        %v487 = vld [vmem:[%s221 + $0x2f8] sm:$0xff]
        %v488 = vld [vmem:[%s221 + $0x300] sm:$0xff]
        %v489 = vld [vmem:[%s221 + $0x308] sm:$0xff]
        %v490 = vld [vmem:[%s221 + $0x310] sm:$0xff]
        %v491 = vld [vmem:[%s221 + $0x318] sm:$0xff]
        %v492 = vld [vmem:[%s221 + $0x320] sm:$0xff]
        %v493 = vld [vmem:[%s221 + $0x328] sm:$0xff]
        %v494 = vld [vmem:[%s221 + $0x330] sm:$0xff]
        %v495 = vld [vmem:[%s221 + $0x338] sm:$0xff]
        %v496 = vld [vmem:[%s221 + $0x340] sm:$0xff]
        %v497 = vld [vmem:[%s221 + $0x348] sm:$0xff]
        %v498 = vld [vmem:[%s221 + $0x350] sm:$0xff]
        %v499 = vld [vmem:[%s221 + $0x358] sm:$0xff]
        %v500 = vld [vmem:[%s221 + $0x360] sm:$0xff]
        %v501 = vld [vmem:[%s221 + $0x368] sm:$0xff]
        %v502 = vld [vmem:[%s221 + $0x370] sm:$0xff]
        %v503 = vld [vmem:[%s221 + $0x378] sm:$0xff]
        %v504 = vld [vmem:[%s221 + $0x380] sm:$0xff]
        %v505 = vld [vmem:[%s221 + $0x388] sm:$0xff]
        %v506 = vld [vmem:[%s221 + $0x390] sm:$0xff]
        %v507 = vld [vmem:[%s221 + $0x398] sm:$0xff]
        %v508 = vld [vmem:[%s221 + $0x3a0] sm:$0xff]
        %v509 = vld [vmem:[%s221 + $0x3a8] sm:$0xff]
        %v510 = vld [vmem:[%s221 + $0x3b0] sm:$0xff]
        %v511 = vld [vmem:[%s221 + $0x3b8] sm:$0xff]
        %v512 = vld [vmem:[%s221 + $0x3c0] sm:$0xff]
        %v513 = vld [vmem:[%s221 + $0x3c8] sm:$0xff]
        %v514 = vld [vmem:[%s221 + $0x3d0] sm:$0xff]
        %v515 = vld [vmem:[%s221 + $0x3d8] sm:$0xff]
        %v516 = vld [vmem:[%s221 + $0x3e0] sm:$0xff]
        %v517 = vld [vmem:[%s221 + $0x3e8] sm:$0xff]
        %v518 = vld [vmem:[%s221 + $0x3f0] sm:$0xff]
        %v519 = vld [vmem:[%s221 + $0x3f8] sm:$0xff]
        %v520 = vlaneseq
        %v521 = vshrl.u32 %v520, 7
        %v522 = vadd.s32 %v521, 8
        %v523 = vadd.s32 %v521, 16
        %v524 = vadd.s32 %v521, 24
        %v525 = vadd.s32 %v521, 32
        %v526 = vadd.s32 %v521, 40
        %v527 = vadd.s32 %v521, 48
        %v528 = vadd.s32 %v521, 56
        %v529 = vadd.s32 %v521, 64
        %v530 = vadd.s32 %v521, 72
        %v531 = vlaneseq
        %v532 = vand.u32 %v531, 127
        %vm533 = vcmp.eq.s32.totalorder %v521, %v532
        %vm534 = vcmp.eq.s32.totalorder %v522, %v532
        %vm535 = vcmp.eq.s32.totalorder %v523, %v532
        %vm536 = vcmp.eq.s32.totalorder %v524, %v532
        %vm537 = vcmp.eq.s32.totalorder %v525, %v532
        %vm538 = vcmp.eq.s32.totalorder %v526, %v532
        %vm539 = vcmp.eq.s32.totalorder %v527, %v532
        %vm540 = vcmp.eq.s32.totalorder %v528, %v532
        %vm541 = vcmp.eq.s32.totalorder %v529, %v532
        %vm542 = vcmp.eq.s32.totalorder %v530, %v532
        %v543 = vsel %vm533, 1, 0
        %v544 = vsel %vm534, 1, 0
        %v545 = vsel %vm535, 1, 0
        %v546 = vsel %vm536, 1, 0
        %v547 = vsel %vm537, 1, 0
        %v548 = vsel %vm538, 1, 0
        %v549 = vsel %vm539, 1, 0
        %v550 = vsel %vm540, 1, 0
        %v551 = vsel %vm541, 1, 0
        %v552 = vsel %vm542, 1, 0
        %v553 = vcvt.s32.f32 %v543
        %v554 = vcvt.s32.f32 %v544
        %v555 = vcvt.s32.f32 %v545
        %v556 = vcvt.s32.f32 %v546
        %v557 = vcvt.s32.f32 %v547
        %v558 = vcvt.s32.f32 %v548
        %v559 = vcvt.s32.f32 %v549
        %v560 = vcvt.s32.f32 %v550
        %v561 = vcvt.s32.f32 %v551
        %v562 = vcvt.s32.f32 %v552
        %vm563 = vcmask 654336
        %v565 = vsel %vm563, %v553, 0
        %v568 = vsel %vm563, %v554, 0
        %v571 = vsel %vm563, %v555, 0
        %v574 = vsel %vm563, %v556, 0
        %v577 = vsel %vm563, %v557, 0
        %v580 = vsel %vm563, %v558, 0
        %v583 = vsel %vm563, %v559, 0
        %v586 = vsel %vm563, %v560, 0
        %v589 = vsel %vm563, %v561, 0
        %v592 = vsel %vm563, %v562, 0
        %v595 = vsel %vm563, %v392, 0
        %v598 = vsel %vm563, %v393, 0
        %v601 = vsel %vm563, %v394, 0
        %v604 = vsel %vm563, %v395, 0
        %v607 = vsel %vm563, %v396, 0
        %v610 = vsel %vm563, %v397, 0
        %v613 = vsel %vm563, %v398, 0
        %v616 = vsel %vm563, %v399, 0
        %v619 = vsel %vm563, %v400, 0
        %v622 = vsel %vm563, %v401, 0
        %v625 = vsel %vm563, %v402, 0
        %v628 = vsel %vm563, %v403, 0
        %v631 = vsel %vm563, %v404, 0
        %v634 = vsel %vm563, %v405, 0
        %v637 = vsel %vm563, %v406, 0
        %v640 = vsel %vm563, %v407, 0
        %v643 = vsel %vm563, %v408, 0
        %v646 = vsel %vm563, %v409, 0
        %v649 = vsel %vm563, %v410, 0
        %v652 = vsel %vm563, %v411, 0
        %v655 = vsel %vm563, %v412, 0
        %v658 = vsel %vm563, %v413, 0
        %v661 = vsel %vm563, %v414, 0
        %v664 = vsel %vm563, %v415, 0
        %v667 = vsel %vm563, %v416, 0
        %v670 = vsel %vm563, %v417, 0
        %v673 = vsel %vm563, %v418, 0
        %v676 = vsel %vm563, %v419, 0
        %v679 = vsel %vm563, %v420, 0
        %v682 = vsel %vm563, %v421, 0
        %v685 = vsel %vm563, %v422, 0
        %v688 = vsel %vm563, %v423, 0
        %v691 = vsel %vm563, %v424, 0
        %v694 = vsel %vm563, %v425, 0
        %v697 = vsel %vm563, %v426, 0
        %v700 = vsel %vm563, %v427, 0
        %v703 = vsel %vm563, %v428, 0
        %v706 = vsel %vm563, %v429, 0
        %v709 = vsel %vm563, %v430, 0
        %v712 = vsel %vm563, %v431, 0
        %v715 = vsel %vm563, %v432, 0
        %v718 = vsel %vm563, %v433, 0
        %v721 = vsel %vm563, %v434, 0
        %v724 = vsel %vm563, %v435, 0
        %v727 = vsel %vm563, %v436, 0
        %v730 = vsel %vm563, %v437, 0
        %v733 = vsel %vm563, %v438, 0
        %v736 = vsel %vm563, %v439, 0
        %v739 = vsel %vm563, %v440, 0
        %v742 = vsel %vm563, %v441, 0
        %v745 = vsel %vm563, %v442, 0
        %v748 = vsel %vm563, %v443, 0
        %v751 = vsel %vm563, %v444, 0
        %v754 = vsel %vm563, %v445, 0
        %v757 = vsel %vm563, %v446, 0
        %v760 = vsel %vm563, %v447, 0
        %v763 = vsel %vm563, %v448, 0
        %v766 = vsel %vm563, %v449, 0
        %v769 = vsel %vm563, %v450, 0
        %v772 = vsel %vm563, %v451, 0
        %v775 = vsel %vm563, %v452, 0
        %v778 = vsel %vm563, %v453, 0
        %v781 = vsel %vm563, %v454, 0
        %v784 = vsel %vm563, %v455, 0
        %v787 = vsel %vm563, %v456, 0
        %v790 = vsel %vm563, %v457, 0
        %v793 = vsel %vm563, %v458, 0
        %v796 = vsel %vm563, %v459, 0
        %v799 = vsel %vm563, %v460, 0
        %v802 = vsel %vm563, %v461, 0
        %v805 = vsel %vm563, %v462, 0
        %v808 = vsel %vm563, %v463, 0
        %v811 = vsel %vm563, %v464, 0
        %v814 = vsel %vm563, %v465, 0
        %v817 = vsel %vm563, %v466, 0
        %v820 = vsel %vm563, %v467, 0
        %v823 = vsel %vm563, %v468, 0
        %v826 = vsel %vm563, %v469, 0
        %v829 = vsel %vm563, %v470, 0
        %v832 = vsel %vm563, %v471, 0
        %v835 = vsel %vm563, %v472, 0
        %v838 = vsel %vm563, %v473, 0
        %v841 = vsel %vm563, %v474, 0
        %v844 = vsel %vm563, %v475, 0
        %v847 = vsel %vm563, %v476, 0
        %v850 = vsel %vm563, %v477, 0
        %v853 = vsel %vm563, %v478, 0
        %v856 = vsel %vm563, %v479, 0
        %v859 = vsel %vm563, %v480, 0
        %v862 = vsel %vm563, %v481, 0
        %v865 = vsel %vm563, %v482, 0
        %v868 = vsel %vm563, %v483, 0
        %v871 = vsel %vm563, %v484, 0
        %v874 = vsel %vm563, %v485, 0
        %v877 = vsel %vm563, %v486, 0
        %v880 = vsel %vm563, %v487, 0
        %v883 = vsel %vm563, %v488, 0
        %v886 = vsel %vm563, %v489, 0
        %v889 = vsel %vm563, %v490, 0
        %v892 = vsel %vm563, %v491, 0
        %v895 = vsel %vm563, %v492, 0
        %v898 = vsel %vm563, %v493, 0
        %v901 = vsel %vm563, %v494, 0
        %v904 = vsel %vm563, %v495, 0
        %v907 = vsel %vm563, %v496, 0
        %v910 = vsel %vm563, %v497, 0
        %v913 = vsel %vm563, %v498, 0
        %v916 = vsel %vm563, %v499, 0
        %v919 = vsel %vm563, %v500, 0
        %v922 = vsel %vm563, %v501, 0
        %v925 = vsel %vm563, %v502, 0
        %v928 = vsel %vm563, %v503, 0
        %v931 = vsel %vm563, %v504, 0
        %v934 = vsel %vm563, %v505, 0
        %v937 = vsel %vm563, %v506, 0
        %v940 = vsel %vm563, %v507, 0
        %v943 = vsel %vm563, %v508, 0
        %v946 = vsel %vm563, %v509, 0
        %v949 = vsel %vm563, %v510, 0
        %v952 = vsel %vm563, %v511, 0
        %v955 = vsel %vm563, %v512, 0
        %v958 = vsel %vm563, %v513, 0
        %v961 = vsel %vm563, %v514, 0
        %v964 = vsel %vm563, %v515, 0
        %v967 = vsel %vm563, %v516, 0
        %v970 = vsel %vm563, %v517, 0
        %v973 = vsel %vm563, %v518, 0
        %v976 = vsel %vm563, %v519, 0
        %v978 = vand.u32 %v640, 4294901760
        %979 = vmatpush.xpose.msra.mxu0 %v978
        %v980 = vand.u32 %v637, 4294901760
        %981 = vmatpush.xpose.msra.mxu0 %v980
        %v982 = vand.u32 %v634, 4294901760
        %983 = vmatpush.xpose.msra.mxu0 %v982
        %v984 = vand.u32 %v631, 4294901760
        %985 = vmatpush.xpose.msra.mxu0 %v984
        %v986 = vand.u32 %v628, 4294901760
        %987 = vmatpush.xpose.msra.mxu0 %v986
        %v988 = vand.u32 %v625, 4294901760
        %989 = vmatpush.xpose.msra.mxu0 %v988
        %v990 = vand.u32 %v622, 4294901760
        %991 = vmatpush.xpose.msra.mxu0 %v990
        %v992 = vand.u32 %v619, 4294901760
        %993 = vmatpush.xpose.msra.mxu0 %v992
        %v994 = vand.u32 %v616, 4294901760
        %995 = vmatpush.xpose.msra.mxu0 %v994
        %v996 = vand.u32 %v613, 4294901760
        %997 = vmatpush.xpose.msra.mxu0 %v996
        %v998 = vand.u32 %v610, 4294901760
        %999 = vmatpush.xpose.msra.mxu0 %v998
        %v1000 = vand.u32 %v607, 4294901760
        %1001 = vmatpush.xpose.msra.mxu0 %v1000
        %v1002 = vand.u32 %v604, 4294901760
        %1003 = vmatpush.xpose.msra.mxu0 %v1002
        %v1004 = vand.u32 %v601, 4294901760
        %1005 = vmatpush.xpose.msra.mxu0 %v1004
        %v1006 = vand.u32 %v598, 4294901760
        %1007 = vmatpush.xpose.msra.mxu0 %v1006
        %v1008 = vand.u32 %v595, 4294901760
        %1009 = vmatpush.xpose.msra.mxu0 %v1008
        %v1010 = vand.u32 %v565, 4294901760
        %v1011 = vsub.f32 %v565, %v1010
        %v1012 = vand.u32 %v1011, 4294901760
        %v1013 = vsub.f32 %v1011, %v1012
        %v1014 = vand.u32 %v1013, 4294901760
        %1015 = vmatmul.f32.gmra.mxu0 %v1014
        %v1016 = vpop.f32.mrf.mxu0
        %v1017 = vadd.f32 0.0, %v1016
        %v1018 = vand.u32 %v568, 4294901760
        %v1019 = vsub.f32 %v568, %v1018
        %v1020 = vand.u32 %v1019, 4294901760
        %v1021 = vsub.f32 %v1019, %v1020
        %v1022 = vand.u32 %v1021, 4294901760
        %1023 = vmatmul.f32.gmra.mxu0 %v1022
        %v1024 = vpop.f32.mrf.mxu0
        %v1025 = vadd.f32 0.0, %v1024
        %v1026 = vand.u32 %v571, 4294901760
        %v1027 = vsub.f32 %v571, %v1026
        %v1028 = vand.u32 %v1027, 4294901760
        %v1029 = vsub.f32 %v1027, %v1028
        %v1030 = vand.u32 %v1029, 4294901760
        %1031 = vmatmul.f32.gmra.mxu0 %v1030
        %v1032 = vpop.f32.mrf.mxu0
        %v1033 = vadd.f32 0.0, %v1032
        %v1034 = vand.u32 %v574, 4294901760
        %v1035 = vsub.f32 %v574, %v1034
        %v1036 = vand.u32 %v1035, 4294901760
        %v1037 = vsub.f32 %v1035, %v1036
        %v1038 = vand.u32 %v1037, 4294901760
        %1039 = vmatmul.f32.gmra.mxu0 %v1038
        %v1040 = vpop.f32.mrf.mxu0
        %v1041 = vadd.f32 0.0, %v1040
        %v1042 = vand.u32 %v577, 4294901760
        %v1043 = vsub.f32 %v577, %v1042
        %v1044 = vand.u32 %v1043, 4294901760
        %v1045 = vsub.f32 %v1043, %v1044
        %v1046 = vand.u32 %v1045, 4294901760
        %1047 = vmatmul.f32.gmra.mxu0 %v1046
        %v1048 = vpop.f32.mrf.mxu0
        %v1049 = vadd.f32 0.0, %v1048
        %v1050 = vand.u32 %v580, 4294901760
        %v1051 = vsub.f32 %v580, %v1050
        %v1052 = vand.u32 %v1051, 4294901760
        %v1053 = vsub.f32 %v1051, %v1052
        %v1054 = vand.u32 %v1053, 4294901760
        %1055 = vmatmul.f32.gmra.mxu0 %v1054
        %v1056 = vpop.f32.mrf.mxu0
        %v1057 = vadd.f32 0.0, %v1056
        %v1058 = vand.u32 %v583, 4294901760
        %v1059 = vsub.f32 %v583, %v1058
        %v1060 = vand.u32 %v1059, 4294901760
        %v1061 = vsub.f32 %v1059, %v1060
        %v1062 = vand.u32 %v1061, 4294901760
        %1063 = vmatmul.f32.gmra.mxu0 %v1062
        %v1064 = vpop.f32.mrf.mxu0
        %v1065 = vadd.f32 0.0, %v1064
        %v1066 = vand.u32 %v586, 4294901760
        %v1067 = vsub.f32 %v586, %v1066
        %v1068 = vand.u32 %v1067, 4294901760
        %v1069 = vsub.f32 %v1067, %v1068
        %v1070 = vand.u32 %v1069, 4294901760
        %1071 = vmatmul.f32.gmra.mxu0 %v1070
        %v1072 = vpop.f32.mrf.mxu0
        %v1073 = vadd.f32 0.0, %v1072
        %v1074 = vand.u32 %v589, 4294901760
        %v1075 = vsub.f32 %v589, %v1074
        %v1076 = vand.u32 %v1075, 4294901760
        %v1077 = vsub.f32 %v1075, %v1076
        %v1078 = vand.u32 %v1077, 4294901760
        %1079 = vmatmul.f32.gmra.mxu0 %v1078
        %v1080 = vpop.f32.mrf.mxu0
        %v1081 = vadd.f32 0.0, %v1080
        %v1082 = vand.u32 %v592, 4294901760
        %v1083 = vsub.f32 %v592, %v1082
        %v1084 = vand.u32 %v1083, 4294901760
        %v1085 = vsub.f32 %v1083, %v1084
        %v1086 = vand.u32 %v1085, 4294901760
        %1087 = vmatmul.f32.gmra.mxu0 %v1086
        %v1088 = vpop.f32.mrf.mxu0
        %v1089 = vadd.f32 0.0, %v1088
        %1090 = vdwg.mxu0
        %v1091 = vand.u32 %v640, 4294901760
        %v1092 = vsub.f32 %v640, %v1091
        %v1093 = vand.u32 %v1092, 4294901760
        %v1094 = vsub.f32 %v1092, %v1093
        %v1095 = vand.u32 %v1094, 4294901760
        %1096 = vmatpush.xpose.msra.mxu0 %v1095
        %v1097 = vand.u32 %v637, 4294901760
        %v1098 = vsub.f32 %v637, %v1097
        %v1099 = vand.u32 %v1098, 4294901760
        %v1100 = vsub.f32 %v1098, %v1099
        %v1101 = vand.u32 %v1100, 4294901760
        %1102 = vmatpush.xpose.msra.mxu0 %v1101
        %v1103 = vand.u32 %v634, 4294901760
        %v1104 = vsub.f32 %v634, %v1103
        %v1105 = vand.u32 %v1104, 4294901760
        %v1106 = vsub.f32 %v1104, %v1105
        %v1107 = vand.u32 %v1106, 4294901760
        %1108 = vmatpush.xpose.msra.mxu0 %v1107
        %v1109 = vand.u32 %v631, 4294901760
        %v1110 = vsub.f32 %v631, %v1109
        %v1111 = vand.u32 %v1110, 4294901760
        %v1112 = vsub.f32 %v1110, %v1111
        %v1113 = vand.u32 %v1112, 4294901760
        %1114 = vmatpush.xpose.msra.mxu0 %v1113
        %v1115 = vand.u32 %v628, 4294901760
        %v1116 = vsub.f32 %v628, %v1115
        %v1117 = vand.u32 %v1116, 4294901760
        %v1118 = vsub.f32 %v1116, %v1117
        %v1119 = vand.u32 %v1118, 4294901760
        %1120 = vmatpush.xpose.msra.mxu0 %v1119
        %v1121 = vand.u32 %v625, 4294901760
        %v1122 = vsub.f32 %v625, %v1121
        %v1123 = vand.u32 %v1122, 4294901760
        %v1124 = vsub.f32 %v1122, %v1123
        %v1125 = vand.u32 %v1124, 4294901760
        %1126 = vmatpush.xpose.msra.mxu0 %v1125
        %v1127 = vand.u32 %v622, 4294901760
        %v1128 = vsub.f32 %v622, %v1127
        %v1129 = vand.u32 %v1128, 4294901760
        %v1130 = vsub.f32 %v1128, %v1129
        %v1131 = vand.u32 %v1130, 4294901760
        %1132 = vmatpush.xpose.msra.mxu0 %v1131
        %v1133 = vand.u32 %v619, 4294901760
        %v1134 = vsub.f32 %v619, %v1133
        %v1135 = vand.u32 %v1134, 4294901760
        %v1136 = vsub.f32 %v1134, %v1135
        %v1137 = vand.u32 %v1136, 4294901760
        %1138 = vmatpush.xpose.msra.mxu0 %v1137
        %v1139 = vand.u32 %v616, 4294901760
        %v1140 = vsub.f32 %v616, %v1139
        %v1141 = vand.u32 %v1140, 4294901760
        %v1142 = vsub.f32 %v1140, %v1141
        %v1143 = vand.u32 %v1142, 4294901760
        %1144 = vmatpush.xpose.msra.mxu0 %v1143
        %v1145 = vand.u32 %v613, 4294901760
        %v1146 = vsub.f32 %v613, %v1145
        %v1147 = vand.u32 %v1146, 4294901760
        %v1148 = vsub.f32 %v1146, %v1147
        %v1149 = vand.u32 %v1148, 4294901760
        %1150 = vmatpush.xpose.msra.mxu0 %v1149
        %v1151 = vand.u32 %v610, 4294901760
        %v1152 = vsub.f32 %v610, %v1151
        %v1153 = vand.u32 %v1152, 4294901760
        %v1154 = vsub.f32 %v1152, %v1153
        %v1155 = vand.u32 %v1154, 4294901760
        %1156 = vmatpush.xpose.msra.mxu0 %v1155
        %v1157 = vand.u32 %v607, 4294901760
        %v1158 = vsub.f32 %v607, %v1157
        %v1159 = vand.u32 %v1158, 4294901760
        %v1160 = vsub.f32 %v1158, %v1159
        %v1161 = vand.u32 %v1160, 4294901760
        %1162 = vmatpush.xpose.msra.mxu0 %v1161
        %v1163 = vand.u32 %v604, 4294901760
        %v1164 = vsub.f32 %v604, %v1163
        %v1165 = vand.u32 %v1164, 4294901760
        %v1166 = vsub.f32 %v1164, %v1165
        %v1167 = vand.u32 %v1166, 4294901760
        %1168 = vmatpush.xpose.msra.mxu0 %v1167
        %v1169 = vand.u32 %v601, 4294901760
        %v1170 = vsub.f32 %v601, %v1169
        %v1171 = vand.u32 %v1170, 4294901760
        %v1172 = vsub.f32 %v1170, %v1171
        %v1173 = vand.u32 %v1172, 4294901760
        %1174 = vmatpush.xpose.msra.mxu0 %v1173
        %v1175 = vand.u32 %v598, 4294901760
        %v1176 = vsub.f32 %v598, %v1175
        %v1177 = vand.u32 %v1176, 4294901760
        %v1178 = vsub.f32 %v1176, %v1177
        %v1179 = vand.u32 %v1178, 4294901760
        %1180 = vmatpush.xpose.msra.mxu0 %v1179
        %v1181 = vand.u32 %v595, 4294901760
        %v1182 = vsub.f32 %v595, %v1181
        %v1183 = vand.u32 %v1182, 4294901760
        %v1184 = vsub.f32 %v1182, %v1183
        %v1185 = vand.u32 %v1184, 4294901760
        %1186 = vmatpush.xpose.msra.mxu0 %v1185
        %v1187 = vand.u32 %v565, 4294901760
        %1188 = vmatmul.f32.gmra.mxu0 %v1187
        %v1189 = vpop.f32.mrf.mxu0
        %v1190 = vadd.f32 %v1017, %v1189
        %v1191 = vand.u32 %v568, 4294901760
        %1192 = vmatmul.f32.gmra.mxu0 %v1191
        %v1193 = vpop.f32.mrf.mxu0
        %v1194 = vadd.f32 %v1025, %v1193
        %v1195 = vand.u32 %v571, 4294901760
        %1196 = vmatmul.f32.gmra.mxu0 %v1195
        %v1197 = vpop.f32.mrf.mxu0
        %v1198 = vadd.f32 %v1033, %v1197
        %v1199 = vand.u32 %v574, 4294901760
        %1200 = vmatmul.f32.gmra.mxu0 %v1199
        %v1201 = vpop.f32.mrf.mxu0
        %v1202 = vadd.f32 %v1041, %v1201
        %v1203 = vand.u32 %v577, 4294901760
        %1204 = vmatmul.f32.gmra.mxu0 %v1203
        %v1205 = vpop.f32.mrf.mxu0
        %v1206 = vadd.f32 %v1049, %v1205
        %v1207 = vand.u32 %v580, 4294901760
        %1208 = vmatmul.f32.gmra.mxu0 %v1207
        %v1209 = vpop.f32.mrf.mxu0
        %v1210 = vadd.f32 %v1057, %v1209
        %v1211 = vand.u32 %v583, 4294901760
        %1212 = vmatmul.f32.gmra.mxu0 %v1211
        %v1213 = vpop.f32.mrf.mxu0
        %v1214 = vadd.f32 %v1065, %v1213
        %v1215 = vand.u32 %v586, 4294901760
        %1216 = vmatmul.f32.gmra.mxu0 %v1215
        %v1217 = vpop.f32.mrf.mxu0
        %v1218 = vadd.f32 %v1073, %v1217
        %v1219 = vand.u32 %v589, 4294901760
        %1220 = vmatmul.f32.gmra.mxu0 %v1219
        %v1221 = vpop.f32.mrf.mxu0
        %v1222 = vadd.f32 %v1081, %v1221
        %v1223 = vand.u32 %v592, 4294901760
        %1224 = vmatmul.f32.gmra.mxu0 %v1223
        %v1225 = vpop.f32.mrf.mxu0
        %v1226 = vadd.f32 %v1089, %v1225
        %1227 = vdwg.mxu0
        %v1228 = vand.u32 %v640, 4294901760
        %v1229 = vsub.f32 %v640, %v1228
        %1230 = vmatpush.xpose.msra.mxu0 %v1229
        %v1231 = vand.u32 %v637, 4294901760
        %v1232 = vsub.f32 %v637, %v1231
        %1233 = vmatpush.xpose.msra.mxu0 %v1232
        %v1234 = vand.u32 %v634, 4294901760
        %v1235 = vsub.f32 %v634, %v1234
        %1236 = vmatpush.xpose.msra.mxu0 %v1235
        %v1237 = vand.u32 %v631, 4294901760
        %v1238 = vsub.f32 %v631, %v1237
        %1239 = vmatpush.xpose.msra.mxu0 %v1238
        %v1240 = vand.u32 %v628, 4294901760
        %v1241 = vsub.f32 %v628, %v1240
        %1242 = vmatpush.xpose.msra.mxu0 %v1241
        %v1243 = vand.u32 %v625, 4294901760
        %v1244 = vsub.f32 %v625, %v1243
        %1245 = vmatpush.xpose.msra.mxu0 %v1244
        %v1246 = vand.u32 %v622, 4294901760
        %v1247 = vsub.f32 %v622, %v1246
        %1248 = vmatpush.xpose.msra.mxu0 %v1247
        %v1249 = vand.u32 %v619, 4294901760
        %v1250 = vsub.f32 %v619, %v1249
        %1251 = vmatpush.xpose.msra.mxu0 %v1250
        %v1252 = vand.u32 %v616, 4294901760
        %v1253 = vsub.f32 %v616, %v1252
        %1254 = vmatpush.xpose.msra.mxu0 %v1253
        %v1255 = vand.u32 %v613, 4294901760
        %v1256 = vsub.f32 %v613, %v1255
        %1257 = vmatpush.xpose.msra.mxu0 %v1256
        %v1258 = vand.u32 %v610, 4294901760
        %v1259 = vsub.f32 %v610, %v1258
        %1260 = vmatpush.xpose.msra.mxu0 %v1259
        %v1261 = vand.u32 %v607, 4294901760
        %v1262 = vsub.f32 %v607, %v1261
        %1263 = vmatpush.xpose.msra.mxu0 %v1262
        %v1264 = vand.u32 %v604, 4294901760
        %v1265 = vsub.f32 %v604, %v1264
        %1266 = vmatpush.xpose.msra.mxu0 %v1265
        %v1267 = vand.u32 %v601, 4294901760
        %v1268 = vsub.f32 %v601, %v1267
        %1269 = vmatpush.xpose.msra.mxu0 %v1268
        %v1270 = vand.u32 %v598, 4294901760
        %v1271 = vsub.f32 %v598, %v1270
        %1272 = vmatpush.xpose.msra.mxu0 %v1271
        %v1273 = vand.u32 %v595, 4294901760
        %v1274 = vsub.f32 %v595, %v1273
        %1275 = vmatpush.xpose.msra.mxu0 %v1274
        %v1276 = vand.u32 %v565, 4294901760
        %v1277 = vsub.f32 %v565, %v1276
        %1278 = vmatmul.f32.gmra.mxu0 %v1277
        %v1279 = vpop.f32.mrf.mxu0
        %v1280 = vadd.f32 %v1190, %v1279
        %v1281 = vand.u32 %v568, 4294901760
        %v1282 = vsub.f32 %v568, %v1281
        %1283 = vmatmul.f32.gmra.mxu0 %v1282
        %v1284 = vpop.f32.mrf.mxu0
        %v1285 = vadd.f32 %v1194, %v1284
        %v1286 = vand.u32 %v571, 4294901760
        %v1287 = vsub.f32 %v571, %v1286
        %1288 = vmatmul.f32.gmra.mxu0 %v1287
        %v1289 = vpop.f32.mrf.mxu0
        %v1290 = vadd.f32 %v1198, %v1289
        %v1291 = vand.u32 %v574, 4294901760
        %v1292 = vsub.f32 %v574, %v1291
        %1293 = vmatmul.f32.gmra.mxu0 %v1292
        %v1294 = vpop.f32.mrf.mxu0
        %v1295 = vadd.f32 %v1202, %v1294
        %v1296 = vand.u32 %v577, 4294901760
        %v1297 = vsub.f32 %v577, %v1296
        %1298 = vmatmul.f32.gmra.mxu0 %v1297
        %v1299 = vpop.f32.mrf.mxu0
        %v1300 = vadd.f32 %v1206, %v1299
        %v1301 = vand.u32 %v580, 4294901760
        %v1302 = vsub.f32 %v580, %v1301
        %1303 = vmatmul.f32.gmra.mxu0 %v1302
        %v1304 = vpop.f32.mrf.mxu0
        %v1305 = vadd.f32 %v1210, %v1304
        %v1306 = vand.u32 %v583, 4294901760
        %v1307 = vsub.f32 %v583, %v1306
        %1308 = vmatmul.f32.gmra.mxu0 %v1307
        %v1309 = vpop.f32.mrf.mxu0
        %v1310 = vadd.f32 %v1214, %v1309
        %v1311 = vand.u32 %v586, 4294901760
        %v1312 = vsub.f32 %v586, %v1311
        %1313 = vmatmul.f32.gmra.mxu0 %v1312
        %v1314 = vpop.f32.mrf.mxu0
        %v1315 = vadd.f32 %v1218, %v1314
        %v1316 = vand.u32 %v589, 4294901760
        %v1317 = vsub.f32 %v589, %v1316
        %1318 = vmatmul.f32.gmra.mxu0 %v1317
        %v1319 = vpop.f32.mrf.mxu0
        %v1320 = vadd.f32 %v1222, %v1319
        %v1321 = vand.u32 %v592, 4294901760
        %v1322 = vsub.f32 %v592, %v1321
        %1323 = vmatmul.f32.gmra.mxu0 %v1322
        %v1324 = vpop.f32.mrf.mxu0
        %v1325 = vadd.f32 %v1226, %v1324
        %1326 = vdwg.mxu0
        %v1327 = vand.u32 %v640, 4294901760
        %1328 = vmatpush.xpose.msra.mxu0 %v1327
        %v1329 = vand.u32 %v637, 4294901760
        %1330 = vmatpush.xpose.msra.mxu0 %v1329
        %v1331 = vand.u32 %v634, 4294901760
        %1332 = vmatpush.xpose.msra.mxu0 %v1331
        %v1333 = vand.u32 %v631, 4294901760
        %1334 = vmatpush.xpose.msra.mxu0 %v1333
        %v1335 = vand.u32 %v628, 4294901760
        %1336 = vmatpush.xpose.msra.mxu0 %v1335
        %v1337 = vand.u32 %v625, 4294901760
        %1338 = vmatpush.xpose.msra.mxu0 %v1337
        %v1339 = vand.u32 %v622, 4294901760
        %1340 = vmatpush.xpose.msra.mxu0 %v1339
        %v1341 = vand.u32 %v619, 4294901760
        %1342 = vmatpush.xpose.msra.mxu0 %v1341
        %v1343 = vand.u32 %v616, 4294901760
        %1344 = vmatpush.xpose.msra.mxu0 %v1343
        %v1345 = vand.u32 %v613, 4294901760
        %1346 = vmatpush.xpose.msra.mxu0 %v1345
        %v1347 = vand.u32 %v610, 4294901760
        %1348 = vmatpush.xpose.msra.mxu0 %v1347
        %v1349 = vand.u32 %v607, 4294901760
        %1350 = vmatpush.xpose.msra.mxu0 %v1349
        %v1351 = vand.u32 %v604, 4294901760
        %1352 = vmatpush.xpose.msra.mxu0 %v1351
        %v1353 = vand.u32 %v601, 4294901760
        %1354 = vmatpush.xpose.msra.mxu0 %v1353
        %v1355 = vand.u32 %v598, 4294901760
        %1356 = vmatpush.xpose.msra.mxu0 %v1355
        %v1357 = vand.u32 %v595, 4294901760
        %1358 = vmatpush.xpose.msra.mxu0 %v1357
        %v1359 = vand.u32 %v565, 4294901760
        %v1360 = vsub.f32 %v565, %v1359
        %v1361 = vand.u32 %v1360, 4294901760
        %1362 = vmatmul.f32.gmra.mxu0 %v1361
        %v1363 = vpop.f32.mrf.mxu0
        %v1364 = vadd.f32 %v1280, %v1363
        %v1365 = vand.u32 %v568, 4294901760
        %v1366 = vsub.f32 %v568, %v1365
        %v1367 = vand.u32 %v1366, 4294901760
        %1368 = vmatmul.f32.gmra.mxu0 %v1367
        %v1369 = vpop.f32.mrf.mxu0
        %v1370 = vadd.f32 %v1285, %v1369
        %v1371 = vand.u32 %v571, 4294901760
        %v1372 = vsub.f32 %v571, %v1371
        %v1373 = vand.u32 %v1372, 4294901760
        %1374 = vmatmul.f32.gmra.mxu0 %v1373
        %v1375 = vpop.f32.mrf.mxu0
        %v1376 = vadd.f32 %v1290, %v1375
        %v1377 = vand.u32 %v574, 4294901760
        %v1378 = vsub.f32 %v574, %v1377
        %v1379 = vand.u32 %v1378, 4294901760
        %1380 = vmatmul.f32.gmra.mxu0 %v1379
        %v1381 = vpop.f32.mrf.mxu0
        %v1382 = vadd.f32 %v1295, %v1381
        %v1383 = vand.u32 %v577, 4294901760
        %v1384 = vsub.f32 %v577, %v1383
        %v1385 = vand.u32 %v1384, 4294901760
        %1386 = vmatmul.f32.gmra.mxu0 %v1385
        %v1387 = vpop.f32.mrf.mxu0
        %v1388 = vadd.f32 %v1300, %v1387
        %v1389 = vand.u32 %v580, 4294901760
        %v1390 = vsub.f32 %v580, %v1389
        %v1391 = vand.u32 %v1390, 4294901760
        %1392 = vmatmul.f32.gmra.mxu0 %v1391
        %v1393 = vpop.f32.mrf.mxu0
        %v1394 = vadd.f32 %v1305, %v1393
        %v1395 = vand.u32 %v583, 4294901760
        %v1396 = vsub.f32 %v583, %v1395
        %v1397 = vand.u32 %v1396, 4294901760
        %1398 = vmatmul.f32.gmra.mxu0 %v1397
        %v1399 = vpop.f32.mrf.mxu0
        %v1400 = vadd.f32 %v1310, %v1399
        %v1401 = vand.u32 %v586, 4294901760
        %v1402 = vsub.f32 %v586, %v1401
        %v1403 = vand.u32 %v1402, 4294901760
        %1404 = vmatmul.f32.gmra.mxu0 %v1403
        %v1405 = vpop.f32.mrf.mxu0
        %v1406 = vadd.f32 %v1315, %v1405
        %v1407 = vand.u32 %v589, 4294901760
        %v1408 = vsub.f32 %v589, %v1407
        %v1409 = vand.u32 %v1408, 4294901760
        %1410 = vmatmul.f32.gmra.mxu0 %v1409
        %v1411 = vpop.f32.mrf.mxu0
        %v1412 = vadd.f32 %v1320, %v1411
        %v1413 = vand.u32 %v592, 4294901760
        %v1414 = vsub.f32 %v592, %v1413
        %v1415 = vand.u32 %v1414, 4294901760
        %1416 = vmatmul.f32.gmra.mxu0 %v1415
        %v1417 = vpop.f32.mrf.mxu0
        %v1418 = vadd.f32 %v1325, %v1417
        %1419 = vdwg.mxu0
        %v1420 = vand.u32 %v640, 4294901760
        %v1421 = vsub.f32 %v640, %v1420
        %v1422 = vand.u32 %v1421, 4294901760
        %1423 = vmatpush.xpose.msra.mxu0 %v1422
        %v1424 = vand.u32 %v637, 4294901760
        %v1425 = vsub.f32 %v637, %v1424
        %v1426 = vand.u32 %v1425, 4294901760
        %1427 = vmatpush.xpose.msra.mxu0 %v1426
        %v1428 = vand.u32 %v634, 4294901760
        %v1429 = vsub.f32 %v634, %v1428
        %v1430 = vand.u32 %v1429, 4294901760
        %1431 = vmatpush.xpose.msra.mxu0 %v1430
        %v1432 = vand.u32 %v631, 4294901760
        %v1433 = vsub.f32 %v631, %v1432
        %v1434 = vand.u32 %v1433, 4294901760
        %1435 = vmatpush.xpose.msra.mxu0 %v1434
        %v1436 = vand.u32 %v628, 4294901760
        %v1437 = vsub.f32 %v628, %v1436
        %v1438 = vand.u32 %v1437, 4294901760
        %1439 = vmatpush.xpose.msra.mxu0 %v1438
        %v1440 = vand.u32 %v625, 4294901760
        %v1441 = vsub.f32 %v625, %v1440
        %v1442 = vand.u32 %v1441, 4294901760
        %1443 = vmatpush.xpose.msra.mxu0 %v1442
        %v1444 = vand.u32 %v622, 4294901760
        %v1445 = vsub.f32 %v622, %v1444
        %v1446 = vand.u32 %v1445, 4294901760
        %1447 = vmatpush.xpose.msra.mxu0 %v1446
        %v1448 = vand.u32 %v619, 4294901760
        %v1449 = vsub.f32 %v619, %v1448
        %v1450 = vand.u32 %v1449, 4294901760
        %1451 = vmatpush.xpose.msra.mxu0 %v1450
        %v1452 = vand.u32 %v616, 4294901760
        %v1453 = vsub.f32 %v616, %v1452
        %v1454 = vand.u32 %v1453, 4294901760
        %1455 = vmatpush.xpose.msra.mxu0 %v1454
        %v1456 = vand.u32 %v613, 4294901760
        %v1457 = vsub.f32 %v613, %v1456
        %v1458 = vand.u32 %v1457, 4294901760
        %1459 = vmatpush.xpose.msra.mxu0 %v1458
        %v1460 = vand.u32 %v610, 4294901760
        %v1461 = vsub.f32 %v610, %v1460
        %v1462 = vand.u32 %v1461, 4294901760
        %1463 = vmatpush.xpose.msra.mxu0 %v1462
        %v1464 = vand.u32 %v607, 4294901760
        %v1465 = vsub.f32 %v607, %v1464
        %v1466 = vand.u32 %v1465, 4294901760
        %1467 = vmatpush.xpose.msra.mxu0 %v1466
        %v1468 = vand.u32 %v604, 4294901760
        %v1469 = vsub.f32 %v604, %v1468
        %v1470 = vand.u32 %v1469, 4294901760
        %1471 = vmatpush.xpose.msra.mxu0 %v1470
        %v1472 = vand.u32 %v601, 4294901760
        %v1473 = vsub.f32 %v601, %v1472
        %v1474 = vand.u32 %v1473, 4294901760
        %1475 = vmatpush.xpose.msra.mxu0 %v1474
        %v1476 = vand.u32 %v598, 4294901760
        %v1477 = vsub.f32 %v598, %v1476
        %v1478 = vand.u32 %v1477, 4294901760
        %1479 = vmatpush.xpose.msra.mxu0 %v1478
        %v1480 = vand.u32 %v595, 4294901760
        %v1481 = vsub.f32 %v595, %v1480
        %v1482 = vand.u32 %v1481, 4294901760
        %1483 = vmatpush.xpose.msra.mxu0 %v1482
        %v1484 = vand.u32 %v565, 4294901760
        %1485 = vmatmul.f32.gmra.mxu0 %v1484
        %v1486 = vpop.f32.mrf.mxu0
        %v1487 = vadd.f32 %v1364, %v1486
        %v1488 = vand.u32 %v568, 4294901760
        %1489 = vmatmul.f32.gmra.mxu0 %v1488
        %v1490 = vpop.f32.mrf.mxu0
        %v1491 = vadd.f32 %v1370, %v1490
        %v1492 = vand.u32 %v571, 4294901760
        %1493 = vmatmul.f32.gmra.mxu0 %v1492
        %v1494 = vpop.f32.mrf.mxu0
        %v1495 = vadd.f32 %v1376, %v1494
        %v1496 = vand.u32 %v574, 4294901760
        %1497 = vmatmul.f32.gmra.mxu0 %v1496
        %v1498 = vpop.f32.mrf.mxu0
        %v1499 = vadd.f32 %v1382, %v1498
        %v1500 = vand.u32 %v577, 4294901760
        %1501 = vmatmul.f32.gmra.mxu0 %v1500
        %v1502 = vpop.f32.mrf.mxu0
        %v1503 = vadd.f32 %v1388, %v1502
        %v1504 = vand.u32 %v580, 4294901760
        %1505 = vmatmul.f32.gmra.mxu0 %v1504
        %v1506 = vpop.f32.mrf.mxu0
        %v1507 = vadd.f32 %v1394, %v1506
        %v1508 = vand.u32 %v583, 4294901760
        %1509 = vmatmul.f32.gmra.mxu0 %v1508
        %v1510 = vpop.f32.mrf.mxu0
        %v1511 = vadd.f32 %v1400, %v1510
        %v1512 = vand.u32 %v586, 4294901760
        %1513 = vmatmul.f32.gmra.mxu0 %v1512
        %v1514 = vpop.f32.mrf.mxu0
        %v1515 = vadd.f32 %v1406, %v1514
        %v1516 = vand.u32 %v589, 4294901760
        %1517 = vmatmul.f32.gmra.mxu0 %v1516
        %v1518 = vpop.f32.mrf.mxu0
        %v1519 = vadd.f32 %v1412, %v1518
        %v1520 = vand.u32 %v592, 4294901760
        %1521 = vmatmul.f32.gmra.mxu0 %v1520
        %v1522 = vpop.f32.mrf.mxu0
        %v1523 = vadd.f32 %v1418, %v1522
        %1524 = vdwg.mxu0
        %v1525 = vand.u32 %v640, 4294901760
        %1526 = vmatpush.xpose.msra.mxu0 %v1525
        %v1527 = vand.u32 %v637, 4294901760
        %1528 = vmatpush.xpose.msra.mxu0 %v1527
        %v1529 = vand.u32 %v634, 4294901760
        %1530 = vmatpush.xpose.msra.mxu0 %v1529
        %v1531 = vand.u32 %v631, 4294901760
        %1532 = vmatpush.xpose.msra.mxu0 %v1531
        %v1533 = vand.u32 %v628, 4294901760
        %1534 = vmatpush.xpose.msra.mxu0 %v1533
        %v1535 = vand.u32 %v625, 4294901760
        %1536 = vmatpush.xpose.msra.mxu0 %v1535
        %v1537 = vand.u32 %v622, 4294901760
        %1538 = vmatpush.xpose.msra.mxu0 %v1537
        %v1539 = vand.u32 %v619, 4294901760
        %1540 = vmatpush.xpose.msra.mxu0 %v1539
        %v1541 = vand.u32 %v616, 4294901760
        %1542 = vmatpush.xpose.msra.mxu0 %v1541
        %v1543 = vand.u32 %v613, 4294901760
        %1544 = vmatpush.xpose.msra.mxu0 %v1543
        %v1545 = vand.u32 %v610, 4294901760
        %1546 = vmatpush.xpose.msra.mxu0 %v1545
        %v1547 = vand.u32 %v607, 4294901760
        %1548 = vmatpush.xpose.msra.mxu0 %v1547
        %v1549 = vand.u32 %v604, 4294901760
        %1550 = vmatpush.xpose.msra.mxu0 %v1549
        %v1551 = vand.u32 %v601, 4294901760
        %1552 = vmatpush.xpose.msra.mxu0 %v1551
        %v1553 = vand.u32 %v598, 4294901760
        %1554 = vmatpush.xpose.msra.mxu0 %v1553
        %v1555 = vand.u32 %v595, 4294901760
        %1556 = vmatpush.xpose.msra.mxu0 %v1555
        %v1557 = vand.u32 %v565, 4294901760
        %1558 = vmatmul.f32.gmra.mxu0 %v1557
        %v1559 = vpop.f32.mrf.mxu0
        %v1560 = vadd.f32 %v1487, %v1559
        %v1561 = vand.u32 %v568, 4294901760
        %1562 = vmatmul.f32.gmra.mxu0 %v1561
        %v1563 = vpop.f32.mrf.mxu0
        %v1564 = vadd.f32 %v1491, %v1563
        %v1565 = vand.u32 %v571, 4294901760
        %1566 = vmatmul.f32.gmra.mxu0 %v1565
        %v1567 = vpop.f32.mrf.mxu0
        %v1568 = vadd.f32 %v1495, %v1567
        %v1569 = vand.u32 %v574, 4294901760
        %1570 = vmatmul.f32.gmra.mxu0 %v1569
        %v1571 = vpop.f32.mrf.mxu0
        %v1572 = vadd.f32 %v1499, %v1571
        %v1573 = vand.u32 %v577, 4294901760
        %1574 = vmatmul.f32.gmra.mxu0 %v1573
        %v1575 = vpop.f32.mrf.mxu0
        %v1576 = vadd.f32 %v1503, %v1575
        %v1577 = vand.u32 %v580, 4294901760
        %1578 = vmatmul.f32.gmra.mxu0 %v1577
        %v1579 = vpop.f32.mrf.mxu0
        %v1580 = vadd.f32 %v1507, %v1579
        %v1581 = vand.u32 %v583, 4294901760
        %1582 = vmatmul.f32.gmra.mxu0 %v1581
        %v1583 = vpop.f32.mrf.mxu0
        %v1584 = vadd.f32 %v1511, %v1583
        %v1585 = vand.u32 %v586, 4294901760
        %1586 = vmatmul.f32.gmra.mxu0 %v1585
        %v1587 = vpop.f32.mrf.mxu0
        %v1588 = vadd.f32 %v1515, %v1587
        %v1589 = vand.u32 %v589, 4294901760
        %1590 = vmatmul.f32.gmra.mxu0 %v1589
        %v1591 = vpop.f32.mrf.mxu0
        %v1592 = vadd.f32 %v1519, %v1591
        %v1593 = vand.u32 %v592, 4294901760
        %1594 = vmatmul.f32.gmra.mxu0 %v1593
        %v1595 = vpop.f32.mrf.mxu0
        %v1596 = vadd.f32 %v1523, %v1595
        %1597 = vdwg.mxu0
        %v1598 = vand.u32 %v688, 4294901760
        %1599 = vmatpush.xpose.msra.mxu0 %v1598
        %v1600 = vand.u32 %v685, 4294901760
        %1601 = vmatpush.xpose.msra.mxu0 %v1600
        %v1602 = vand.u32 %v682, 4294901760
        %1603 = vmatpush.xpose.msra.mxu0 %v1602
        %v1604 = vand.u32 %v679, 4294901760
        %1605 = vmatpush.xpose.msra.mxu0 %v1604
        %v1606 = vand.u32 %v676, 4294901760
        %1607 = vmatpush.xpose.msra.mxu0 %v1606
        %v1608 = vand.u32 %v673, 4294901760
        %1609 = vmatpush.xpose.msra.mxu0 %v1608
        %v1610 = vand.u32 %v670, 4294901760
        %1611 = vmatpush.xpose.msra.mxu0 %v1610
        %v1612 = vand.u32 %v667, 4294901760
        %1613 = vmatpush.xpose.msra.mxu0 %v1612
        %v1614 = vand.u32 %v664, 4294901760
        %1615 = vmatpush.xpose.msra.mxu0 %v1614
        %v1616 = vand.u32 %v661, 4294901760
        %1617 = vmatpush.xpose.msra.mxu0 %v1616
        %v1618 = vand.u32 %v658, 4294901760
        %1619 = vmatpush.xpose.msra.mxu0 %v1618
        %v1620 = vand.u32 %v655, 4294901760
        %1621 = vmatpush.xpose.msra.mxu0 %v1620
        %v1622 = vand.u32 %v652, 4294901760
        %1623 = vmatpush.xpose.msra.mxu0 %v1622
        %v1624 = vand.u32 %v649, 4294901760
        %1625 = vmatpush.xpose.msra.mxu0 %v1624
        %v1626 = vand.u32 %v646, 4294901760
        %1627 = vmatpush.xpose.msra.mxu0 %v1626
        %v1628 = vand.u32 %v643, 4294901760
        %1629 = vmatpush.xpose.msra.mxu0 %v1628
        %v1630 = vand.u32 %v565, 4294901760
        %v1631 = vsub.f32 %v565, %v1630
        %v1632 = vand.u32 %v1631, 4294901760
        %v1633 = vsub.f32 %v1631, %v1632
        %v1634 = vand.u32 %v1633, 4294901760
        %1635 = vmatmul.f32.gmra.mxu0 %v1634
        %v1636 = vpop.f32.mrf.mxu0
        %v1637 = vadd.f32 0.0, %v1636
        %v1638 = vand.u32 %v568, 4294901760
        %v1639 = vsub.f32 %v568, %v1638
        %v1640 = vand.u32 %v1639, 4294901760
        %v1641 = vsub.f32 %v1639, %v1640
        %v1642 = vand.u32 %v1641, 4294901760
        %1643 = vmatmul.f32.gmra.mxu0 %v1642
        %v1644 = vpop.f32.mrf.mxu0
        %v1645 = vadd.f32 0.0, %v1644
        %v1646 = vand.u32 %v571, 4294901760
        %v1647 = vsub.f32 %v571, %v1646
        %v1648 = vand.u32 %v1647, 4294901760
        %v1649 = vsub.f32 %v1647, %v1648
        %v1650 = vand.u32 %v1649, 4294901760
        %1651 = vmatmul.f32.gmra.mxu0 %v1650
        %v1652 = vpop.f32.mrf.mxu0
        %v1653 = vadd.f32 0.0, %v1652
        %v1654 = vand.u32 %v574, 4294901760
        %v1655 = vsub.f32 %v574, %v1654
        %v1656 = vand.u32 %v1655, 4294901760
        %v1657 = vsub.f32 %v1655, %v1656
        %v1658 = vand.u32 %v1657, 4294901760
        %1659 = vmatmul.f32.gmra.mxu0 %v1658
        %v1660 = vpop.f32.mrf.mxu0
        %v1661 = vadd.f32 0.0, %v1660
        %v1662 = vand.u32 %v577, 4294901760
        %v1663 = vsub.f32 %v577, %v1662
        %v1664 = vand.u32 %v1663, 4294901760
        %v1665 = vsub.f32 %v1663, %v1664
        %v1666 = vand.u32 %v1665, 4294901760
        %1667 = vmatmul.f32.gmra.mxu0 %v1666
        %v1668 = vpop.f32.mrf.mxu0
        %v1669 = vadd.f32 0.0, %v1668
        %v1670 = vand.u32 %v580, 4294901760
        %v1671 = vsub.f32 %v580, %v1670
        %v1672 = vand.u32 %v1671, 4294901760
        %v1673 = vsub.f32 %v1671, %v1672
        %v1674 = vand.u32 %v1673, 4294901760
        %1675 = vmatmul.f32.gmra.mxu0 %v1674
        %v1676 = vpop.f32.mrf.mxu0
        %v1677 = vadd.f32 0.0, %v1676
        %v1678 = vand.u32 %v583, 4294901760
        %v1679 = vsub.f32 %v583, %v1678
        %v1680 = vand.u32 %v1679, 4294901760
        %v1681 = vsub.f32 %v1679, %v1680
        %v1682 = vand.u32 %v1681, 4294901760
        %1683 = vmatmul.f32.gmra.mxu0 %v1682
        %v1684 = vpop.f32.mrf.mxu0
        %v1685 = vadd.f32 0.0, %v1684
        %v1686 = vand.u32 %v586, 4294901760
        %v1687 = vsub.f32 %v586, %v1686
        %v1688 = vand.u32 %v1687, 4294901760
        %v1689 = vsub.f32 %v1687, %v1688
        %v1690 = vand.u32 %v1689, 4294901760
        %1691 = vmatmul.f32.gmra.mxu0 %v1690
        %v1692 = vpop.f32.mrf.mxu0
        %v1693 = vadd.f32 0.0, %v1692
        %v1694 = vand.u32 %v589, 4294901760
        %v1695 = vsub.f32 %v589, %v1694
        %v1696 = vand.u32 %v1695, 4294901760
        %v1697 = vsub.f32 %v1695, %v1696
        %v1698 = vand.u32 %v1697, 4294901760
        %1699 = vmatmul.f32.gmra.mxu0 %v1698
        %v1700 = vpop.f32.mrf.mxu0
        %v1701 = vadd.f32 0.0, %v1700
        %v1702 = vand.u32 %v592, 4294901760
        %v1703 = vsub.f32 %v592, %v1702
        %v1704 = vand.u32 %v1703, 4294901760
        %v1705 = vsub.f32 %v1703, %v1704
        %v1706 = vand.u32 %v1705, 4294901760
        %1707 = vmatmul.f32.gmra.mxu0 %v1706
        %v1708 = vpop.f32.mrf.mxu0
        %v1709 = vadd.f32 0.0, %v1708
        %1710 = vdwg.mxu0
        %v1711 = vand.u32 %v688, 4294901760
        %v1712 = vsub.f32 %v688, %v1711
        %v1713 = vand.u32 %v1712, 4294901760
        %v1714 = vsub.f32 %v1712, %v1713
        %v1715 = vand.u32 %v1714, 4294901760
        %1716 = vmatpush.xpose.msra.mxu0 %v1715
        %v1717 = vand.u32 %v685, 4294901760
        %v1718 = vsub.f32 %v685, %v1717
        %v1719 = vand.u32 %v1718, 4294901760
        %v1720 = vsub.f32 %v1718, %v1719
        %v1721 = vand.u32 %v1720, 4294901760
        %1722 = vmatpush.xpose.msra.mxu0 %v1721
        %v1723 = vand.u32 %v682, 4294901760
        %v1724 = vsub.f32 %v682, %v1723
        %v1725 = vand.u32 %v1724, 4294901760
        %v1726 = vsub.f32 %v1724, %v1725
        %v1727 = vand.u32 %v1726, 4294901760
        %1728 = vmatpush.xpose.msra.mxu0 %v1727
        %v1729 = vand.u32 %v679, 4294901760
        %v1730 = vsub.f32 %v679, %v1729
        %v1731 = vand.u32 %v1730, 4294901760
        %v1732 = vsub.f32 %v1730, %v1731
        %v1733 = vand.u32 %v1732, 4294901760
        %1734 = vmatpush.xpose.msra.mxu0 %v1733
        %v1735 = vand.u32 %v676, 4294901760
        %v1736 = vsub.f32 %v676, %v1735
        %v1737 = vand.u32 %v1736, 4294901760
        %v1738 = vsub.f32 %v1736, %v1737
        %v1739 = vand.u32 %v1738, 4294901760
        %1740 = vmatpush.xpose.msra.mxu0 %v1739
        %v1741 = vand.u32 %v673, 4294901760
        %v1742 = vsub.f32 %v673, %v1741
        %v1743 = vand.u32 %v1742, 4294901760
        %v1744 = vsub.f32 %v1742, %v1743
        %v1745 = vand.u32 %v1744, 4294901760
        %1746 = vmatpush.xpose.msra.mxu0 %v1745
        %v1747 = vand.u32 %v670, 4294901760
        %v1748 = vsub.f32 %v670, %v1747
        %v1749 = vand.u32 %v1748, 4294901760
        %v1750 = vsub.f32 %v1748, %v1749
        %v1751 = vand.u32 %v1750, 4294901760
        %1752 = vmatpush.xpose.msra.mxu0 %v1751
        %v1753 = vand.u32 %v667, 4294901760
        %v1754 = vsub.f32 %v667, %v1753
        %v1755 = vand.u32 %v1754, 4294901760
        %v1756 = vsub.f32 %v1754, %v1755
        %v1757 = vand.u32 %v1756, 4294901760
        %1758 = vmatpush.xpose.msra.mxu0 %v1757
        %v1759 = vand.u32 %v664, 4294901760
        %v1760 = vsub.f32 %v664, %v1759
        %v1761 = vand.u32 %v1760, 4294901760
        %v1762 = vsub.f32 %v1760, %v1761
        %v1763 = vand.u32 %v1762, 4294901760
        %1764 = vmatpush.xpose.msra.mxu0 %v1763
        %v1765 = vand.u32 %v661, 4294901760
        %v1766 = vsub.f32 %v661, %v1765
        %v1767 = vand.u32 %v1766, 4294901760
        %v1768 = vsub.f32 %v1766, %v1767
        %v1769 = vand.u32 %v1768, 4294901760
        %1770 = vmatpush.xpose.msra.mxu0 %v1769
        %v1771 = vand.u32 %v658, 4294901760
        %v1772 = vsub.f32 %v658, %v1771
        %v1773 = vand.u32 %v1772, 4294901760
        %v1774 = vsub.f32 %v1772, %v1773
        %v1775 = vand.u32 %v1774, 4294901760
        %1776 = vmatpush.xpose.msra.mxu0 %v1775
        %v1777 = vand.u32 %v655, 4294901760
        %v1778 = vsub.f32 %v655, %v1777
        %v1779 = vand.u32 %v1778, 4294901760
        %v1780 = vsub.f32 %v1778, %v1779
        %v1781 = vand.u32 %v1780, 4294901760
        %1782 = vmatpush.xpose.msra.mxu0 %v1781
        %v1783 = vand.u32 %v652, 4294901760
        %v1784 = vsub.f32 %v652, %v1783
        %v1785 = vand.u32 %v1784, 4294901760
        %v1786 = vsub.f32 %v1784, %v1785
        %v1787 = vand.u32 %v1786, 4294901760
        %1788 = vmatpush.xpose.msra.mxu0 %v1787
        %v1789 = vand.u32 %v649, 4294901760
        %v1790 = vsub.f32 %v649, %v1789
        %v1791 = vand.u32 %v1790, 4294901760
        %v1792 = vsub.f32 %v1790, %v1791
        %v1793 = vand.u32 %v1792, 4294901760
        %1794 = vmatpush.xpose.msra.mxu0 %v1793
        %v1795 = vand.u32 %v646, 4294901760
        %v1796 = vsub.f32 %v646, %v1795
        %v1797 = vand.u32 %v1796, 4294901760
        %v1798 = vsub.f32 %v1796, %v1797
        %v1799 = vand.u32 %v1798, 4294901760
        %1800 = vmatpush.xpose.msra.mxu0 %v1799
        %v1801 = vand.u32 %v643, 4294901760
        %v1802 = vsub.f32 %v643, %v1801
        %v1803 = vand.u32 %v1802, 4294901760
        %v1804 = vsub.f32 %v1802, %v1803
        %v1805 = vand.u32 %v1804, 4294901760
        %1806 = vmatpush.xpose.msra.mxu0 %v1805
        %v1807 = vand.u32 %v565, 4294901760
        %1808 = vmatmul.f32.gmra.mxu0 %v1807
        %v1809 = vpop.f32.mrf.mxu0
        %v1810 = vadd.f32 %v1637, %v1809
        %v1811 = vand.u32 %v568, 4294901760
        %1812 = vmatmul.f32.gmra.mxu0 %v1811
        %v1813 = vpop.f32.mrf.mxu0
        %v1814 = vadd.f32 %v1645, %v1813
        %v1815 = vand.u32 %v571, 4294901760
        %1816 = vmatmul.f32.gmra.mxu0 %v1815
        %v1817 = vpop.f32.mrf.mxu0
        %v1818 = vadd.f32 %v1653, %v1817
        %v1819 = vand.u32 %v574, 4294901760
        %1820 = vmatmul.f32.gmra.mxu0 %v1819
        %v1821 = vpop.f32.mrf.mxu0
        %v1822 = vadd.f32 %v1661, %v1821
        %v1823 = vand.u32 %v577, 4294901760
        %1824 = vmatmul.f32.gmra.mxu0 %v1823
        %v1825 = vpop.f32.mrf.mxu0
        %v1826 = vadd.f32 %v1669, %v1825
        %v1827 = vand.u32 %v580, 4294901760
        %1828 = vmatmul.f32.gmra.mxu0 %v1827
        %v1829 = vpop.f32.mrf.mxu0
        %v1830 = vadd.f32 %v1677, %v1829
        %v1831 = vand.u32 %v583, 4294901760
        %1832 = vmatmul.f32.gmra.mxu0 %v1831
        %v1833 = vpop.f32.mrf.mxu0
        %v1834 = vadd.f32 %v1685, %v1833
        %v1835 = vand.u32 %v586, 4294901760
        %1836 = vmatmul.f32.gmra.mxu0 %v1835
        %v1837 = vpop.f32.mrf.mxu0
        %v1838 = vadd.f32 %v1693, %v1837
        %v1839 = vand.u32 %v589, 4294901760
        %1840 = vmatmul.f32.gmra.mxu0 %v1839
        %v1841 = vpop.f32.mrf.mxu0
        %v1842 = vadd.f32 %v1701, %v1841
        %v1843 = vand.u32 %v592, 4294901760
        %1844 = vmatmul.f32.gmra.mxu0 %v1843
        %v1845 = vpop.f32.mrf.mxu0
        %v1846 = vadd.f32 %v1709, %v1845
        %1847 = vdwg.mxu0
        %v1848 = vand.u32 %v688, 4294901760
        %v1849 = vsub.f32 %v688, %v1848
        %1850 = vmatpush.xpose.msra.mxu0 %v1849
        %v1851 = vand.u32 %v685, 4294901760
        %v1852 = vsub.f32 %v685, %v1851
        %1853 = vmatpush.xpose.msra.mxu0 %v1852
        %v1854 = vand.u32 %v682, 4294901760
        %v1855 = vsub.f32 %v682, %v1854
        %1856 = vmatpush.xpose.msra.mxu0 %v1855
        %v1857 = vand.u32 %v679, 4294901760
        %v1858 = vsub.f32 %v679, %v1857
        %1859 = vmatpush.xpose.msra.mxu0 %v1858
        %v1860 = vand.u32 %v676, 4294901760
        %v1861 = vsub.f32 %v676, %v1860
        %1862 = vmatpush.xpose.msra.mxu0 %v1861
        %v1863 = vand.u32 %v673, 4294901760
        %v1864 = vsub.f32 %v673, %v1863
        %1865 = vmatpush.xpose.msra.mxu0 %v1864
        %v1866 = vand.u32 %v670, 4294901760
        %v1867 = vsub.f32 %v670, %v1866
        %1868 = vmatpush.xpose.msra.mxu0 %v1867
        %v1869 = vand.u32 %v667, 4294901760
        %v1870 = vsub.f32 %v667, %v1869
        %1871 = vmatpush.xpose.msra.mxu0 %v1870
        %v1872 = vand.u32 %v664, 4294901760
        %v1873 = vsub.f32 %v664, %v1872
        %1874 = vmatpush.xpose.msra.mxu0 %v1873
        %v1875 = vand.u32 %v661, 4294901760
        %v1876 = vsub.f32 %v661, %v1875
        %1877 = vmatpush.xpose.msra.mxu0 %v1876
        %v1878 = vand.u32 %v658, 4294901760
        %v1879 = vsub.f32 %v658, %v1878
        %1880 = vmatpush.xpose.msra.mxu0 %v1879
        %v1881 = vand.u32 %v655, 4294901760
        %v1882 = vsub.f32 %v655, %v1881
        %1883 = vmatpush.xpose.msra.mxu0 %v1882
        %v1884 = vand.u32 %v652, 4294901760
        %v1885 = vsub.f32 %v652, %v1884
        %1886 = vmatpush.xpose.msra.mxu0 %v1885
        %v1887 = vand.u32 %v649, 4294901760
        %v1888 = vsub.f32 %v649, %v1887
        %1889 = vmatpush.xpose.msra.mxu0 %v1888
        %v1890 = vand.u32 %v646, 4294901760
        %v1891 = vsub.f32 %v646, %v1890
        %1892 = vmatpush.xpose.msra.mxu0 %v1891
        %v1893 = vand.u32 %v643, 4294901760
        %v1894 = vsub.f32 %v643, %v1893
        %1895 = vmatpush.xpose.msra.mxu0 %v1894
        %v1896 = vand.u32 %v565, 4294901760
        %v1897 = vsub.f32 %v565, %v1896
        %1898 = vmatmul.f32.gmra.mxu0 %v1897
        %v1899 = vpop.f32.mrf.mxu0
        %v1900 = vadd.f32 %v1810, %v1899
        %v1901 = vand.u32 %v568, 4294901760
        %v1902 = vsub.f32 %v568, %v1901
        %1903 = vmatmul.f32.gmra.mxu0 %v1902
        %v1904 = vpop.f32.mrf.mxu0
        %v1905 = vadd.f32 %v1814, %v1904
        %v1906 = vand.u32 %v571, 4294901760
        %v1907 = vsub.f32 %v571, %v1906
        %1908 = vmatmul.f32.gmra.mxu0 %v1907
        %v1909 = vpop.f32.mrf.mxu0
        %v1910 = vadd.f32 %v1818, %v1909
        %v1911 = vand.u32 %v574, 4294901760
        %v1912 = vsub.f32 %v574, %v1911
        %1913 = vmatmul.f32.gmra.mxu0 %v1912
        %v1914 = vpop.f32.mrf.mxu0
        %v1915 = vadd.f32 %v1822, %v1914
        %v1916 = vand.u32 %v577, 4294901760
        %v1917 = vsub.f32 %v577, %v1916
        %1918 = vmatmul.f32.gmra.mxu0 %v1917
        %v1919 = vpop.f32.mrf.mxu0
        %v1920 = vadd.f32 %v1826, %v1919
        %v1921 = vand.u32 %v580, 4294901760
        %v1922 = vsub.f32 %v580, %v1921
        %1923 = vmatmul.f32.gmra.mxu0 %v1922
        %v1924 = vpop.f32.mrf.mxu0
        %v1925 = vadd.f32 %v1830, %v1924
        %v1926 = vand.u32 %v583, 4294901760
        %v1927 = vsub.f32 %v583, %v1926
        %1928 = vmatmul.f32.gmra.mxu0 %v1927
        %v1929 = vpop.f32.mrf.mxu0
        %v1930 = vadd.f32 %v1834, %v1929
        %v1931 = vand.u32 %v586, 4294901760
        %v1932 = vsub.f32 %v586, %v1931
        %1933 = vmatmul.f32.gmra.mxu0 %v1932
        %v1934 = vpop.f32.mrf.mxu0
        %v1935 = vadd.f32 %v1838, %v1934
        %v1936 = vand.u32 %v589, 4294901760
        %v1937 = vsub.f32 %v589, %v1936
        %1938 = vmatmul.f32.gmra.mxu0 %v1937
        %v1939 = vpop.f32.mrf.mxu0
        %v1940 = vadd.f32 %v1842, %v1939
        %v1941 = vand.u32 %v592, 4294901760
        %v1942 = vsub.f32 %v592, %v1941
        %1943 = vmatmul.f32.gmra.mxu0 %v1942
        %v1944 = vpop.f32.mrf.mxu0
        %v1945 = vadd.f32 %v1846, %v1944
        %1946 = vdwg.mxu0
        %v1947 = vand.u32 %v688, 4294901760
        %1948 = vmatpush.xpose.msra.mxu0 %v1947
        %v1949 = vand.u32 %v685, 4294901760
        %1950 = vmatpush.xpose.msra.mxu0 %v1949
        %v1951 = vand.u32 %v682, 4294901760
        %1952 = vmatpush.xpose.msra.mxu0 %v1951
        %v1953 = vand.u32 %v679, 4294901760
        %1954 = vmatpush.xpose.msra.mxu0 %v1953
        %v1955 = vand.u32 %v676, 4294901760
        %1956 = vmatpush.xpose.msra.mxu0 %v1955
        %v1957 = vand.u32 %v673, 4294901760
        %1958 = vmatpush.xpose.msra.mxu0 %v1957
        %v1959 = vand.u32 %v670, 4294901760
        %1960 = vmatpush.xpose.msra.mxu0 %v1959
        %v1961 = vand.u32 %v667, 4294901760
        %1962 = vmatpush.xpose.msra.mxu0 %v1961
        %v1963 = vand.u32 %v664, 4294901760
        %1964 = vmatpush.xpose.msra.mxu0 %v1963
        %v1965 = vand.u32 %v661, 4294901760
        %1966 = vmatpush.xpose.msra.mxu0 %v1965
        %v1967 = vand.u32 %v658, 4294901760
        %1968 = vmatpush.xpose.msra.mxu0 %v1967
        %v1969 = vand.u32 %v655, 4294901760
        %1970 = vmatpush.xpose.msra.mxu0 %v1969
        %v1971 = vand.u32 %v652, 4294901760
        %1972 = vmatpush.xpose.msra.mxu0 %v1971
        %v1973 = vand.u32 %v649, 4294901760
        %1974 = vmatpush.xpose.msra.mxu0 %v1973
        %v1975 = vand.u32 %v646, 4294901760
        %1976 = vmatpush.xpose.msra.mxu0 %v1975
        %v1977 = vand.u32 %v643, 4294901760
        %1978 = vmatpush.xpose.msra.mxu0 %v1977
        %v1979 = vand.u32 %v565, 4294901760
        %v1980 = vsub.f32 %v565, %v1979
        %v1981 = vand.u32 %v1980, 4294901760
        %1982 = vmatmul.f32.gmra.mxu0 %v1981
        %v1983 = vpop.f32.mrf.mxu0
        %v1984 = vadd.f32 %v1900, %v1983
        %v1985 = vand.u32 %v568, 4294901760
        %v1986 = vsub.f32 %v568, %v1985
        %v1987 = vand.u32 %v1986, 4294901760
        %1988 = vmatmul.f32.gmra.mxu0 %v1987
        %v1989 = vpop.f32.mrf.mxu0
        %v1990 = vadd.f32 %v1905, %v1989
        %v1991 = vand.u32 %v571, 4294901760
        %v1992 = vsub.f32 %v571, %v1991
        %v1993 = vand.u32 %v1992, 4294901760
        %1994 = vmatmul.f32.gmra.mxu0 %v1993
        %v1995 = vpop.f32.mrf.mxu0
        %v1996 = vadd.f32 %v1910, %v1995
        %v1997 = vand.u32 %v574, 4294901760
        %v1998 = vsub.f32 %v574, %v1997
        %v1999 = vand.u32 %v1998, 4294901760
        %2000 = vmatmul.f32.gmra.mxu0 %v1999
        %v2001 = vpop.f32.mrf.mxu0
        %v2002 = vadd.f32 %v1915, %v2001
        %v2003 = vand.u32 %v577, 4294901760
        %v2004 = vsub.f32 %v577, %v2003
        %v2005 = vand.u32 %v2004, 4294901760
        %2006 = vmatmul.f32.gmra.mxu0 %v2005
        %v2007 = vpop.f32.mrf.mxu0
        %v2008 = vadd.f32 %v1920, %v2007
        %v2009 = vand.u32 %v580, 4294901760
        %v2010 = vsub.f32 %v580, %v2009
        %v2011 = vand.u32 %v2010, 4294901760
        %2012 = vmatmul.f32.gmra.mxu0 %v2011
        %v2013 = vpop.f32.mrf.mxu0
        %v2014 = vadd.f32 %v1925, %v2013
        %v2015 = vand.u32 %v583, 4294901760
        %v2016 = vsub.f32 %v583, %v2015
        %v2017 = vand.u32 %v2016, 4294901760
        %2018 = vmatmul.f32.gmra.mxu0 %v2017
        %v2019 = vpop.f32.mrf.mxu0
        %v2020 = vadd.f32 %v1930, %v2019
        %v2021 = vand.u32 %v586, 4294901760
        %v2022 = vsub.f32 %v586, %v2021
        %v2023 = vand.u32 %v2022, 4294901760
        %2024 = vmatmul.f32.gmra.mxu0 %v2023
        %v2025 = vpop.f32.mrf.mxu0
        %v2026 = vadd.f32 %v1935, %v2025
        %v2027 = vand.u32 %v589, 4294901760
        %v2028 = vsub.f32 %v589, %v2027
        %v2029 = vand.u32 %v2028, 4294901760
        %2030 = vmatmul.f32.gmra.mxu0 %v2029
        %v2031 = vpop.f32.mrf.mxu0
        %v2032 = vadd.f32 %v1940, %v2031
        %v2033 = vand.u32 %v592, 4294901760
        %v2034 = vsub.f32 %v592, %v2033
        %v2035 = vand.u32 %v2034, 4294901760
        %2036 = vmatmul.f32.gmra.mxu0 %v2035
        %v2037 = vpop.f32.mrf.mxu0
        %v2038 = vadd.f32 %v1945, %v2037
        %2039 = vdwg.mxu0
        %v2040 = vand.u32 %v688, 4294901760
        %v2041 = vsub.f32 %v688, %v2040
        %v2042 = vand.u32 %v2041, 4294901760
        %2043 = vmatpush.xpose.msra.mxu0 %v2042
        %v2044 = vand.u32 %v685, 4294901760
        %v2045 = vsub.f32 %v685, %v2044
        %v2046 = vand.u32 %v2045, 4294901760
        %2047 = vmatpush.xpose.msra.mxu0 %v2046
        %v2048 = vand.u32 %v682, 4294901760
        %v2049 = vsub.f32 %v682, %v2048
        %v2050 = vand.u32 %v2049, 4294901760
        %2051 = vmatpush.xpose.msra.mxu0 %v2050
        %v2052 = vand.u32 %v679, 4294901760
        %v2053 = vsub.f32 %v679, %v2052
        %v2054 = vand.u32 %v2053, 4294901760
        %2055 = vmatpush.xpose.msra.mxu0 %v2054
        %v2056 = vand.u32 %v676, 4294901760
        %v2057 = vsub.f32 %v676, %v2056
        %v2058 = vand.u32 %v2057, 4294901760
        %2059 = vmatpush.xpose.msra.mxu0 %v2058
        %v2060 = vand.u32 %v673, 4294901760
        %v2061 = vsub.f32 %v673, %v2060
        %v2062 = vand.u32 %v2061, 4294901760
        %2063 = vmatpush.xpose.msra.mxu0 %v2062
        %v2064 = vand.u32 %v670, 4294901760
        %v2065 = vsub.f32 %v670, %v2064
        %v2066 = vand.u32 %v2065, 4294901760
        %2067 = vmatpush.xpose.msra.mxu0 %v2066
        %v2068 = vand.u32 %v667, 4294901760
        %v2069 = vsub.f32 %v667, %v2068
        %v2070 = vand.u32 %v2069, 4294901760
        %2071 = vmatpush.xpose.msra.mxu0 %v2070
        %v2072 = vand.u32 %v664, 4294901760
        %v2073 = vsub.f32 %v664, %v2072
        %v2074 = vand.u32 %v2073, 4294901760
        %2075 = vmatpush.xpose.msra.mxu0 %v2074
        %v2076 = vand.u32 %v661, 4294901760
        %v2077 = vsub.f32 %v661, %v2076
        %v2078 = vand.u32 %v2077, 4294901760
        %2079 = vmatpush.xpose.msra.mxu0 %v2078
        %v2080 = vand.u32 %v658, 4294901760
        %v2081 = vsub.f32 %v658, %v2080
        %v2082 = vand.u32 %v2081, 4294901760
        %2083 = vmatpush.xpose.msra.mxu0 %v2082
        %v2084 = vand.u32 %v655, 4294901760
        %v2085 = vsub.f32 %v655, %v2084
        %v2086 = vand.u32 %v2085, 4294901760
        %2087 = vmatpush.xpose.msra.mxu0 %v2086
        %v2088 = vand.u32 %v652, 4294901760
        %v2089 = vsub.f32 %v652, %v2088
        %v2090 = vand.u32 %v2089, 4294901760
        %2091 = vmatpush.xpose.msra.mxu0 %v2090
        %v2092 = vand.u32 %v649, 4294901760
        %v2093 = vsub.f32 %v649, %v2092
        %v2094 = vand.u32 %v2093, 4294901760
        %2095 = vmatpush.xpose.msra.mxu0 %v2094
        %v2096 = vand.u32 %v646, 4294901760
        %v2097 = vsub.f32 %v646, %v2096
        %v2098 = vand.u32 %v2097, 4294901760
        %2099 = vmatpush.xpose.msra.mxu0 %v2098
        %v2100 = vand.u32 %v643, 4294901760
        %v2101 = vsub.f32 %v643, %v2100
        %v2102 = vand.u32 %v2101, 4294901760
        %2103 = vmatpush.xpose.msra.mxu0 %v2102
        %v2104 = vand.u32 %v565, 4294901760
        %2105 = vmatmul.f32.gmra.mxu0 %v2104
        %v2106 = vpop.f32.mrf.mxu0
        %v2107 = vadd.f32 %v1984, %v2106
        %v2108 = vand.u32 %v568, 4294901760
        %2109 = vmatmul.f32.gmra.mxu0 %v2108
        %v2110 = vpop.f32.mrf.mxu0
        %v2111 = vadd.f32 %v1990, %v2110
        %v2112 = vand.u32 %v571, 4294901760
        %2113 = vmatmul.f32.gmra.mxu0 %v2112
        %v2114 = vpop.f32.mrf.mxu0
        %v2115 = vadd.f32 %v1996, %v2114
        %v2116 = vand.u32 %v574, 4294901760
        %2117 = vmatmul.f32.gmra.mxu0 %v2116
        %v2118 = vpop.f32.mrf.mxu0
        %v2119 = vadd.f32 %v2002, %v2118
        %v2120 = vand.u32 %v577, 4294901760
        %2121 = vmatmul.f32.gmra.mxu0 %v2120
        %v2122 = vpop.f32.mrf.mxu0
        %v2123 = vadd.f32 %v2008, %v2122
        %v2124 = vand.u32 %v580, 4294901760
        %2125 = vmatmul.f32.gmra.mxu0 %v2124
        %v2126 = vpop.f32.mrf.mxu0
        %v2127 = vadd.f32 %v2014, %v2126
        %v2128 = vand.u32 %v583, 4294901760
        %2129 = vmatmul.f32.gmra.mxu0 %v2128
        %v2130 = vpop.f32.mrf.mxu0
        %v2131 = vadd.f32 %v2020, %v2130
        %v2132 = vand.u32 %v586, 4294901760
        %2133 = vmatmul.f32.gmra.mxu0 %v2132
        %v2134 = vpop.f32.mrf.mxu0
        %v2135 = vadd.f32 %v2026, %v2134
        %v2136 = vand.u32 %v589, 4294901760
        %2137 = vmatmul.f32.gmra.mxu0 %v2136
        %v2138 = vpop.f32.mrf.mxu0
        %v2139 = vadd.f32 %v2032, %v2138
        %v2140 = vand.u32 %v592, 4294901760
        %2141 = vmatmul.f32.gmra.mxu0 %v2140
        %v2142 = vpop.f32.mrf.mxu0
        %v2143 = vadd.f32 %v2038, %v2142
        %2144 = vdwg.mxu0
        %v2145 = vand.u32 %v688, 4294901760
        %2146 = vmatpush.xpose.msra.mxu0 %v2145
        %v2147 = vand.u32 %v685, 4294901760
        %2148 = vmatpush.xpose.msra.mxu0 %v2147
        %v2149 = vand.u32 %v682, 4294901760
        %2150 = vmatpush.xpose.msra.mxu0 %v2149
        %v2151 = vand.u32 %v679, 4294901760
        %2152 = vmatpush.xpose.msra.mxu0 %v2151
        %v2153 = vand.u32 %v676, 4294901760
        %2154 = vmatpush.xpose.msra.mxu0 %v2153
        %v2155 = vand.u32 %v673, 4294901760
        %2156 = vmatpush.xpose.msra.mxu0 %v2155
        %v2157 = vand.u32 %v670, 4294901760
        %2158 = vmatpush.xpose.msra.mxu0 %v2157
        %v2159 = vand.u32 %v667, 4294901760
        %2160 = vmatpush.xpose.msra.mxu0 %v2159
        %v2161 = vand.u32 %v664, 4294901760
        %2162 = vmatpush.xpose.msra.mxu0 %v2161
        %v2163 = vand.u32 %v661, 4294901760
        %2164 = vmatpush.xpose.msra.mxu0 %v2163
        %v2165 = vand.u32 %v658, 4294901760
        %2166 = vmatpush.xpose.msra.mxu0 %v2165
        %v2167 = vand.u32 %v655, 4294901760
        %2168 = vmatpush.xpose.msra.mxu0 %v2167
        %v2169 = vand.u32 %v652, 4294901760
        %2170 = vmatpush.xpose.msra.mxu0 %v2169
        %v2171 = vand.u32 %v649, 4294901760
        %2172 = vmatpush.xpose.msra.mxu0 %v2171
        %v2173 = vand.u32 %v646, 4294901760
        %2174 = vmatpush.xpose.msra.mxu0 %v2173
        %v2175 = vand.u32 %v643, 4294901760
        %2176 = vmatpush.xpose.msra.mxu0 %v2175
        %v2177 = vand.u32 %v565, 4294901760
        %2178 = vmatmul.f32.gmra.mxu0 %v2177
        %v2179 = vpop.f32.mrf.mxu0
        %v2180 = vadd.f32 %v2107, %v2179
        %v2181 = vand.u32 %v568, 4294901760
        %2182 = vmatmul.f32.gmra.mxu0 %v2181
        %v2183 = vpop.f32.mrf.mxu0
        %v2184 = vadd.f32 %v2111, %v2183
        %v2185 = vand.u32 %v571, 4294901760
        %2186 = vmatmul.f32.gmra.mxu0 %v2185
        %v2187 = vpop.f32.mrf.mxu0
        %v2188 = vadd.f32 %v2115, %v2187
        %v2189 = vand.u32 %v574, 4294901760
        %2190 = vmatmul.f32.gmra.mxu0 %v2189
        %v2191 = vpop.f32.mrf.mxu0
        %v2192 = vadd.f32 %v2119, %v2191
        %v2193 = vand.u32 %v577, 4294901760
        %2194 = vmatmul.f32.gmra.mxu0 %v2193
        %v2195 = vpop.f32.mrf.mxu0
        %v2196 = vadd.f32 %v2123, %v2195
        %v2197 = vand.u32 %v580, 4294901760
        %2198 = vmatmul.f32.gmra.mxu0 %v2197
        %v2199 = vpop.f32.mrf.mxu0
        %v2200 = vadd.f32 %v2127, %v2199
        %v2201 = vand.u32 %v583, 4294901760
        %2202 = vmatmul.f32.gmra.mxu0 %v2201
        %v2203 = vpop.f32.mrf.mxu0
        %v2204 = vadd.f32 %v2131, %v2203
        %v2205 = vand.u32 %v586, 4294901760
        %2206 = vmatmul.f32.gmra.mxu0 %v2205
        %v2207 = vpop.f32.mrf.mxu0
        %v2208 = vadd.f32 %v2135, %v2207
        %v2209 = vand.u32 %v589, 4294901760
        %2210 = vmatmul.f32.gmra.mxu0 %v2209
        %v2211 = vpop.f32.mrf.mxu0
        %v2212 = vadd.f32 %v2139, %v2211
        %v2213 = vand.u32 %v592, 4294901760
        %2214 = vmatmul.f32.gmra.mxu0 %v2213
        %v2215 = vpop.f32.mrf.mxu0
        %v2216 = vadd.f32 %v2143, %v2215
        %2217 = vdwg.mxu0
        %v2218 = vand.u32 %v736, 4294901760
        %2219 = vmatpush.xpose.msra.mxu0 %v2218
        %v2220 = vand.u32 %v733, 4294901760
        %2221 = vmatpush.xpose.msra.mxu0 %v2220
        %v2222 = vand.u32 %v730, 4294901760
        %2223 = vmatpush.xpose.msra.mxu0 %v2222
        %v2224 = vand.u32 %v727, 4294901760
        %2225 = vmatpush.xpose.msra.mxu0 %v2224
        %v2226 = vand.u32 %v724, 4294901760
        %2227 = vmatpush.xpose.msra.mxu0 %v2226
        %v2228 = vand.u32 %v721, 4294901760
        %2229 = vmatpush.xpose.msra.mxu0 %v2228
        %v2230 = vand.u32 %v718, 4294901760
        %2231 = vmatpush.xpose.msra.mxu0 %v2230
        %v2232 = vand.u32 %v715, 4294901760
        %2233 = vmatpush.xpose.msra.mxu0 %v2232
        %v2234 = vand.u32 %v712, 4294901760
        %2235 = vmatpush.xpose.msra.mxu0 %v2234
        %v2236 = vand.u32 %v709, 4294901760
        %2237 = vmatpush.xpose.msra.mxu0 %v2236
        %v2238 = vand.u32 %v706, 4294901760
        %2239 = vmatpush.xpose.msra.mxu0 %v2238
        %v2240 = vand.u32 %v703, 4294901760
        %2241 = vmatpush.xpose.msra.mxu0 %v2240
        %v2242 = vand.u32 %v700, 4294901760
        %2243 = vmatpush.xpose.msra.mxu0 %v2242
        %v2244 = vand.u32 %v697, 4294901760
        %2245 = vmatpush.xpose.msra.mxu0 %v2244
        %v2246 = vand.u32 %v694, 4294901760
        %2247 = vmatpush.xpose.msra.mxu0 %v2246
        %v2248 = vand.u32 %v691, 4294901760
        %2249 = vmatpush.xpose.msra.mxu0 %v2248
        %v2250 = vand.u32 %v565, 4294901760
        %v2251 = vsub.f32 %v565, %v2250
        %v2252 = vand.u32 %v2251, 4294901760
        %v2253 = vsub.f32 %v2251, %v2252
        %v2254 = vand.u32 %v2253, 4294901760
        %2255 = vmatmul.f32.gmra.mxu0 %v2254
        %v2256 = vpop.f32.mrf.mxu0
        %v2257 = vadd.f32 0.0, %v2256
        %v2258 = vand.u32 %v568, 4294901760
        %v2259 = vsub.f32 %v568, %v2258
        %v2260 = vand.u32 %v2259, 4294901760
        %v2261 = vsub.f32 %v2259, %v2260
        %v2262 = vand.u32 %v2261, 4294901760
        %2263 = vmatmul.f32.gmra.mxu0 %v2262
        %v2264 = vpop.f32.mrf.mxu0
        %v2265 = vadd.f32 0.0, %v2264
        %v2266 = vand.u32 %v571, 4294901760
        %v2267 = vsub.f32 %v571, %v2266
        %v2268 = vand.u32 %v2267, 4294901760
        %v2269 = vsub.f32 %v2267, %v2268
        %v2270 = vand.u32 %v2269, 4294901760
        %2271 = vmatmul.f32.gmra.mxu0 %v2270
        %v2272 = vpop.f32.mrf.mxu0
        %v2273 = vadd.f32 0.0, %v2272
        %v2274 = vand.u32 %v574, 4294901760
        %v2275 = vsub.f32 %v574, %v2274
        %v2276 = vand.u32 %v2275, 4294901760
        %v2277 = vsub.f32 %v2275, %v2276
        %v2278 = vand.u32 %v2277, 4294901760
        %2279 = vmatmul.f32.gmra.mxu0 %v2278
        %v2280 = vpop.f32.mrf.mxu0
        %v2281 = vadd.f32 0.0, %v2280
        %v2282 = vand.u32 %v577, 4294901760
        %v2283 = vsub.f32 %v577, %v2282
        %v2284 = vand.u32 %v2283, 4294901760
        %v2285 = vsub.f32 %v2283, %v2284
        %v2286 = vand.u32 %v2285, 4294901760
        %2287 = vmatmul.f32.gmra.mxu0 %v2286
        %v2288 = vpop.f32.mrf.mxu0
        %v2289 = vadd.f32 0.0, %v2288
        %v2290 = vand.u32 %v580, 4294901760
        %v2291 = vsub.f32 %v580, %v2290
        %v2292 = vand.u32 %v2291, 4294901760
        %v2293 = vsub.f32 %v2291, %v2292
        %v2294 = vand.u32 %v2293, 4294901760
        %2295 = vmatmul.f32.gmra.mxu0 %v2294
        %v2296 = vpop.f32.mrf.mxu0
        %v2297 = vadd.f32 0.0, %v2296
        %v2298 = vand.u32 %v583, 4294901760
        %v2299 = vsub.f32 %v583, %v2298
        %v2300 = vand.u32 %v2299, 4294901760
        %v2301 = vsub.f32 %v2299, %v2300
        %v2302 = vand.u32 %v2301, 4294901760
        %2303 = vmatmul.f32.gmra.mxu0 %v2302
        %v2304 = vpop.f32.mrf.mxu0
        %v2305 = vadd.f32 0.0, %v2304
        %v2306 = vand.u32 %v586, 4294901760
        %v2307 = vsub.f32 %v586, %v2306
        %v2308 = vand.u32 %v2307, 4294901760
        %v2309 = vsub.f32 %v2307, %v2308
        %v2310 = vand.u32 %v2309, 4294901760
        %2311 = vmatmul.f32.gmra.mxu0 %v2310
        %v2312 = vpop.f32.mrf.mxu0
        %v2313 = vadd.f32 0.0, %v2312
        %v2314 = vand.u32 %v589, 4294901760
        %v2315 = vsub.f32 %v589, %v2314
        %v2316 = vand.u32 %v2315, 4294901760
        %v2317 = vsub.f32 %v2315, %v2316
        %v2318 = vand.u32 %v2317, 4294901760
        %2319 = vmatmul.f32.gmra.mxu0 %v2318
        %v2320 = vpop.f32.mrf.mxu0
        %v2321 = vadd.f32 0.0, %v2320
        %v2322 = vand.u32 %v592, 4294901760
        %v2323 = vsub.f32 %v592, %v2322
        %v2324 = vand.u32 %v2323, 4294901760
        %v2325 = vsub.f32 %v2323, %v2324
        %v2326 = vand.u32 %v2325, 4294901760
        %2327 = vmatmul.f32.gmra.mxu0 %v2326
        %v2328 = vpop.f32.mrf.mxu0
        %v2329 = vadd.f32 0.0, %v2328
        %2330 = vdwg.mxu0
        %v2331 = vand.u32 %v736, 4294901760
        %v2332 = vsub.f32 %v736, %v2331
        %v2333 = vand.u32 %v2332, 4294901760
        %v2334 = vsub.f32 %v2332, %v2333
        %v2335 = vand.u32 %v2334, 4294901760
        %2336 = vmatpush.xpose.msra.mxu0 %v2335
        %v2337 = vand.u32 %v733, 4294901760
        %v2338 = vsub.f32 %v733, %v2337
        %v2339 = vand.u32 %v2338, 4294901760
        %v2340 = vsub.f32 %v2338, %v2339
        %v2341 = vand.u32 %v2340, 4294901760
        %2342 = vmatpush.xpose.msra.mxu0 %v2341
        %v2343 = vand.u32 %v730, 4294901760
        %v2344 = vsub.f32 %v730, %v2343
        %v2345 = vand.u32 %v2344, 4294901760
        %v2346 = vsub.f32 %v2344, %v2345
        %v2347 = vand.u32 %v2346, 4294901760
        %2348 = vmatpush.xpose.msra.mxu0 %v2347
        %v2349 = vand.u32 %v727, 4294901760
        %v2350 = vsub.f32 %v727, %v2349
        %v2351 = vand.u32 %v2350, 4294901760
        %v2352 = vsub.f32 %v2350, %v2351
        %v2353 = vand.u32 %v2352, 4294901760
        %2354 = vmatpush.xpose.msra.mxu0 %v2353
        %v2355 = vand.u32 %v724, 4294901760
        %v2356 = vsub.f32 %v724, %v2355
        %v2357 = vand.u32 %v2356, 4294901760
        %v2358 = vsub.f32 %v2356, %v2357
        %v2359 = vand.u32 %v2358, 4294901760
        %2360 = vmatpush.xpose.msra.mxu0 %v2359
        %v2361 = vand.u32 %v721, 4294901760
        %v2362 = vsub.f32 %v721, %v2361
        %v2363 = vand.u32 %v2362, 4294901760
        %v2364 = vsub.f32 %v2362, %v2363
        %v2365 = vand.u32 %v2364, 4294901760
        %2366 = vmatpush.xpose.msra.mxu0 %v2365
        %v2367 = vand.u32 %v718, 4294901760
        %v2368 = vsub.f32 %v718, %v2367
        %v2369 = vand.u32 %v2368, 4294901760
        %v2370 = vsub.f32 %v2368, %v2369
        %v2371 = vand.u32 %v2370, 4294901760
        %2372 = vmatpush.xpose.msra.mxu0 %v2371
        %v2373 = vand.u32 %v715, 4294901760
        %v2374 = vsub.f32 %v715, %v2373
        %v2375 = vand.u32 %v2374, 4294901760
        %v2376 = vsub.f32 %v2374, %v2375
        %v2377 = vand.u32 %v2376, 4294901760
        %2378 = vmatpush.xpose.msra.mxu0 %v2377
        %v2379 = vand.u32 %v712, 4294901760
        %v2380 = vsub.f32 %v712, %v2379
        %v2381 = vand.u32 %v2380, 4294901760
        %v2382 = vsub.f32 %v2380, %v2381
        %v2383 = vand.u32 %v2382, 4294901760
        %2384 = vmatpush.xpose.msra.mxu0 %v2383
        %v2385 = vand.u32 %v709, 4294901760
        %v2386 = vsub.f32 %v709, %v2385
        %v2387 = vand.u32 %v2386, 4294901760
        %v2388 = vsub.f32 %v2386, %v2387
        %v2389 = vand.u32 %v2388, 4294901760
        %2390 = vmatpush.xpose.msra.mxu0 %v2389
        %v2391 = vand.u32 %v706, 4294901760
        %v2392 = vsub.f32 %v706, %v2391
        %v2393 = vand.u32 %v2392, 4294901760
        %v2394 = vsub.f32 %v2392, %v2393
        %v2395 = vand.u32 %v2394, 4294901760
        %2396 = vmatpush.xpose.msra.mxu0 %v2395
        %v2397 = vand.u32 %v703, 4294901760
        %v2398 = vsub.f32 %v703, %v2397
        %v2399 = vand.u32 %v2398, 4294901760
        %v2400 = vsub.f32 %v2398, %v2399
        %v2401 = vand.u32 %v2400, 4294901760
        %2402 = vmatpush.xpose.msra.mxu0 %v2401
        %v2403 = vand.u32 %v700, 4294901760
        %v2404 = vsub.f32 %v700, %v2403
        %v2405 = vand.u32 %v2404, 4294901760
        %v2406 = vsub.f32 %v2404, %v2405
        %v2407 = vand.u32 %v2406, 4294901760
        %2408 = vmatpush.xpose.msra.mxu0 %v2407
        %v2409 = vand.u32 %v697, 4294901760
        %v2410 = vsub.f32 %v697, %v2409
        %v2411 = vand.u32 %v2410, 4294901760
        %v2412 = vsub.f32 %v2410, %v2411
        %v2413 = vand.u32 %v2412, 4294901760
        %2414 = vmatpush.xpose.msra.mxu0 %v2413
        %v2415 = vand.u32 %v694, 4294901760
        %v2416 = vsub.f32 %v694, %v2415
        %v2417 = vand.u32 %v2416, 4294901760
        %v2418 = vsub.f32 %v2416, %v2417
        %v2419 = vand.u32 %v2418, 4294901760
        %2420 = vmatpush.xpose.msra.mxu0 %v2419
        %v2421 = vand.u32 %v691, 4294901760
        %v2422 = vsub.f32 %v691, %v2421
        %v2423 = vand.u32 %v2422, 4294901760
        %v2424 = vsub.f32 %v2422, %v2423
        %v2425 = vand.u32 %v2424, 4294901760
        %2426 = vmatpush.xpose.msra.mxu0 %v2425
        %v2427 = vand.u32 %v565, 4294901760
        %2428 = vmatmul.f32.gmra.mxu0 %v2427
        %v2429 = vpop.f32.mrf.mxu0
        %v2430 = vadd.f32 %v2257, %v2429
        %v2431 = vand.u32 %v568, 4294901760
        %2432 = vmatmul.f32.gmra.mxu0 %v2431
        %v2433 = vpop.f32.mrf.mxu0
        %v2434 = vadd.f32 %v2265, %v2433
        %v2435 = vand.u32 %v571, 4294901760
        %2436 = vmatmul.f32.gmra.mxu0 %v2435
        %v2437 = vpop.f32.mrf.mxu0
        %v2438 = vadd.f32 %v2273, %v2437
        %v2439 = vand.u32 %v574, 4294901760
        %2440 = vmatmul.f32.gmra.mxu0 %v2439
        %v2441 = vpop.f32.mrf.mxu0
        %v2442 = vadd.f32 %v2281, %v2441
        %v2443 = vand.u32 %v577, 4294901760
        %2444 = vmatmul.f32.gmra.mxu0 %v2443
        %v2445 = vpop.f32.mrf.mxu0
        %v2446 = vadd.f32 %v2289, %v2445
        %v2447 = vand.u32 %v580, 4294901760
        %2448 = vmatmul.f32.gmra.mxu0 %v2447
        %v2449 = vpop.f32.mrf.mxu0
        %v2450 = vadd.f32 %v2297, %v2449
        %v2451 = vand.u32 %v583, 4294901760
        %2452 = vmatmul.f32.gmra.mxu0 %v2451
        %v2453 = vpop.f32.mrf.mxu0
        %v2454 = vadd.f32 %v2305, %v2453
        %v2455 = vand.u32 %v586, 4294901760
        %2456 = vmatmul.f32.gmra.mxu0 %v2455
        %v2457 = vpop.f32.mrf.mxu0
        %v2458 = vadd.f32 %v2313, %v2457
        %v2459 = vand.u32 %v589, 4294901760
        %2460 = vmatmul.f32.gmra.mxu0 %v2459
        %v2461 = vpop.f32.mrf.mxu0
        %v2462 = vadd.f32 %v2321, %v2461
        %v2463 = vand.u32 %v592, 4294901760
        %2464 = vmatmul.f32.gmra.mxu0 %v2463
        %v2465 = vpop.f32.mrf.mxu0
        %v2466 = vadd.f32 %v2329, %v2465
        %2467 = vdwg.mxu0
        %v2468 = vand.u32 %v736, 4294901760
        %v2469 = vsub.f32 %v736, %v2468
        %2470 = vmatpush.xpose.msra.mxu0 %v2469
        %v2471 = vand.u32 %v733, 4294901760
        %v2472 = vsub.f32 %v733, %v2471
        %2473 = vmatpush.xpose.msra.mxu0 %v2472
        %v2474 = vand.u32 %v730, 4294901760
        %v2475 = vsub.f32 %v730, %v2474
        %2476 = vmatpush.xpose.msra.mxu0 %v2475
        %v2477 = vand.u32 %v727, 4294901760
        %v2478 = vsub.f32 %v727, %v2477
        %2479 = vmatpush.xpose.msra.mxu0 %v2478
        %v2480 = vand.u32 %v724, 4294901760
        %v2481 = vsub.f32 %v724, %v2480
        %2482 = vmatpush.xpose.msra.mxu0 %v2481
        %v2483 = vand.u32 %v721, 4294901760
        %v2484 = vsub.f32 %v721, %v2483
        %2485 = vmatpush.xpose.msra.mxu0 %v2484
        %v2486 = vand.u32 %v718, 4294901760
        %v2487 = vsub.f32 %v718, %v2486
        %2488 = vmatpush.xpose.msra.mxu0 %v2487
        %v2489 = vand.u32 %v715, 4294901760
        %v2490 = vsub.f32 %v715, %v2489
        %2491 = vmatpush.xpose.msra.mxu0 %v2490
        %v2492 = vand.u32 %v712, 4294901760
        %v2493 = vsub.f32 %v712, %v2492
        %2494 = vmatpush.xpose.msra.mxu0 %v2493
        %v2495 = vand.u32 %v709, 4294901760
        %v2496 = vsub.f32 %v709, %v2495
        %2497 = vmatpush.xpose.msra.mxu0 %v2496
        %v2498 = vand.u32 %v706, 4294901760
        %v2499 = vsub.f32 %v706, %v2498
        %2500 = vmatpush.xpose.msra.mxu0 %v2499
        %v2501 = vand.u32 %v703, 4294901760
        %v2502 = vsub.f32 %v703, %v2501
        %2503 = vmatpush.xpose.msra.mxu0 %v2502
        %v2504 = vand.u32 %v700, 4294901760
        %v2505 = vsub.f32 %v700, %v2504
        %2506 = vmatpush.xpose.msra.mxu0 %v2505
        %v2507 = vand.u32 %v697, 4294901760
        %v2508 = vsub.f32 %v697, %v2507
        %2509 = vmatpush.xpose.msra.mxu0 %v2508
        %v2510 = vand.u32 %v694, 4294901760
        %v2511 = vsub.f32 %v694, %v2510
        %2512 = vmatpush.xpose.msra.mxu0 %v2511
        %v2513 = vand.u32 %v691, 4294901760
        %v2514 = vsub.f32 %v691, %v2513
        %2515 = vmatpush.xpose.msra.mxu0 %v2514
        %v2516 = vand.u32 %v565, 4294901760
        %v2517 = vsub.f32 %v565, %v2516
        %2518 = vmatmul.f32.gmra.mxu0 %v2517
        %v2519 = vpop.f32.mrf.mxu0
        %v2520 = vadd.f32 %v2430, %v2519
        %v2521 = vand.u32 %v568, 4294901760
        %v2522 = vsub.f32 %v568, %v2521
        %2523 = vmatmul.f32.gmra.mxu0 %v2522
        %v2524 = vpop.f32.mrf.mxu0
        %v2525 = vadd.f32 %v2434, %v2524
        %v2526 = vand.u32 %v571, 4294901760
        %v2527 = vsub.f32 %v571, %v2526
        %2528 = vmatmul.f32.gmra.mxu0 %v2527
        %v2529 = vpop.f32.mrf.mxu0
        %v2530 = vadd.f32 %v2438, %v2529
        %v2531 = vand.u32 %v574, 4294901760
        %v2532 = vsub.f32 %v574, %v2531
        %2533 = vmatmul.f32.gmra.mxu0 %v2532
        %v2534 = vpop.f32.mrf.mxu0
        %v2535 = vadd.f32 %v2442, %v2534
        %v2536 = vand.u32 %v577, 4294901760
        %v2537 = vsub.f32 %v577, %v2536
        %2538 = vmatmul.f32.gmra.mxu0 %v2537
        %v2539 = vpop.f32.mrf.mxu0
        %v2540 = vadd.f32 %v2446, %v2539
        %v2541 = vand.u32 %v580, 4294901760
        %v2542 = vsub.f32 %v580, %v2541
        %2543 = vmatmul.f32.gmra.mxu0 %v2542
        %v2544 = vpop.f32.mrf.mxu0
        %v2545 = vadd.f32 %v2450, %v2544
        %v2546 = vand.u32 %v583, 4294901760
        %v2547 = vsub.f32 %v583, %v2546
        %2548 = vmatmul.f32.gmra.mxu0 %v2547
        %v2549 = vpop.f32.mrf.mxu0
        %v2550 = vadd.f32 %v2454, %v2549
        %v2551 = vand.u32 %v586, 4294901760
        %v2552 = vsub.f32 %v586, %v2551
        %2553 = vmatmul.f32.gmra.mxu0 %v2552
        %v2554 = vpop.f32.mrf.mxu0
        %v2555 = vadd.f32 %v2458, %v2554
        %v2556 = vand.u32 %v589, 4294901760
        %v2557 = vsub.f32 %v589, %v2556
        %2558 = vmatmul.f32.gmra.mxu0 %v2557
        %v2559 = vpop.f32.mrf.mxu0
        %v2560 = vadd.f32 %v2462, %v2559
        %v2561 = vand.u32 %v592, 4294901760
        %v2562 = vsub.f32 %v592, %v2561
        %2563 = vmatmul.f32.gmra.mxu0 %v2562
        %v2564 = vpop.f32.mrf.mxu0
        %v2565 = vadd.f32 %v2466, %v2564
        %2566 = vdwg.mxu0
        %v2567 = vand.u32 %v736, 4294901760
        %2568 = vmatpush.xpose.msra.mxu0 %v2567
        %v2569 = vand.u32 %v733, 4294901760
        %2570 = vmatpush.xpose.msra.mxu0 %v2569
        %v2571 = vand.u32 %v730, 4294901760
        %2572 = vmatpush.xpose.msra.mxu0 %v2571
        %v2573 = vand.u32 %v727, 4294901760
        %2574 = vmatpush.xpose.msra.mxu0 %v2573
        %v2575 = vand.u32 %v724, 4294901760
        %2576 = vmatpush.xpose.msra.mxu0 %v2575
        %v2577 = vand.u32 %v721, 4294901760
        %2578 = vmatpush.xpose.msra.mxu0 %v2577
        %v2579 = vand.u32 %v718, 4294901760
        %2580 = vmatpush.xpose.msra.mxu0 %v2579
        %v2581 = vand.u32 %v715, 4294901760
        %2582 = vmatpush.xpose.msra.mxu0 %v2581
        %v2583 = vand.u32 %v712, 4294901760
        %2584 = vmatpush.xpose.msra.mxu0 %v2583
        %v2585 = vand.u32 %v709, 4294901760
        %2586 = vmatpush.xpose.msra.mxu0 %v2585
        %v2587 = vand.u32 %v706, 4294901760
        %2588 = vmatpush.xpose.msra.mxu0 %v2587
        %v2589 = vand.u32 %v703, 4294901760
        %2590 = vmatpush.xpose.msra.mxu0 %v2589
        %v2591 = vand.u32 %v700, 4294901760
        %2592 = vmatpush.xpose.msra.mxu0 %v2591
        %v2593 = vand.u32 %v697, 4294901760
        %2594 = vmatpush.xpose.msra.mxu0 %v2593
        %v2595 = vand.u32 %v694, 4294901760
        %2596 = vmatpush.xpose.msra.mxu0 %v2595
        %v2597 = vand.u32 %v691, 4294901760
        %2598 = vmatpush.xpose.msra.mxu0 %v2597
        %v2599 = vand.u32 %v565, 4294901760
        %v2600 = vsub.f32 %v565, %v2599
        %v2601 = vand.u32 %v2600, 4294901760
        %2602 = vmatmul.f32.gmra.mxu0 %v2601
        %v2603 = vpop.f32.mrf.mxu0
        %v2604 = vadd.f32 %v2520, %v2603
        %v2605 = vand.u32 %v568, 4294901760
        %v2606 = vsub.f32 %v568, %v2605
        %v2607 = vand.u32 %v2606, 4294901760
        %2608 = vmatmul.f32.gmra.mxu0 %v2607
        %v2609 = vpop.f32.mrf.mxu0
        %v2610 = vadd.f32 %v2525, %v2609
        %v2611 = vand.u32 %v571, 4294901760
        %v2612 = vsub.f32 %v571, %v2611
        %v2613 = vand.u32 %v2612, 4294901760
        %2614 = vmatmul.f32.gmra.mxu0 %v2613
        %v2615 = vpop.f32.mrf.mxu0
        %v2616 = vadd.f32 %v2530, %v2615
        %v2617 = vand.u32 %v574, 4294901760
        %v2618 = vsub.f32 %v574, %v2617
        %v2619 = vand.u32 %v2618, 4294901760
        %2620 = vmatmul.f32.gmra.mxu0 %v2619
        %v2621 = vpop.f32.mrf.mxu0
        %v2622 = vadd.f32 %v2535, %v2621
        %v2623 = vand.u32 %v577, 4294901760
        %v2624 = vsub.f32 %v577, %v2623
        %v2625 = vand.u32 %v2624, 4294901760
        %2626 = vmatmul.f32.gmra.mxu0 %v2625
        %v2627 = vpop.f32.mrf.mxu0
        %v2628 = vadd.f32 %v2540, %v2627
        %v2629 = vand.u32 %v580, 4294901760
        %v2630 = vsub.f32 %v580, %v2629
        %v2631 = vand.u32 %v2630, 4294901760
        %2632 = vmatmul.f32.gmra.mxu0 %v2631
        %v2633 = vpop.f32.mrf.mxu0
        %v2634 = vadd.f32 %v2545, %v2633
        %v2635 = vand.u32 %v583, 4294901760
        %v2636 = vsub.f32 %v583, %v2635
        %v2637 = vand.u32 %v2636, 4294901760
        %2638 = vmatmul.f32.gmra.mxu0 %v2637
        %v2639 = vpop.f32.mrf.mxu0
        %v2640 = vadd.f32 %v2550, %v2639
        %v2641 = vand.u32 %v586, 4294901760
        %v2642 = vsub.f32 %v586, %v2641
        %v2643 = vand.u32 %v2642, 4294901760
        %2644 = vmatmul.f32.gmra.mxu0 %v2643
        %v2645 = vpop.f32.mrf.mxu0
        %v2646 = vadd.f32 %v2555, %v2645
        %v2647 = vand.u32 %v589, 4294901760
        %v2648 = vsub.f32 %v589, %v2647
        %v2649 = vand.u32 %v2648, 4294901760
        %2650 = vmatmul.f32.gmra.mxu0 %v2649
        %v2651 = vpop.f32.mrf.mxu0
        %v2652 = vadd.f32 %v2560, %v2651
        %v2653 = vand.u32 %v592, 4294901760
        %v2654 = vsub.f32 %v592, %v2653
        %v2655 = vand.u32 %v2654, 4294901760
        %2656 = vmatmul.f32.gmra.mxu0 %v2655
        %v2657 = vpop.f32.mrf.mxu0
        %v2658 = vadd.f32 %v2565, %v2657
        %2659 = vdwg.mxu0
        %v2660 = vand.u32 %v736, 4294901760
        %v2661 = vsub.f32 %v736, %v2660
        %v2662 = vand.u32 %v2661, 4294901760
        %2663 = vmatpush.xpose.msra.mxu0 %v2662
        %v2664 = vand.u32 %v733, 4294901760
        %v2665 = vsub.f32 %v733, %v2664
        %v2666 = vand.u32 %v2665, 4294901760
        %2667 = vmatpush.xpose.msra.mxu0 %v2666
        %v2668 = vand.u32 %v730, 4294901760
        %v2669 = vsub.f32 %v730, %v2668
        %v2670 = vand.u32 %v2669, 4294901760
        %2671 = vmatpush.xpose.msra.mxu0 %v2670
        %v2672 = vand.u32 %v727, 4294901760
        %v2673 = vsub.f32 %v727, %v2672
        %v2674 = vand.u32 %v2673, 4294901760
        %2675 = vmatpush.xpose.msra.mxu0 %v2674
        %v2676 = vand.u32 %v724, 4294901760
        %v2677 = vsub.f32 %v724, %v2676
        %v2678 = vand.u32 %v2677, 4294901760
        %2679 = vmatpush.xpose.msra.mxu0 %v2678
        %v2680 = vand.u32 %v721, 4294901760
        %v2681 = vsub.f32 %v721, %v2680
        %v2682 = vand.u32 %v2681, 4294901760
        %2683 = vmatpush.xpose.msra.mxu0 %v2682
        %v2684 = vand.u32 %v718, 4294901760
        %v2685 = vsub.f32 %v718, %v2684
        %v2686 = vand.u32 %v2685, 4294901760
        %2687 = vmatpush.xpose.msra.mxu0 %v2686
        %v2688 = vand.u32 %v715, 4294901760
        %v2689 = vsub.f32 %v715, %v2688
        %v2690 = vand.u32 %v2689, 4294901760
        %2691 = vmatpush.xpose.msra.mxu0 %v2690
        %v2692 = vand.u32 %v712, 4294901760
        %v2693 = vsub.f32 %v712, %v2692
        %v2694 = vand.u32 %v2693, 4294901760
        %2695 = vmatpush.xpose.msra.mxu0 %v2694
        %v2696 = vand.u32 %v709, 4294901760
        %v2697 = vsub.f32 %v709, %v2696
        %v2698 = vand.u32 %v2697, 4294901760
        %2699 = vmatpush.xpose.msra.mxu0 %v2698
        %v2700 = vand.u32 %v706, 4294901760
        %v2701 = vsub.f32 %v706, %v2700
        %v2702 = vand.u32 %v2701, 4294901760
        %2703 = vmatpush.xpose.msra.mxu0 %v2702
        %v2704 = vand.u32 %v703, 4294901760
        %v2705 = vsub.f32 %v703, %v2704
        %v2706 = vand.u32 %v2705, 4294901760
        %2707 = vmatpush.xpose.msra.mxu0 %v2706
        %v2708 = vand.u32 %v700, 4294901760
        %v2709 = vsub.f32 %v700, %v2708
        %v2710 = vand.u32 %v2709, 4294901760
        %2711 = vmatpush.xpose.msra.mxu0 %v2710
        %v2712 = vand.u32 %v697, 4294901760
        %v2713 = vsub.f32 %v697, %v2712
        %v2714 = vand.u32 %v2713, 4294901760
        %2715 = vmatpush.xpose.msra.mxu0 %v2714
        %v2716 = vand.u32 %v694, 4294901760
        %v2717 = vsub.f32 %v694, %v2716
        %v2718 = vand.u32 %v2717, 4294901760
        %2719 = vmatpush.xpose.msra.mxu0 %v2718
        %v2720 = vand.u32 %v691, 4294901760
        %v2721 = vsub.f32 %v691, %v2720
        %v2722 = vand.u32 %v2721, 4294901760
        %2723 = vmatpush.xpose.msra.mxu0 %v2722
        %v2724 = vand.u32 %v565, 4294901760
        %2725 = vmatmul.f32.gmra.mxu0 %v2724
        %v2726 = vpop.f32.mrf.mxu0
        %v2727 = vadd.f32 %v2604, %v2726
        %v2728 = vand.u32 %v568, 4294901760
        %2729 = vmatmul.f32.gmra.mxu0 %v2728
        %v2730 = vpop.f32.mrf.mxu0
        %v2731 = vadd.f32 %v2610, %v2730
        %v2732 = vand.u32 %v571, 4294901760
        %2733 = vmatmul.f32.gmra.mxu0 %v2732
        %v2734 = vpop.f32.mrf.mxu0
        %v2735 = vadd.f32 %v2616, %v2734
        %v2736 = vand.u32 %v574, 4294901760
        %2737 = vmatmul.f32.gmra.mxu0 %v2736
        %v2738 = vpop.f32.mrf.mxu0
        %v2739 = vadd.f32 %v2622, %v2738
        %v2740 = vand.u32 %v577, 4294901760
        %2741 = vmatmul.f32.gmra.mxu0 %v2740
        %v2742 = vpop.f32.mrf.mxu0
        %v2743 = vadd.f32 %v2628, %v2742
        %v2744 = vand.u32 %v580, 4294901760
        %2745 = vmatmul.f32.gmra.mxu0 %v2744
        %v2746 = vpop.f32.mrf.mxu0
        %v2747 = vadd.f32 %v2634, %v2746
        %v2748 = vand.u32 %v583, 4294901760
        %2749 = vmatmul.f32.gmra.mxu0 %v2748
        %v2750 = vpop.f32.mrf.mxu0
        %v2751 = vadd.f32 %v2640, %v2750
        %v2752 = vand.u32 %v586, 4294901760
        %2753 = vmatmul.f32.gmra.mxu0 %v2752
        %v2754 = vpop.f32.mrf.mxu0
        %v2755 = vadd.f32 %v2646, %v2754
        %v2756 = vand.u32 %v589, 4294901760
        %2757 = vmatmul.f32.gmra.mxu0 %v2756
        %v2758 = vpop.f32.mrf.mxu0
        %v2759 = vadd.f32 %v2652, %v2758
        %v2760 = vand.u32 %v592, 4294901760
        %2761 = vmatmul.f32.gmra.mxu0 %v2760
        %v2762 = vpop.f32.mrf.mxu0
        %v2763 = vadd.f32 %v2658, %v2762
        %2764 = vdwg.mxu0
        %v2765 = vand.u32 %v736, 4294901760
        %2766 = vmatpush.xpose.msra.mxu0 %v2765
        %v2767 = vand.u32 %v733, 4294901760
        %2768 = vmatpush.xpose.msra.mxu0 %v2767
        %v2769 = vand.u32 %v730, 4294901760
        %2770 = vmatpush.xpose.msra.mxu0 %v2769
        %v2771 = vand.u32 %v727, 4294901760
        %2772 = vmatpush.xpose.msra.mxu0 %v2771
        %v2773 = vand.u32 %v724, 4294901760
        %2774 = vmatpush.xpose.msra.mxu0 %v2773
        %v2775 = vand.u32 %v721, 4294901760
        %2776 = vmatpush.xpose.msra.mxu0 %v2775
        %v2777 = vand.u32 %v718, 4294901760
        %2778 = vmatpush.xpose.msra.mxu0 %v2777
        %v2779 = vand.u32 %v715, 4294901760
        %2780 = vmatpush.xpose.msra.mxu0 %v2779
        %v2781 = vand.u32 %v712, 4294901760
        %2782 = vmatpush.xpose.msra.mxu0 %v2781
        %v2783 = vand.u32 %v709, 4294901760
        %2784 = vmatpush.xpose.msra.mxu0 %v2783
        %v2785 = vand.u32 %v706, 4294901760
        %2786 = vmatpush.xpose.msra.mxu0 %v2785
        %v2787 = vand.u32 %v703, 4294901760
        %2788 = vmatpush.xpose.msra.mxu0 %v2787
        %v2789 = vand.u32 %v700, 4294901760
        %2790 = vmatpush.xpose.msra.mxu0 %v2789
        %v2791 = vand.u32 %v697, 4294901760
        %2792 = vmatpush.xpose.msra.mxu0 %v2791
        %v2793 = vand.u32 %v694, 4294901760
        %2794 = vmatpush.xpose.msra.mxu0 %v2793
        %v2795 = vand.u32 %v691, 4294901760
        %2796 = vmatpush.xpose.msra.mxu0 %v2795
        %v2797 = vand.u32 %v565, 4294901760
        %2798 = vmatmul.f32.gmra.mxu0 %v2797
        %v2799 = vpop.f32.mrf.mxu0
        %v2800 = vadd.f32 %v2727, %v2799
        %v2801 = vand.u32 %v568, 4294901760
        %2802 = vmatmul.f32.gmra.mxu0 %v2801
        %v2803 = vpop.f32.mrf.mxu0
        %v2804 = vadd.f32 %v2731, %v2803
        %v2805 = vand.u32 %v571, 4294901760
        %2806 = vmatmul.f32.gmra.mxu0 %v2805
        %v2807 = vpop.f32.mrf.mxu0
        %v2808 = vadd.f32 %v2735, %v2807
        %v2809 = vand.u32 %v574, 4294901760
        %2810 = vmatmul.f32.gmra.mxu0 %v2809
        %v2811 = vpop.f32.mrf.mxu0
        %v2812 = vadd.f32 %v2739, %v2811
        %v2813 = vand.u32 %v577, 4294901760
        %2814 = vmatmul.f32.gmra.mxu0 %v2813
        %v2815 = vpop.f32.mrf.mxu0
        %v2816 = vadd.f32 %v2743, %v2815
        %v2817 = vand.u32 %v580, 4294901760
        %2818 = vmatmul.f32.gmra.mxu0 %v2817
        %v2819 = vpop.f32.mrf.mxu0
        %v2820 = vadd.f32 %v2747, %v2819
        %v2821 = vand.u32 %v583, 4294901760
        %2822 = vmatmul.f32.gmra.mxu0 %v2821
        %v2823 = vpop.f32.mrf.mxu0
        %v2824 = vadd.f32 %v2751, %v2823
        %v2825 = vand.u32 %v586, 4294901760
        %2826 = vmatmul.f32.gmra.mxu0 %v2825
        %v2827 = vpop.f32.mrf.mxu0
        %v2828 = vadd.f32 %v2755, %v2827
        %v2829 = vand.u32 %v589, 4294901760
        %2830 = vmatmul.f32.gmra.mxu0 %v2829
        %v2831 = vpop.f32.mrf.mxu0
        %v2832 = vadd.f32 %v2759, %v2831
        %v2833 = vand.u32 %v592, 4294901760
        %2834 = vmatmul.f32.gmra.mxu0 %v2833
        %v2835 = vpop.f32.mrf.mxu0
        %v2836 = vadd.f32 %v2763, %v2835
        %2837 = vdwg.mxu0
        %v2838 = vand.u32 %v784, 4294901760
        %2839 = vmatpush.xpose.msra.mxu0 %v2838
        %v2840 = vand.u32 %v781, 4294901760
        %2841 = vmatpush.xpose.msra.mxu0 %v2840
        %v2842 = vand.u32 %v778, 4294901760
        %2843 = vmatpush.xpose.msra.mxu0 %v2842
        %v2844 = vand.u32 %v775, 4294901760
        %2845 = vmatpush.xpose.msra.mxu0 %v2844
        %v2846 = vand.u32 %v772, 4294901760
        %2847 = vmatpush.xpose.msra.mxu0 %v2846
        %v2848 = vand.u32 %v769, 4294901760
        %2849 = vmatpush.xpose.msra.mxu0 %v2848
        %v2850 = vand.u32 %v766, 4294901760
        %2851 = vmatpush.xpose.msra.mxu0 %v2850
        %v2852 = vand.u32 %v763, 4294901760
        %2853 = vmatpush.xpose.msra.mxu0 %v2852
        %v2854 = vand.u32 %v760, 4294901760
        %2855 = vmatpush.xpose.msra.mxu0 %v2854
        %v2856 = vand.u32 %v757, 4294901760
        %2857 = vmatpush.xpose.msra.mxu0 %v2856
        %v2858 = vand.u32 %v754, 4294901760
        %2859 = vmatpush.xpose.msra.mxu0 %v2858
        %v2860 = vand.u32 %v751, 4294901760
        %2861 = vmatpush.xpose.msra.mxu0 %v2860
        %v2862 = vand.u32 %v748, 4294901760
        %2863 = vmatpush.xpose.msra.mxu0 %v2862
        %v2864 = vand.u32 %v745, 4294901760
        %2865 = vmatpush.xpose.msra.mxu0 %v2864
        %v2866 = vand.u32 %v742, 4294901760
        %2867 = vmatpush.xpose.msra.mxu0 %v2866
        %v2868 = vand.u32 %v739, 4294901760
        %2869 = vmatpush.xpose.msra.mxu0 %v2868
        %v2870 = vand.u32 %v565, 4294901760
        %v2871 = vsub.f32 %v565, %v2870
        %v2872 = vand.u32 %v2871, 4294901760
        %v2873 = vsub.f32 %v2871, %v2872
        %v2874 = vand.u32 %v2873, 4294901760
        %2875 = vmatmul.f32.gmra.mxu0 %v2874
        %v2876 = vpop.f32.mrf.mxu0
        %v2877 = vadd.f32 0.0, %v2876
        %v2878 = vand.u32 %v568, 4294901760
        %v2879 = vsub.f32 %v568, %v2878
        %v2880 = vand.u32 %v2879, 4294901760
        %v2881 = vsub.f32 %v2879, %v2880
        %v2882 = vand.u32 %v2881, 4294901760
        %2883 = vmatmul.f32.gmra.mxu0 %v2882
        %v2884 = vpop.f32.mrf.mxu0
        %v2885 = vadd.f32 0.0, %v2884
        %v2886 = vand.u32 %v571, 4294901760
        %v2887 = vsub.f32 %v571, %v2886
        %v2888 = vand.u32 %v2887, 4294901760
        %v2889 = vsub.f32 %v2887, %v2888
        %v2890 = vand.u32 %v2889, 4294901760
        %2891 = vmatmul.f32.gmra.mxu0 %v2890
        %v2892 = vpop.f32.mrf.mxu0
        %v2893 = vadd.f32 0.0, %v2892
        %v2894 = vand.u32 %v574, 4294901760
        %v2895 = vsub.f32 %v574, %v2894
        %v2896 = vand.u32 %v2895, 4294901760
        %v2897 = vsub.f32 %v2895, %v2896
        %v2898 = vand.u32 %v2897, 4294901760
        %2899 = vmatmul.f32.gmra.mxu0 %v2898
        %v2900 = vpop.f32.mrf.mxu0
        %v2901 = vadd.f32 0.0, %v2900
        %v2902 = vand.u32 %v577, 4294901760
        %v2903 = vsub.f32 %v577, %v2902
        %v2904 = vand.u32 %v2903, 4294901760
        %v2905 = vsub.f32 %v2903, %v2904
        %v2906 = vand.u32 %v2905, 4294901760
        %2907 = vmatmul.f32.gmra.mxu0 %v2906
        %v2908 = vpop.f32.mrf.mxu0
        %v2909 = vadd.f32 0.0, %v2908
        %v2910 = vand.u32 %v580, 4294901760
        %v2911 = vsub.f32 %v580, %v2910
        %v2912 = vand.u32 %v2911, 4294901760
        %v2913 = vsub.f32 %v2911, %v2912
        %v2914 = vand.u32 %v2913, 4294901760
        %2915 = vmatmul.f32.gmra.mxu0 %v2914
        %v2916 = vpop.f32.mrf.mxu0
        %v2917 = vadd.f32 0.0, %v2916
        %v2918 = vand.u32 %v583, 4294901760
        %v2919 = vsub.f32 %v583, %v2918
        %v2920 = vand.u32 %v2919, 4294901760
        %v2921 = vsub.f32 %v2919, %v2920
        %v2922 = vand.u32 %v2921, 4294901760
        %2923 = vmatmul.f32.gmra.mxu0 %v2922
        %v2924 = vpop.f32.mrf.mxu0
        %v2925 = vadd.f32 0.0, %v2924
        %v2926 = vand.u32 %v586, 4294901760
        %v2927 = vsub.f32 %v586, %v2926
        %v2928 = vand.u32 %v2927, 4294901760
        %v2929 = vsub.f32 %v2927, %v2928
        %v2930 = vand.u32 %v2929, 4294901760
        %2931 = vmatmul.f32.gmra.mxu0 %v2930
        %v2932 = vpop.f32.mrf.mxu0
        %v2933 = vadd.f32 0.0, %v2932
        %v2934 = vand.u32 %v589, 4294901760
        %v2935 = vsub.f32 %v589, %v2934
        %v2936 = vand.u32 %v2935, 4294901760
        %v2937 = vsub.f32 %v2935, %v2936
        %v2938 = vand.u32 %v2937, 4294901760
        %2939 = vmatmul.f32.gmra.mxu0 %v2938
        %v2940 = vpop.f32.mrf.mxu0
        %v2941 = vadd.f32 0.0, %v2940
        %v2942 = vand.u32 %v592, 4294901760
        %v2943 = vsub.f32 %v592, %v2942
        %v2944 = vand.u32 %v2943, 4294901760
        %v2945 = vsub.f32 %v2943, %v2944
        %v2946 = vand.u32 %v2945, 4294901760
        %2947 = vmatmul.f32.gmra.mxu0 %v2946
        %v2948 = vpop.f32.mrf.mxu0
        %v2949 = vadd.f32 0.0, %v2948
        %2950 = vdwg.mxu0
        %v2951 = vand.u32 %v784, 4294901760
        %v2952 = vsub.f32 %v784, %v2951
        %v2953 = vand.u32 %v2952, 4294901760
        %v2954 = vsub.f32 %v2952, %v2953
        %v2955 = vand.u32 %v2954, 4294901760
        %2956 = vmatpush.xpose.msra.mxu0 %v2955
        %v2957 = vand.u32 %v781, 4294901760
        %v2958 = vsub.f32 %v781, %v2957
        %v2959 = vand.u32 %v2958, 4294901760
        %v2960 = vsub.f32 %v2958, %v2959
        %v2961 = vand.u32 %v2960, 4294901760
        %2962 = vmatpush.xpose.msra.mxu0 %v2961
        %v2963 = vand.u32 %v778, 4294901760
        %v2964 = vsub.f32 %v778, %v2963
        %v2965 = vand.u32 %v2964, 4294901760
        %v2966 = vsub.f32 %v2964, %v2965
        %v2967 = vand.u32 %v2966, 4294901760
        %2968 = vmatpush.xpose.msra.mxu0 %v2967
        %v2969 = vand.u32 %v775, 4294901760
        %v2970 = vsub.f32 %v775, %v2969
        %v2971 = vand.u32 %v2970, 4294901760
        %v2972 = vsub.f32 %v2970, %v2971
        %v2973 = vand.u32 %v2972, 4294901760
        %2974 = vmatpush.xpose.msra.mxu0 %v2973
        %v2975 = vand.u32 %v772, 4294901760
        %v2976 = vsub.f32 %v772, %v2975
        %v2977 = vand.u32 %v2976, 4294901760
        %v2978 = vsub.f32 %v2976, %v2977
        %v2979 = vand.u32 %v2978, 4294901760
        %2980 = vmatpush.xpose.msra.mxu0 %v2979
        %v2981 = vand.u32 %v769, 4294901760
        %v2982 = vsub.f32 %v769, %v2981
        %v2983 = vand.u32 %v2982, 4294901760
        %v2984 = vsub.f32 %v2982, %v2983
        %v2985 = vand.u32 %v2984, 4294901760
        %2986 = vmatpush.xpose.msra.mxu0 %v2985
        %v2987 = vand.u32 %v766, 4294901760
        %v2988 = vsub.f32 %v766, %v2987
        %v2989 = vand.u32 %v2988, 4294901760
        %v2990 = vsub.f32 %v2988, %v2989
        %v2991 = vand.u32 %v2990, 4294901760
        %2992 = vmatpush.xpose.msra.mxu0 %v2991
        %v2993 = vand.u32 %v763, 4294901760
        %v2994 = vsub.f32 %v763, %v2993
        %v2995 = vand.u32 %v2994, 4294901760
        %v2996 = vsub.f32 %v2994, %v2995
        %v2997 = vand.u32 %v2996, 4294901760
        %2998 = vmatpush.xpose.msra.mxu0 %v2997
        %v2999 = vand.u32 %v760, 4294901760
        %v3000 = vsub.f32 %v760, %v2999
        %v3001 = vand.u32 %v3000, 4294901760
        %v3002 = vsub.f32 %v3000, %v3001
        %v3003 = vand.u32 %v3002, 4294901760
        %3004 = vmatpush.xpose.msra.mxu0 %v3003
        %v3005 = vand.u32 %v757, 4294901760
        %v3006 = vsub.f32 %v757, %v3005
        %v3007 = vand.u32 %v3006, 4294901760
        %v3008 = vsub.f32 %v3006, %v3007
        %v3009 = vand.u32 %v3008, 4294901760
        %3010 = vmatpush.xpose.msra.mxu0 %v3009
        %v3011 = vand.u32 %v754, 4294901760
        %v3012 = vsub.f32 %v754, %v3011
        %v3013 = vand.u32 %v3012, 4294901760
        %v3014 = vsub.f32 %v3012, %v3013
        %v3015 = vand.u32 %v3014, 4294901760
        %3016 = vmatpush.xpose.msra.mxu0 %v3015
        %v3017 = vand.u32 %v751, 4294901760
        %v3018 = vsub.f32 %v751, %v3017
        %v3019 = vand.u32 %v3018, 4294901760
        %v3020 = vsub.f32 %v3018, %v3019
        %v3021 = vand.u32 %v3020, 4294901760
        %3022 = vmatpush.xpose.msra.mxu0 %v3021
        %v3023 = vand.u32 %v748, 4294901760
        %v3024 = vsub.f32 %v748, %v3023
        %v3025 = vand.u32 %v3024, 4294901760
        %v3026 = vsub.f32 %v3024, %v3025
        %v3027 = vand.u32 %v3026, 4294901760
        %3028 = vmatpush.xpose.msra.mxu0 %v3027
        %v3029 = vand.u32 %v745, 4294901760
        %v3030 = vsub.f32 %v745, %v3029
        %v3031 = vand.u32 %v3030, 4294901760
        %v3032 = vsub.f32 %v3030, %v3031
        %v3033 = vand.u32 %v3032, 4294901760
        %3034 = vmatpush.xpose.msra.mxu0 %v3033
        %v3035 = vand.u32 %v742, 4294901760
        %v3036 = vsub.f32 %v742, %v3035
        %v3037 = vand.u32 %v3036, 4294901760
        %v3038 = vsub.f32 %v3036, %v3037
        %v3039 = vand.u32 %v3038, 4294901760
        %3040 = vmatpush.xpose.msra.mxu0 %v3039
        %v3041 = vand.u32 %v739, 4294901760
        %v3042 = vsub.f32 %v739, %v3041
        %v3043 = vand.u32 %v3042, 4294901760
        %v3044 = vsub.f32 %v3042, %v3043
        %v3045 = vand.u32 %v3044, 4294901760
        %3046 = vmatpush.xpose.msra.mxu0 %v3045
        %v3047 = vand.u32 %v565, 4294901760
        %3048 = vmatmul.f32.gmra.mxu0 %v3047
        %v3049 = vpop.f32.mrf.mxu0
        %v3050 = vadd.f32 %v2877, %v3049
        %v3051 = vand.u32 %v568, 4294901760
        %3052 = vmatmul.f32.gmra.mxu0 %v3051
        %v3053 = vpop.f32.mrf.mxu0
        %v3054 = vadd.f32 %v2885, %v3053
        %v3055 = vand.u32 %v571, 4294901760
        %3056 = vmatmul.f32.gmra.mxu0 %v3055
        %v3057 = vpop.f32.mrf.mxu0
        %v3058 = vadd.f32 %v2893, %v3057
        %v3059 = vand.u32 %v574, 4294901760
        %3060 = vmatmul.f32.gmra.mxu0 %v3059
        %v3061 = vpop.f32.mrf.mxu0
        %v3062 = vadd.f32 %v2901, %v3061
        %v3063 = vand.u32 %v577, 4294901760
        %3064 = vmatmul.f32.gmra.mxu0 %v3063
        %v3065 = vpop.f32.mrf.mxu0
        %v3066 = vadd.f32 %v2909, %v3065
        %v3067 = vand.u32 %v580, 4294901760
        %3068 = vmatmul.f32.gmra.mxu0 %v3067
        %v3069 = vpop.f32.mrf.mxu0
        %v3070 = vadd.f32 %v2917, %v3069
        %v3071 = vand.u32 %v583, 4294901760
        %3072 = vmatmul.f32.gmra.mxu0 %v3071
        %v3073 = vpop.f32.mrf.mxu0
        %v3074 = vadd.f32 %v2925, %v3073
        %v3075 = vand.u32 %v586, 4294901760
        %3076 = vmatmul.f32.gmra.mxu0 %v3075
        %v3077 = vpop.f32.mrf.mxu0
        %v3078 = vadd.f32 %v2933, %v3077
        %v3079 = vand.u32 %v589, 4294901760
        %3080 = vmatmul.f32.gmra.mxu0 %v3079
        %v3081 = vpop.f32.mrf.mxu0
        %v3082 = vadd.f32 %v2941, %v3081
        %v3083 = vand.u32 %v592, 4294901760
        %3084 = vmatmul.f32.gmra.mxu0 %v3083
        %v3085 = vpop.f32.mrf.mxu0
        %v3086 = vadd.f32 %v2949, %v3085
        %3087 = vdwg.mxu0
        %v3088 = vand.u32 %v784, 4294901760
        %v3089 = vsub.f32 %v784, %v3088
        %3090 = vmatpush.xpose.msra.mxu0 %v3089
        %v3091 = vand.u32 %v781, 4294901760
        %v3092 = vsub.f32 %v781, %v3091
        %3093 = vmatpush.xpose.msra.mxu0 %v3092
        %v3094 = vand.u32 %v778, 4294901760
        %v3095 = vsub.f32 %v778, %v3094
        %3096 = vmatpush.xpose.msra.mxu0 %v3095
        %v3097 = vand.u32 %v775, 4294901760
        %v3098 = vsub.f32 %v775, %v3097
        %3099 = vmatpush.xpose.msra.mxu0 %v3098
        %v3100 = vand.u32 %v772, 4294901760
        %v3101 = vsub.f32 %v772, %v3100
        %3102 = vmatpush.xpose.msra.mxu0 %v3101
        %v3103 = vand.u32 %v769, 4294901760
        %v3104 = vsub.f32 %v769, %v3103
        %3105 = vmatpush.xpose.msra.mxu0 %v3104
        %v3106 = vand.u32 %v766, 4294901760
        %v3107 = vsub.f32 %v766, %v3106
        %3108 = vmatpush.xpose.msra.mxu0 %v3107
        %v3109 = vand.u32 %v763, 4294901760
        %v3110 = vsub.f32 %v763, %v3109
        %3111 = vmatpush.xpose.msra.mxu0 %v3110
        %v3112 = vand.u32 %v760, 4294901760
        %v3113 = vsub.f32 %v760, %v3112
        %3114 = vmatpush.xpose.msra.mxu0 %v3113
        %v3115 = vand.u32 %v757, 4294901760
        %v3116 = vsub.f32 %v757, %v3115
        %3117 = vmatpush.xpose.msra.mxu0 %v3116
        %v3118 = vand.u32 %v754, 4294901760
        %v3119 = vsub.f32 %v754, %v3118
        %3120 = vmatpush.xpose.msra.mxu0 %v3119
        %v3121 = vand.u32 %v751, 4294901760
        %v3122 = vsub.f32 %v751, %v3121
        %3123 = vmatpush.xpose.msra.mxu0 %v3122
        %v3124 = vand.u32 %v748, 4294901760
        %v3125 = vsub.f32 %v748, %v3124
        %3126 = vmatpush.xpose.msra.mxu0 %v3125
        %v3127 = vand.u32 %v745, 4294901760
        %v3128 = vsub.f32 %v745, %v3127
        %3129 = vmatpush.xpose.msra.mxu0 %v3128
        %v3130 = vand.u32 %v742, 4294901760
        %v3131 = vsub.f32 %v742, %v3130
        %3132 = vmatpush.xpose.msra.mxu0 %v3131
        %v3133 = vand.u32 %v739, 4294901760
        %v3134 = vsub.f32 %v739, %v3133
        %3135 = vmatpush.xpose.msra.mxu0 %v3134
        %v3136 = vand.u32 %v565, 4294901760
        %v3137 = vsub.f32 %v565, %v3136
        %3138 = vmatmul.f32.gmra.mxu0 %v3137
        %v3139 = vpop.f32.mrf.mxu0
        %v3140 = vadd.f32 %v3050, %v3139
        %v3141 = vand.u32 %v568, 4294901760
        %v3142 = vsub.f32 %v568, %v3141
        %3143 = vmatmul.f32.gmra.mxu0 %v3142
        %v3144 = vpop.f32.mrf.mxu0
        %v3145 = vadd.f32 %v3054, %v3144
        %v3146 = vand.u32 %v571, 4294901760
        %v3147 = vsub.f32 %v571, %v3146
        %3148 = vmatmul.f32.gmra.mxu0 %v3147
        %v3149 = vpop.f32.mrf.mxu0
        %v3150 = vadd.f32 %v3058, %v3149
        %v3151 = vand.u32 %v574, 4294901760
        %v3152 = vsub.f32 %v574, %v3151
        %3153 = vmatmul.f32.gmra.mxu0 %v3152
        %v3154 = vpop.f32.mrf.mxu0
        %v3155 = vadd.f32 %v3062, %v3154
        %v3156 = vand.u32 %v577, 4294901760
        %v3157 = vsub.f32 %v577, %v3156
        %3158 = vmatmul.f32.gmra.mxu0 %v3157
        %v3159 = vpop.f32.mrf.mxu0
        %v3160 = vadd.f32 %v3066, %v3159
        %v3161 = vand.u32 %v580, 4294901760
        %v3162 = vsub.f32 %v580, %v3161
        %3163 = vmatmul.f32.gmra.mxu0 %v3162
        %v3164 = vpop.f32.mrf.mxu0
        %v3165 = vadd.f32 %v3070, %v3164
        %v3166 = vand.u32 %v583, 4294901760
        %v3167 = vsub.f32 %v583, %v3166
        %3168 = vmatmul.f32.gmra.mxu0 %v3167
        %v3169 = vpop.f32.mrf.mxu0
        %v3170 = vadd.f32 %v3074, %v3169
        %v3171 = vand.u32 %v586, 4294901760
        %v3172 = vsub.f32 %v586, %v3171
        %3173 = vmatmul.f32.gmra.mxu0 %v3172
        %v3174 = vpop.f32.mrf.mxu0
        %v3175 = vadd.f32 %v3078, %v3174
        %v3176 = vand.u32 %v589, 4294901760
        %v3177 = vsub.f32 %v589, %v3176
        %3178 = vmatmul.f32.gmra.mxu0 %v3177
        %v3179 = vpop.f32.mrf.mxu0
        %v3180 = vadd.f32 %v3082, %v3179
        %v3181 = vand.u32 %v592, 4294901760
        %v3182 = vsub.f32 %v592, %v3181
        %3183 = vmatmul.f32.gmra.mxu0 %v3182
        %v3184 = vpop.f32.mrf.mxu0
        %v3185 = vadd.f32 %v3086, %v3184
        %3186 = vdwg.mxu0
        %v3187 = vand.u32 %v784, 4294901760
        %3188 = vmatpush.xpose.msra.mxu0 %v3187
        %v3189 = vand.u32 %v781, 4294901760
        %3190 = vmatpush.xpose.msra.mxu0 %v3189
        %v3191 = vand.u32 %v778, 4294901760
        %3192 = vmatpush.xpose.msra.mxu0 %v3191
        %v3193 = vand.u32 %v775, 4294901760
        %3194 = vmatpush.xpose.msra.mxu0 %v3193
        %v3195 = vand.u32 %v772, 4294901760
        %3196 = vmatpush.xpose.msra.mxu0 %v3195
        %v3197 = vand.u32 %v769, 4294901760
        %3198 = vmatpush.xpose.msra.mxu0 %v3197
        %v3199 = vand.u32 %v766, 4294901760
        %3200 = vmatpush.xpose.msra.mxu0 %v3199
        %v3201 = vand.u32 %v763, 4294901760
        %3202 = vmatpush.xpose.msra.mxu0 %v3201
        %v3203 = vand.u32 %v760, 4294901760
        %3204 = vmatpush.xpose.msra.mxu0 %v3203
        %v3205 = vand.u32 %v757, 4294901760
        %3206 = vmatpush.xpose.msra.mxu0 %v3205
        %v3207 = vand.u32 %v754, 4294901760
        %3208 = vmatpush.xpose.msra.mxu0 %v3207
        %v3209 = vand.u32 %v751, 4294901760
        %3210 = vmatpush.xpose.msra.mxu0 %v3209
        %v3211 = vand.u32 %v748, 4294901760
        %3212 = vmatpush.xpose.msra.mxu0 %v3211
        %v3213 = vand.u32 %v745, 4294901760
        %3214 = vmatpush.xpose.msra.mxu0 %v3213
        %v3215 = vand.u32 %v742, 4294901760
        %3216 = vmatpush.xpose.msra.mxu0 %v3215
        %v3217 = vand.u32 %v739, 4294901760
        %3218 = vmatpush.xpose.msra.mxu0 %v3217
        %v3219 = vand.u32 %v565, 4294901760
        %v3220 = vsub.f32 %v565, %v3219
        %v3221 = vand.u32 %v3220, 4294901760
        %3222 = vmatmul.f32.gmra.mxu0 %v3221
        %v3223 = vpop.f32.mrf.mxu0
        %v3224 = vadd.f32 %v3140, %v3223
        %v3225 = vand.u32 %v568, 4294901760
        %v3226 = vsub.f32 %v568, %v3225
        %v3227 = vand.u32 %v3226, 4294901760
        %3228 = vmatmul.f32.gmra.mxu0 %v3227
        %v3229 = vpop.f32.mrf.mxu0
        %v3230 = vadd.f32 %v3145, %v3229
        %v3231 = vand.u32 %v571, 4294901760
        %v3232 = vsub.f32 %v571, %v3231
        %v3233 = vand.u32 %v3232, 4294901760
        %3234 = vmatmul.f32.gmra.mxu0 %v3233
        %v3235 = vpop.f32.mrf.mxu0
        %v3236 = vadd.f32 %v3150, %v3235
        %v3237 = vand.u32 %v574, 4294901760
        %v3238 = vsub.f32 %v574, %v3237
        %v3239 = vand.u32 %v3238, 4294901760
        %3240 = vmatmul.f32.gmra.mxu0 %v3239
        %v3241 = vpop.f32.mrf.mxu0
        %v3242 = vadd.f32 %v3155, %v3241
        %v3243 = vand.u32 %v577, 4294901760
        %v3244 = vsub.f32 %v577, %v3243
        %v3245 = vand.u32 %v3244, 4294901760
        %3246 = vmatmul.f32.gmra.mxu0 %v3245
        %v3247 = vpop.f32.mrf.mxu0
        %v3248 = vadd.f32 %v3160, %v3247
        %v3249 = vand.u32 %v580, 4294901760
        %v3250 = vsub.f32 %v580, %v3249
        %v3251 = vand.u32 %v3250, 4294901760
        %3252 = vmatmul.f32.gmra.mxu0 %v3251
        %v3253 = vpop.f32.mrf.mxu0
        %v3254 = vadd.f32 %v3165, %v3253
        %v3255 = vand.u32 %v583, 4294901760
        %v3256 = vsub.f32 %v583, %v3255
        %v3257 = vand.u32 %v3256, 4294901760
        %3258 = vmatmul.f32.gmra.mxu0 %v3257
        %v3259 = vpop.f32.mrf.mxu0
        %v3260 = vadd.f32 %v3170, %v3259
        %v3261 = vand.u32 %v586, 4294901760
        %v3262 = vsub.f32 %v586, %v3261
        %v3263 = vand.u32 %v3262, 4294901760
        %3264 = vmatmul.f32.gmra.mxu0 %v3263
        %v3265 = vpop.f32.mrf.mxu0
        %v3266 = vadd.f32 %v3175, %v3265
        %v3267 = vand.u32 %v589, 4294901760
        %v3268 = vsub.f32 %v589, %v3267
        %v3269 = vand.u32 %v3268, 4294901760
        %3270 = vmatmul.f32.gmra.mxu0 %v3269
        %v3271 = vpop.f32.mrf.mxu0
        %v3272 = vadd.f32 %v3180, %v3271
        %v3273 = vand.u32 %v592, 4294901760
        %v3274 = vsub.f32 %v592, %v3273
        %v3275 = vand.u32 %v3274, 4294901760
        %3276 = vmatmul.f32.gmra.mxu0 %v3275
        %v3277 = vpop.f32.mrf.mxu0
        %v3278 = vadd.f32 %v3185, %v3277
        %3279 = vdwg.mxu0
        %v3280 = vand.u32 %v784, 4294901760
        %v3281 = vsub.f32 %v784, %v3280
        %v3282 = vand.u32 %v3281, 4294901760
        %3283 = vmatpush.xpose.msra.mxu0 %v3282
        %v3284 = vand.u32 %v781, 4294901760
        %v3285 = vsub.f32 %v781, %v3284
        %v3286 = vand.u32 %v3285, 4294901760
        %3287 = vmatpush.xpose.msra.mxu0 %v3286
        %v3288 = vand.u32 %v778, 4294901760
        %v3289 = vsub.f32 %v778, %v3288
        %v3290 = vand.u32 %v3289, 4294901760
        %3291 = vmatpush.xpose.msra.mxu0 %v3290
        %v3292 = vand.u32 %v775, 4294901760
        %v3293 = vsub.f32 %v775, %v3292
        %v3294 = vand.u32 %v3293, 4294901760
        %3295 = vmatpush.xpose.msra.mxu0 %v3294
        %v3296 = vand.u32 %v772, 4294901760
        %v3297 = vsub.f32 %v772, %v3296
        %v3298 = vand.u32 %v3297, 4294901760
        %3299 = vmatpush.xpose.msra.mxu0 %v3298
        %v3300 = vand.u32 %v769, 4294901760
        %v3301 = vsub.f32 %v769, %v3300
        %v3302 = vand.u32 %v3301, 4294901760
        %3303 = vmatpush.xpose.msra.mxu0 %v3302
        %v3304 = vand.u32 %v766, 4294901760
        %v3305 = vsub.f32 %v766, %v3304
        %v3306 = vand.u32 %v3305, 4294901760
        %3307 = vmatpush.xpose.msra.mxu0 %v3306
        %v3308 = vand.u32 %v763, 4294901760
        %v3309 = vsub.f32 %v763, %v3308
        %v3310 = vand.u32 %v3309, 4294901760
        %3311 = vmatpush.xpose.msra.mxu0 %v3310
        %v3312 = vand.u32 %v760, 4294901760
        %v3313 = vsub.f32 %v760, %v3312
        %v3314 = vand.u32 %v3313, 4294901760
        %3315 = vmatpush.xpose.msra.mxu0 %v3314
        %v3316 = vand.u32 %v757, 4294901760
        %v3317 = vsub.f32 %v757, %v3316
        %v3318 = vand.u32 %v3317, 4294901760
        %3319 = vmatpush.xpose.msra.mxu0 %v3318
        %v3320 = vand.u32 %v754, 4294901760
        %v3321 = vsub.f32 %v754, %v3320
        %v3322 = vand.u32 %v3321, 4294901760
        %3323 = vmatpush.xpose.msra.mxu0 %v3322
        %v3324 = vand.u32 %v751, 4294901760
        %v3325 = vsub.f32 %v751, %v3324
        %v3326 = vand.u32 %v3325, 4294901760
        %3327 = vmatpush.xpose.msra.mxu0 %v3326
        %v3328 = vand.u32 %v748, 4294901760
        %v3329 = vsub.f32 %v748, %v3328
        %v3330 = vand.u32 %v3329, 4294901760
        %3331 = vmatpush.xpose.msra.mxu0 %v3330
        %v3332 = vand.u32 %v745, 4294901760
        %v3333 = vsub.f32 %v745, %v3332
        %v3334 = vand.u32 %v3333, 4294901760
        %3335 = vmatpush.xpose.msra.mxu0 %v3334
        %v3336 = vand.u32 %v742, 4294901760
        %v3337 = vsub.f32 %v742, %v3336
        %v3338 = vand.u32 %v3337, 4294901760
        %3339 = vmatpush.xpose.msra.mxu0 %v3338
        %v3340 = vand.u32 %v739, 4294901760
        %v3341 = vsub.f32 %v739, %v3340
        %v3342 = vand.u32 %v3341, 4294901760
        %3343 = vmatpush.xpose.msra.mxu0 %v3342
        %v3344 = vand.u32 %v565, 4294901760
        %3345 = vmatmul.f32.gmra.mxu0 %v3344
        %v3346 = vpop.f32.mrf.mxu0
        %v3347 = vadd.f32 %v3224, %v3346
        %v3348 = vand.u32 %v568, 4294901760
        %3349 = vmatmul.f32.gmra.mxu0 %v3348
        %v3350 = vpop.f32.mrf.mxu0
        %v3351 = vadd.f32 %v3230, %v3350
        %v3352 = vand.u32 %v571, 4294901760
        %3353 = vmatmul.f32.gmra.mxu0 %v3352
        %v3354 = vpop.f32.mrf.mxu0
        %v3355 = vadd.f32 %v3236, %v3354
        %v3356 = vand.u32 %v574, 4294901760
        %3357 = vmatmul.f32.gmra.mxu0 %v3356
        %v3358 = vpop.f32.mrf.mxu0
        %v3359 = vadd.f32 %v3242, %v3358
        %v3360 = vand.u32 %v577, 4294901760
        %3361 = vmatmul.f32.gmra.mxu0 %v3360
        %v3362 = vpop.f32.mrf.mxu0
        %v3363 = vadd.f32 %v3248, %v3362
        %v3364 = vand.u32 %v580, 4294901760
        %3365 = vmatmul.f32.gmra.mxu0 %v3364
        %v3366 = vpop.f32.mrf.mxu0
        %v3367 = vadd.f32 %v3254, %v3366
        %v3368 = vand.u32 %v583, 4294901760
        %3369 = vmatmul.f32.gmra.mxu0 %v3368
        %v3370 = vpop.f32.mrf.mxu0
        %v3371 = vadd.f32 %v3260, %v3370
        %v3372 = vand.u32 %v586, 4294901760
        %3373 = vmatmul.f32.gmra.mxu0 %v3372
        %v3374 = vpop.f32.mrf.mxu0
        %v3375 = vadd.f32 %v3266, %v3374
        %v3376 = vand.u32 %v589, 4294901760
        %3377 = vmatmul.f32.gmra.mxu0 %v3376
        %v3378 = vpop.f32.mrf.mxu0
        %v3379 = vadd.f32 %v3272, %v3378
        %v3380 = vand.u32 %v592, 4294901760
        %3381 = vmatmul.f32.gmra.mxu0 %v3380
        %v3382 = vpop.f32.mrf.mxu0
        %v3383 = vadd.f32 %v3278, %v3382
        %3384 = vdwg.mxu0
        %v3385 = vand.u32 %v784, 4294901760
        %3386 = vmatpush.xpose.msra.mxu0 %v3385
        %v3387 = vand.u32 %v781, 4294901760
        %3388 = vmatpush.xpose.msra.mxu0 %v3387
        %v3389 = vand.u32 %v778, 4294901760
        %3390 = vmatpush.xpose.msra.mxu0 %v3389
        %v3391 = vand.u32 %v775, 4294901760
        %3392 = vmatpush.xpose.msra.mxu0 %v3391
        %v3393 = vand.u32 %v772, 4294901760
        %3394 = vmatpush.xpose.msra.mxu0 %v3393
        %v3395 = vand.u32 %v769, 4294901760
        %3396 = vmatpush.xpose.msra.mxu0 %v3395
        %v3397 = vand.u32 %v766, 4294901760
        %3398 = vmatpush.xpose.msra.mxu0 %v3397
        %v3399 = vand.u32 %v763, 4294901760
        %3400 = vmatpush.xpose.msra.mxu0 %v3399
        %v3401 = vand.u32 %v760, 4294901760
        %3402 = vmatpush.xpose.msra.mxu0 %v3401
        %v3403 = vand.u32 %v757, 4294901760
        %3404 = vmatpush.xpose.msra.mxu0 %v3403
        %v3405 = vand.u32 %v754, 4294901760
        %3406 = vmatpush.xpose.msra.mxu0 %v3405
        %v3407 = vand.u32 %v751, 4294901760
        %3408 = vmatpush.xpose.msra.mxu0 %v3407
        %v3409 = vand.u32 %v748, 4294901760
        %3410 = vmatpush.xpose.msra.mxu0 %v3409
        %v3411 = vand.u32 %v745, 4294901760
        %3412 = vmatpush.xpose.msra.mxu0 %v3411
        %v3413 = vand.u32 %v742, 4294901760
        %3414 = vmatpush.xpose.msra.mxu0 %v3413
        %v3415 = vand.u32 %v739, 4294901760
        %3416 = vmatpush.xpose.msra.mxu0 %v3415
        %v3417 = vand.u32 %v565, 4294901760
        %3418 = vmatmul.f32.gmra.mxu0 %v3417
        %v3419 = vpop.f32.mrf.mxu0
        %v3420 = vadd.f32 %v3347, %v3419
        %v3421 = vand.u32 %v568, 4294901760
        %3422 = vmatmul.f32.gmra.mxu0 %v3421
        %v3423 = vpop.f32.mrf.mxu0
        %v3424 = vadd.f32 %v3351, %v3423
        %v3425 = vand.u32 %v571, 4294901760
        %3426 = vmatmul.f32.gmra.mxu0 %v3425
        %v3427 = vpop.f32.mrf.mxu0
        %v3428 = vadd.f32 %v3355, %v3427
        %v3429 = vand.u32 %v574, 4294901760
        %3430 = vmatmul.f32.gmra.mxu0 %v3429
        %v3431 = vpop.f32.mrf.mxu0
        %v3432 = vadd.f32 %v3359, %v3431
        %v3433 = vand.u32 %v577, 4294901760
        %3434 = vmatmul.f32.gmra.mxu0 %v3433
        %v3435 = vpop.f32.mrf.mxu0
        %v3436 = vadd.f32 %v3363, %v3435
        %v3437 = vand.u32 %v580, 4294901760
        %3438 = vmatmul.f32.gmra.mxu0 %v3437
        %v3439 = vpop.f32.mrf.mxu0
        %v3440 = vadd.f32 %v3367, %v3439
        %v3441 = vand.u32 %v583, 4294901760
        %3442 = vmatmul.f32.gmra.mxu0 %v3441
        %v3443 = vpop.f32.mrf.mxu0
        %v3444 = vadd.f32 %v3371, %v3443
        %v3445 = vand.u32 %v586, 4294901760
        %3446 = vmatmul.f32.gmra.mxu0 %v3445
        %v3447 = vpop.f32.mrf.mxu0
        %v3448 = vadd.f32 %v3375, %v3447
        %v3449 = vand.u32 %v589, 4294901760
        %3450 = vmatmul.f32.gmra.mxu0 %v3449
        %v3451 = vpop.f32.mrf.mxu0
        %v3452 = vadd.f32 %v3379, %v3451
        %v3453 = vand.u32 %v592, 4294901760
        %3454 = vmatmul.f32.gmra.mxu0 %v3453
        %v3455 = vpop.f32.mrf.mxu0
        %v3456 = vadd.f32 %v3383, %v3455
        %3457 = vdwg.mxu0
        %v3458 = vand.u32 %v832, 4294901760
        %3459 = vmatpush.xpose.msra.mxu0 %v3458
        %v3460 = vand.u32 %v829, 4294901760
        %3461 = vmatpush.xpose.msra.mxu0 %v3460
        %v3462 = vand.u32 %v826, 4294901760
        %3463 = vmatpush.xpose.msra.mxu0 %v3462
        %v3464 = vand.u32 %v823, 4294901760
        %3465 = vmatpush.xpose.msra.mxu0 %v3464
        %v3466 = vand.u32 %v820, 4294901760
        %3467 = vmatpush.xpose.msra.mxu0 %v3466
        %v3468 = vand.u32 %v817, 4294901760
        %3469 = vmatpush.xpose.msra.mxu0 %v3468
        %v3470 = vand.u32 %v814, 4294901760
        %3471 = vmatpush.xpose.msra.mxu0 %v3470
        %v3472 = vand.u32 %v811, 4294901760
        %3473 = vmatpush.xpose.msra.mxu0 %v3472
        %v3474 = vand.u32 %v808, 4294901760
        %3475 = vmatpush.xpose.msra.mxu0 %v3474
        %v3476 = vand.u32 %v805, 4294901760
        %3477 = vmatpush.xpose.msra.mxu0 %v3476
        %v3478 = vand.u32 %v802, 4294901760
        %3479 = vmatpush.xpose.msra.mxu0 %v3478
        %v3480 = vand.u32 %v799, 4294901760
        %3481 = vmatpush.xpose.msra.mxu0 %v3480
        %v3482 = vand.u32 %v796, 4294901760
        %3483 = vmatpush.xpose.msra.mxu0 %v3482
        %v3484 = vand.u32 %v793, 4294901760
        %3485 = vmatpush.xpose.msra.mxu0 %v3484
        %v3486 = vand.u32 %v790, 4294901760
        %3487 = vmatpush.xpose.msra.mxu0 %v3486
        %v3488 = vand.u32 %v787, 4294901760
        %3489 = vmatpush.xpose.msra.mxu0 %v3488
        %v3490 = vand.u32 %v565, 4294901760
        %v3491 = vsub.f32 %v565, %v3490
        %v3492 = vand.u32 %v3491, 4294901760
        %v3493 = vsub.f32 %v3491, %v3492
        %v3494 = vand.u32 %v3493, 4294901760
        %3495 = vmatmul.f32.gmra.mxu0 %v3494
        %v3496 = vpop.f32.mrf.mxu0
        %v3497 = vadd.f32 0.0, %v3496
        %v3498 = vand.u32 %v568, 4294901760
        %v3499 = vsub.f32 %v568, %v3498
        %v3500 = vand.u32 %v3499, 4294901760
        %v3501 = vsub.f32 %v3499, %v3500
        %v3502 = vand.u32 %v3501, 4294901760
        %3503 = vmatmul.f32.gmra.mxu0 %v3502
        %v3504 = vpop.f32.mrf.mxu0
        %v3505 = vadd.f32 0.0, %v3504
        %v3506 = vand.u32 %v571, 4294901760
        %v3507 = vsub.f32 %v571, %v3506
        %v3508 = vand.u32 %v3507, 4294901760
        %v3509 = vsub.f32 %v3507, %v3508
        %v3510 = vand.u32 %v3509, 4294901760
        %3511 = vmatmul.f32.gmra.mxu0 %v3510
        %v3512 = vpop.f32.mrf.mxu0
        %v3513 = vadd.f32 0.0, %v3512
        %v3514 = vand.u32 %v574, 4294901760
        %v3515 = vsub.f32 %v574, %v3514
        %v3516 = vand.u32 %v3515, 4294901760
        %v3517 = vsub.f32 %v3515, %v3516
        %v3518 = vand.u32 %v3517, 4294901760
        %3519 = vmatmul.f32.gmra.mxu0 %v3518
        %v3520 = vpop.f32.mrf.mxu0
        %v3521 = vadd.f32 0.0, %v3520
        %v3522 = vand.u32 %v577, 4294901760
        %v3523 = vsub.f32 %v577, %v3522
        %v3524 = vand.u32 %v3523, 4294901760
        %v3525 = vsub.f32 %v3523, %v3524
        %v3526 = vand.u32 %v3525, 4294901760
        %3527 = vmatmul.f32.gmra.mxu0 %v3526
        %v3528 = vpop.f32.mrf.mxu0
        %v3529 = vadd.f32 0.0, %v3528
        %v3530 = vand.u32 %v580, 4294901760
        %v3531 = vsub.f32 %v580, %v3530
        %v3532 = vand.u32 %v3531, 4294901760
        %v3533 = vsub.f32 %v3531, %v3532
        %v3534 = vand.u32 %v3533, 4294901760
        %3535 = vmatmul.f32.gmra.mxu0 %v3534
        %v3536 = vpop.f32.mrf.mxu0
        %v3537 = vadd.f32 0.0, %v3536
        %v3538 = vand.u32 %v583, 4294901760
        %v3539 = vsub.f32 %v583, %v3538
        %v3540 = vand.u32 %v3539, 4294901760
        %v3541 = vsub.f32 %v3539, %v3540
        %v3542 = vand.u32 %v3541, 4294901760
        %3543 = vmatmul.f32.gmra.mxu0 %v3542
        %v3544 = vpop.f32.mrf.mxu0
        %v3545 = vadd.f32 0.0, %v3544
        %v3546 = vand.u32 %v586, 4294901760
        %v3547 = vsub.f32 %v586, %v3546
        %v3548 = vand.u32 %v3547, 4294901760
        %v3549 = vsub.f32 %v3547, %v3548
        %v3550 = vand.u32 %v3549, 4294901760
        %3551 = vmatmul.f32.gmra.mxu0 %v3550
        %v3552 = vpop.f32.mrf.mxu0
        %v3553 = vadd.f32 0.0, %v3552
        %v3554 = vand.u32 %v589, 4294901760
        %v3555 = vsub.f32 %v589, %v3554
        %v3556 = vand.u32 %v3555, 4294901760
        %v3557 = vsub.f32 %v3555, %v3556
        %v3558 = vand.u32 %v3557, 4294901760
        %3559 = vmatmul.f32.gmra.mxu0 %v3558
        %v3560 = vpop.f32.mrf.mxu0
        %v3561 = vadd.f32 0.0, %v3560
        %v3562 = vand.u32 %v592, 4294901760
        %v3563 = vsub.f32 %v592, %v3562
        %v3564 = vand.u32 %v3563, 4294901760
        %v3565 = vsub.f32 %v3563, %v3564
        %v3566 = vand.u32 %v3565, 4294901760
        %3567 = vmatmul.f32.gmra.mxu0 %v3566
        %v3568 = vpop.f32.mrf.mxu0
        %v3569 = vadd.f32 0.0, %v3568
        %3570 = vdwg.mxu0
        %v3571 = vand.u32 %v832, 4294901760
        %v3572 = vsub.f32 %v832, %v3571
        %v3573 = vand.u32 %v3572, 4294901760
        %v3574 = vsub.f32 %v3572, %v3573
        %v3575 = vand.u32 %v3574, 4294901760
        %3576 = vmatpush.xpose.msra.mxu0 %v3575
        %v3577 = vand.u32 %v829, 4294901760
        %v3578 = vsub.f32 %v829, %v3577
        %v3579 = vand.u32 %v3578, 4294901760
        %v3580 = vsub.f32 %v3578, %v3579
        %v3581 = vand.u32 %v3580, 4294901760
        %3582 = vmatpush.xpose.msra.mxu0 %v3581
        %v3583 = vand.u32 %v826, 4294901760
        %v3584 = vsub.f32 %v826, %v3583
        %v3585 = vand.u32 %v3584, 4294901760
        %v3586 = vsub.f32 %v3584, %v3585
        %v3587 = vand.u32 %v3586, 4294901760
        %3588 = vmatpush.xpose.msra.mxu0 %v3587
        %v3589 = vand.u32 %v823, 4294901760
        %v3590 = vsub.f32 %v823, %v3589
        %v3591 = vand.u32 %v3590, 4294901760
        %v3592 = vsub.f32 %v3590, %v3591
        %v3593 = vand.u32 %v3592, 4294901760
        %3594 = vmatpush.xpose.msra.mxu0 %v3593
        %v3595 = vand.u32 %v820, 4294901760
        %v3596 = vsub.f32 %v820, %v3595
        %v3597 = vand.u32 %v3596, 4294901760
        %v3598 = vsub.f32 %v3596, %v3597
        %v3599 = vand.u32 %v3598, 4294901760
        %3600 = vmatpush.xpose.msra.mxu0 %v3599
        %v3601 = vand.u32 %v817, 4294901760
        %v3602 = vsub.f32 %v817, %v3601
        %v3603 = vand.u32 %v3602, 4294901760
        %v3604 = vsub.f32 %v3602, %v3603
        %v3605 = vand.u32 %v3604, 4294901760
        %3606 = vmatpush.xpose.msra.mxu0 %v3605
        %v3607 = vand.u32 %v814, 4294901760
        %v3608 = vsub.f32 %v814, %v3607
        %v3609 = vand.u32 %v3608, 4294901760
        %v3610 = vsub.f32 %v3608, %v3609
        %v3611 = vand.u32 %v3610, 4294901760
        %3612 = vmatpush.xpose.msra.mxu0 %v3611
        %v3613 = vand.u32 %v811, 4294901760
        %v3614 = vsub.f32 %v811, %v3613
        %v3615 = vand.u32 %v3614, 4294901760
        %v3616 = vsub.f32 %v3614, %v3615
        %v3617 = vand.u32 %v3616, 4294901760
        %3618 = vmatpush.xpose.msra.mxu0 %v3617
        %v3619 = vand.u32 %v808, 4294901760
        %v3620 = vsub.f32 %v808, %v3619
        %v3621 = vand.u32 %v3620, 4294901760
        %v3622 = vsub.f32 %v3620, %v3621
        %v3623 = vand.u32 %v3622, 4294901760
        %3624 = vmatpush.xpose.msra.mxu0 %v3623
        %v3625 = vand.u32 %v805, 4294901760
        %v3626 = vsub.f32 %v805, %v3625
        %v3627 = vand.u32 %v3626, 4294901760
        %v3628 = vsub.f32 %v3626, %v3627
        %v3629 = vand.u32 %v3628, 4294901760
        %3630 = vmatpush.xpose.msra.mxu0 %v3629
        %v3631 = vand.u32 %v802, 4294901760
        %v3632 = vsub.f32 %v802, %v3631
        %v3633 = vand.u32 %v3632, 4294901760
        %v3634 = vsub.f32 %v3632, %v3633
        %v3635 = vand.u32 %v3634, 4294901760
        %3636 = vmatpush.xpose.msra.mxu0 %v3635
        %v3637 = vand.u32 %v799, 4294901760
        %v3638 = vsub.f32 %v799, %v3637
        %v3639 = vand.u32 %v3638, 4294901760
        %v3640 = vsub.f32 %v3638, %v3639
        %v3641 = vand.u32 %v3640, 4294901760
        %3642 = vmatpush.xpose.msra.mxu0 %v3641
        %v3643 = vand.u32 %v796, 4294901760
        %v3644 = vsub.f32 %v796, %v3643
        %v3645 = vand.u32 %v3644, 4294901760
        %v3646 = vsub.f32 %v3644, %v3645
        %v3647 = vand.u32 %v3646, 4294901760
        %3648 = vmatpush.xpose.msra.mxu0 %v3647
        %v3649 = vand.u32 %v793, 4294901760
        %v3650 = vsub.f32 %v793, %v3649
        %v3651 = vand.u32 %v3650, 4294901760
        %v3652 = vsub.f32 %v3650, %v3651
        %v3653 = vand.u32 %v3652, 4294901760
        %3654 = vmatpush.xpose.msra.mxu0 %v3653
        %v3655 = vand.u32 %v790, 4294901760
        %v3656 = vsub.f32 %v790, %v3655
        %v3657 = vand.u32 %v3656, 4294901760
        %v3658 = vsub.f32 %v3656, %v3657
        %v3659 = vand.u32 %v3658, 4294901760
        %3660 = vmatpush.xpose.msra.mxu0 %v3659
        %v3661 = vand.u32 %v787, 4294901760
        %v3662 = vsub.f32 %v787, %v3661
        %v3663 = vand.u32 %v3662, 4294901760
        %v3664 = vsub.f32 %v3662, %v3663
        %v3665 = vand.u32 %v3664, 4294901760
        %3666 = vmatpush.xpose.msra.mxu0 %v3665
        %v3667 = vand.u32 %v565, 4294901760
        %3668 = vmatmul.f32.gmra.mxu0 %v3667
        %v3669 = vpop.f32.mrf.mxu0
        %v3670 = vadd.f32 %v3497, %v3669
        %v3671 = vand.u32 %v568, 4294901760
        %3672 = vmatmul.f32.gmra.mxu0 %v3671
        %v3673 = vpop.f32.mrf.mxu0
        %v3674 = vadd.f32 %v3505, %v3673
        %v3675 = vand.u32 %v571, 4294901760
        %3676 = vmatmul.f32.gmra.mxu0 %v3675
        %v3677 = vpop.f32.mrf.mxu0
        %v3678 = vadd.f32 %v3513, %v3677
        %v3679 = vand.u32 %v574, 4294901760
        %3680 = vmatmul.f32.gmra.mxu0 %v3679
        %v3681 = vpop.f32.mrf.mxu0
        %v3682 = vadd.f32 %v3521, %v3681
        %v3683 = vand.u32 %v577, 4294901760
        %3684 = vmatmul.f32.gmra.mxu0 %v3683
        %v3685 = vpop.f32.mrf.mxu0
        %v3686 = vadd.f32 %v3529, %v3685
        %v3687 = vand.u32 %v580, 4294901760
        %3688 = vmatmul.f32.gmra.mxu0 %v3687
        %v3689 = vpop.f32.mrf.mxu0
        %v3690 = vadd.f32 %v3537, %v3689
        %v3691 = vand.u32 %v583, 4294901760
        %3692 = vmatmul.f32.gmra.mxu0 %v3691
        %v3693 = vpop.f32.mrf.mxu0
        %v3694 = vadd.f32 %v3545, %v3693
        %v3695 = vand.u32 %v586, 4294901760
        %3696 = vmatmul.f32.gmra.mxu0 %v3695
        %v3697 = vpop.f32.mrf.mxu0
        %v3698 = vadd.f32 %v3553, %v3697
        %v3699 = vand.u32 %v589, 4294901760
        %3700 = vmatmul.f32.gmra.mxu0 %v3699
        %v3701 = vpop.f32.mrf.mxu0
        %v3702 = vadd.f32 %v3561, %v3701
        %v3703 = vand.u32 %v592, 4294901760
        %3704 = vmatmul.f32.gmra.mxu0 %v3703
        %v3705 = vpop.f32.mrf.mxu0
        %v3706 = vadd.f32 %v3569, %v3705
        %3707 = vdwg.mxu0
        %v3708 = vand.u32 %v832, 4294901760
        %v3709 = vsub.f32 %v832, %v3708
        %3710 = vmatpush.xpose.msra.mxu0 %v3709
        %v3711 = vand.u32 %v829, 4294901760
        %v3712 = vsub.f32 %v829, %v3711
        %3713 = vmatpush.xpose.msra.mxu0 %v3712
        %v3714 = vand.u32 %v826, 4294901760
        %v3715 = vsub.f32 %v826, %v3714
        %3716 = vmatpush.xpose.msra.mxu0 %v3715
        %v3717 = vand.u32 %v823, 4294901760
        %v3718 = vsub.f32 %v823, %v3717
        %3719 = vmatpush.xpose.msra.mxu0 %v3718
        %v3720 = vand.u32 %v820, 4294901760
        %v3721 = vsub.f32 %v820, %v3720
        %3722 = vmatpush.xpose.msra.mxu0 %v3721
        %v3723 = vand.u32 %v817, 4294901760
        %v3724 = vsub.f32 %v817, %v3723
        %3725 = vmatpush.xpose.msra.mxu0 %v3724
        %v3726 = vand.u32 %v814, 4294901760
        %v3727 = vsub.f32 %v814, %v3726
        %3728 = vmatpush.xpose.msra.mxu0 %v3727
        %v3729 = vand.u32 %v811, 4294901760
        %v3730 = vsub.f32 %v811, %v3729
        %3731 = vmatpush.xpose.msra.mxu0 %v3730
        %v3732 = vand.u32 %v808, 4294901760
        %v3733 = vsub.f32 %v808, %v3732
        %3734 = vmatpush.xpose.msra.mxu0 %v3733
        %v3735 = vand.u32 %v805, 4294901760
        %v3736 = vsub.f32 %v805, %v3735
        %3737 = vmatpush.xpose.msra.mxu0 %v3736
        %v3738 = vand.u32 %v802, 4294901760
        %v3739 = vsub.f32 %v802, %v3738
        %3740 = vmatpush.xpose.msra.mxu0 %v3739
        %v3741 = vand.u32 %v799, 4294901760
        %v3742 = vsub.f32 %v799, %v3741
        %3743 = vmatpush.xpose.msra.mxu0 %v3742
        %v3744 = vand.u32 %v796, 4294901760
        %v3745 = vsub.f32 %v796, %v3744
        %3746 = vmatpush.xpose.msra.mxu0 %v3745
        %v3747 = vand.u32 %v793, 4294901760
        %v3748 = vsub.f32 %v793, %v3747
        %3749 = vmatpush.xpose.msra.mxu0 %v3748
        %v3750 = vand.u32 %v790, 4294901760
        %v3751 = vsub.f32 %v790, %v3750
        %3752 = vmatpush.xpose.msra.mxu0 %v3751
        %v3753 = vand.u32 %v787, 4294901760
        %v3754 = vsub.f32 %v787, %v3753
        %3755 = vmatpush.xpose.msra.mxu0 %v3754
        %v3756 = vand.u32 %v565, 4294901760
        %v3757 = vsub.f32 %v565, %v3756
        %3758 = vmatmul.f32.gmra.mxu0 %v3757
        %v3759 = vpop.f32.mrf.mxu0
        %v3760 = vadd.f32 %v3670, %v3759
        %v3761 = vand.u32 %v568, 4294901760
        %v3762 = vsub.f32 %v568, %v3761
        %3763 = vmatmul.f32.gmra.mxu0 %v3762
        %v3764 = vpop.f32.mrf.mxu0
        %v3765 = vadd.f32 %v3674, %v3764
        %v3766 = vand.u32 %v571, 4294901760
        %v3767 = vsub.f32 %v571, %v3766
        %3768 = vmatmul.f32.gmra.mxu0 %v3767
        %v3769 = vpop.f32.mrf.mxu0
        %v3770 = vadd.f32 %v3678, %v3769
        %v3771 = vand.u32 %v574, 4294901760
        %v3772 = vsub.f32 %v574, %v3771
        %3773 = vmatmul.f32.gmra.mxu0 %v3772
        %v3774 = vpop.f32.mrf.mxu0
        %v3775 = vadd.f32 %v3682, %v3774
        %v3776 = vand.u32 %v577, 4294901760
        %v3777 = vsub.f32 %v577, %v3776
        %3778 = vmatmul.f32.gmra.mxu0 %v3777
        %v3779 = vpop.f32.mrf.mxu0
        %v3780 = vadd.f32 %v3686, %v3779
        %v3781 = vand.u32 %v580, 4294901760
        %v3782 = vsub.f32 %v580, %v3781
        %3783 = vmatmul.f32.gmra.mxu0 %v3782
        %v3784 = vpop.f32.mrf.mxu0
        %v3785 = vadd.f32 %v3690, %v3784
        %v3786 = vand.u32 %v583, 4294901760
        %v3787 = vsub.f32 %v583, %v3786
        %3788 = vmatmul.f32.gmra.mxu0 %v3787
        %v3789 = vpop.f32.mrf.mxu0
        %v3790 = vadd.f32 %v3694, %v3789
        %v3791 = vand.u32 %v586, 4294901760
        %v3792 = vsub.f32 %v586, %v3791
        %3793 = vmatmul.f32.gmra.mxu0 %v3792
        %v3794 = vpop.f32.mrf.mxu0
        %v3795 = vadd.f32 %v3698, %v3794
        %v3796 = vand.u32 %v589, 4294901760
        %v3797 = vsub.f32 %v589, %v3796
        %3798 = vmatmul.f32.gmra.mxu0 %v3797
        %v3799 = vpop.f32.mrf.mxu0
        %v3800 = vadd.f32 %v3702, %v3799
        %v3801 = vand.u32 %v592, 4294901760
        %v3802 = vsub.f32 %v592, %v3801
        %3803 = vmatmul.f32.gmra.mxu0 %v3802
        %v3804 = vpop.f32.mrf.mxu0
        %v3805 = vadd.f32 %v3706, %v3804
        %3806 = vdwg.mxu0
        %v3807 = vand.u32 %v832, 4294901760
        %3808 = vmatpush.xpose.msra.mxu0 %v3807
        %v3809 = vand.u32 %v829, 4294901760
        %3810 = vmatpush.xpose.msra.mxu0 %v3809
        %v3811 = vand.u32 %v826, 4294901760
        %3812 = vmatpush.xpose.msra.mxu0 %v3811
        %v3813 = vand.u32 %v823, 4294901760
        %3814 = vmatpush.xpose.msra.mxu0 %v3813
        %v3815 = vand.u32 %v820, 4294901760
        %3816 = vmatpush.xpose.msra.mxu0 %v3815
        %v3817 = vand.u32 %v817, 4294901760
        %3818 = vmatpush.xpose.msra.mxu0 %v3817
        %v3819 = vand.u32 %v814, 4294901760
        %3820 = vmatpush.xpose.msra.mxu0 %v3819
        %v3821 = vand.u32 %v811, 4294901760
        %3822 = vmatpush.xpose.msra.mxu0 %v3821
        %v3823 = vand.u32 %v808, 4294901760
        %3824 = vmatpush.xpose.msra.mxu0 %v3823
        %v3825 = vand.u32 %v805, 4294901760
        %3826 = vmatpush.xpose.msra.mxu0 %v3825
        %v3827 = vand.u32 %v802, 4294901760
        %3828 = vmatpush.xpose.msra.mxu0 %v3827
        %v3829 = vand.u32 %v799, 4294901760
        %3830 = vmatpush.xpose.msra.mxu0 %v3829
        %v3831 = vand.u32 %v796, 4294901760
        %3832 = vmatpush.xpose.msra.mxu0 %v3831
        %v3833 = vand.u32 %v793, 4294901760
        %3834 = vmatpush.xpose.msra.mxu0 %v3833
        %v3835 = vand.u32 %v790, 4294901760
        %3836 = vmatpush.xpose.msra.mxu0 %v3835
        %v3837 = vand.u32 %v787, 4294901760
        %3838 = vmatpush.xpose.msra.mxu0 %v3837
        %v3839 = vand.u32 %v565, 4294901760
        %v3840 = vsub.f32 %v565, %v3839
        %v3841 = vand.u32 %v3840, 4294901760
        %3842 = vmatmul.f32.gmra.mxu0 %v3841
        %v3843 = vpop.f32.mrf.mxu0
        %v3844 = vadd.f32 %v3760, %v3843
        %v3845 = vand.u32 %v568, 4294901760
        %v3846 = vsub.f32 %v568, %v3845
        %v3847 = vand.u32 %v3846, 4294901760
        %3848 = vmatmul.f32.gmra.mxu0 %v3847
        %v3849 = vpop.f32.mrf.mxu0
        %v3850 = vadd.f32 %v3765, %v3849
        %v3851 = vand.u32 %v571, 4294901760
        %v3852 = vsub.f32 %v571, %v3851
        %v3853 = vand.u32 %v3852, 4294901760
        %3854 = vmatmul.f32.gmra.mxu0 %v3853
        %v3855 = vpop.f32.mrf.mxu0
        %v3856 = vadd.f32 %v3770, %v3855
        %v3857 = vand.u32 %v574, 4294901760
        %v3858 = vsub.f32 %v574, %v3857
        %v3859 = vand.u32 %v3858, 4294901760
        %3860 = vmatmul.f32.gmra.mxu0 %v3859
        %v3861 = vpop.f32.mrf.mxu0
        %v3862 = vadd.f32 %v3775, %v3861
        %v3863 = vand.u32 %v577, 4294901760
        %v3864 = vsub.f32 %v577, %v3863
        %v3865 = vand.u32 %v3864, 4294901760
        %3866 = vmatmul.f32.gmra.mxu0 %v3865
        %v3867 = vpop.f32.mrf.mxu0
        %v3868 = vadd.f32 %v3780, %v3867
        %v3869 = vand.u32 %v580, 4294901760
        %v3870 = vsub.f32 %v580, %v3869
        %v3871 = vand.u32 %v3870, 4294901760
        %3872 = vmatmul.f32.gmra.mxu0 %v3871
        %v3873 = vpop.f32.mrf.mxu0
        %v3874 = vadd.f32 %v3785, %v3873
        %v3875 = vand.u32 %v583, 4294901760
        %v3876 = vsub.f32 %v583, %v3875
        %v3877 = vand.u32 %v3876, 4294901760
        %3878 = vmatmul.f32.gmra.mxu0 %v3877
        %v3879 = vpop.f32.mrf.mxu0
        %v3880 = vadd.f32 %v3790, %v3879
        %v3881 = vand.u32 %v586, 4294901760
        %v3882 = vsub.f32 %v586, %v3881
        %v3883 = vand.u32 %v3882, 4294901760
        %3884 = vmatmul.f32.gmra.mxu0 %v3883
        %v3885 = vpop.f32.mrf.mxu0
        %v3886 = vadd.f32 %v3795, %v3885
        %v3887 = vand.u32 %v589, 4294901760
        %v3888 = vsub.f32 %v589, %v3887
        %v3889 = vand.u32 %v3888, 4294901760
        %3890 = vmatmul.f32.gmra.mxu0 %v3889
        %v3891 = vpop.f32.mrf.mxu0
        %v3892 = vadd.f32 %v3800, %v3891
        %v3893 = vand.u32 %v592, 4294901760
        %v3894 = vsub.f32 %v592, %v3893
        %v3895 = vand.u32 %v3894, 4294901760
        %3896 = vmatmul.f32.gmra.mxu0 %v3895
        %v3897 = vpop.f32.mrf.mxu0
        %v3898 = vadd.f32 %v3805, %v3897
        %3899 = vdwg.mxu0
        %v3900 = vand.u32 %v832, 4294901760
        %v3901 = vsub.f32 %v832, %v3900
        %v3902 = vand.u32 %v3901, 4294901760
        %3903 = vmatpush.xpose.msra.mxu0 %v3902
        %v3904 = vand.u32 %v829, 4294901760
        %v3905 = vsub.f32 %v829, %v3904
        %v3906 = vand.u32 %v3905, 4294901760
        %3907 = vmatpush.xpose.msra.mxu0 %v3906
        %v3908 = vand.u32 %v826, 4294901760
        %v3909 = vsub.f32 %v826, %v3908
        %v3910 = vand.u32 %v3909, 4294901760
        %3911 = vmatpush.xpose.msra.mxu0 %v3910
        %v3912 = vand.u32 %v823, 4294901760
        %v3913 = vsub.f32 %v823, %v3912
        %v3914 = vand.u32 %v3913, 4294901760
        %3915 = vmatpush.xpose.msra.mxu0 %v3914
        %v3916 = vand.u32 %v820, 4294901760
        %v3917 = vsub.f32 %v820, %v3916
        %v3918 = vand.u32 %v3917, 4294901760
        %3919 = vmatpush.xpose.msra.mxu0 %v3918
        %v3920 = vand.u32 %v817, 4294901760
        %v3921 = vsub.f32 %v817, %v3920
        %v3922 = vand.u32 %v3921, 4294901760
        %3923 = vmatpush.xpose.msra.mxu0 %v3922
        %v3924 = vand.u32 %v814, 4294901760
        %v3925 = vsub.f32 %v814, %v3924
        %v3926 = vand.u32 %v3925, 4294901760
        %3927 = vmatpush.xpose.msra.mxu0 %v3926
        %v3928 = vand.u32 %v811, 4294901760
        %v3929 = vsub.f32 %v811, %v3928
        %v3930 = vand.u32 %v3929, 4294901760
        %3931 = vmatpush.xpose.msra.mxu0 %v3930
        %v3932 = vand.u32 %v808, 4294901760
        %v3933 = vsub.f32 %v808, %v3932
        %v3934 = vand.u32 %v3933, 4294901760
        %3935 = vmatpush.xpose.msra.mxu0 %v3934
        %v3936 = vand.u32 %v805, 4294901760
        %v3937 = vsub.f32 %v805, %v3936
        %v3938 = vand.u32 %v3937, 4294901760
        %3939 = vmatpush.xpose.msra.mxu0 %v3938
        %v3940 = vand.u32 %v802, 4294901760
        %v3941 = vsub.f32 %v802, %v3940
        %v3942 = vand.u32 %v3941, 4294901760
        %3943 = vmatpush.xpose.msra.mxu0 %v3942
        %v3944 = vand.u32 %v799, 4294901760
        %v3945 = vsub.f32 %v799, %v3944
        %v3946 = vand.u32 %v3945, 4294901760
        %3947 = vmatpush.xpose.msra.mxu0 %v3946
        %v3948 = vand.u32 %v796, 4294901760
        %v3949 = vsub.f32 %v796, %v3948
        %v3950 = vand.u32 %v3949, 4294901760
        %3951 = vmatpush.xpose.msra.mxu0 %v3950
        %v3952 = vand.u32 %v793, 4294901760
        %v3953 = vsub.f32 %v793, %v3952
        %v3954 = vand.u32 %v3953, 4294901760
        %3955 = vmatpush.xpose.msra.mxu0 %v3954
        %v3956 = vand.u32 %v790, 4294901760
        %v3957 = vsub.f32 %v790, %v3956
        %v3958 = vand.u32 %v3957, 4294901760
        %3959 = vmatpush.xpose.msra.mxu0 %v3958
        %v3960 = vand.u32 %v787, 4294901760
        %v3961 = vsub.f32 %v787, %v3960
        %v3962 = vand.u32 %v3961, 4294901760
        %3963 = vmatpush.xpose.msra.mxu0 %v3962
        %v3964 = vand.u32 %v565, 4294901760
        %3965 = vmatmul.f32.gmra.mxu0 %v3964
        %v3966 = vpop.f32.mrf.mxu0
        %v3967 = vadd.f32 %v3844, %v3966
        %v3968 = vand.u32 %v568, 4294901760
        %3969 = vmatmul.f32.gmra.mxu0 %v3968
        %v3970 = vpop.f32.mrf.mxu0
        %v3971 = vadd.f32 %v3850, %v3970
        %v3972 = vand.u32 %v571, 4294901760
        %3973 = vmatmul.f32.gmra.mxu0 %v3972
        %v3974 = vpop.f32.mrf.mxu0
        %v3975 = vadd.f32 %v3856, %v3974
        %v3976 = vand.u32 %v574, 4294901760
        %3977 = vmatmul.f32.gmra.mxu0 %v3976
        %v3978 = vpop.f32.mrf.mxu0
        %v3979 = vadd.f32 %v3862, %v3978
        %v3980 = vand.u32 %v577, 4294901760
        %3981 = vmatmul.f32.gmra.mxu0 %v3980
        %v3982 = vpop.f32.mrf.mxu0
        %v3983 = vadd.f32 %v3868, %v3982
        %v3984 = vand.u32 %v580, 4294901760
        %3985 = vmatmul.f32.gmra.mxu0 %v3984
        %v3986 = vpop.f32.mrf.mxu0
        %v3987 = vadd.f32 %v3874, %v3986
        %v3988 = vand.u32 %v583, 4294901760
        %3989 = vmatmul.f32.gmra.mxu0 %v3988
        %v3990 = vpop.f32.mrf.mxu0
        %v3991 = vadd.f32 %v3880, %v3990
        %v3992 = vand.u32 %v586, 4294901760
        %3993 = vmatmul.f32.gmra.mxu0 %v3992
        %v3994 = vpop.f32.mrf.mxu0
        %v3995 = vadd.f32 %v3886, %v3994
        %v3996 = vand.u32 %v589, 4294901760
        %3997 = vmatmul.f32.gmra.mxu0 %v3996
        %v3998 = vpop.f32.mrf.mxu0
        %v3999 = vadd.f32 %v3892, %v3998
        %v4000 = vand.u32 %v592, 4294901760
        %4001 = vmatmul.f32.gmra.mxu0 %v4000
        %v4002 = vpop.f32.mrf.mxu0
        %v4003 = vadd.f32 %v3898, %v4002
        %4004 = vdwg.mxu0
        %v4005 = vand.u32 %v832, 4294901760
        %4006 = vmatpush.xpose.msra.mxu0 %v4005
        %v4007 = vand.u32 %v829, 4294901760
        %4008 = vmatpush.xpose.msra.mxu0 %v4007
        %v4009 = vand.u32 %v826, 4294901760
        %4010 = vmatpush.xpose.msra.mxu0 %v4009
        %v4011 = vand.u32 %v823, 4294901760
        %4012 = vmatpush.xpose.msra.mxu0 %v4011
        %v4013 = vand.u32 %v820, 4294901760
        %4014 = vmatpush.xpose.msra.mxu0 %v4013
        %v4015 = vand.u32 %v817, 4294901760
        %4016 = vmatpush.xpose.msra.mxu0 %v4015
        %v4017 = vand.u32 %v814, 4294901760
        %4018 = vmatpush.xpose.msra.mxu0 %v4017
        %v4019 = vand.u32 %v811, 4294901760
        %4020 = vmatpush.xpose.msra.mxu0 %v4019
        %v4021 = vand.u32 %v808, 4294901760
        %4022 = vmatpush.xpose.msra.mxu0 %v4021
        %v4023 = vand.u32 %v805, 4294901760
        %4024 = vmatpush.xpose.msra.mxu0 %v4023
        %v4025 = vand.u32 %v802, 4294901760
        %4026 = vmatpush.xpose.msra.mxu0 %v4025
        %v4027 = vand.u32 %v799, 4294901760
        %4028 = vmatpush.xpose.msra.mxu0 %v4027
        %v4029 = vand.u32 %v796, 4294901760
        %4030 = vmatpush.xpose.msra.mxu0 %v4029
        %v4031 = vand.u32 %v793, 4294901760
        %4032 = vmatpush.xpose.msra.mxu0 %v4031
        %v4033 = vand.u32 %v790, 4294901760
        %4034 = vmatpush.xpose.msra.mxu0 %v4033
        %v4035 = vand.u32 %v787, 4294901760
        %4036 = vmatpush.xpose.msra.mxu0 %v4035
        %v4037 = vand.u32 %v565, 4294901760
        %4038 = vmatmul.f32.gmra.mxu0 %v4037
        %v4039 = vpop.f32.mrf.mxu0
        %v4040 = vadd.f32 %v3967, %v4039
        %v4041 = vand.u32 %v568, 4294901760
        %4042 = vmatmul.f32.gmra.mxu0 %v4041
        %v4043 = vpop.f32.mrf.mxu0
        %v4044 = vadd.f32 %v3971, %v4043
        %v4045 = vand.u32 %v571, 4294901760
        %4046 = vmatmul.f32.gmra.mxu0 %v4045
        %v4047 = vpop.f32.mrf.mxu0
        %v4048 = vadd.f32 %v3975, %v4047
        %v4049 = vand.u32 %v574, 4294901760
        %4050 = vmatmul.f32.gmra.mxu0 %v4049
        %v4051 = vpop.f32.mrf.mxu0
        %v4052 = vadd.f32 %v3979, %v4051
        %v4053 = vand.u32 %v577, 4294901760
        %4054 = vmatmul.f32.gmra.mxu0 %v4053
        %v4055 = vpop.f32.mrf.mxu0
        %v4056 = vadd.f32 %v3983, %v4055
        %v4057 = vand.u32 %v580, 4294901760
        %4058 = vmatmul.f32.gmra.mxu0 %v4057
        %v4059 = vpop.f32.mrf.mxu0
        %v4060 = vadd.f32 %v3987, %v4059
        %v4061 = vand.u32 %v583, 4294901760
        %4062 = vmatmul.f32.gmra.mxu0 %v4061
        %v4063 = vpop.f32.mrf.mxu0
        %v4064 = vadd.f32 %v3991, %v4063
        %v4065 = vand.u32 %v586, 4294901760
        %4066 = vmatmul.f32.gmra.mxu0 %v4065
        %v4067 = vpop.f32.mrf.mxu0
        %v4068 = vadd.f32 %v3995, %v4067
        %v4069 = vand.u32 %v589, 4294901760
        %4070 = vmatmul.f32.gmra.mxu0 %v4069
        %v4071 = vpop.f32.mrf.mxu0
        %v4072 = vadd.f32 %v3999, %v4071
        %v4073 = vand.u32 %v592, 4294901760
        %4074 = vmatmul.f32.gmra.mxu0 %v4073
        %v4075 = vpop.f32.mrf.mxu0
        %v4076 = vadd.f32 %v4003, %v4075
        %4077 = vdwg.mxu0
        %v4078 = vand.u32 %v880, 4294901760
        %4079 = vmatpush.xpose.msra.mxu0 %v4078
        %v4080 = vand.u32 %v877, 4294901760
        %4081 = vmatpush.xpose.msra.mxu0 %v4080
        %v4082 = vand.u32 %v874, 4294901760
        %4083 = vmatpush.xpose.msra.mxu0 %v4082
        %v4084 = vand.u32 %v871, 4294901760
        %4085 = vmatpush.xpose.msra.mxu0 %v4084
        %v4086 = vand.u32 %v868, 4294901760
        %4087 = vmatpush.xpose.msra.mxu0 %v4086
        %v4088 = vand.u32 %v865, 4294901760
        %4089 = vmatpush.xpose.msra.mxu0 %v4088
        %v4090 = vand.u32 %v862, 4294901760
        %4091 = vmatpush.xpose.msra.mxu0 %v4090
        %v4092 = vand.u32 %v859, 4294901760
        %4093 = vmatpush.xpose.msra.mxu0 %v4092
        %v4094 = vand.u32 %v856, 4294901760
        %4095 = vmatpush.xpose.msra.mxu0 %v4094
        %v4096 = vand.u32 %v853, 4294901760
        %4097 = vmatpush.xpose.msra.mxu0 %v4096
        %v4098 = vand.u32 %v850, 4294901760
        %4099 = vmatpush.xpose.msra.mxu0 %v4098
        %v4100 = vand.u32 %v847, 4294901760
        %4101 = vmatpush.xpose.msra.mxu0 %v4100
        %v4102 = vand.u32 %v844, 4294901760
        %4103 = vmatpush.xpose.msra.mxu0 %v4102
        %v4104 = vand.u32 %v841, 4294901760
        %4105 = vmatpush.xpose.msra.mxu0 %v4104
        %v4106 = vand.u32 %v838, 4294901760
        %4107 = vmatpush.xpose.msra.mxu0 %v4106
        %v4108 = vand.u32 %v835, 4294901760
        %4109 = vmatpush.xpose.msra.mxu0 %v4108
        %v4110 = vand.u32 %v565, 4294901760
        %v4111 = vsub.f32 %v565, %v4110
        %v4112 = vand.u32 %v4111, 4294901760
        %v4113 = vsub.f32 %v4111, %v4112
        %v4114 = vand.u32 %v4113, 4294901760
        %4115 = vmatmul.f32.gmra.mxu0 %v4114
        %v4116 = vpop.f32.mrf.mxu0
        %v4117 = vadd.f32 0.0, %v4116
        %v4118 = vand.u32 %v568, 4294901760
        %v4119 = vsub.f32 %v568, %v4118
        %v4120 = vand.u32 %v4119, 4294901760
        %v4121 = vsub.f32 %v4119, %v4120
        %v4122 = vand.u32 %v4121, 4294901760
        %4123 = vmatmul.f32.gmra.mxu0 %v4122
        %v4124 = vpop.f32.mrf.mxu0
        %v4125 = vadd.f32 0.0, %v4124
        %v4126 = vand.u32 %v571, 4294901760
        %v4127 = vsub.f32 %v571, %v4126
        %v4128 = vand.u32 %v4127, 4294901760
        %v4129 = vsub.f32 %v4127, %v4128
        %v4130 = vand.u32 %v4129, 4294901760
        %4131 = vmatmul.f32.gmra.mxu0 %v4130
        %v4132 = vpop.f32.mrf.mxu0
        %v4133 = vadd.f32 0.0, %v4132
        %v4134 = vand.u32 %v574, 4294901760
        %v4135 = vsub.f32 %v574, %v4134
        %v4136 = vand.u32 %v4135, 4294901760
        %v4137 = vsub.f32 %v4135, %v4136
        %v4138 = vand.u32 %v4137, 4294901760
        %4139 = vmatmul.f32.gmra.mxu0 %v4138
        %v4140 = vpop.f32.mrf.mxu0
        %v4141 = vadd.f32 0.0, %v4140
        %v4142 = vand.u32 %v577, 4294901760
        %v4143 = vsub.f32 %v577, %v4142
        %v4144 = vand.u32 %v4143, 4294901760
        %v4145 = vsub.f32 %v4143, %v4144
        %v4146 = vand.u32 %v4145, 4294901760
        %4147 = vmatmul.f32.gmra.mxu0 %v4146
        %v4148 = vpop.f32.mrf.mxu0
        %v4149 = vadd.f32 0.0, %v4148
        %v4150 = vand.u32 %v580, 4294901760
        %v4151 = vsub.f32 %v580, %v4150
        %v4152 = vand.u32 %v4151, 4294901760
        %v4153 = vsub.f32 %v4151, %v4152
        %v4154 = vand.u32 %v4153, 4294901760
        %4155 = vmatmul.f32.gmra.mxu0 %v4154
        %v4156 = vpop.f32.mrf.mxu0
        %v4157 = vadd.f32 0.0, %v4156
        %v4158 = vand.u32 %v583, 4294901760
        %v4159 = vsub.f32 %v583, %v4158
        %v4160 = vand.u32 %v4159, 4294901760
        %v4161 = vsub.f32 %v4159, %v4160
        %v4162 = vand.u32 %v4161, 4294901760
        %4163 = vmatmul.f32.gmra.mxu0 %v4162
        %v4164 = vpop.f32.mrf.mxu0
        %v4165 = vadd.f32 0.0, %v4164
        %v4166 = vand.u32 %v586, 4294901760
        %v4167 = vsub.f32 %v586, %v4166
        %v4168 = vand.u32 %v4167, 4294901760
        %v4169 = vsub.f32 %v4167, %v4168
        %v4170 = vand.u32 %v4169, 4294901760
        %4171 = vmatmul.f32.gmra.mxu0 %v4170
        %v4172 = vpop.f32.mrf.mxu0
        %v4173 = vadd.f32 0.0, %v4172
        %v4174 = vand.u32 %v589, 4294901760
        %v4175 = vsub.f32 %v589, %v4174
        %v4176 = vand.u32 %v4175, 4294901760
        %v4177 = vsub.f32 %v4175, %v4176
        %v4178 = vand.u32 %v4177, 4294901760
        %4179 = vmatmul.f32.gmra.mxu0 %v4178
        %v4180 = vpop.f32.mrf.mxu0
        %v4181 = vadd.f32 0.0, %v4180
        %v4182 = vand.u32 %v592, 4294901760
        %v4183 = vsub.f32 %v592, %v4182
        %v4184 = vand.u32 %v4183, 4294901760
        %v4185 = vsub.f32 %v4183, %v4184
        %v4186 = vand.u32 %v4185, 4294901760
        %4187 = vmatmul.f32.gmra.mxu0 %v4186
        %v4188 = vpop.f32.mrf.mxu0
        %v4189 = vadd.f32 0.0, %v4188
        %4190 = vdwg.mxu0
        %v4191 = vand.u32 %v880, 4294901760
        %v4192 = vsub.f32 %v880, %v4191
        %v4193 = vand.u32 %v4192, 4294901760
        %v4194 = vsub.f32 %v4192, %v4193
        %v4195 = vand.u32 %v4194, 4294901760
        %4196 = vmatpush.xpose.msra.mxu0 %v4195
        %v4197 = vand.u32 %v877, 4294901760
        %v4198 = vsub.f32 %v877, %v4197
        %v4199 = vand.u32 %v4198, 4294901760
        %v4200 = vsub.f32 %v4198, %v4199
        %v4201 = vand.u32 %v4200, 4294901760
        %4202 = vmatpush.xpose.msra.mxu0 %v4201
        %v4203 = vand.u32 %v874, 4294901760
        %v4204 = vsub.f32 %v874, %v4203
        %v4205 = vand.u32 %v4204, 4294901760
        %v4206 = vsub.f32 %v4204, %v4205
        %v4207 = vand.u32 %v4206, 4294901760
        %4208 = vmatpush.xpose.msra.mxu0 %v4207
        %v4209 = vand.u32 %v871, 4294901760
        %v4210 = vsub.f32 %v871, %v4209
        %v4211 = vand.u32 %v4210, 4294901760
        %v4212 = vsub.f32 %v4210, %v4211
        %v4213 = vand.u32 %v4212, 4294901760
        %4214 = vmatpush.xpose.msra.mxu0 %v4213
        %v4215 = vand.u32 %v868, 4294901760
        %v4216 = vsub.f32 %v868, %v4215
        %v4217 = vand.u32 %v4216, 4294901760
        %v4218 = vsub.f32 %v4216, %v4217
        %v4219 = vand.u32 %v4218, 4294901760
        %4220 = vmatpush.xpose.msra.mxu0 %v4219
        %v4221 = vand.u32 %v865, 4294901760
        %v4222 = vsub.f32 %v865, %v4221
        %v4223 = vand.u32 %v4222, 4294901760
        %v4224 = vsub.f32 %v4222, %v4223
        %v4225 = vand.u32 %v4224, 4294901760
        %4226 = vmatpush.xpose.msra.mxu0 %v4225
        %v4227 = vand.u32 %v862, 4294901760
        %v4228 = vsub.f32 %v862, %v4227
        %v4229 = vand.u32 %v4228, 4294901760
        %v4230 = vsub.f32 %v4228, %v4229
        %v4231 = vand.u32 %v4230, 4294901760
        %4232 = vmatpush.xpose.msra.mxu0 %v4231
        %v4233 = vand.u32 %v859, 4294901760
        %v4234 = vsub.f32 %v859, %v4233
        %v4235 = vand.u32 %v4234, 4294901760
        %v4236 = vsub.f32 %v4234, %v4235
        %v4237 = vand.u32 %v4236, 4294901760
        %4238 = vmatpush.xpose.msra.mxu0 %v4237
        %v4239 = vand.u32 %v856, 4294901760
        %v4240 = vsub.f32 %v856, %v4239
        %v4241 = vand.u32 %v4240, 4294901760
        %v4242 = vsub.f32 %v4240, %v4241
        %v4243 = vand.u32 %v4242, 4294901760
        %4244 = vmatpush.xpose.msra.mxu0 %v4243
        %v4245 = vand.u32 %v853, 4294901760
        %v4246 = vsub.f32 %v853, %v4245
        %v4247 = vand.u32 %v4246, 4294901760
        %v4248 = vsub.f32 %v4246, %v4247
        %v4249 = vand.u32 %v4248, 4294901760
        %4250 = vmatpush.xpose.msra.mxu0 %v4249
        %v4251 = vand.u32 %v850, 4294901760
        %v4252 = vsub.f32 %v850, %v4251
        %v4253 = vand.u32 %v4252, 4294901760
        %v4254 = vsub.f32 %v4252, %v4253
        %v4255 = vand.u32 %v4254, 4294901760
        %4256 = vmatpush.xpose.msra.mxu0 %v4255
        %v4257 = vand.u32 %v847, 4294901760
        %v4258 = vsub.f32 %v847, %v4257
        %v4259 = vand.u32 %v4258, 4294901760
        %v4260 = vsub.f32 %v4258, %v4259
        %v4261 = vand.u32 %v4260, 4294901760
        %4262 = vmatpush.xpose.msra.mxu0 %v4261
        %v4263 = vand.u32 %v844, 4294901760
        %v4264 = vsub.f32 %v844, %v4263
        %v4265 = vand.u32 %v4264, 4294901760
        %v4266 = vsub.f32 %v4264, %v4265
        %v4267 = vand.u32 %v4266, 4294901760
        %4268 = vmatpush.xpose.msra.mxu0 %v4267
        %v4269 = vand.u32 %v841, 4294901760
        %v4270 = vsub.f32 %v841, %v4269
        %v4271 = vand.u32 %v4270, 4294901760
        %v4272 = vsub.f32 %v4270, %v4271
        %v4273 = vand.u32 %v4272, 4294901760
        %4274 = vmatpush.xpose.msra.mxu0 %v4273
        %v4275 = vand.u32 %v838, 4294901760
        %v4276 = vsub.f32 %v838, %v4275
        %v4277 = vand.u32 %v4276, 4294901760
        %v4278 = vsub.f32 %v4276, %v4277
        %v4279 = vand.u32 %v4278, 4294901760
        %4280 = vmatpush.xpose.msra.mxu0 %v4279
        %v4281 = vand.u32 %v835, 4294901760
        %v4282 = vsub.f32 %v835, %v4281
        %v4283 = vand.u32 %v4282, 4294901760
        %v4284 = vsub.f32 %v4282, %v4283
        %v4285 = vand.u32 %v4284, 4294901760
        %4286 = vmatpush.xpose.msra.mxu0 %v4285
        %v4287 = vand.u32 %v565, 4294901760
        %4288 = vmatmul.f32.gmra.mxu0 %v4287
        %v4289 = vpop.f32.mrf.mxu0
        %v4290 = vadd.f32 %v4117, %v4289
        %v4291 = vand.u32 %v568, 4294901760
        %4292 = vmatmul.f32.gmra.mxu0 %v4291
        %v4293 = vpop.f32.mrf.mxu0
        %v4294 = vadd.f32 %v4125, %v4293
        %v4295 = vand.u32 %v571, 4294901760
        %4296 = vmatmul.f32.gmra.mxu0 %v4295
        %v4297 = vpop.f32.mrf.mxu0
        %v4298 = vadd.f32 %v4133, %v4297
        %v4299 = vand.u32 %v574, 4294901760
        %4300 = vmatmul.f32.gmra.mxu0 %v4299
        %v4301 = vpop.f32.mrf.mxu0
        %v4302 = vadd.f32 %v4141, %v4301
        %v4303 = vand.u32 %v577, 4294901760
        %4304 = vmatmul.f32.gmra.mxu0 %v4303
        %v4305 = vpop.f32.mrf.mxu0
        %v4306 = vadd.f32 %v4149, %v4305
        %v4307 = vand.u32 %v580, 4294901760
        %4308 = vmatmul.f32.gmra.mxu0 %v4307
        %v4309 = vpop.f32.mrf.mxu0
        %v4310 = vadd.f32 %v4157, %v4309
        %v4311 = vand.u32 %v583, 4294901760
        %4312 = vmatmul.f32.gmra.mxu0 %v4311
        %v4313 = vpop.f32.mrf.mxu0
        %v4314 = vadd.f32 %v4165, %v4313
        %v4315 = vand.u32 %v586, 4294901760
        %4316 = vmatmul.f32.gmra.mxu0 %v4315
        %v4317 = vpop.f32.mrf.mxu0
        %v4318 = vadd.f32 %v4173, %v4317
        %v4319 = vand.u32 %v589, 4294901760
        %4320 = vmatmul.f32.gmra.mxu0 %v4319
        %v4321 = vpop.f32.mrf.mxu0
        %v4322 = vadd.f32 %v4181, %v4321
        %v4323 = vand.u32 %v592, 4294901760
        %4324 = vmatmul.f32.gmra.mxu0 %v4323
        %v4325 = vpop.f32.mrf.mxu0
        %v4326 = vadd.f32 %v4189, %v4325
        %4327 = vdwg.mxu0
        %v4328 = vand.u32 %v880, 4294901760
        %v4329 = vsub.f32 %v880, %v4328
        %4330 = vmatpush.xpose.msra.mxu0 %v4329
        %v4331 = vand.u32 %v877, 4294901760
        %v4332 = vsub.f32 %v877, %v4331
        %4333 = vmatpush.xpose.msra.mxu0 %v4332
        %v4334 = vand.u32 %v874, 4294901760
        %v4335 = vsub.f32 %v874, %v4334
        %4336 = vmatpush.xpose.msra.mxu0 %v4335
        %v4337 = vand.u32 %v871, 4294901760
        %v4338 = vsub.f32 %v871, %v4337
        %4339 = vmatpush.xpose.msra.mxu0 %v4338
        %v4340 = vand.u32 %v868, 4294901760
        %v4341 = vsub.f32 %v868, %v4340
        %4342 = vmatpush.xpose.msra.mxu0 %v4341
        %v4343 = vand.u32 %v865, 4294901760
        %v4344 = vsub.f32 %v865, %v4343
        %4345 = vmatpush.xpose.msra.mxu0 %v4344
        %v4346 = vand.u32 %v862, 4294901760
        %v4347 = vsub.f32 %v862, %v4346
        %4348 = vmatpush.xpose.msra.mxu0 %v4347
        %v4349 = vand.u32 %v859, 4294901760
        %v4350 = vsub.f32 %v859, %v4349
        %4351 = vmatpush.xpose.msra.mxu0 %v4350
        %v4352 = vand.u32 %v856, 4294901760
        %v4353 = vsub.f32 %v856, %v4352
        %4354 = vmatpush.xpose.msra.mxu0 %v4353
        %v4355 = vand.u32 %v853, 4294901760
        %v4356 = vsub.f32 %v853, %v4355
        %4357 = vmatpush.xpose.msra.mxu0 %v4356
        %v4358 = vand.u32 %v850, 4294901760
        %v4359 = vsub.f32 %v850, %v4358
        %4360 = vmatpush.xpose.msra.mxu0 %v4359
        %v4361 = vand.u32 %v847, 4294901760
        %v4362 = vsub.f32 %v847, %v4361
        %4363 = vmatpush.xpose.msra.mxu0 %v4362
        %v4364 = vand.u32 %v844, 4294901760
        %v4365 = vsub.f32 %v844, %v4364
        %4366 = vmatpush.xpose.msra.mxu0 %v4365
        %v4367 = vand.u32 %v841, 4294901760
        %v4368 = vsub.f32 %v841, %v4367
        %4369 = vmatpush.xpose.msra.mxu0 %v4368
        %v4370 = vand.u32 %v838, 4294901760
        %v4371 = vsub.f32 %v838, %v4370
        %4372 = vmatpush.xpose.msra.mxu0 %v4371
        %v4373 = vand.u32 %v835, 4294901760
        %v4374 = vsub.f32 %v835, %v4373
        %4375 = vmatpush.xpose.msra.mxu0 %v4374
        %v4376 = vand.u32 %v565, 4294901760
        %v4377 = vsub.f32 %v565, %v4376
        %4378 = vmatmul.f32.gmra.mxu0 %v4377
        %v4379 = vpop.f32.mrf.mxu0
        %v4380 = vadd.f32 %v4290, %v4379
        %v4381 = vand.u32 %v568, 4294901760
        %v4382 = vsub.f32 %v568, %v4381
        %4383 = vmatmul.f32.gmra.mxu0 %v4382
        %v4384 = vpop.f32.mrf.mxu0
        %v4385 = vadd.f32 %v4294, %v4384
        %v4386 = vand.u32 %v571, 4294901760
        %v4387 = vsub.f32 %v571, %v4386
        %4388 = vmatmul.f32.gmra.mxu0 %v4387
        %v4389 = vpop.f32.mrf.mxu0
        %v4390 = vadd.f32 %v4298, %v4389
        %v4391 = vand.u32 %v574, 4294901760
        %v4392 = vsub.f32 %v574, %v4391
        %4393 = vmatmul.f32.gmra.mxu0 %v4392
        %v4394 = vpop.f32.mrf.mxu0
        %v4395 = vadd.f32 %v4302, %v4394
        %v4396 = vand.u32 %v577, 4294901760
        %v4397 = vsub.f32 %v577, %v4396
        %4398 = vmatmul.f32.gmra.mxu0 %v4397
        %v4399 = vpop.f32.mrf.mxu0
        %v4400 = vadd.f32 %v4306, %v4399
        %v4401 = vand.u32 %v580, 4294901760
        %v4402 = vsub.f32 %v580, %v4401
        %4403 = vmatmul.f32.gmra.mxu0 %v4402
        %v4404 = vpop.f32.mrf.mxu0
        %v4405 = vadd.f32 %v4310, %v4404
        %v4406 = vand.u32 %v583, 4294901760
        %v4407 = vsub.f32 %v583, %v4406
        %4408 = vmatmul.f32.gmra.mxu0 %v4407
        %v4409 = vpop.f32.mrf.mxu0
        %v4410 = vadd.f32 %v4314, %v4409
        %v4411 = vand.u32 %v586, 4294901760
        %v4412 = vsub.f32 %v586, %v4411
        %4413 = vmatmul.f32.gmra.mxu0 %v4412
        %v4414 = vpop.f32.mrf.mxu0
        %v4415 = vadd.f32 %v4318, %v4414
        %v4416 = vand.u32 %v589, 4294901760
        %v4417 = vsub.f32 %v589, %v4416
        %4418 = vmatmul.f32.gmra.mxu0 %v4417
        %v4419 = vpop.f32.mrf.mxu0
        %v4420 = vadd.f32 %v4322, %v4419
        %v4421 = vand.u32 %v592, 4294901760
        %v4422 = vsub.f32 %v592, %v4421
        %4423 = vmatmul.f32.gmra.mxu0 %v4422
        %v4424 = vpop.f32.mrf.mxu0
        %v4425 = vadd.f32 %v4326, %v4424
        %4426 = vdwg.mxu0
        %v4427 = vand.u32 %v880, 4294901760
        %4428 = vmatpush.xpose.msra.mxu0 %v4427
        %v4429 = vand.u32 %v877, 4294901760
        %4430 = vmatpush.xpose.msra.mxu0 %v4429
        %v4431 = vand.u32 %v874, 4294901760
        %4432 = vmatpush.xpose.msra.mxu0 %v4431
        %v4433 = vand.u32 %v871, 4294901760
        %4434 = vmatpush.xpose.msra.mxu0 %v4433
        %v4435 = vand.u32 %v868, 4294901760
        %4436 = vmatpush.xpose.msra.mxu0 %v4435
        %v4437 = vand.u32 %v865, 4294901760
        %4438 = vmatpush.xpose.msra.mxu0 %v4437
        %v4439 = vand.u32 %v862, 4294901760
        %4440 = vmatpush.xpose.msra.mxu0 %v4439
        %v4441 = vand.u32 %v859, 4294901760
        %4442 = vmatpush.xpose.msra.mxu0 %v4441
        %v4443 = vand.u32 %v856, 4294901760
        %4444 = vmatpush.xpose.msra.mxu0 %v4443
        %v4445 = vand.u32 %v853, 4294901760
        %4446 = vmatpush.xpose.msra.mxu0 %v4445
        %v4447 = vand.u32 %v850, 4294901760
        %4448 = vmatpush.xpose.msra.mxu0 %v4447
        %v4449 = vand.u32 %v847, 4294901760
        %4450 = vmatpush.xpose.msra.mxu0 %v4449
        %v4451 = vand.u32 %v844, 4294901760
        %4452 = vmatpush.xpose.msra.mxu0 %v4451
        %v4453 = vand.u32 %v841, 4294901760
        %4454 = vmatpush.xpose.msra.mxu0 %v4453
        %v4455 = vand.u32 %v838, 4294901760
        %4456 = vmatpush.xpose.msra.mxu0 %v4455
        %v4457 = vand.u32 %v835, 4294901760
        %4458 = vmatpush.xpose.msra.mxu0 %v4457
        %v4459 = vand.u32 %v565, 4294901760
        %v4460 = vsub.f32 %v565, %v4459
        %v4461 = vand.u32 %v4460, 4294901760
        %4462 = vmatmul.f32.gmra.mxu0 %v4461
        %v4463 = vpop.f32.mrf.mxu0
        %v4464 = vadd.f32 %v4380, %v4463
        %v4465 = vand.u32 %v568, 4294901760
        %v4466 = vsub.f32 %v568, %v4465
        %v4467 = vand.u32 %v4466, 4294901760
        %4468 = vmatmul.f32.gmra.mxu0 %v4467
        %v4469 = vpop.f32.mrf.mxu0
        %v4470 = vadd.f32 %v4385, %v4469
        %v4471 = vand.u32 %v571, 4294901760
        %v4472 = vsub.f32 %v571, %v4471
        %v4473 = vand.u32 %v4472, 4294901760
        %4474 = vmatmul.f32.gmra.mxu0 %v4473
        %v4475 = vpop.f32.mrf.mxu0
        %v4476 = vadd.f32 %v4390, %v4475
        %v4477 = vand.u32 %v574, 4294901760
        %v4478 = vsub.f32 %v574, %v4477
        %v4479 = vand.u32 %v4478, 4294901760
        %4480 = vmatmul.f32.gmra.mxu0 %v4479
        %v4481 = vpop.f32.mrf.mxu0
        %v4482 = vadd.f32 %v4395, %v4481
        %v4483 = vand.u32 %v577, 4294901760
        %v4484 = vsub.f32 %v577, %v4483
        %v4485 = vand.u32 %v4484, 4294901760
        %4486 = vmatmul.f32.gmra.mxu0 %v4485
        %v4487 = vpop.f32.mrf.mxu0
        %v4488 = vadd.f32 %v4400, %v4487
        %v4489 = vand.u32 %v580, 4294901760
        %v4490 = vsub.f32 %v580, %v4489
        %v4491 = vand.u32 %v4490, 4294901760
        %4492 = vmatmul.f32.gmra.mxu0 %v4491
        %v4493 = vpop.f32.mrf.mxu0
        %v4494 = vadd.f32 %v4405, %v4493
        %v4495 = vand.u32 %v583, 4294901760
        %v4496 = vsub.f32 %v583, %v4495
        %v4497 = vand.u32 %v4496, 4294901760
        %4498 = vmatmul.f32.gmra.mxu0 %v4497
        %v4499 = vpop.f32.mrf.mxu0
        %v4500 = vadd.f32 %v4410, %v4499
        %v4501 = vand.u32 %v586, 4294901760
        %v4502 = vsub.f32 %v586, %v4501
        %v4503 = vand.u32 %v4502, 4294901760
        %4504 = vmatmul.f32.gmra.mxu0 %v4503
        %v4505 = vpop.f32.mrf.mxu0
        %v4506 = vadd.f32 %v4415, %v4505
        %v4507 = vand.u32 %v589, 4294901760
        %v4508 = vsub.f32 %v589, %v4507
        %v4509 = vand.u32 %v4508, 4294901760
        %4510 = vmatmul.f32.gmra.mxu0 %v4509
        %v4511 = vpop.f32.mrf.mxu0
        %v4512 = vadd.f32 %v4420, %v4511
        %v4513 = vand.u32 %v592, 4294901760
        %v4514 = vsub.f32 %v592, %v4513
        %v4515 = vand.u32 %v4514, 4294901760
        %4516 = vmatmul.f32.gmra.mxu0 %v4515
        %v4517 = vpop.f32.mrf.mxu0
        %v4518 = vadd.f32 %v4425, %v4517
        %4519 = vdwg.mxu0
        %v4520 = vand.u32 %v880, 4294901760
        %v4521 = vsub.f32 %v880, %v4520
        %v4522 = vand.u32 %v4521, 4294901760
        %4523 = vmatpush.xpose.msra.mxu0 %v4522
        %v4524 = vand.u32 %v877, 4294901760
        %v4525 = vsub.f32 %v877, %v4524
        %v4526 = vand.u32 %v4525, 4294901760
        %4527 = vmatpush.xpose.msra.mxu0 %v4526
        %v4528 = vand.u32 %v874, 4294901760
        %v4529 = vsub.f32 %v874, %v4528
        %v4530 = vand.u32 %v4529, 4294901760
        %4531 = vmatpush.xpose.msra.mxu0 %v4530
        %v4532 = vand.u32 %v871, 4294901760
        %v4533 = vsub.f32 %v871, %v4532
        %v4534 = vand.u32 %v4533, 4294901760
        %4535 = vmatpush.xpose.msra.mxu0 %v4534
        %v4536 = vand.u32 %v868, 4294901760
        %v4537 = vsub.f32 %v868, %v4536
        %v4538 = vand.u32 %v4537, 4294901760
        %4539 = vmatpush.xpose.msra.mxu0 %v4538
        %v4540 = vand.u32 %v865, 4294901760
        %v4541 = vsub.f32 %v865, %v4540
        %v4542 = vand.u32 %v4541, 4294901760
        %4543 = vmatpush.xpose.msra.mxu0 %v4542
        %v4544 = vand.u32 %v862, 4294901760
        %v4545 = vsub.f32 %v862, %v4544
        %v4546 = vand.u32 %v4545, 4294901760
        %4547 = vmatpush.xpose.msra.mxu0 %v4546
        %v4548 = vand.u32 %v859, 4294901760
        %v4549 = vsub.f32 %v859, %v4548
        %v4550 = vand.u32 %v4549, 4294901760
        %4551 = vmatpush.xpose.msra.mxu0 %v4550
        %v4552 = vand.u32 %v856, 4294901760
        %v4553 = vsub.f32 %v856, %v4552
        %v4554 = vand.u32 %v4553, 4294901760
        %4555 = vmatpush.xpose.msra.mxu0 %v4554
        %v4556 = vand.u32 %v853, 4294901760
        %v4557 = vsub.f32 %v853, %v4556
        %v4558 = vand.u32 %v4557, 4294901760
        %4559 = vmatpush.xpose.msra.mxu0 %v4558
        %v4560 = vand.u32 %v850, 4294901760
        %v4561 = vsub.f32 %v850, %v4560
        %v4562 = vand.u32 %v4561, 4294901760
        %4563 = vmatpush.xpose.msra.mxu0 %v4562
        %v4564 = vand.u32 %v847, 4294901760
        %v4565 = vsub.f32 %v847, %v4564
        %v4566 = vand.u32 %v4565, 4294901760
        %4567 = vmatpush.xpose.msra.mxu0 %v4566
        %v4568 = vand.u32 %v844, 4294901760
        %v4569 = vsub.f32 %v844, %v4568
        %v4570 = vand.u32 %v4569, 4294901760
        %4571 = vmatpush.xpose.msra.mxu0 %v4570
        %v4572 = vand.u32 %v841, 4294901760
        %v4573 = vsub.f32 %v841, %v4572
        %v4574 = vand.u32 %v4573, 4294901760
        %4575 = vmatpush.xpose.msra.mxu0 %v4574
        %v4576 = vand.u32 %v838, 4294901760
        %v4577 = vsub.f32 %v838, %v4576
        %v4578 = vand.u32 %v4577, 4294901760
        %4579 = vmatpush.xpose.msra.mxu0 %v4578
        %v4580 = vand.u32 %v835, 4294901760
        %v4581 = vsub.f32 %v835, %v4580
        %v4582 = vand.u32 %v4581, 4294901760
        %4583 = vmatpush.xpose.msra.mxu0 %v4582
        %v4584 = vand.u32 %v565, 4294901760
        %4585 = vmatmul.f32.gmra.mxu0 %v4584
        %v4586 = vpop.f32.mrf.mxu0
        %v4587 = vadd.f32 %v4464, %v4586
        %v4588 = vand.u32 %v568, 4294901760
        %4589 = vmatmul.f32.gmra.mxu0 %v4588
        %v4590 = vpop.f32.mrf.mxu0
        %v4591 = vadd.f32 %v4470, %v4590
        %v4592 = vand.u32 %v571, 4294901760
        %4593 = vmatmul.f32.gmra.mxu0 %v4592
        %v4594 = vpop.f32.mrf.mxu0
        %v4595 = vadd.f32 %v4476, %v4594
        %v4596 = vand.u32 %v574, 4294901760
        %4597 = vmatmul.f32.gmra.mxu0 %v4596
        %v4598 = vpop.f32.mrf.mxu0
        %v4599 = vadd.f32 %v4482, %v4598
        %v4600 = vand.u32 %v577, 4294901760
        %4601 = vmatmul.f32.gmra.mxu0 %v4600
        %v4602 = vpop.f32.mrf.mxu0
        %v4603 = vadd.f32 %v4488, %v4602
        %v4604 = vand.u32 %v580, 4294901760
        %4605 = vmatmul.f32.gmra.mxu0 %v4604
        %v4606 = vpop.f32.mrf.mxu0
        %v4607 = vadd.f32 %v4494, %v4606
        %v4608 = vand.u32 %v583, 4294901760
        %4609 = vmatmul.f32.gmra.mxu0 %v4608
        %v4610 = vpop.f32.mrf.mxu0
        %v4611 = vadd.f32 %v4500, %v4610
        %v4612 = vand.u32 %v586, 4294901760
        %4613 = vmatmul.f32.gmra.mxu0 %v4612
        %v4614 = vpop.f32.mrf.mxu0
        %v4615 = vadd.f32 %v4506, %v4614
        %v4616 = vand.u32 %v589, 4294901760
        %4617 = vmatmul.f32.gmra.mxu0 %v4616
        %v4618 = vpop.f32.mrf.mxu0
        %v4619 = vadd.f32 %v4512, %v4618
        %v4620 = vand.u32 %v592, 4294901760
        %4621 = vmatmul.f32.gmra.mxu0 %v4620
        %v4622 = vpop.f32.mrf.mxu0
        %v4623 = vadd.f32 %v4518, %v4622
        %4624 = vdwg.mxu0
        %v4625 = vand.u32 %v880, 4294901760
        %4626 = vmatpush.xpose.msra.mxu0 %v4625
        %v4627 = vand.u32 %v877, 4294901760
        %4628 = vmatpush.xpose.msra.mxu0 %v4627
        %v4629 = vand.u32 %v874, 4294901760
        %4630 = vmatpush.xpose.msra.mxu0 %v4629
        %v4631 = vand.u32 %v871, 4294901760
        %4632 = vmatpush.xpose.msra.mxu0 %v4631
        %v4633 = vand.u32 %v868, 4294901760
        %4634 = vmatpush.xpose.msra.mxu0 %v4633
        %v4635 = vand.u32 %v865, 4294901760
        %4636 = vmatpush.xpose.msra.mxu0 %v4635
        %v4637 = vand.u32 %v862, 4294901760
        %4638 = vmatpush.xpose.msra.mxu0 %v4637
        %v4639 = vand.u32 %v859, 4294901760
        %4640 = vmatpush.xpose.msra.mxu0 %v4639
        %v4641 = vand.u32 %v856, 4294901760
        %4642 = vmatpush.xpose.msra.mxu0 %v4641
        %v4643 = vand.u32 %v853, 4294901760
        %4644 = vmatpush.xpose.msra.mxu0 %v4643
        %v4645 = vand.u32 %v850, 4294901760
        %4646 = vmatpush.xpose.msra.mxu0 %v4645
        %v4647 = vand.u32 %v847, 4294901760
        %4648 = vmatpush.xpose.msra.mxu0 %v4647
        %v4649 = vand.u32 %v844, 4294901760
        %4650 = vmatpush.xpose.msra.mxu0 %v4649
        %v4651 = vand.u32 %v841, 4294901760
        %4652 = vmatpush.xpose.msra.mxu0 %v4651
        %v4653 = vand.u32 %v838, 4294901760
        %4654 = vmatpush.xpose.msra.mxu0 %v4653
        %v4655 = vand.u32 %v835, 4294901760
        %4656 = vmatpush.xpose.msra.mxu0 %v4655
        %v4657 = vand.u32 %v565, 4294901760
        %4658 = vmatmul.f32.gmra.mxu0 %v4657
        %v4659 = vpop.f32.mrf.mxu0
        %v4660 = vadd.f32 %v4587, %v4659
        %v4661 = vand.u32 %v568, 4294901760
        %4662 = vmatmul.f32.gmra.mxu0 %v4661
        %v4663 = vpop.f32.mrf.mxu0
        %v4664 = vadd.f32 %v4591, %v4663
        %v4665 = vand.u32 %v571, 4294901760
        %4666 = vmatmul.f32.gmra.mxu0 %v4665
        %v4667 = vpop.f32.mrf.mxu0
        %v4668 = vadd.f32 %v4595, %v4667
        %v4669 = vand.u32 %v574, 4294901760
        %4670 = vmatmul.f32.gmra.mxu0 %v4669
        %v4671 = vpop.f32.mrf.mxu0
        %v4672 = vadd.f32 %v4599, %v4671
        %v4673 = vand.u32 %v577, 4294901760
        %4674 = vmatmul.f32.gmra.mxu0 %v4673
        %v4675 = vpop.f32.mrf.mxu0
        %v4676 = vadd.f32 %v4603, %v4675
        %v4677 = vand.u32 %v580, 4294901760
        %4678 = vmatmul.f32.gmra.mxu0 %v4677
        %v4679 = vpop.f32.mrf.mxu0
        %v4680 = vadd.f32 %v4607, %v4679
        %v4681 = vand.u32 %v583, 4294901760
        %4682 = vmatmul.f32.gmra.mxu0 %v4681
        %v4683 = vpop.f32.mrf.mxu0
        %v4684 = vadd.f32 %v4611, %v4683
        %v4685 = vand.u32 %v586, 4294901760
        %4686 = vmatmul.f32.gmra.mxu0 %v4685
        %v4687 = vpop.f32.mrf.mxu0
        %v4688 = vadd.f32 %v4615, %v4687
        %v4689 = vand.u32 %v589, 4294901760
        %4690 = vmatmul.f32.gmra.mxu0 %v4689
        %v4691 = vpop.f32.mrf.mxu0
        %v4692 = vadd.f32 %v4619, %v4691
        %v4693 = vand.u32 %v592, 4294901760
        %4694 = vmatmul.f32.gmra.mxu0 %v4693
        %v4695 = vpop.f32.mrf.mxu0
        %v4696 = vadd.f32 %v4623, %v4695
        %4697 = vdwg.mxu0
        %v4698 = vand.u32 %v928, 4294901760
        %4699 = vmatpush.xpose.msra.mxu0 %v4698
        %v4700 = vand.u32 %v925, 4294901760
        %4701 = vmatpush.xpose.msra.mxu0 %v4700
        %v4702 = vand.u32 %v922, 4294901760
        %4703 = vmatpush.xpose.msra.mxu0 %v4702
        %v4704 = vand.u32 %v919, 4294901760
        %4705 = vmatpush.xpose.msra.mxu0 %v4704
        %v4706 = vand.u32 %v916, 4294901760
        %4707 = vmatpush.xpose.msra.mxu0 %v4706
        %v4708 = vand.u32 %v913, 4294901760
        %4709 = vmatpush.xpose.msra.mxu0 %v4708
        %v4710 = vand.u32 %v910, 4294901760
        %4711 = vmatpush.xpose.msra.mxu0 %v4710
        %v4712 = vand.u32 %v907, 4294901760
        %4713 = vmatpush.xpose.msra.mxu0 %v4712
        %v4714 = vand.u32 %v904, 4294901760
        %4715 = vmatpush.xpose.msra.mxu0 %v4714
        %v4716 = vand.u32 %v901, 4294901760
        %4717 = vmatpush.xpose.msra.mxu0 %v4716
        %v4718 = vand.u32 %v898, 4294901760
        %4719 = vmatpush.xpose.msra.mxu0 %v4718
        %v4720 = vand.u32 %v895, 4294901760
        %4721 = vmatpush.xpose.msra.mxu0 %v4720
        %v4722 = vand.u32 %v892, 4294901760
        %4723 = vmatpush.xpose.msra.mxu0 %v4722
        %v4724 = vand.u32 %v889, 4294901760
        %4725 = vmatpush.xpose.msra.mxu0 %v4724
        %v4726 = vand.u32 %v886, 4294901760
        %4727 = vmatpush.xpose.msra.mxu0 %v4726
        %v4728 = vand.u32 %v883, 4294901760
        %4729 = vmatpush.xpose.msra.mxu0 %v4728
        %v4730 = vand.u32 %v565, 4294901760
        %v4731 = vsub.f32 %v565, %v4730
        %v4732 = vand.u32 %v4731, 4294901760
        %v4733 = vsub.f32 %v4731, %v4732
        %v4734 = vand.u32 %v4733, 4294901760
        %4735 = vmatmul.f32.gmra.mxu0 %v4734
        %v4736 = vpop.f32.mrf.mxu0
        %v4737 = vadd.f32 0.0, %v4736
        %v4738 = vand.u32 %v568, 4294901760
        %v4739 = vsub.f32 %v568, %v4738
        %v4740 = vand.u32 %v4739, 4294901760
        %v4741 = vsub.f32 %v4739, %v4740
        %v4742 = vand.u32 %v4741, 4294901760
        %4743 = vmatmul.f32.gmra.mxu0 %v4742
        %v4744 = vpop.f32.mrf.mxu0
        %v4745 = vadd.f32 0.0, %v4744
        %v4746 = vand.u32 %v571, 4294901760
        %v4747 = vsub.f32 %v571, %v4746
        %v4748 = vand.u32 %v4747, 4294901760
        %v4749 = vsub.f32 %v4747, %v4748
        %v4750 = vand.u32 %v4749, 4294901760
        %4751 = vmatmul.f32.gmra.mxu0 %v4750
        %v4752 = vpop.f32.mrf.mxu0
        %v4753 = vadd.f32 0.0, %v4752
        %v4754 = vand.u32 %v574, 4294901760
        %v4755 = vsub.f32 %v574, %v4754
        %v4756 = vand.u32 %v4755, 4294901760
        %v4757 = vsub.f32 %v4755, %v4756
        %v4758 = vand.u32 %v4757, 4294901760
        %4759 = vmatmul.f32.gmra.mxu0 %v4758
        %v4760 = vpop.f32.mrf.mxu0
        %v4761 = vadd.f32 0.0, %v4760
        %v4762 = vand.u32 %v577, 4294901760
        %v4763 = vsub.f32 %v577, %v4762
        %v4764 = vand.u32 %v4763, 4294901760
        %v4765 = vsub.f32 %v4763, %v4764
        %v4766 = vand.u32 %v4765, 4294901760
        %4767 = vmatmul.f32.gmra.mxu0 %v4766
        %v4768 = vpop.f32.mrf.mxu0
        %v4769 = vadd.f32 0.0, %v4768
        %v4770 = vand.u32 %v580, 4294901760
        %v4771 = vsub.f32 %v580, %v4770
        %v4772 = vand.u32 %v4771, 4294901760
        %v4773 = vsub.f32 %v4771, %v4772
        %v4774 = vand.u32 %v4773, 4294901760
        %4775 = vmatmul.f32.gmra.mxu0 %v4774
        %v4776 = vpop.f32.mrf.mxu0
        %v4777 = vadd.f32 0.0, %v4776
        %v4778 = vand.u32 %v583, 4294901760
        %v4779 = vsub.f32 %v583, %v4778
        %v4780 = vand.u32 %v4779, 4294901760
        %v4781 = vsub.f32 %v4779, %v4780
        %v4782 = vand.u32 %v4781, 4294901760
        %4783 = vmatmul.f32.gmra.mxu0 %v4782
        %v4784 = vpop.f32.mrf.mxu0
        %v4785 = vadd.f32 0.0, %v4784
        %v4786 = vand.u32 %v586, 4294901760
        %v4787 = vsub.f32 %v586, %v4786
        %v4788 = vand.u32 %v4787, 4294901760
        %v4789 = vsub.f32 %v4787, %v4788
        %v4790 = vand.u32 %v4789, 4294901760
        %4791 = vmatmul.f32.gmra.mxu0 %v4790
        %v4792 = vpop.f32.mrf.mxu0
        %v4793 = vadd.f32 0.0, %v4792
        %v4794 = vand.u32 %v589, 4294901760
        %v4795 = vsub.f32 %v589, %v4794
        %v4796 = vand.u32 %v4795, 4294901760
        %v4797 = vsub.f32 %v4795, %v4796
        %v4798 = vand.u32 %v4797, 4294901760
        %4799 = vmatmul.f32.gmra.mxu0 %v4798
        %v4800 = vpop.f32.mrf.mxu0
        %v4801 = vadd.f32 0.0, %v4800
        %v4802 = vand.u32 %v592, 4294901760
        %v4803 = vsub.f32 %v592, %v4802
        %v4804 = vand.u32 %v4803, 4294901760
        %v4805 = vsub.f32 %v4803, %v4804
        %v4806 = vand.u32 %v4805, 4294901760
        %4807 = vmatmul.f32.gmra.mxu0 %v4806
        %v4808 = vpop.f32.mrf.mxu0
        %v4809 = vadd.f32 0.0, %v4808
        %4810 = vdwg.mxu0
        %v4811 = vand.u32 %v928, 4294901760
        %v4812 = vsub.f32 %v928, %v4811
        %v4813 = vand.u32 %v4812, 4294901760
        %v4814 = vsub.f32 %v4812, %v4813
        %v4815 = vand.u32 %v4814, 4294901760
        %4816 = vmatpush.xpose.msra.mxu0 %v4815
        %v4817 = vand.u32 %v925, 4294901760
        %v4818 = vsub.f32 %v925, %v4817
        %v4819 = vand.u32 %v4818, 4294901760
        %v4820 = vsub.f32 %v4818, %v4819
        %v4821 = vand.u32 %v4820, 4294901760
        %4822 = vmatpush.xpose.msra.mxu0 %v4821
        %v4823 = vand.u32 %v922, 4294901760
        %v4824 = vsub.f32 %v922, %v4823
        %v4825 = vand.u32 %v4824, 4294901760
        %v4826 = vsub.f32 %v4824, %v4825
        %v4827 = vand.u32 %v4826, 4294901760
        %4828 = vmatpush.xpose.msra.mxu0 %v4827
        %v4829 = vand.u32 %v919, 4294901760
        %v4830 = vsub.f32 %v919, %v4829
        %v4831 = vand.u32 %v4830, 4294901760
        %v4832 = vsub.f32 %v4830, %v4831
        %v4833 = vand.u32 %v4832, 4294901760
        %4834 = vmatpush.xpose.msra.mxu0 %v4833
        %v4835 = vand.u32 %v916, 4294901760
        %v4836 = vsub.f32 %v916, %v4835
        %v4837 = vand.u32 %v4836, 4294901760
        %v4838 = vsub.f32 %v4836, %v4837
        %v4839 = vand.u32 %v4838, 4294901760
        %4840 = vmatpush.xpose.msra.mxu0 %v4839
        %v4841 = vand.u32 %v913, 4294901760
        %v4842 = vsub.f32 %v913, %v4841
        %v4843 = vand.u32 %v4842, 4294901760
        %v4844 = vsub.f32 %v4842, %v4843
        %v4845 = vand.u32 %v4844, 4294901760
        %4846 = vmatpush.xpose.msra.mxu0 %v4845
        %v4847 = vand.u32 %v910, 4294901760
        %v4848 = vsub.f32 %v910, %v4847
        %v4849 = vand.u32 %v4848, 4294901760
        %v4850 = vsub.f32 %v4848, %v4849
        %v4851 = vand.u32 %v4850, 4294901760
        %4852 = vmatpush.xpose.msra.mxu0 %v4851
        %v4853 = vand.u32 %v907, 4294901760
        %v4854 = vsub.f32 %v907, %v4853
        %v4855 = vand.u32 %v4854, 4294901760
        %v4856 = vsub.f32 %v4854, %v4855
        %v4857 = vand.u32 %v4856, 4294901760
        %4858 = vmatpush.xpose.msra.mxu0 %v4857
        %v4859 = vand.u32 %v904, 4294901760
        %v4860 = vsub.f32 %v904, %v4859
        %v4861 = vand.u32 %v4860, 4294901760
        %v4862 = vsub.f32 %v4860, %v4861
        %v4863 = vand.u32 %v4862, 4294901760
        %4864 = vmatpush.xpose.msra.mxu0 %v4863
        %v4865 = vand.u32 %v901, 4294901760
        %v4866 = vsub.f32 %v901, %v4865
        %v4867 = vand.u32 %v4866, 4294901760
        %v4868 = vsub.f32 %v4866, %v4867
        %v4869 = vand.u32 %v4868, 4294901760
        %4870 = vmatpush.xpose.msra.mxu0 %v4869
        %v4871 = vand.u32 %v898, 4294901760
        %v4872 = vsub.f32 %v898, %v4871
        %v4873 = vand.u32 %v4872, 4294901760
        %v4874 = vsub.f32 %v4872, %v4873
        %v4875 = vand.u32 %v4874, 4294901760
        %4876 = vmatpush.xpose.msra.mxu0 %v4875
        %v4877 = vand.u32 %v895, 4294901760
        %v4878 = vsub.f32 %v895, %v4877
        %v4879 = vand.u32 %v4878, 4294901760
        %v4880 = vsub.f32 %v4878, %v4879
        %v4881 = vand.u32 %v4880, 4294901760
        %4882 = vmatpush.xpose.msra.mxu0 %v4881
        %v4883 = vand.u32 %v892, 4294901760
        %v4884 = vsub.f32 %v892, %v4883
        %v4885 = vand.u32 %v4884, 4294901760
        %v4886 = vsub.f32 %v4884, %v4885
        %v4887 = vand.u32 %v4886, 4294901760
        %4888 = vmatpush.xpose.msra.mxu0 %v4887
        %v4889 = vand.u32 %v889, 4294901760
        %v4890 = vsub.f32 %v889, %v4889
        %v4891 = vand.u32 %v4890, 4294901760
        %v4892 = vsub.f32 %v4890, %v4891
        %v4893 = vand.u32 %v4892, 4294901760
        %4894 = vmatpush.xpose.msra.mxu0 %v4893
        %v4895 = vand.u32 %v886, 4294901760
        %v4896 = vsub.f32 %v886, %v4895
        %v4897 = vand.u32 %v4896, 4294901760
        %v4898 = vsub.f32 %v4896, %v4897
        %v4899 = vand.u32 %v4898, 4294901760
        %4900 = vmatpush.xpose.msra.mxu0 %v4899
        %v4901 = vand.u32 %v883, 4294901760
        %v4902 = vsub.f32 %v883, %v4901
        %v4903 = vand.u32 %v4902, 4294901760
        %v4904 = vsub.f32 %v4902, %v4903
        %v4905 = vand.u32 %v4904, 4294901760
        %4906 = vmatpush.xpose.msra.mxu0 %v4905
        %v4907 = vand.u32 %v565, 4294901760
        %4908 = vmatmul.f32.gmra.mxu0 %v4907
        %v4909 = vpop.f32.mrf.mxu0
        %v4910 = vadd.f32 %v4737, %v4909
        %v4911 = vand.u32 %v568, 4294901760
        %4912 = vmatmul.f32.gmra.mxu0 %v4911
        %v4913 = vpop.f32.mrf.mxu0
        %v4914 = vadd.f32 %v4745, %v4913
        %v4915 = vand.u32 %v571, 4294901760
        %4916 = vmatmul.f32.gmra.mxu0 %v4915
        %v4917 = vpop.f32.mrf.mxu0
        %v4918 = vadd.f32 %v4753, %v4917
        %v4919 = vand.u32 %v574, 4294901760
        %4920 = vmatmul.f32.gmra.mxu0 %v4919
        %v4921 = vpop.f32.mrf.mxu0
        %v4922 = vadd.f32 %v4761, %v4921
        %v4923 = vand.u32 %v577, 4294901760
        %4924 = vmatmul.f32.gmra.mxu0 %v4923
        %v4925 = vpop.f32.mrf.mxu0
        %v4926 = vadd.f32 %v4769, %v4925
        %v4927 = vand.u32 %v580, 4294901760
        %4928 = vmatmul.f32.gmra.mxu0 %v4927
        %v4929 = vpop.f32.mrf.mxu0
        %v4930 = vadd.f32 %v4777, %v4929
        %v4931 = vand.u32 %v583, 4294901760
        %4932 = vmatmul.f32.gmra.mxu0 %v4931
        %v4933 = vpop.f32.mrf.mxu0
        %v4934 = vadd.f32 %v4785, %v4933
        %v4935 = vand.u32 %v586, 4294901760
        %4936 = vmatmul.f32.gmra.mxu0 %v4935
        %v4937 = vpop.f32.mrf.mxu0
        %v4938 = vadd.f32 %v4793, %v4937
        %v4939 = vand.u32 %v589, 4294901760
        %4940 = vmatmul.f32.gmra.mxu0 %v4939
        %v4941 = vpop.f32.mrf.mxu0
        %v4942 = vadd.f32 %v4801, %v4941
        %v4943 = vand.u32 %v592, 4294901760
        %4944 = vmatmul.f32.gmra.mxu0 %v4943
        %v4945 = vpop.f32.mrf.mxu0
        %v4946 = vadd.f32 %v4809, %v4945
        %4947 = vdwg.mxu0
        %v4948 = vand.u32 %v928, 4294901760
        %v4949 = vsub.f32 %v928, %v4948
        %4950 = vmatpush.xpose.msra.mxu0 %v4949
        %v4951 = vand.u32 %v925, 4294901760
        %v4952 = vsub.f32 %v925, %v4951
        %4953 = vmatpush.xpose.msra.mxu0 %v4952
        %v4954 = vand.u32 %v922, 4294901760
        %v4955 = vsub.f32 %v922, %v4954
        %4956 = vmatpush.xpose.msra.mxu0 %v4955
        %v4957 = vand.u32 %v919, 4294901760
        %v4958 = vsub.f32 %v919, %v4957
        %4959 = vmatpush.xpose.msra.mxu0 %v4958
        %v4960 = vand.u32 %v916, 4294901760
        %v4961 = vsub.f32 %v916, %v4960
        %4962 = vmatpush.xpose.msra.mxu0 %v4961
        %v4963 = vand.u32 %v913, 4294901760
        %v4964 = vsub.f32 %v913, %v4963
        %4965 = vmatpush.xpose.msra.mxu0 %v4964
        %v4966 = vand.u32 %v910, 4294901760
        %v4967 = vsub.f32 %v910, %v4966
        %4968 = vmatpush.xpose.msra.mxu0 %v4967
        %v4969 = vand.u32 %v907, 4294901760
        %v4970 = vsub.f32 %v907, %v4969
        %4971 = vmatpush.xpose.msra.mxu0 %v4970
        %v4972 = vand.u32 %v904, 4294901760
        %v4973 = vsub.f32 %v904, %v4972
        %4974 = vmatpush.xpose.msra.mxu0 %v4973
        %v4975 = vand.u32 %v901, 4294901760
        %v4976 = vsub.f32 %v901, %v4975
        %4977 = vmatpush.xpose.msra.mxu0 %v4976
        %v4978 = vand.u32 %v898, 4294901760
        %v4979 = vsub.f32 %v898, %v4978
        %4980 = vmatpush.xpose.msra.mxu0 %v4979
        %v4981 = vand.u32 %v895, 4294901760
        %v4982 = vsub.f32 %v895, %v4981
        %4983 = vmatpush.xpose.msra.mxu0 %v4982
        %v4984 = vand.u32 %v892, 4294901760
        %v4985 = vsub.f32 %v892, %v4984
        %4986 = vmatpush.xpose.msra.mxu0 %v4985
        %v4987 = vand.u32 %v889, 4294901760
        %v4988 = vsub.f32 %v889, %v4987
        %4989 = vmatpush.xpose.msra.mxu0 %v4988
        %v4990 = vand.u32 %v886, 4294901760
        %v4991 = vsub.f32 %v886, %v4990
        %4992 = vmatpush.xpose.msra.mxu0 %v4991
        %v4993 = vand.u32 %v883, 4294901760
        %v4994 = vsub.f32 %v883, %v4993
        %4995 = vmatpush.xpose.msra.mxu0 %v4994
        %v4996 = vand.u32 %v565, 4294901760
        %v4997 = vsub.f32 %v565, %v4996
        %4998 = vmatmul.f32.gmra.mxu0 %v4997
        %v4999 = vpop.f32.mrf.mxu0
        %v5000 = vadd.f32 %v4910, %v4999
        %v5001 = vand.u32 %v568, 4294901760
        %v5002 = vsub.f32 %v568, %v5001
        %5003 = vmatmul.f32.gmra.mxu0 %v5002
        %v5004 = vpop.f32.mrf.mxu0
        %v5005 = vadd.f32 %v4914, %v5004
        %v5006 = vand.u32 %v571, 4294901760
        %v5007 = vsub.f32 %v571, %v5006
        %5008 = vmatmul.f32.gmra.mxu0 %v5007
        %v5009 = vpop.f32.mrf.mxu0
        %v5010 = vadd.f32 %v4918, %v5009
        %v5011 = vand.u32 %v574, 4294901760
        %v5012 = vsub.f32 %v574, %v5011
        %5013 = vmatmul.f32.gmra.mxu0 %v5012
        %v5014 = vpop.f32.mrf.mxu0
        %v5015 = vadd.f32 %v4922, %v5014
        %v5016 = vand.u32 %v577, 4294901760
        %v5017 = vsub.f32 %v577, %v5016
        %5018 = vmatmul.f32.gmra.mxu0 %v5017
        %v5019 = vpop.f32.mrf.mxu0
        %v5020 = vadd.f32 %v4926, %v5019
        %v5021 = vand.u32 %v580, 4294901760
        %v5022 = vsub.f32 %v580, %v5021
        %5023 = vmatmul.f32.gmra.mxu0 %v5022
        %v5024 = vpop.f32.mrf.mxu0
        %v5025 = vadd.f32 %v4930, %v5024
        %v5026 = vand.u32 %v583, 4294901760
        %v5027 = vsub.f32 %v583, %v5026
        %5028 = vmatmul.f32.gmra.mxu0 %v5027
        %v5029 = vpop.f32.mrf.mxu0
        %v5030 = vadd.f32 %v4934, %v5029
        %v5031 = vand.u32 %v586, 4294901760
        %v5032 = vsub.f32 %v586, %v5031
        %5033 = vmatmul.f32.gmra.mxu0 %v5032
        %v5034 = vpop.f32.mrf.mxu0
        %v5035 = vadd.f32 %v4938, %v5034
        %v5036 = vand.u32 %v589, 4294901760
        %v5037 = vsub.f32 %v589, %v5036
        %5038 = vmatmul.f32.gmra.mxu0 %v5037
        %v5039 = vpop.f32.mrf.mxu0
        %v5040 = vadd.f32 %v4942, %v5039
        %v5041 = vand.u32 %v592, 4294901760
        %v5042 = vsub.f32 %v592, %v5041
        %5043 = vmatmul.f32.gmra.mxu0 %v5042
        %v5044 = vpop.f32.mrf.mxu0
        %v5045 = vadd.f32 %v4946, %v5044
        %5046 = vdwg.mxu0
        %v5047 = vand.u32 %v928, 4294901760
        %5048 = vmatpush.xpose.msra.mxu0 %v5047
        %v5049 = vand.u32 %v925, 4294901760
        %5050 = vmatpush.xpose.msra.mxu0 %v5049
        %v5051 = vand.u32 %v922, 4294901760
        %5052 = vmatpush.xpose.msra.mxu0 %v5051
        %v5053 = vand.u32 %v919, 4294901760
        %5054 = vmatpush.xpose.msra.mxu0 %v5053
        %v5055 = vand.u32 %v916, 4294901760
        %5056 = vmatpush.xpose.msra.mxu0 %v5055
        %v5057 = vand.u32 %v913, 4294901760
        %5058 = vmatpush.xpose.msra.mxu0 %v5057
        %v5059 = vand.u32 %v910, 4294901760
        %5060 = vmatpush.xpose.msra.mxu0 %v5059
        %v5061 = vand.u32 %v907, 4294901760
        %5062 = vmatpush.xpose.msra.mxu0 %v5061
        %v5063 = vand.u32 %v904, 4294901760
        %5064 = vmatpush.xpose.msra.mxu0 %v5063
        %v5065 = vand.u32 %v901, 4294901760
        %5066 = vmatpush.xpose.msra.mxu0 %v5065
        %v5067 = vand.u32 %v898, 4294901760
        %5068 = vmatpush.xpose.msra.mxu0 %v5067
        %v5069 = vand.u32 %v895, 4294901760
        %5070 = vmatpush.xpose.msra.mxu0 %v5069
        %v5071 = vand.u32 %v892, 4294901760
        %5072 = vmatpush.xpose.msra.mxu0 %v5071
        %v5073 = vand.u32 %v889, 4294901760
        %5074 = vmatpush.xpose.msra.mxu0 %v5073
        %v5075 = vand.u32 %v886, 4294901760
        %5076 = vmatpush.xpose.msra.mxu0 %v5075
        %v5077 = vand.u32 %v883, 4294901760
        %5078 = vmatpush.xpose.msra.mxu0 %v5077
        %v5079 = vand.u32 %v565, 4294901760
        %v5080 = vsub.f32 %v565, %v5079
        %v5081 = vand.u32 %v5080, 4294901760
        %5082 = vmatmul.f32.gmra.mxu0 %v5081
        %v5083 = vpop.f32.mrf.mxu0
        %v5084 = vadd.f32 %v5000, %v5083
        %v5085 = vand.u32 %v568, 4294901760
        %v5086 = vsub.f32 %v568, %v5085
        %v5087 = vand.u32 %v5086, 4294901760
        %5088 = vmatmul.f32.gmra.mxu0 %v5087
        %v5089 = vpop.f32.mrf.mxu0
        %v5090 = vadd.f32 %v5005, %v5089
        %v5091 = vand.u32 %v571, 4294901760
        %v5092 = vsub.f32 %v571, %v5091
        %v5093 = vand.u32 %v5092, 4294901760
        %5094 = vmatmul.f32.gmra.mxu0 %v5093
        %v5095 = vpop.f32.mrf.mxu0
        %v5096 = vadd.f32 %v5010, %v5095
        %v5097 = vand.u32 %v574, 4294901760
        %v5098 = vsub.f32 %v574, %v5097
        %v5099 = vand.u32 %v5098, 4294901760
        %5100 = vmatmul.f32.gmra.mxu0 %v5099
        %v5101 = vpop.f32.mrf.mxu0
        %v5102 = vadd.f32 %v5015, %v5101
        %v5103 = vand.u32 %v577, 4294901760
        %v5104 = vsub.f32 %v577, %v5103
        %v5105 = vand.u32 %v5104, 4294901760
        %5106 = vmatmul.f32.gmra.mxu0 %v5105
        %v5107 = vpop.f32.mrf.mxu0
        %v5108 = vadd.f32 %v5020, %v5107
        %v5109 = vand.u32 %v580, 4294901760
        %v5110 = vsub.f32 %v580, %v5109
        %v5111 = vand.u32 %v5110, 4294901760
        %5112 = vmatmul.f32.gmra.mxu0 %v5111
        %v5113 = vpop.f32.mrf.mxu0
        %v5114 = vadd.f32 %v5025, %v5113
        %v5115 = vand.u32 %v583, 4294901760
        %v5116 = vsub.f32 %v583, %v5115
        %v5117 = vand.u32 %v5116, 4294901760
        %5118 = vmatmul.f32.gmra.mxu0 %v5117
        %v5119 = vpop.f32.mrf.mxu0
        %v5120 = vadd.f32 %v5030, %v5119
        %v5121 = vand.u32 %v586, 4294901760
        %v5122 = vsub.f32 %v586, %v5121
        %v5123 = vand.u32 %v5122, 4294901760
        %5124 = vmatmul.f32.gmra.mxu0 %v5123
        %v5125 = vpop.f32.mrf.mxu0
        %v5126 = vadd.f32 %v5035, %v5125
        %v5127 = vand.u32 %v589, 4294901760
        %v5128 = vsub.f32 %v589, %v5127
        %v5129 = vand.u32 %v5128, 4294901760
        %5130 = vmatmul.f32.gmra.mxu0 %v5129
        %v5131 = vpop.f32.mrf.mxu0
        %v5132 = vadd.f32 %v5040, %v5131
        %v5133 = vand.u32 %v592, 4294901760
        %v5134 = vsub.f32 %v592, %v5133
        %v5135 = vand.u32 %v5134, 4294901760
        %5136 = vmatmul.f32.gmra.mxu0 %v5135
        %v5137 = vpop.f32.mrf.mxu0
        %v5138 = vadd.f32 %v5045, %v5137
        %5139 = vdwg.mxu0
        %v5140 = vand.u32 %v928, 4294901760
        %v5141 = vsub.f32 %v928, %v5140
        %v5142 = vand.u32 %v5141, 4294901760
        %5143 = vmatpush.xpose.msra.mxu0 %v5142
        %v5144 = vand.u32 %v925, 4294901760
        %v5145 = vsub.f32 %v925, %v5144
        %v5146 = vand.u32 %v5145, 4294901760
        %5147 = vmatpush.xpose.msra.mxu0 %v5146
        %v5148 = vand.u32 %v922, 4294901760
        %v5149 = vsub.f32 %v922, %v5148
        %v5150 = vand.u32 %v5149, 4294901760
        %5151 = vmatpush.xpose.msra.mxu0 %v5150
        %v5152 = vand.u32 %v919, 4294901760
        %v5153 = vsub.f32 %v919, %v5152
        %v5154 = vand.u32 %v5153, 4294901760
        %5155 = vmatpush.xpose.msra.mxu0 %v5154
        %v5156 = vand.u32 %v916, 4294901760
        %v5157 = vsub.f32 %v916, %v5156
        %v5158 = vand.u32 %v5157, 4294901760
        %5159 = vmatpush.xpose.msra.mxu0 %v5158
        %v5160 = vand.u32 %v913, 4294901760
        %v5161 = vsub.f32 %v913, %v5160
        %v5162 = vand.u32 %v5161, 4294901760
        %5163 = vmatpush.xpose.msra.mxu0 %v5162
        %v5164 = vand.u32 %v910, 4294901760
        %v5165 = vsub.f32 %v910, %v5164
        %v5166 = vand.u32 %v5165, 4294901760
        %5167 = vmatpush.xpose.msra.mxu0 %v5166
        %v5168 = vand.u32 %v907, 4294901760
        %v5169 = vsub.f32 %v907, %v5168
        %v5170 = vand.u32 %v5169, 4294901760
        %5171 = vmatpush.xpose.msra.mxu0 %v5170
        %v5172 = vand.u32 %v904, 4294901760
        %v5173 = vsub.f32 %v904, %v5172
        %v5174 = vand.u32 %v5173, 4294901760
        %5175 = vmatpush.xpose.msra.mxu0 %v5174
        %v5176 = vand.u32 %v901, 4294901760
        %v5177 = vsub.f32 %v901, %v5176
        %v5178 = vand.u32 %v5177, 4294901760
        %5179 = vmatpush.xpose.msra.mxu0 %v5178
        %v5180 = vand.u32 %v898, 4294901760
        %v5181 = vsub.f32 %v898, %v5180
        %v5182 = vand.u32 %v5181, 4294901760
        %5183 = vmatpush.xpose.msra.mxu0 %v5182
        %v5184 = vand.u32 %v895, 4294901760
        %v5185 = vsub.f32 %v895, %v5184
        %v5186 = vand.u32 %v5185, 4294901760
        %5187 = vmatpush.xpose.msra.mxu0 %v5186
        %v5188 = vand.u32 %v892, 4294901760
        %v5189 = vsub.f32 %v892, %v5188
        %v5190 = vand.u32 %v5189, 4294901760
        %5191 = vmatpush.xpose.msra.mxu0 %v5190
        %v5192 = vand.u32 %v889, 4294901760
        %v5193 = vsub.f32 %v889, %v5192
        %v5194 = vand.u32 %v5193, 4294901760
        %5195 = vmatpush.xpose.msra.mxu0 %v5194
        %v5196 = vand.u32 %v886, 4294901760
        %v5197 = vsub.f32 %v886, %v5196
        %v5198 = vand.u32 %v5197, 4294901760
        %5199 = vmatpush.xpose.msra.mxu0 %v5198
        %v5200 = vand.u32 %v883, 4294901760
        %v5201 = vsub.f32 %v883, %v5200
        %v5202 = vand.u32 %v5201, 4294901760
        %5203 = vmatpush.xpose.msra.mxu0 %v5202
        %v5204 = vand.u32 %v565, 4294901760
        %5205 = vmatmul.f32.gmra.mxu0 %v5204
        %v5206 = vpop.f32.mrf.mxu0
        %v5207 = vadd.f32 %v5084, %v5206
        %v5208 = vand.u32 %v568, 4294901760
        %5209 = vmatmul.f32.gmra.mxu0 %v5208
        %v5210 = vpop.f32.mrf.mxu0
        %v5211 = vadd.f32 %v5090, %v5210
        %v5212 = vand.u32 %v571, 4294901760
        %5213 = vmatmul.f32.gmra.mxu0 %v5212
        %v5214 = vpop.f32.mrf.mxu0
        %v5215 = vadd.f32 %v5096, %v5214
        %v5216 = vand.u32 %v574, 4294901760
        %5217 = vmatmul.f32.gmra.mxu0 %v5216
        %v5218 = vpop.f32.mrf.mxu0
        %v5219 = vadd.f32 %v5102, %v5218
        %v5220 = vand.u32 %v577, 4294901760
        %5221 = vmatmul.f32.gmra.mxu0 %v5220
        %v5222 = vpop.f32.mrf.mxu0
        %v5223 = vadd.f32 %v5108, %v5222
        %v5224 = vand.u32 %v580, 4294901760
        %5225 = vmatmul.f32.gmra.mxu0 %v5224
        %v5226 = vpop.f32.mrf.mxu0
        %v5227 = vadd.f32 %v5114, %v5226
        %v5228 = vand.u32 %v583, 4294901760
        %5229 = vmatmul.f32.gmra.mxu0 %v5228
        %v5230 = vpop.f32.mrf.mxu0
        %v5231 = vadd.f32 %v5120, %v5230
        %v5232 = vand.u32 %v586, 4294901760
        %5233 = vmatmul.f32.gmra.mxu0 %v5232
        %v5234 = vpop.f32.mrf.mxu0
        %v5235 = vadd.f32 %v5126, %v5234
        %v5236 = vand.u32 %v589, 4294901760
        %5237 = vmatmul.f32.gmra.mxu0 %v5236
        %v5238 = vpop.f32.mrf.mxu0
        %v5239 = vadd.f32 %v5132, %v5238
        %v5240 = vand.u32 %v592, 4294901760
        %5241 = vmatmul.f32.gmra.mxu0 %v5240
        %v5242 = vpop.f32.mrf.mxu0
        %v5243 = vadd.f32 %v5138, %v5242
        %5244 = vdwg.mxu0
        %v5245 = vand.u32 %v928, 4294901760
        %5246 = vmatpush.xpose.msra.mxu0 %v5245
        %v5247 = vand.u32 %v925, 4294901760
        %5248 = vmatpush.xpose.msra.mxu0 %v5247
        %v5249 = vand.u32 %v922, 4294901760
        %5250 = vmatpush.xpose.msra.mxu0 %v5249
        %v5251 = vand.u32 %v919, 4294901760
        %5252 = vmatpush.xpose.msra.mxu0 %v5251
        %v5253 = vand.u32 %v916, 4294901760
        %5254 = vmatpush.xpose.msra.mxu0 %v5253
        %v5255 = vand.u32 %v913, 4294901760
        %5256 = vmatpush.xpose.msra.mxu0 %v5255
        %v5257 = vand.u32 %v910, 4294901760
        %5258 = vmatpush.xpose.msra.mxu0 %v5257
        %v5259 = vand.u32 %v907, 4294901760
        %5260 = vmatpush.xpose.msra.mxu0 %v5259
        %v5261 = vand.u32 %v904, 4294901760
        %5262 = vmatpush.xpose.msra.mxu0 %v5261
        %v5263 = vand.u32 %v901, 4294901760
        %5264 = vmatpush.xpose.msra.mxu0 %v5263
        %v5265 = vand.u32 %v898, 4294901760
        %5266 = vmatpush.xpose.msra.mxu0 %v5265
        %v5267 = vand.u32 %v895, 4294901760
        %5268 = vmatpush.xpose.msra.mxu0 %v5267
        %v5269 = vand.u32 %v892, 4294901760
        %5270 = vmatpush.xpose.msra.mxu0 %v5269
        %v5271 = vand.u32 %v889, 4294901760
        %5272 = vmatpush.xpose.msra.mxu0 %v5271
        %v5273 = vand.u32 %v886, 4294901760
        %5274 = vmatpush.xpose.msra.mxu0 %v5273
        %v5275 = vand.u32 %v883, 4294901760
        %5276 = vmatpush.xpose.msra.mxu0 %v5275
        %v5277 = vand.u32 %v565, 4294901760
        %5278 = vmatmul.f32.gmra.mxu0 %v5277
        %v5279 = vpop.f32.mrf.mxu0
        %v5280 = vadd.f32 %v5207, %v5279
        %v5281 = vand.u32 %v568, 4294901760
        %5282 = vmatmul.f32.gmra.mxu0 %v5281
        %v5283 = vpop.f32.mrf.mxu0
        %v5284 = vadd.f32 %v5211, %v5283
        %v5285 = vand.u32 %v571, 4294901760
        %5286 = vmatmul.f32.gmra.mxu0 %v5285
        %v5287 = vpop.f32.mrf.mxu0
        %v5288 = vadd.f32 %v5215, %v5287
        %v5289 = vand.u32 %v574, 4294901760
        %5290 = vmatmul.f32.gmra.mxu0 %v5289
        %v5291 = vpop.f32.mrf.mxu0
        %v5292 = vadd.f32 %v5219, %v5291
        %v5293 = vand.u32 %v577, 4294901760
        %5294 = vmatmul.f32.gmra.mxu0 %v5293
        %v5295 = vpop.f32.mrf.mxu0
        %v5296 = vadd.f32 %v5223, %v5295
        %v5297 = vand.u32 %v580, 4294901760
        %5298 = vmatmul.f32.gmra.mxu0 %v5297
        %v5299 = vpop.f32.mrf.mxu0
        %v5300 = vadd.f32 %v5227, %v5299
        %v5301 = vand.u32 %v583, 4294901760
        %5302 = vmatmul.f32.gmra.mxu0 %v5301
        %v5303 = vpop.f32.mrf.mxu0
        %v5304 = vadd.f32 %v5231, %v5303
        %v5305 = vand.u32 %v586, 4294901760
        %5306 = vmatmul.f32.gmra.mxu0 %v5305
        %v5307 = vpop.f32.mrf.mxu0
        %v5308 = vadd.f32 %v5235, %v5307
        %v5309 = vand.u32 %v589, 4294901760
        %5310 = vmatmul.f32.gmra.mxu0 %v5309
        %v5311 = vpop.f32.mrf.mxu0
        %v5312 = vadd.f32 %v5239, %v5311
        %v5313 = vand.u32 %v592, 4294901760
        %5314 = vmatmul.f32.gmra.mxu0 %v5313
        %v5315 = vpop.f32.mrf.mxu0
        %v5316 = vadd.f32 %v5243, %v5315
        %5317 = vdwg.mxu0
        %v5318 = vand.u32 %v976, 4294901760
        %5319 = vmatpush.xpose.msra.mxu0 %v5318
        %v5320 = vand.u32 %v973, 4294901760
        %5321 = vmatpush.xpose.msra.mxu0 %v5320
        %v5322 = vand.u32 %v970, 4294901760
        %5323 = vmatpush.xpose.msra.mxu0 %v5322
        %v5324 = vand.u32 %v967, 4294901760
        %5325 = vmatpush.xpose.msra.mxu0 %v5324
        %v5326 = vand.u32 %v964, 4294901760
        %5327 = vmatpush.xpose.msra.mxu0 %v5326
        %v5328 = vand.u32 %v961, 4294901760
        %5329 = vmatpush.xpose.msra.mxu0 %v5328
        %v5330 = vand.u32 %v958, 4294901760
        %5331 = vmatpush.xpose.msra.mxu0 %v5330
        %v5332 = vand.u32 %v955, 4294901760
        %5333 = vmatpush.xpose.msra.mxu0 %v5332
        %v5334 = vand.u32 %v952, 4294901760
        %5335 = vmatpush.xpose.msra.mxu0 %v5334
        %v5336 = vand.u32 %v949, 4294901760
        %5337 = vmatpush.xpose.msra.mxu0 %v5336
        %v5338 = vand.u32 %v946, 4294901760
        %5339 = vmatpush.xpose.msra.mxu0 %v5338
        %v5340 = vand.u32 %v943, 4294901760
        %5341 = vmatpush.xpose.msra.mxu0 %v5340
        %v5342 = vand.u32 %v940, 4294901760
        %5343 = vmatpush.xpose.msra.mxu0 %v5342
        %v5344 = vand.u32 %v937, 4294901760
        %5345 = vmatpush.xpose.msra.mxu0 %v5344
        %v5346 = vand.u32 %v934, 4294901760
        %5347 = vmatpush.xpose.msra.mxu0 %v5346
        %v5348 = vand.u32 %v931, 4294901760
        %5349 = vmatpush.xpose.msra.mxu0 %v5348
        %v5350 = vand.u32 %v565, 4294901760
        %v5351 = vsub.f32 %v565, %v5350
        %v5352 = vand.u32 %v5351, 4294901760
        %v5353 = vsub.f32 %v5351, %v5352
        %v5354 = vand.u32 %v5353, 4294901760
        %5355 = vmatmul.f32.gmra.mxu0 %v5354
        %v5356 = vpop.f32.mrf.mxu0
        %v5357 = vadd.f32 0.0, %v5356
        %v5358 = vand.u32 %v568, 4294901760
        %v5359 = vsub.f32 %v568, %v5358
        %v5360 = vand.u32 %v5359, 4294901760
        %v5361 = vsub.f32 %v5359, %v5360
        %v5362 = vand.u32 %v5361, 4294901760
        %5363 = vmatmul.f32.gmra.mxu0 %v5362
        %v5364 = vpop.f32.mrf.mxu0
        %v5365 = vadd.f32 0.0, %v5364
        %v5366 = vand.u32 %v571, 4294901760
        %v5367 = vsub.f32 %v571, %v5366
        %v5368 = vand.u32 %v5367, 4294901760
        %v5369 = vsub.f32 %v5367, %v5368
        %v5370 = vand.u32 %v5369, 4294901760
        %5371 = vmatmul.f32.gmra.mxu0 %v5370
        %v5372 = vpop.f32.mrf.mxu0
        %v5373 = vadd.f32 0.0, %v5372
        %v5374 = vand.u32 %v574, 4294901760
        %v5375 = vsub.f32 %v574, %v5374
        %v5376 = vand.u32 %v5375, 4294901760
        %v5377 = vsub.f32 %v5375, %v5376
        %v5378 = vand.u32 %v5377, 4294901760
        %5379 = vmatmul.f32.gmra.mxu0 %v5378
        %v5380 = vpop.f32.mrf.mxu0
        %v5381 = vadd.f32 0.0, %v5380
        %v5382 = vand.u32 %v577, 4294901760
        %v5383 = vsub.f32 %v577, %v5382
        %v5384 = vand.u32 %v5383, 4294901760
        %v5385 = vsub.f32 %v5383, %v5384
        %v5386 = vand.u32 %v5385, 4294901760
        %5387 = vmatmul.f32.gmra.mxu0 %v5386
        %v5388 = vpop.f32.mrf.mxu0
        %v5389 = vadd.f32 0.0, %v5388
        %v5390 = vand.u32 %v580, 4294901760
        %v5391 = vsub.f32 %v580, %v5390
        %v5392 = vand.u32 %v5391, 4294901760
        %v5393 = vsub.f32 %v5391, %v5392
        %v5394 = vand.u32 %v5393, 4294901760
        %5395 = vmatmul.f32.gmra.mxu0 %v5394
        %v5396 = vpop.f32.mrf.mxu0
        %v5397 = vadd.f32 0.0, %v5396
        %v5398 = vand.u32 %v583, 4294901760
        %v5399 = vsub.f32 %v583, %v5398
        %v5400 = vand.u32 %v5399, 4294901760
        %v5401 = vsub.f32 %v5399, %v5400
        %v5402 = vand.u32 %v5401, 4294901760
        %5403 = vmatmul.f32.gmra.mxu0 %v5402
        %v5404 = vpop.f32.mrf.mxu0
        %v5405 = vadd.f32 0.0, %v5404
        %v5406 = vand.u32 %v586, 4294901760
        %v5407 = vsub.f32 %v586, %v5406
        %v5408 = vand.u32 %v5407, 4294901760
        %v5409 = vsub.f32 %v5407, %v5408
        %v5410 = vand.u32 %v5409, 4294901760
        %5411 = vmatmul.f32.gmra.mxu0 %v5410
        %v5412 = vpop.f32.mrf.mxu0
        %v5413 = vadd.f32 0.0, %v5412
        %v5414 = vand.u32 %v589, 4294901760
        %v5415 = vsub.f32 %v589, %v5414
        %v5416 = vand.u32 %v5415, 4294901760
        %v5417 = vsub.f32 %v5415, %v5416
        %v5418 = vand.u32 %v5417, 4294901760
        %5419 = vmatmul.f32.gmra.mxu0 %v5418
        %v5420 = vpop.f32.mrf.mxu0
        %v5421 = vadd.f32 0.0, %v5420
        %v5422 = vand.u32 %v592, 4294901760
        %v5423 = vsub.f32 %v592, %v5422
        %v5424 = vand.u32 %v5423, 4294901760
        %v5425 = vsub.f32 %v5423, %v5424
        %v5426 = vand.u32 %v5425, 4294901760
        %5427 = vmatmul.f32.gmra.mxu0 %v5426
        %v5428 = vpop.f32.mrf.mxu0
        %v5429 = vadd.f32 0.0, %v5428
        %5430 = vdwg.mxu0
        %v5431 = vand.u32 %v976, 4294901760
        %v5432 = vsub.f32 %v976, %v5431
        %v5433 = vand.u32 %v5432, 4294901760
        %v5434 = vsub.f32 %v5432, %v5433
        %v5435 = vand.u32 %v5434, 4294901760
        %5436 = vmatpush.xpose.msra.mxu0 %v5435
        %v5437 = vand.u32 %v973, 4294901760
        %v5438 = vsub.f32 %v973, %v5437
        %v5439 = vand.u32 %v5438, 4294901760
        %v5440 = vsub.f32 %v5438, %v5439
        %v5441 = vand.u32 %v5440, 4294901760
        %5442 = vmatpush.xpose.msra.mxu0 %v5441
        %v5443 = vand.u32 %v970, 4294901760
        %v5444 = vsub.f32 %v970, %v5443
        %v5445 = vand.u32 %v5444, 4294901760
        %v5446 = vsub.f32 %v5444, %v5445
        %v5447 = vand.u32 %v5446, 4294901760
        %5448 = vmatpush.xpose.msra.mxu0 %v5447
        %v5449 = vand.u32 %v967, 4294901760
        %v5450 = vsub.f32 %v967, %v5449
        %v5451 = vand.u32 %v5450, 4294901760
        %v5452 = vsub.f32 %v5450, %v5451
        %v5453 = vand.u32 %v5452, 4294901760
        %5454 = vmatpush.xpose.msra.mxu0 %v5453
        %v5455 = vand.u32 %v964, 4294901760
        %v5456 = vsub.f32 %v964, %v5455
        %v5457 = vand.u32 %v5456, 4294901760
        %v5458 = vsub.f32 %v5456, %v5457
        %v5459 = vand.u32 %v5458, 4294901760
        %5460 = vmatpush.xpose.msra.mxu0 %v5459
        %v5461 = vand.u32 %v961, 4294901760
        %v5462 = vsub.f32 %v961, %v5461
        %v5463 = vand.u32 %v5462, 4294901760
        %v5464 = vsub.f32 %v5462, %v5463
        %v5465 = vand.u32 %v5464, 4294901760
        %5466 = vmatpush.xpose.msra.mxu0 %v5465
        %v5467 = vand.u32 %v958, 4294901760
        %v5468 = vsub.f32 %v958, %v5467
        %v5469 = vand.u32 %v5468, 4294901760
        %v5470 = vsub.f32 %v5468, %v5469
        %v5471 = vand.u32 %v5470, 4294901760
        %5472 = vmatpush.xpose.msra.mxu0 %v5471
        %v5473 = vand.u32 %v955, 4294901760
        %v5474 = vsub.f32 %v955, %v5473
        %v5475 = vand.u32 %v5474, 4294901760
        %v5476 = vsub.f32 %v5474, %v5475
        %v5477 = vand.u32 %v5476, 4294901760
        %5478 = vmatpush.xpose.msra.mxu0 %v5477
        %v5479 = vand.u32 %v952, 4294901760
        %v5480 = vsub.f32 %v952, %v5479
        %v5481 = vand.u32 %v5480, 4294901760
        %v5482 = vsub.f32 %v5480, %v5481
        %v5483 = vand.u32 %v5482, 4294901760
        %5484 = vmatpush.xpose.msra.mxu0 %v5483
        %v5485 = vand.u32 %v949, 4294901760
        %v5486 = vsub.f32 %v949, %v5485
        %v5487 = vand.u32 %v5486, 4294901760
        %v5488 = vsub.f32 %v5486, %v5487
        %v5489 = vand.u32 %v5488, 4294901760
        %5490 = vmatpush.xpose.msra.mxu0 %v5489
        %v5491 = vand.u32 %v946, 4294901760
        %v5492 = vsub.f32 %v946, %v5491
        %v5493 = vand.u32 %v5492, 4294901760
        %v5494 = vsub.f32 %v5492, %v5493
        %v5495 = vand.u32 %v5494, 4294901760
        %5496 = vmatpush.xpose.msra.mxu0 %v5495
        %v5497 = vand.u32 %v943, 4294901760
        %v5498 = vsub.f32 %v943, %v5497
        %v5499 = vand.u32 %v5498, 4294901760
        %v5500 = vsub.f32 %v5498, %v5499
        %v5501 = vand.u32 %v5500, 4294901760
        %5502 = vmatpush.xpose.msra.mxu0 %v5501
        %v5503 = vand.u32 %v940, 4294901760
        %v5504 = vsub.f32 %v940, %v5503
        %v5505 = vand.u32 %v5504, 4294901760
        %v5506 = vsub.f32 %v5504, %v5505
        %v5507 = vand.u32 %v5506, 4294901760
        %5508 = vmatpush.xpose.msra.mxu0 %v5507
        %v5509 = vand.u32 %v937, 4294901760
        %v5510 = vsub.f32 %v937, %v5509
        %v5511 = vand.u32 %v5510, 4294901760
        %v5512 = vsub.f32 %v5510, %v5511
        %v5513 = vand.u32 %v5512, 4294901760
        %5514 = vmatpush.xpose.msra.mxu0 %v5513
        %v5515 = vand.u32 %v934, 4294901760
        %v5516 = vsub.f32 %v934, %v5515
        %v5517 = vand.u32 %v5516, 4294901760
        %v5518 = vsub.f32 %v5516, %v5517
        %v5519 = vand.u32 %v5518, 4294901760
        %5520 = vmatpush.xpose.msra.mxu0 %v5519
        %v5521 = vand.u32 %v931, 4294901760
        %v5522 = vsub.f32 %v931, %v5521
        %v5523 = vand.u32 %v5522, 4294901760
        %v5524 = vsub.f32 %v5522, %v5523
        %v5525 = vand.u32 %v5524, 4294901760
        %5526 = vmatpush.xpose.msra.mxu0 %v5525
        %v5527 = vand.u32 %v565, 4294901760
        %5528 = vmatmul.f32.gmra.mxu0 %v5527
        %v5529 = vpop.f32.mrf.mxu0
        %v5530 = vadd.f32 %v5357, %v5529
        %v5531 = vand.u32 %v568, 4294901760
        %5532 = vmatmul.f32.gmra.mxu0 %v5531
        %v5533 = vpop.f32.mrf.mxu0
        %v5534 = vadd.f32 %v5365, %v5533
        %v5535 = vand.u32 %v571, 4294901760
        %5536 = vmatmul.f32.gmra.mxu0 %v5535
        %v5537 = vpop.f32.mrf.mxu0
        %v5538 = vadd.f32 %v5373, %v5537
        %v5539 = vand.u32 %v574, 4294901760
        %5540 = vmatmul.f32.gmra.mxu0 %v5539
        %v5541 = vpop.f32.mrf.mxu0
        %v5542 = vadd.f32 %v5381, %v5541
        %v5543 = vand.u32 %v577, 4294901760
        %5544 = vmatmul.f32.gmra.mxu0 %v5543
        %v5545 = vpop.f32.mrf.mxu0
        %v5546 = vadd.f32 %v5389, %v5545
        %v5547 = vand.u32 %v580, 4294901760
        %5548 = vmatmul.f32.gmra.mxu0 %v5547
        %v5549 = vpop.f32.mrf.mxu0
        %v5550 = vadd.f32 %v5397, %v5549
        %v5551 = vand.u32 %v583, 4294901760
        %5552 = vmatmul.f32.gmra.mxu0 %v5551
        %v5553 = vpop.f32.mrf.mxu0
        %v5554 = vadd.f32 %v5405, %v5553
        %v5555 = vand.u32 %v586, 4294901760
        %5556 = vmatmul.f32.gmra.mxu0 %v5555
        %v5557 = vpop.f32.mrf.mxu0
        %v5558 = vadd.f32 %v5413, %v5557
        %v5559 = vand.u32 %v589, 4294901760
        %5560 = vmatmul.f32.gmra.mxu0 %v5559
        %v5561 = vpop.f32.mrf.mxu0
        %v5562 = vadd.f32 %v5421, %v5561
        %v5563 = vand.u32 %v592, 4294901760
        %5564 = vmatmul.f32.gmra.mxu0 %v5563
        %v5565 = vpop.f32.mrf.mxu0
        %v5566 = vadd.f32 %v5429, %v5565
        %5567 = vdwg.mxu0
        %v5568 = vand.u32 %v976, 4294901760
        %v5569 = vsub.f32 %v976, %v5568
        %5570 = vmatpush.xpose.msra.mxu0 %v5569
        %v5571 = vand.u32 %v973, 4294901760
        %v5572 = vsub.f32 %v973, %v5571
        %5573 = vmatpush.xpose.msra.mxu0 %v5572
        %v5574 = vand.u32 %v970, 4294901760
        %v5575 = vsub.f32 %v970, %v5574
        %5576 = vmatpush.xpose.msra.mxu0 %v5575
        %v5577 = vand.u32 %v967, 4294901760
        %v5578 = vsub.f32 %v967, %v5577
        %5579 = vmatpush.xpose.msra.mxu0 %v5578
        %v5580 = vand.u32 %v964, 4294901760
        %v5581 = vsub.f32 %v964, %v5580
        %5582 = vmatpush.xpose.msra.mxu0 %v5581
        %v5583 = vand.u32 %v961, 4294901760
        %v5584 = vsub.f32 %v961, %v5583
        %5585 = vmatpush.xpose.msra.mxu0 %v5584
        %v5586 = vand.u32 %v958, 4294901760
        %v5587 = vsub.f32 %v958, %v5586
        %5588 = vmatpush.xpose.msra.mxu0 %v5587
        %v5589 = vand.u32 %v955, 4294901760
        %v5590 = vsub.f32 %v955, %v5589
        %5591 = vmatpush.xpose.msra.mxu0 %v5590
        %v5592 = vand.u32 %v952, 4294901760
        %v5593 = vsub.f32 %v952, %v5592
        %5594 = vmatpush.xpose.msra.mxu0 %v5593
        %v5595 = vand.u32 %v949, 4294901760
        %v5596 = vsub.f32 %v949, %v5595
        %5597 = vmatpush.xpose.msra.mxu0 %v5596
        %v5598 = vand.u32 %v946, 4294901760
        %v5599 = vsub.f32 %v946, %v5598
        %5600 = vmatpush.xpose.msra.mxu0 %v5599
        %v5601 = vand.u32 %v943, 4294901760
        %v5602 = vsub.f32 %v943, %v5601
        %5603 = vmatpush.xpose.msra.mxu0 %v5602
        %v5604 = vand.u32 %v940, 4294901760
        %v5605 = vsub.f32 %v940, %v5604
        %5606 = vmatpush.xpose.msra.mxu0 %v5605
        %v5607 = vand.u32 %v937, 4294901760
        %v5608 = vsub.f32 %v937, %v5607
        %5609 = vmatpush.xpose.msra.mxu0 %v5608
        %v5610 = vand.u32 %v934, 4294901760
        %v5611 = vsub.f32 %v934, %v5610
        %5612 = vmatpush.xpose.msra.mxu0 %v5611
        %v5613 = vand.u32 %v931, 4294901760
        %v5614 = vsub.f32 %v931, %v5613
        %5615 = vmatpush.xpose.msra.mxu0 %v5614
        %v5616 = vand.u32 %v565, 4294901760
        %v5617 = vsub.f32 %v565, %v5616
        %5618 = vmatmul.f32.gmra.mxu0 %v5617
        %v5619 = vpop.f32.mrf.mxu0
        %v5620 = vadd.f32 %v5530, %v5619
        %v5621 = vand.u32 %v568, 4294901760
        %v5622 = vsub.f32 %v568, %v5621
        %5623 = vmatmul.f32.gmra.mxu0 %v5622
        %v5624 = vpop.f32.mrf.mxu0
        %v5625 = vadd.f32 %v5534, %v5624
        %v5626 = vand.u32 %v571, 4294901760
        %v5627 = vsub.f32 %v571, %v5626
        %5628 = vmatmul.f32.gmra.mxu0 %v5627
        %v5629 = vpop.f32.mrf.mxu0
        %v5630 = vadd.f32 %v5538, %v5629
        %v5631 = vand.u32 %v574, 4294901760
        %v5632 = vsub.f32 %v574, %v5631
        %5633 = vmatmul.f32.gmra.mxu0 %v5632
        %v5634 = vpop.f32.mrf.mxu0
        %v5635 = vadd.f32 %v5542, %v5634
        %v5636 = vand.u32 %v577, 4294901760
        %v5637 = vsub.f32 %v577, %v5636
        %5638 = vmatmul.f32.gmra.mxu0 %v5637
        %v5639 = vpop.f32.mrf.mxu0
        %v5640 = vadd.f32 %v5546, %v5639
        %v5641 = vand.u32 %v580, 4294901760
        %v5642 = vsub.f32 %v580, %v5641
        %5643 = vmatmul.f32.gmra.mxu0 %v5642
        %v5644 = vpop.f32.mrf.mxu0
        %v5645 = vadd.f32 %v5550, %v5644
        %v5646 = vand.u32 %v583, 4294901760
        %v5647 = vsub.f32 %v583, %v5646
        %5648 = vmatmul.f32.gmra.mxu0 %v5647
        %v5649 = vpop.f32.mrf.mxu0
        %v5650 = vadd.f32 %v5554, %v5649
        %v5651 = vand.u32 %v586, 4294901760
        %v5652 = vsub.f32 %v586, %v5651
        %5653 = vmatmul.f32.gmra.mxu0 %v5652
        %v5654 = vpop.f32.mrf.mxu0
        %v5655 = vadd.f32 %v5558, %v5654
        %v5656 = vand.u32 %v589, 4294901760
        %v5657 = vsub.f32 %v589, %v5656
        %5658 = vmatmul.f32.gmra.mxu0 %v5657
        %v5659 = vpop.f32.mrf.mxu0
        %v5660 = vadd.f32 %v5562, %v5659
        %v5661 = vand.u32 %v592, 4294901760
        %v5662 = vsub.f32 %v592, %v5661
        %5663 = vmatmul.f32.gmra.mxu0 %v5662
        %v5664 = vpop.f32.mrf.mxu0
        %v5665 = vadd.f32 %v5566, %v5664
        %5666 = vdwg.mxu0
        %v5667 = vand.u32 %v976, 4294901760
        %5668 = vmatpush.xpose.msra.mxu0 %v5667
        %v5669 = vand.u32 %v973, 4294901760
        %5670 = vmatpush.xpose.msra.mxu0 %v5669
        %v5671 = vand.u32 %v970, 4294901760
        %5672 = vmatpush.xpose.msra.mxu0 %v5671
        %v5673 = vand.u32 %v967, 4294901760
        %5674 = vmatpush.xpose.msra.mxu0 %v5673
        %v5675 = vand.u32 %v964, 4294901760
        %5676 = vmatpush.xpose.msra.mxu0 %v5675
        %v5677 = vand.u32 %v961, 4294901760
        %5678 = vmatpush.xpose.msra.mxu0 %v5677
        %v5679 = vand.u32 %v958, 4294901760
        %5680 = vmatpush.xpose.msra.mxu0 %v5679
        %v5681 = vand.u32 %v955, 4294901760
        %5682 = vmatpush.xpose.msra.mxu0 %v5681
        %v5683 = vand.u32 %v952, 4294901760
        %5684 = vmatpush.xpose.msra.mxu0 %v5683
        %v5685 = vand.u32 %v949, 4294901760
        %5686 = vmatpush.xpose.msra.mxu0 %v5685
        %v5687 = vand.u32 %v946, 4294901760
        %5688 = vmatpush.xpose.msra.mxu0 %v5687
        %v5689 = vand.u32 %v943, 4294901760
        %5690 = vmatpush.xpose.msra.mxu0 %v5689
        %v5691 = vand.u32 %v940, 4294901760
        %5692 = vmatpush.xpose.msra.mxu0 %v5691
        %v5693 = vand.u32 %v937, 4294901760
        %5694 = vmatpush.xpose.msra.mxu0 %v5693
        %v5695 = vand.u32 %v934, 4294901760
        %5696 = vmatpush.xpose.msra.mxu0 %v5695
        %v5697 = vand.u32 %v931, 4294901760
        %5698 = vmatpush.xpose.msra.mxu0 %v5697
        %v5699 = vand.u32 %v565, 4294901760
        %v5700 = vsub.f32 %v565, %v5699
        %v5701 = vand.u32 %v5700, 4294901760
        %5702 = vmatmul.f32.gmra.mxu0 %v5701
        %v5703 = vpop.f32.mrf.mxu0
        %v5704 = vadd.f32 %v5620, %v5703
        %v5705 = vand.u32 %v568, 4294901760
        %v5706 = vsub.f32 %v568, %v5705
        %v5707 = vand.u32 %v5706, 4294901760
        %5708 = vmatmul.f32.gmra.mxu0 %v5707
        %v5709 = vpop.f32.mrf.mxu0
        %v5710 = vadd.f32 %v5625, %v5709
        %v5711 = vand.u32 %v571, 4294901760
        %v5712 = vsub.f32 %v571, %v5711
        %v5713 = vand.u32 %v5712, 4294901760
        %5714 = vmatmul.f32.gmra.mxu0 %v5713
        %v5715 = vpop.f32.mrf.mxu0
        %v5716 = vadd.f32 %v5630, %v5715
        %v5717 = vand.u32 %v574, 4294901760
        %v5718 = vsub.f32 %v574, %v5717
        %v5719 = vand.u32 %v5718, 4294901760
        %5720 = vmatmul.f32.gmra.mxu0 %v5719
        %v5721 = vpop.f32.mrf.mxu0
        %v5722 = vadd.f32 %v5635, %v5721
        %v5723 = vand.u32 %v577, 4294901760
        %v5724 = vsub.f32 %v577, %v5723
        %v5725 = vand.u32 %v5724, 4294901760
        %5726 = vmatmul.f32.gmra.mxu0 %v5725
        %v5727 = vpop.f32.mrf.mxu0
        %v5728 = vadd.f32 %v5640, %v5727
        %v5729 = vand.u32 %v580, 4294901760
        %v5730 = vsub.f32 %v580, %v5729
        %v5731 = vand.u32 %v5730, 4294901760
        %5732 = vmatmul.f32.gmra.mxu0 %v5731
        %v5733 = vpop.f32.mrf.mxu0
        %v5734 = vadd.f32 %v5645, %v5733
        %v5735 = vand.u32 %v583, 4294901760
        %v5736 = vsub.f32 %v583, %v5735
        %v5737 = vand.u32 %v5736, 4294901760
        %5738 = vmatmul.f32.gmra.mxu0 %v5737
        %v5739 = vpop.f32.mrf.mxu0
        %v5740 = vadd.f32 %v5650, %v5739
        %v5741 = vand.u32 %v586, 4294901760
        %v5742 = vsub.f32 %v586, %v5741
        %v5743 = vand.u32 %v5742, 4294901760
        %5744 = vmatmul.f32.gmra.mxu0 %v5743
        %v5745 = vpop.f32.mrf.mxu0
        %v5746 = vadd.f32 %v5655, %v5745
        %v5747 = vand.u32 %v589, 4294901760
        %v5748 = vsub.f32 %v589, %v5747
        %v5749 = vand.u32 %v5748, 4294901760
        %5750 = vmatmul.f32.gmra.mxu0 %v5749
        %v5751 = vpop.f32.mrf.mxu0
        %v5752 = vadd.f32 %v5660, %v5751
        %v5753 = vand.u32 %v592, 4294901760
        %v5754 = vsub.f32 %v592, %v5753
        %v5755 = vand.u32 %v5754, 4294901760
        %5756 = vmatmul.f32.gmra.mxu0 %v5755
        %v5757 = vpop.f32.mrf.mxu0
        %v5758 = vadd.f32 %v5665, %v5757
        %5759 = vdwg.mxu0
        %v5760 = vand.u32 %v976, 4294901760
        %v5761 = vsub.f32 %v976, %v5760
        %v5762 = vand.u32 %v5761, 4294901760
        %5763 = vmatpush.xpose.msra.mxu0 %v5762
        %v5764 = vand.u32 %v973, 4294901760
        %v5765 = vsub.f32 %v973, %v5764
        %v5766 = vand.u32 %v5765, 4294901760
        %5767 = vmatpush.xpose.msra.mxu0 %v5766
        %v5768 = vand.u32 %v970, 4294901760
        %v5769 = vsub.f32 %v970, %v5768
        %v5770 = vand.u32 %v5769, 4294901760
        %5771 = vmatpush.xpose.msra.mxu0 %v5770
        %v5772 = vand.u32 %v967, 4294901760
        %v5773 = vsub.f32 %v967, %v5772
        %v5774 = vand.u32 %v5773, 4294901760
        %5775 = vmatpush.xpose.msra.mxu0 %v5774
        %v5776 = vand.u32 %v964, 4294901760
        %v5777 = vsub.f32 %v964, %v5776
        %v5778 = vand.u32 %v5777, 4294901760
        %5779 = vmatpush.xpose.msra.mxu0 %v5778
        %v5780 = vand.u32 %v961, 4294901760
        %v5781 = vsub.f32 %v961, %v5780
        %v5782 = vand.u32 %v5781, 4294901760
        %5783 = vmatpush.xpose.msra.mxu0 %v5782
        %v5784 = vand.u32 %v958, 4294901760
        %v5785 = vsub.f32 %v958, %v5784
        %v5786 = vand.u32 %v5785, 4294901760
        %5787 = vmatpush.xpose.msra.mxu0 %v5786
        %v5788 = vand.u32 %v955, 4294901760
        %v5789 = vsub.f32 %v955, %v5788
        %v5790 = vand.u32 %v5789, 4294901760
        %5791 = vmatpush.xpose.msra.mxu0 %v5790
        %v5792 = vand.u32 %v952, 4294901760
        %v5793 = vsub.f32 %v952, %v5792
        %v5794 = vand.u32 %v5793, 4294901760
        %5795 = vmatpush.xpose.msra.mxu0 %v5794
        %v5796 = vand.u32 %v949, 4294901760
        %v5797 = vsub.f32 %v949, %v5796
        %v5798 = vand.u32 %v5797, 4294901760
        %5799 = vmatpush.xpose.msra.mxu0 %v5798
        %v5800 = vand.u32 %v946, 4294901760
        %v5801 = vsub.f32 %v946, %v5800
        %v5802 = vand.u32 %v5801, 4294901760
        %5803 = vmatpush.xpose.msra.mxu0 %v5802
        %v5804 = vand.u32 %v943, 4294901760
        %v5805 = vsub.f32 %v943, %v5804
        %v5806 = vand.u32 %v5805, 4294901760
        %5807 = vmatpush.xpose.msra.mxu0 %v5806
        %v5808 = vand.u32 %v940, 4294901760
        %v5809 = vsub.f32 %v940, %v5808
        %v5810 = vand.u32 %v5809, 4294901760
        %5811 = vmatpush.xpose.msra.mxu0 %v5810
        %v5812 = vand.u32 %v937, 4294901760
        %v5813 = vsub.f32 %v937, %v5812
        %v5814 = vand.u32 %v5813, 4294901760
        %5815 = vmatpush.xpose.msra.mxu0 %v5814
        %v5816 = vand.u32 %v934, 4294901760
        %v5817 = vsub.f32 %v934, %v5816
        %v5818 = vand.u32 %v5817, 4294901760
        %5819 = vmatpush.xpose.msra.mxu0 %v5818
        %v5820 = vand.u32 %v931, 4294901760
        %v5821 = vsub.f32 %v931, %v5820
        %v5822 = vand.u32 %v5821, 4294901760
        %5823 = vmatpush.xpose.msra.mxu0 %v5822
        %v5824 = vand.u32 %v565, 4294901760
        %5825 = vmatmul.f32.gmra.mxu0 %v5824
        %v5826 = vpop.f32.mrf.mxu0
        %v5827 = vadd.f32 %v5704, %v5826
        %v5828 = vand.u32 %v568, 4294901760
        %5829 = vmatmul.f32.gmra.mxu0 %v5828
        %v5830 = vpop.f32.mrf.mxu0
        %v5831 = vadd.f32 %v5710, %v5830
        %v5832 = vand.u32 %v571, 4294901760
        %5833 = vmatmul.f32.gmra.mxu0 %v5832
        %v5834 = vpop.f32.mrf.mxu0
        %v5835 = vadd.f32 %v5716, %v5834
        %v5836 = vand.u32 %v574, 4294901760
        %5837 = vmatmul.f32.gmra.mxu0 %v5836
        %v5838 = vpop.f32.mrf.mxu0
        %v5839 = vadd.f32 %v5722, %v5838
        %v5840 = vand.u32 %v577, 4294901760
        %5841 = vmatmul.f32.gmra.mxu0 %v5840
        %v5842 = vpop.f32.mrf.mxu0
        %v5843 = vadd.f32 %v5728, %v5842
        %v5844 = vand.u32 %v580, 4294901760
        %5845 = vmatmul.f32.gmra.mxu0 %v5844
        %v5846 = vpop.f32.mrf.mxu0
        %v5847 = vadd.f32 %v5734, %v5846
        %v5848 = vand.u32 %v583, 4294901760
        %5849 = vmatmul.f32.gmra.mxu0 %v5848
        %v5850 = vpop.f32.mrf.mxu0
        %v5851 = vadd.f32 %v5740, %v5850
        %v5852 = vand.u32 %v586, 4294901760
        %5853 = vmatmul.f32.gmra.mxu0 %v5852
        %v5854 = vpop.f32.mrf.mxu0
        %v5855 = vadd.f32 %v5746, %v5854
        %v5856 = vand.u32 %v589, 4294901760
        %5857 = vmatmul.f32.gmra.mxu0 %v5856
        %v5858 = vpop.f32.mrf.mxu0
        %v5859 = vadd.f32 %v5752, %v5858
        %v5860 = vand.u32 %v592, 4294901760
        %5861 = vmatmul.f32.gmra.mxu0 %v5860
        %v5862 = vpop.f32.mrf.mxu0
        %v5863 = vadd.f32 %v5758, %v5862
        %5864 = vdwg.mxu0
        %v5865 = vand.u32 %v976, 4294901760
        %5866 = vmatpush.xpose.msra.mxu0 %v5865
        %v5867 = vand.u32 %v973, 4294901760
        %5868 = vmatpush.xpose.msra.mxu0 %v5867
        %v5869 = vand.u32 %v970, 4294901760
        %5870 = vmatpush.xpose.msra.mxu0 %v5869
        %v5871 = vand.u32 %v967, 4294901760
        %5872 = vmatpush.xpose.msra.mxu0 %v5871
        %v5873 = vand.u32 %v964, 4294901760
        %5874 = vmatpush.xpose.msra.mxu0 %v5873
        %v5875 = vand.u32 %v961, 4294901760
        %5876 = vmatpush.xpose.msra.mxu0 %v5875
        %v5877 = vand.u32 %v958, 4294901760
        %5878 = vmatpush.xpose.msra.mxu0 %v5877
        %v5879 = vand.u32 %v955, 4294901760
        %5880 = vmatpush.xpose.msra.mxu0 %v5879
        %v5881 = vand.u32 %v952, 4294901760
        %5882 = vmatpush.xpose.msra.mxu0 %v5881
        %v5883 = vand.u32 %v949, 4294901760
        %5884 = vmatpush.xpose.msra.mxu0 %v5883
        %v5885 = vand.u32 %v946, 4294901760
        %5886 = vmatpush.xpose.msra.mxu0 %v5885
        %v5887 = vand.u32 %v943, 4294901760
        %5888 = vmatpush.xpose.msra.mxu0 %v5887
        %v5889 = vand.u32 %v940, 4294901760
        %5890 = vmatpush.xpose.msra.mxu0 %v5889
        %v5891 = vand.u32 %v937, 4294901760
        %5892 = vmatpush.xpose.msra.mxu0 %v5891
        %v5893 = vand.u32 %v934, 4294901760
        %5894 = vmatpush.xpose.msra.mxu0 %v5893
        %v5895 = vand.u32 %v931, 4294901760
        %5896 = vmatpush.xpose.msra.mxu0 %v5895
        %v5897 = vand.u32 %v565, 4294901760
        %5898 = vmatmul.f32.gmra.mxu0 %v5897
        %v5899 = vpop.f32.mrf.mxu0
        %v5900 = vadd.f32 %v5827, %v5899
        %v5901 = vand.u32 %v568, 4294901760
        %5902 = vmatmul.f32.gmra.mxu0 %v5901
        %v5903 = vpop.f32.mrf.mxu0
        %v5904 = vadd.f32 %v5831, %v5903
        %v5905 = vand.u32 %v571, 4294901760
        %5906 = vmatmul.f32.gmra.mxu0 %v5905
        %v5907 = vpop.f32.mrf.mxu0
        %v5908 = vadd.f32 %v5835, %v5907
        %v5909 = vand.u32 %v574, 4294901760
        %5910 = vmatmul.f32.gmra.mxu0 %v5909
        %v5911 = vpop.f32.mrf.mxu0
        %v5912 = vadd.f32 %v5839, %v5911
        %v5913 = vand.u32 %v577, 4294901760
        %5914 = vmatmul.f32.gmra.mxu0 %v5913
        %v5915 = vpop.f32.mrf.mxu0
        %v5916 = vadd.f32 %v5843, %v5915
        %v5917 = vand.u32 %v580, 4294901760
        %5918 = vmatmul.f32.gmra.mxu0 %v5917
        %v5919 = vpop.f32.mrf.mxu0
        %v5920 = vadd.f32 %v5847, %v5919
        %v5921 = vand.u32 %v583, 4294901760
        %5922 = vmatmul.f32.gmra.mxu0 %v5921
        %v5923 = vpop.f32.mrf.mxu0
        %v5924 = vadd.f32 %v5851, %v5923
        %v5925 = vand.u32 %v586, 4294901760
        %5926 = vmatmul.f32.gmra.mxu0 %v5925
        %v5927 = vpop.f32.mrf.mxu0
        %v5928 = vadd.f32 %v5855, %v5927
        %v5929 = vand.u32 %v589, 4294901760
        %5930 = vmatmul.f32.gmra.mxu0 %v5929
        %v5931 = vpop.f32.mrf.mxu0
        %v5932 = vadd.f32 %v5859, %v5931
        %v5933 = vand.u32 %v592, 4294901760
        %5934 = vmatmul.f32.gmra.mxu0 %v5933
        %v5935 = vpop.f32.mrf.mxu0
        %v5936 = vadd.f32 %v5863, %v5935
        %5937 = vdwg.mxu0
        %v5938 = vsub.s32 %v232, 1
        %v5939 = vperm.slane %v5938, 0
        %v5940 = vperm.slane %v5938, 1
        %v5941 = vperm.slane %v5938, 2
        %v5942 = vperm.slane %v5938, 3
        %v5943 = vperm.slane %v5938, 4
        %v5944 = vperm.slane %v5938, 5
        %v5945 = vperm.slane %v5938, 6
        %v5946 = vperm.slane %v5938, 7
        %vm5947 = vcmp.eq.s32.totalorder %v521, %v5939
        %vm5948 = vcmp.eq.s32.totalorder %v521, %v5940
        %vm5949 = vcmp.eq.s32.totalorder %v521, %v5941
        %vm5950 = vcmp.eq.s32.totalorder %v521, %v5942
        %vm5951 = vcmp.eq.s32.totalorder %v521, %v5943
        %vm5952 = vcmp.eq.s32.totalorder %v521, %v5944
        %vm5953 = vcmp.eq.s32.totalorder %v521, %v5945
        %vm5954 = vcmp.eq.s32.totalorder %v521, %v5946
        %vm5955 = vcmp.eq.s32.totalorder %v522, %v5939
        %vm5956 = vcmp.eq.s32.totalorder %v522, %v5940
        %vm5957 = vcmp.eq.s32.totalorder %v522, %v5941
        %vm5958 = vcmp.eq.s32.totalorder %v522, %v5942
        %vm5959 = vcmp.eq.s32.totalorder %v522, %v5943
        %vm5960 = vcmp.eq.s32.totalorder %v522, %v5944
        %vm5961 = vcmp.eq.s32.totalorder %v522, %v5945
        %vm5962 = vcmp.eq.s32.totalorder %v522, %v5946
        %vm5963 = vcmp.eq.s32.totalorder %v523, %v5939
        %vm5964 = vcmp.eq.s32.totalorder %v523, %v5940
        %vm5965 = vcmp.eq.s32.totalorder %v523, %v5941
        %vm5966 = vcmp.eq.s32.totalorder %v523, %v5942
        %vm5967 = vcmp.eq.s32.totalorder %v523, %v5943
        %vm5968 = vcmp.eq.s32.totalorder %v523, %v5944
        %vm5969 = vcmp.eq.s32.totalorder %v523, %v5945
        %vm5970 = vcmp.eq.s32.totalorder %v523, %v5946
        %vm5971 = vcmp.eq.s32.totalorder %v524, %v5939
        %vm5972 = vcmp.eq.s32.totalorder %v524, %v5940
        %vm5973 = vcmp.eq.s32.totalorder %v524, %v5941
        %vm5974 = vcmp.eq.s32.totalorder %v524, %v5942
        %vm5975 = vcmp.eq.s32.totalorder %v524, %v5943
        %vm5976 = vcmp.eq.s32.totalorder %v524, %v5944
        %vm5977 = vcmp.eq.s32.totalorder %v524, %v5945
        %vm5978 = vcmp.eq.s32.totalorder %v524, %v5946
        %vm5979 = vcmp.eq.s32.totalorder %v525, %v5939
        %vm5980 = vcmp.eq.s32.totalorder %v525, %v5940
        %vm5981 = vcmp.eq.s32.totalorder %v525, %v5941
        %vm5982 = vcmp.eq.s32.totalorder %v525, %v5942
        %vm5983 = vcmp.eq.s32.totalorder %v525, %v5943
        %vm5984 = vcmp.eq.s32.totalorder %v525, %v5944
        %vm5985 = vcmp.eq.s32.totalorder %v525, %v5945
        %vm5986 = vcmp.eq.s32.totalorder %v525, %v5946
        %vm5987 = vcmp.eq.s32.totalorder %v526, %v5939
        %vm5988 = vcmp.eq.s32.totalorder %v526, %v5940
        %vm5989 = vcmp.eq.s32.totalorder %v526, %v5941
        %vm5990 = vcmp.eq.s32.totalorder %v526, %v5942
        %vm5991 = vcmp.eq.s32.totalorder %v526, %v5943
        %vm5992 = vcmp.eq.s32.totalorder %v526, %v5944
        %vm5993 = vcmp.eq.s32.totalorder %v526, %v5945
        %vm5994 = vcmp.eq.s32.totalorder %v526, %v5946
        %vm5995 = vcmp.eq.s32.totalorder %v527, %v5939
        %vm5996 = vcmp.eq.s32.totalorder %v527, %v5940
        %vm5997 = vcmp.eq.s32.totalorder %v527, %v5941
        %vm5998 = vcmp.eq.s32.totalorder %v527, %v5942
        %vm5999 = vcmp.eq.s32.totalorder %v527, %v5943
        %vm6000 = vcmp.eq.s32.totalorder %v527, %v5944
        %vm6001 = vcmp.eq.s32.totalorder %v527, %v5945
        %vm6002 = vcmp.eq.s32.totalorder %v527, %v5946
        %vm6003 = vcmp.eq.s32.totalorder %v528, %v5939
        %vm6004 = vcmp.eq.s32.totalorder %v528, %v5940
        %vm6005 = vcmp.eq.s32.totalorder %v528, %v5941
        %vm6006 = vcmp.eq.s32.totalorder %v528, %v5942
        %vm6007 = vcmp.eq.s32.totalorder %v528, %v5943
        %vm6008 = vcmp.eq.s32.totalorder %v528, %v5944
        %vm6009 = vcmp.eq.s32.totalorder %v528, %v5945
        %vm6010 = vcmp.eq.s32.totalorder %v528, %v5946
        %vm6011 = vcmp.eq.s32.totalorder %v529, %v5939
        %vm6012 = vcmp.eq.s32.totalorder %v529, %v5940
        %vm6013 = vcmp.eq.s32.totalorder %v529, %v5941
        %vm6014 = vcmp.eq.s32.totalorder %v529, %v5942
        %vm6015 = vcmp.eq.s32.totalorder %v529, %v5943
        %vm6016 = vcmp.eq.s32.totalorder %v529, %v5944
        %vm6017 = vcmp.eq.s32.totalorder %v529, %v5945
        %vm6018 = vcmp.eq.s32.totalorder %v529, %v5946
        %vm6019 = vcmp.eq.s32.totalorder %v530, %v5939
        %vm6020 = vcmp.eq.s32.totalorder %v530, %v5940
        %vm6021 = vcmp.eq.s32.totalorder %v530, %v5941
        %vm6022 = vcmp.eq.s32.totalorder %v530, %v5942
        %vm6023 = vcmp.eq.s32.totalorder %v530, %v5943
        %vm6024 = vcmp.eq.s32.totalorder %v530, %v5944
        %vm6025 = vcmp.eq.s32.totalorder %v530, %v5945
        %vm6026 = vcmp.eq.s32.totalorder %v530, %v5946
        %v6027 = vsub.f32 0.0, %v1560
        %v6028 = vsub.f32 0.0, %v2180
        %v6029 = vsub.f32 0.0, %v2800
        %v6030 = vsub.f32 0.0, %v3420
        %v6031 = vsub.f32 0.0, %v4040
        %v6032 = vsub.f32 0.0, %v4660
        %v6033 = vsub.f32 0.0, %v5280
        %v6034 = vsub.f32 0.0, %v5900
        %v6035 = vsub.f32 0.0, %v1564
        %v6036 = vsub.f32 0.0, %v2184
        %v6037 = vsub.f32 0.0, %v2804
        %v6038 = vsub.f32 0.0, %v3424
        %v6039 = vsub.f32 0.0, %v4044
        %v6040 = vsub.f32 0.0, %v4664
        %v6041 = vsub.f32 0.0, %v5284
        %v6042 = vsub.f32 0.0, %v5904
        %v6043 = vsub.f32 0.0, %v1568
        %v6044 = vsub.f32 0.0, %v2188
        %v6045 = vsub.f32 0.0, %v2808
        %v6046 = vsub.f32 0.0, %v3428
        %v6047 = vsub.f32 0.0, %v4048
        %v6048 = vsub.f32 0.0, %v4668
        %v6049 = vsub.f32 0.0, %v5288
        %v6050 = vsub.f32 0.0, %v5908
        %v6051 = vsub.f32 0.0, %v1572
        %v6052 = vsub.f32 0.0, %v2192
        %v6053 = vsub.f32 0.0, %v2812
        %v6054 = vsub.f32 0.0, %v3432
        %v6055 = vsub.f32 0.0, %v4052
        %v6056 = vsub.f32 0.0, %v4672
        %v6057 = vsub.f32 0.0, %v5292
        %v6058 = vsub.f32 0.0, %v5912
        %v6059 = vsub.f32 0.0, %v1576
        %v6060 = vsub.f32 0.0, %v2196
        %v6061 = vsub.f32 0.0, %v2816
        %v6062 = vsub.f32 0.0, %v3436
        %v6063 = vsub.f32 0.0, %v4056
        %v6064 = vsub.f32 0.0, %v4676
        %v6065 = vsub.f32 0.0, %v5296
        %v6066 = vsub.f32 0.0, %v5916
        %v6067 = vsub.f32 0.0, %v1580
        %v6068 = vsub.f32 0.0, %v2200
        %v6069 = vsub.f32 0.0, %v2820
        %v6070 = vsub.f32 0.0, %v3440
        %v6071 = vsub.f32 0.0, %v4060
        %v6072 = vsub.f32 0.0, %v4680
        %v6073 = vsub.f32 0.0, %v5300
        %v6074 = vsub.f32 0.0, %v5920
        %v6075 = vsub.f32 0.0, %v1584
        %v6076 = vsub.f32 0.0, %v2204
        %v6077 = vsub.f32 0.0, %v2824
        %v6078 = vsub.f32 0.0, %v3444
        %v6079 = vsub.f32 0.0, %v4064
        %v6080 = vsub.f32 0.0, %v4684
        %v6081 = vsub.f32 0.0, %v5304
        %v6082 = vsub.f32 0.0, %v5924
        %v6083 = vsub.f32 0.0, %v1588
        %v6084 = vsub.f32 0.0, %v2208
        %v6085 = vsub.f32 0.0, %v2828
        %v6086 = vsub.f32 0.0, %v3448
        %v6087 = vsub.f32 0.0, %v4068
        %v6088 = vsub.f32 0.0, %v4688
        %v6089 = vsub.f32 0.0, %v5308
        %v6090 = vsub.f32 0.0, %v5928
        %v6091 = vsub.f32 0.0, %v1592
        %v6092 = vsub.f32 0.0, %v2212
        %v6093 = vsub.f32 0.0, %v2832
        %v6094 = vsub.f32 0.0, %v3452
        %v6095 = vsub.f32 0.0, %v4072
        %v6096 = vsub.f32 0.0, %v4692
        %v6097 = vsub.f32 0.0, %v5312
        %v6098 = vsub.f32 0.0, %v5932
        %v6099 = vsub.f32 0.0, %v1596
        %v6100 = vsub.f32 0.0, %v2216
        %v6101 = vsub.f32 0.0, %v2836
        %v6102 = vsub.f32 0.0, %v3456
        %v6103 = vsub.f32 0.0, %v4076
        %v6104 = vsub.f32 0.0, %v4696
        %v6105 = vsub.f32 0.0, %v5316
        %v6106 = vsub.f32 0.0, %v5936
        %v6107 = vsel %vm5947, %v1560, %v6027
        %v6108 = vsel %vm5948, %v2180, %v6028
        %v6109 = vsel %vm5949, %v2800, %v6029
        %v6110 = vsel %vm5950, %v3420, %v6030
        %v6111 = vsel %vm5951, %v4040, %v6031
        %v6112 = vsel %vm5952, %v4660, %v6032
        %v6113 = vsel %vm5953, %v5280, %v6033
        %v6114 = vsel %vm5954, %v5900, %v6034
        %v6115 = vsel %vm5955, %v1564, %v6035
        %v6116 = vsel %vm5956, %v2184, %v6036
        %v6117 = vsel %vm5957, %v2804, %v6037
        %v6118 = vsel %vm5958, %v3424, %v6038
        %v6119 = vsel %vm5959, %v4044, %v6039
        %v6120 = vsel %vm5960, %v4664, %v6040
        %v6121 = vsel %vm5961, %v5284, %v6041
        %v6122 = vsel %vm5962, %v5904, %v6042
        %v6123 = vsel %vm5963, %v1568, %v6043
        %v6124 = vsel %vm5964, %v2188, %v6044
        %v6125 = vsel %vm5965, %v2808, %v6045
        %v6126 = vsel %vm5966, %v3428, %v6046
        %v6127 = vsel %vm5967, %v4048, %v6047
        %v6128 = vsel %vm5968, %v4668, %v6048
        %v6129 = vsel %vm5969, %v5288, %v6049
        %v6130 = vsel %vm5970, %v5908, %v6050
        %v6131 = vsel %vm5971, %v1572, %v6051
        %v6132 = vsel %vm5972, %v2192, %v6052
        %v6133 = vsel %vm5973, %v2812, %v6053
        %v6134 = vsel %vm5974, %v3432, %v6054
        %v6135 = vsel %vm5975, %v4052, %v6055
        %v6136 = vsel %vm5976, %v4672, %v6056
        %v6137 = vsel %vm5977, %v5292, %v6057
        %v6138 = vsel %vm5978, %v5912, %v6058
        %v6139 = vsel %vm5979, %v1576, %v6059
        %v6140 = vsel %vm5980, %v2196, %v6060
        %v6141 = vsel %vm5981, %v2816, %v6061
        %v6142 = vsel %vm5982, %v3436, %v6062
        %v6143 = vsel %vm5983, %v4056, %v6063
        %v6144 = vsel %vm5984, %v4676, %v6064
        %v6145 = vsel %vm5985, %v5296, %v6065
        %v6146 = vsel %vm5986, %v5916, %v6066
        %v6147 = vsel %vm5987, %v1580, %v6067
        %v6148 = vsel %vm5988, %v2200, %v6068
        %v6149 = vsel %vm5989, %v2820, %v6069
        %v6150 = vsel %vm5990, %v3440, %v6070
        %v6151 = vsel %vm5991, %v4060, %v6071
        %v6152 = vsel %vm5992, %v4680, %v6072
        %v6153 = vsel %vm5993, %v5300, %v6073
        %v6154 = vsel %vm5994, %v5920, %v6074
        %v6155 = vsel %vm5995, %v1584, %v6075
        %v6156 = vsel %vm5996, %v2204, %v6076
        %v6157 = vsel %vm5997, %v2824, %v6077
        %v6158 = vsel %vm5998, %v3444, %v6078
        %v6159 = vsel %vm5999, %v4064, %v6079
        %v6160 = vsel %vm6000, %v4684, %v6080
        %v6161 = vsel %vm6001, %v5304, %v6081
        %v6162 = vsel %vm6002, %v5924, %v6082
        %v6163 = vsel %vm6003, %v1588, %v6083
        %v6164 = vsel %vm6004, %v2208, %v6084
        %v6165 = vsel %vm6005, %v2828, %v6085
        %v6166 = vsel %vm6006, %v3448, %v6086
        %v6167 = vsel %vm6007, %v4068, %v6087
        %v6168 = vsel %vm6008, %v4688, %v6088
        %v6169 = vsel %vm6009, %v5308, %v6089
        %v6170 = vsel %vm6010, %v5928, %v6090
        %v6171 = vsel %vm6011, %v1592, %v6091
        %v6172 = vsel %vm6012, %v2212, %v6092
        %v6173 = vsel %vm6013, %v2832, %v6093
        %v6174 = vsel %vm6014, %v3452, %v6094
        %v6175 = vsel %vm6015, %v4072, %v6095
        %v6176 = vsel %vm6016, %v4692, %v6096
        %v6177 = vsel %vm6017, %v5312, %v6097
        %v6178 = vsel %vm6018, %v5932, %v6098
        %v6179 = vsel %vm6019, %v1596, %v6099
        %v6180 = vsel %vm6020, %v2216, %v6100
        %v6181 = vsel %vm6021, %v2836, %v6101
        %v6182 = vsel %vm6022, %v3456, %v6102
        %v6183 = vsel %vm6023, %v4076, %v6103
        %v6184 = vsel %vm6024, %v4696, %v6104
        %v6185 = vsel %vm6025, %v5316, %v6105
        %v6186 = vsel %vm6026, %v5936, %v6106
        %v6187 = vsel %vm5947, %v6027, %v1560
        %v6188 = vsel %vm5948, %v6028, %v2180
        %v6189 = vsel %vm5949, %v6029, %v2800
        %v6190 = vsel %vm5950, %v6030, %v3420
        %v6191 = vsel %vm5951, %v6031, %v4040
        %v6192 = vsel %vm5952, %v6032, %v4660
        %v6193 = vsel %vm5953, %v6033, %v5280
        %v6194 = vsel %vm5954, %v6034, %v5900
        %v6195 = vsel %vm5955, %v6035, %v1564
        %v6196 = vsel %vm5956, %v6036, %v2184
        %v6197 = vsel %vm5957, %v6037, %v2804
        %v6198 = vsel %vm5958, %v6038, %v3424
        %v6199 = vsel %vm5959, %v6039, %v4044
        %v6200 = vsel %vm5960, %v6040, %v4664
        %v6201 = vsel %vm5961, %v6041, %v5284
        %v6202 = vsel %vm5962, %v6042, %v5904
        %v6203 = vsel %vm5963, %v6043, %v1568
        %v6204 = vsel %vm5964, %v6044, %v2188
        %v6205 = vsel %vm5965, %v6045, %v2808
        %v6206 = vsel %vm5966, %v6046, %v3428
        %v6207 = vsel %vm5967, %v6047, %v4048
        %v6208 = vsel %vm5968, %v6048, %v4668
        %v6209 = vsel %vm5969, %v6049, %v5288
        %v6210 = vsel %vm5970, %v6050, %v5908
        %v6211 = vsel %vm5971, %v6051, %v1572
        %v6212 = vsel %vm5972, %v6052, %v2192
        %v6213 = vsel %vm5973, %v6053, %v2812
        %v6214 = vsel %vm5974, %v6054, %v3432
        %v6215 = vsel %vm5975, %v6055, %v4052
        %v6216 = vsel %vm5976, %v6056, %v4672
        %v6217 = vsel %vm5977, %v6057, %v5292
        %v6218 = vsel %vm5978, %v6058, %v5912
        %v6219 = vsel %vm5979, %v6059, %v1576
        %v6220 = vsel %vm5980, %v6060, %v2196
        %v6221 = vsel %vm5981, %v6061, %v2816
        %v6222 = vsel %vm5982, %v6062, %v3436
        %v6223 = vsel %vm5983, %v6063, %v4056
        %v6224 = vsel %vm5984, %v6064, %v4676
        %v6225 = vsel %vm5985, %v6065, %v5296
        %v6226 = vsel %vm5986, %v6066, %v5916
        %v6227 = vsel %vm5987, %v6067, %v1580
        %v6228 = vsel %vm5988, %v6068, %v2200
        %v6229 = vsel %vm5989, %v6069, %v2820
        %v6230 = vsel %vm5990, %v6070, %v3440
        %v6231 = vsel %vm5991, %v6071, %v4060
        %v6232 = vsel %vm5992, %v6072, %v4680
        %v6233 = vsel %vm5993, %v6073, %v5300
        %v6234 = vsel %vm5994, %v6074, %v5920
        %v6235 = vsel %vm5995, %v6075, %v1584
        %v6236 = vsel %vm5996, %v6076, %v2204
        %v6237 = vsel %vm5997, %v6077, %v2824
        %v6238 = vsel %vm5998, %v6078, %v3444
        %v6239 = vsel %vm5999, %v6079, %v4064
        %v6240 = vsel %vm6000, %v6080, %v4684
        %v6241 = vsel %vm6001, %v6081, %v5304
        %v6242 = vsel %vm6002, %v6082, %v5924
        %v6243 = vsel %vm6003, %v6083, %v1588
        %v6244 = vsel %vm6004, %v6084, %v2208
        %v6245 = vsel %vm6005, %v6085, %v2828
        %v6246 = vsel %vm6006, %v6086, %v3448
        %v6247 = vsel %vm6007, %v6087, %v4068
        %v6248 = vsel %vm6008, %v6088, %v4688
        %v6249 = vsel %vm6009, %v6089, %v5308
        %v6250 = vsel %vm6010, %v6090, %v5928
        %v6251 = vsel %vm6011, %v6091, %v1592
        %v6252 = vsel %vm6012, %v6092, %v2212
        %v6253 = vsel %vm6013, %v6093, %v2832
        %v6254 = vsel %vm6014, %v6094, %v3452
        %v6255 = vsel %vm6015, %v6095, %v4072
        %v6256 = vsel %vm6016, %v6096, %v4692
        %v6257 = vsel %vm6017, %v6097, %v5312
        %v6258 = vsel %vm6018, %v6098, %v5932
        %v6259 = vsel %vm6019, %v6099, %v1596
        %v6260 = vsel %vm6020, %v6100, %v2216
        %v6261 = vsel %vm6021, %v6101, %v2836
        %v6262 = vsel %vm6022, %v6102, %v3456
        %v6263 = vsel %vm6023, %v6103, %v4076
        %v6264 = vsel %vm6024, %v6104, %v4696
        %v6265 = vsel %vm6025, %v6105, %v5316
        %v6266 = vsel %vm6026, %v6106, %v5936
        %v6267 = vand.u32 2147483647, %v1560
        %v6268 = vand.u32 2147483647, %v2180
        %v6269 = vand.u32 2147483647, %v2800
        %v6270 = vand.u32 2147483647, %v3420
        %v6271 = vand.u32 2147483647, %v4040
        %v6272 = vand.u32 2147483647, %v4660
        %v6273 = vand.u32 2147483647, %v5280
        %v6274 = vand.u32 2147483647, %v5900
        %v6275 = vand.u32 2147483647, %v1564
        %v6276 = vand.u32 2147483647, %v2184
        %v6277 = vand.u32 2147483647, %v2804
        %v6278 = vand.u32 2147483647, %v3424
        %v6279 = vand.u32 2147483647, %v4044
        %v6280 = vand.u32 2147483647, %v4664
        %v6281 = vand.u32 2147483647, %v5284
        %v6282 = vand.u32 2147483647, %v5904
        %v6283 = vand.u32 2147483647, %v1568
        %v6284 = vand.u32 2147483647, %v2188
        %v6285 = vand.u32 2147483647, %v2808
        %v6286 = vand.u32 2147483647, %v3428
        %v6287 = vand.u32 2147483647, %v4048
        %v6288 = vand.u32 2147483647, %v4668
        %v6289 = vand.u32 2147483647, %v5288
        %v6290 = vand.u32 2147483647, %v5908
        %v6291 = vand.u32 2147483647, %v1572
        %v6292 = vand.u32 2147483647, %v2192
        %v6293 = vand.u32 2147483647, %v2812
        %v6294 = vand.u32 2147483647, %v3432
        %v6295 = vand.u32 2147483647, %v4052
        %v6296 = vand.u32 2147483647, %v4672
        %v6297 = vand.u32 2147483647, %v5292
        %v6298 = vand.u32 2147483647, %v5912
        %v6299 = vand.u32 2147483647, %v1576
        %v6300 = vand.u32 2147483647, %v2196
        %v6301 = vand.u32 2147483647, %v2816
        %v6302 = vand.u32 2147483647, %v3436
        %v6303 = vand.u32 2147483647, %v4056
        %v6304 = vand.u32 2147483647, %v4676
        %v6305 = vand.u32 2147483647, %v5296
        %v6306 = vand.u32 2147483647, %v5916
        %v6307 = vand.u32 2147483647, %v1580
        %v6308 = vand.u32 2147483647, %v2200
        %v6309 = vand.u32 2147483647, %v2820
        %v6310 = vand.u32 2147483647, %v3440
        %v6311 = vand.u32 2147483647, %v4060
        %v6312 = vand.u32 2147483647, %v4680
        %v6313 = vand.u32 2147483647, %v5300
        %v6314 = vand.u32 2147483647, %v5920
        %v6315 = vand.u32 2147483647, %v1584
        %v6316 = vand.u32 2147483647, %v2204
        %v6317 = vand.u32 2147483647, %v2824
        %v6318 = vand.u32 2147483647, %v3444
        %v6319 = vand.u32 2147483647, %v4064
        %v6320 = vand.u32 2147483647, %v4684
        %v6321 = vand.u32 2147483647, %v5304
        %v6322 = vand.u32 2147483647, %v5924
        %v6323 = vand.u32 2147483647, %v1588
        %v6324 = vand.u32 2147483647, %v2208
        %v6325 = vand.u32 2147483647, %v2828
        %v6326 = vand.u32 2147483647, %v3448
        %v6327 = vand.u32 2147483647, %v4068
        %v6328 = vand.u32 2147483647, %v4688
        %v6329 = vand.u32 2147483647, %v5308
        %v6330 = vand.u32 2147483647, %v5928
        %v6331 = vand.u32 2147483647, %v1592
        %v6332 = vand.u32 2147483647, %v2212
        %v6333 = vand.u32 2147483647, %v2832
        %v6334 = vand.u32 2147483647, %v3452
        %v6335 = vand.u32 2147483647, %v4072
        %v6336 = vand.u32 2147483647, %v4692
        %v6337 = vand.u32 2147483647, %v5312
        %v6338 = vand.u32 2147483647, %v5932
        %v6339 = vand.u32 2147483647, %v1596
        %v6340 = vand.u32 2147483647, %v2216
        %v6341 = vand.u32 2147483647, %v2836
        %v6342 = vand.u32 2147483647, %v3456
        %v6343 = vand.u32 2147483647, %v4076
        %v6344 = vand.u32 2147483647, %v4696
        %v6345 = vand.u32 2147483647, %v5316
        %v6346 = vand.u32 2147483647, %v5936
        %v6347 = vsub.f32 0.0, %v6267
        %v6348 = vsub.f32 0.0, %v6268
        %v6349 = vsub.f32 0.0, %v6269
        %v6350 = vsub.f32 0.0, %v6270
        %v6351 = vsub.f32 0.0, %v6271
        %v6352 = vsub.f32 0.0, %v6272
        %v6353 = vsub.f32 0.0, %v6273
        %v6354 = vsub.f32 0.0, %v6274
        %v6355 = vsub.f32 0.0, %v6275
        %v6356 = vsub.f32 0.0, %v6276
        %v6357 = vsub.f32 0.0, %v6277
        %v6358 = vsub.f32 0.0, %v6278
        %v6359 = vsub.f32 0.0, %v6279
        %v6360 = vsub.f32 0.0, %v6280
        %v6361 = vsub.f32 0.0, %v6281
        %v6362 = vsub.f32 0.0, %v6282
        %v6363 = vsub.f32 0.0, %v6283
        %v6364 = vsub.f32 0.0, %v6284
        %v6365 = vsub.f32 0.0, %v6285
        %v6366 = vsub.f32 0.0, %v6286
        %v6367 = vsub.f32 0.0, %v6287
        %v6368 = vsub.f32 0.0, %v6288
        %v6369 = vsub.f32 0.0, %v6289
        %v6370 = vsub.f32 0.0, %v6290
        %v6371 = vsub.f32 0.0, %v6291
        %v6372 = vsub.f32 0.0, %v6292
        %v6373 = vsub.f32 0.0, %v6293
        %v6374 = vsub.f32 0.0, %v6294
        %v6375 = vsub.f32 0.0, %v6295
        %v6376 = vsub.f32 0.0, %v6296
        %v6377 = vsub.f32 0.0, %v6297
        %v6378 = vsub.f32 0.0, %v6298
        %v6379 = vsub.f32 0.0, %v6299
        %v6380 = vsub.f32 0.0, %v6300
        %v6381 = vsub.f32 0.0, %v6301
        %v6382 = vsub.f32 0.0, %v6302
        %v6383 = vsub.f32 0.0, %v6303
        %v6384 = vsub.f32 0.0, %v6304
        %v6385 = vsub.f32 0.0, %v6305
        %v6386 = vsub.f32 0.0, %v6306
        %v6387 = vsub.f32 0.0, %v6307
        %v6388 = vsub.f32 0.0, %v6308
        %v6389 = vsub.f32 0.0, %v6309
        %v6390 = vsub.f32 0.0, %v6310
        %v6391 = vsub.f32 0.0, %v6311
        %v6392 = vsub.f32 0.0, %v6312
        %v6393 = vsub.f32 0.0, %v6313
        %v6394 = vsub.f32 0.0, %v6314
        %v6395 = vsub.f32 0.0, %v6315
        %v6396 = vsub.f32 0.0, %v6316
        %v6397 = vsub.f32 0.0, %v6317
        %v6398 = vsub.f32 0.0, %v6318
        %v6399 = vsub.f32 0.0, %v6319
        %v6400 = vsub.f32 0.0, %v6320
        %v6401 = vsub.f32 0.0, %v6321
        %v6402 = vsub.f32 0.0, %v6322
        %v6403 = vsub.f32 0.0, %v6323
        %v6404 = vsub.f32 0.0, %v6324
        %v6405 = vsub.f32 0.0, %v6325
        %v6406 = vsub.f32 0.0, %v6326
        %v6407 = vsub.f32 0.0, %v6327
        %v6408 = vsub.f32 0.0, %v6328
        %v6409 = vsub.f32 0.0, %v6329
        %v6410 = vsub.f32 0.0, %v6330
        %v6411 = vsub.f32 0.0, %v6331
        %v6412 = vsub.f32 0.0, %v6332
        %v6413 = vsub.f32 0.0, %v6333
        %v6414 = vsub.f32 0.0, %v6334
        %v6415 = vsub.f32 0.0, %v6335
        %v6416 = vsub.f32 0.0, %v6336
        %v6417 = vsub.f32 0.0, %v6337
        %v6418 = vsub.f32 0.0, %v6338
        %v6419 = vsub.f32 0.0, %v6339
        %v6420 = vsub.f32 0.0, %v6340
        %v6421 = vsub.f32 0.0, %v6341
        %v6422 = vsub.f32 0.0, %v6342
        %v6423 = vsub.f32 0.0, %v6343
        %v6424 = vsub.f32 0.0, %v6344
        %v6425 = vsub.f32 0.0, %v6345
        %v6426 = vsub.f32 0.0, %v6346
        %v6427 = vmul.f32 %v6347, 1.442695
        %v6428 = vpow.pop %v6427
        %v6429 = vmul.f32 %v6348, 1.442695
        %v6430 = vpow.pop %v6429
        %v6431 = vmul.f32 %v6349, 1.442695
        %v6432 = vpow.pop %v6431
        %v6433 = vmul.f32 %v6350, 1.442695
        %v6434 = vpow.pop %v6433
        %v6435 = vmul.f32 %v6351, 1.442695
        %v6436 = vpow.pop %v6435
        %v6437 = vmul.f32 %v6352, 1.442695
        %v6438 = vpow.pop %v6437
        %v6439 = vmul.f32 %v6353, 1.442695
        %v6440 = vpow.pop %v6439
        %v6441 = vmul.f32 %v6354, 1.442695
        %v6442 = vpow.pop %v6441
        %v6443 = vmul.f32 %v6355, 1.442695
        %v6444 = vpow.pop %v6443
        %v6445 = vmul.f32 %v6356, 1.442695
        %v6446 = vpow.pop %v6445
        %v6447 = vmul.f32 %v6357, 1.442695
        %v6448 = vpow.pop %v6447
        %v6449 = vmul.f32 %v6358, 1.442695
        %v6450 = vpow.pop %v6449
        %v6451 = vmul.f32 %v6359, 1.442695
        %v6452 = vpow.pop %v6451
        %v6453 = vmul.f32 %v6360, 1.442695
        %v6454 = vpow.pop %v6453
        %v6455 = vmul.f32 %v6361, 1.442695
        %v6456 = vpow.pop %v6455
        %v6457 = vmul.f32 %v6362, 1.442695
        %v6458 = vpow.pop %v6457
        %v6459 = vmul.f32 %v6363, 1.442695
        %v6460 = vpow.pop %v6459
        %v6461 = vmul.f32 %v6364, 1.442695
        %v6462 = vpow.pop %v6461
        %v6463 = vmul.f32 %v6365, 1.442695
        %v6464 = vpow.pop %v6463
        %v6465 = vmul.f32 %v6366, 1.442695
        %v6466 = vpow.pop %v6465
        %v6467 = vmul.f32 %v6367, 1.442695
        %v6468 = vpow.pop %v6467
        %v6469 = vmul.f32 %v6368, 1.442695
        %v6470 = vpow.pop %v6469
        %v6471 = vmul.f32 %v6369, 1.442695
        %v6472 = vpow.pop %v6471
        %v6473 = vmul.f32 %v6370, 1.442695
        %v6474 = vpow.pop %v6473
        %v6475 = vmul.f32 %v6371, 1.442695
        %v6476 = vpow.pop %v6475
        %v6477 = vmul.f32 %v6372, 1.442695
        %v6478 = vpow.pop %v6477
        %v6479 = vmul.f32 %v6373, 1.442695
        %v6480 = vpow.pop %v6479
        %v6481 = vmul.f32 %v6374, 1.442695
        %v6482 = vpow.pop %v6481
        %v6483 = vmul.f32 %v6375, 1.442695
        %v6484 = vpow.pop %v6483
        %v6485 = vmul.f32 %v6376, 1.442695
        %v6486 = vpow.pop %v6485
        %v6487 = vmul.f32 %v6377, 1.442695
        %v6488 = vpow.pop %v6487
        %v6489 = vmul.f32 %v6378, 1.442695
        %v6490 = vpow.pop %v6489
        %v6491 = vmul.f32 %v6379, 1.442695
        %v6492 = vpow.pop %v6491
        %v6493 = vmul.f32 %v6380, 1.442695
        %v6494 = vpow.pop %v6493
        %v6495 = vmul.f32 %v6381, 1.442695
        %v6496 = vpow.pop %v6495
        %v6497 = vmul.f32 %v6382, 1.442695
        %v6498 = vpow.pop %v6497
        %v6499 = vmul.f32 %v6383, 1.442695
        %v6500 = vpow.pop %v6499
        %v6501 = vmul.f32 %v6384, 1.442695
        %v6502 = vpow.pop %v6501
        %v6503 = vmul.f32 %v6385, 1.442695
        %v6504 = vpow.pop %v6503
        %v6505 = vmul.f32 %v6386, 1.442695
        %v6506 = vpow.pop %v6505
        %v6507 = vmul.f32 %v6387, 1.442695
        %v6508 = vpow.pop %v6507
        %v6509 = vmul.f32 %v6388, 1.442695
        %v6510 = vpow.pop %v6509
        %v6511 = vmul.f32 %v6389, 1.442695
        %v6512 = vpow.pop %v6511
        %v6513 = vmul.f32 %v6390, 1.442695
        %v6514 = vpow.pop %v6513
        %v6515 = vmul.f32 %v6391, 1.442695
        %v6516 = vpow.pop %v6515
        %v6517 = vmul.f32 %v6392, 1.442695
        %v6518 = vpow.pop %v6517
        %v6519 = vmul.f32 %v6393, 1.442695
        %v6520 = vpow.pop %v6519
        %v6521 = vmul.f32 %v6394, 1.442695
        %v6522 = vpow.pop %v6521
        %v6523 = vmul.f32 %v6395, 1.442695
        %v6524 = vpow.pop %v6523
        %v6525 = vmul.f32 %v6396, 1.442695
        %v6526 = vpow.pop %v6525
        %v6527 = vmul.f32 %v6397, 1.442695
        %v6528 = vpow.pop %v6527
        %v6529 = vmul.f32 %v6398, 1.442695
        %v6530 = vpow.pop %v6529
        %v6531 = vmul.f32 %v6399, 1.442695
        %v6532 = vpow.pop %v6531
        %v6533 = vmul.f32 %v6400, 1.442695
        %v6534 = vpow.pop %v6533
        %v6535 = vmul.f32 %v6401, 1.442695
        %v6536 = vpow.pop %v6535
        %v6537 = vmul.f32 %v6402, 1.442695
        %v6538 = vpow.pop %v6537
        %v6539 = vmul.f32 %v6403, 1.442695
        %v6540 = vpow.pop %v6539
        %v6541 = vmul.f32 %v6404, 1.442695
        %v6542 = vpow.pop %v6541
        %v6543 = vmul.f32 %v6405, 1.442695
        %v6544 = vpow.pop %v6543
        %v6545 = vmul.f32 %v6406, 1.442695
        %v6546 = vpow.pop %v6545
        %v6547 = vmul.f32 %v6407, 1.442695
        %v6548 = vpow.pop %v6547
        %v6549 = vmul.f32 %v6408, 1.442695
        %v6550 = vpow.pop %v6549
        %v6551 = vmul.f32 %v6409, 1.442695
        %v6552 = vpow.pop %v6551
        %v6553 = vmul.f32 %v6410, 1.442695
        %v6554 = vpow.pop %v6553
        %v6555 = vmul.f32 %v6411, 1.442695
        %v6556 = vpow.pop %v6555
        %v6557 = vmul.f32 %v6412, 1.442695
        %v6558 = vpow.pop %v6557
        %v6559 = vmul.f32 %v6413, 1.442695
        %v6560 = vpow.pop %v6559
        %v6561 = vmul.f32 %v6414, 1.442695
        %v6562 = vpow.pop %v6561
        %v6563 = vmul.f32 %v6415, 1.442695
        %v6564 = vpow.pop %v6563
        %v6565 = vmul.f32 %v6416, 1.442695
        %v6566 = vpow.pop %v6565
        %v6567 = vmul.f32 %v6417, 1.442695
        %v6568 = vpow.pop %v6567
        %v6569 = vmul.f32 %v6418, 1.442695
        %v6570 = vpow.pop %v6569
        %v6571 = vmul.f32 %v6419, 1.442695
        %v6572 = vpow.pop %v6571
        %v6573 = vmul.f32 %v6420, 1.442695
        %v6574 = vpow.pop %v6573
        %v6575 = vmul.f32 %v6421, 1.442695
        %v6576 = vpow.pop %v6575
        %v6577 = vmul.f32 %v6422, 1.442695
        %v6578 = vpow.pop %v6577
        %v6579 = vmul.f32 %v6423, 1.442695
        %v6580 = vpow.pop %v6579
        %v6581 = vmul.f32 %v6424, 1.442695
        %v6582 = vpow.pop %v6581
        %v6583 = vmul.f32 %v6425, 1.442695
        %v6584 = vpow.pop %v6583
        %v6585 = vmul.f32 %v6426, 1.442695
        %v6586 = vpow.pop %v6585
        %v6587 = vadd.f32 %v6428, 1.0
        %v6588 = vlog2.pop %v6587
        %v6589 = vmul.f32 %v6588, 0.6931472
        %v6590 = vmul.f32 -0.5, %v6428
        %v6591 = vadd.f32 %v6590, 1.0
        %v6592 = vmul.f32 %v6591, %v6428
        %v6593 = vand.u32 2147483647, %v6428
        %vm6594 = vcmp.lt.f32.partialorder %v6593, 0.0004427343
        %v6595 = vsel %vm6594, %v6592, %v6589
        %v6596 = vadd.f32 %v6430, 1.0
        %v6597 = vlog2.pop %v6596
        %v6598 = vmul.f32 %v6597, 0.6931472
        %v6599 = vmul.f32 -0.5, %v6430
        %v6600 = vadd.f32 %v6599, 1.0
        %v6601 = vmul.f32 %v6600, %v6430
        %v6602 = vand.u32 2147483647, %v6430
        %vm6603 = vcmp.lt.f32.partialorder %v6602, 0.0004427343
        %v6604 = vsel %vm6603, %v6601, %v6598
        %v6605 = vadd.f32 %v6432, 1.0
        %v6606 = vlog2.pop %v6605
        %v6607 = vmul.f32 %v6606, 0.6931472
        %v6608 = vmul.f32 -0.5, %v6432
        %v6609 = vadd.f32 %v6608, 1.0
        %v6610 = vmul.f32 %v6609, %v6432
        %v6611 = vand.u32 2147483647, %v6432
        %vm6612 = vcmp.lt.f32.partialorder %v6611, 0.0004427343
        %v6613 = vsel %vm6612, %v6610, %v6607
        %v6614 = vadd.f32 %v6434, 1.0
        %v6615 = vlog2.pop %v6614
        %v6616 = vmul.f32 %v6615, 0.6931472
        %v6617 = vmul.f32 -0.5, %v6434
        %v6618 = vadd.f32 %v6617, 1.0
        %v6619 = vmul.f32 %v6618, %v6434
        %v6620 = vand.u32 2147483647, %v6434
        %vm6621 = vcmp.lt.f32.partialorder %v6620, 0.0004427343
        %v6622 = vsel %vm6621, %v6619, %v6616
        %v6623 = vadd.f32 %v6436, 1.0
        %v6624 = vlog2.pop %v6623
        %v6625 = vmul.f32 %v6624, 0.6931472
        %v6626 = vmul.f32 -0.5, %v6436
        %v6627 = vadd.f32 %v6626, 1.0
        %v6628 = vmul.f32 %v6627, %v6436
        %v6629 = vand.u32 2147483647, %v6436
        %vm6630 = vcmp.lt.f32.partialorder %v6629, 0.0004427343
        %v6631 = vsel %vm6630, %v6628, %v6625
        %v6632 = vadd.f32 %v6438, 1.0
        %v6633 = vlog2.pop %v6632
        %v6634 = vmul.f32 %v6633, 0.6931472
        %v6635 = vmul.f32 -0.5, %v6438
        %v6636 = vadd.f32 %v6635, 1.0
        %v6637 = vmul.f32 %v6636, %v6438
        %v6638 = vand.u32 2147483647, %v6438
        %vm6639 = vcmp.lt.f32.partialorder %v6638, 0.0004427343
        %v6640 = vsel %vm6639, %v6637, %v6634
        %v6641 = vadd.f32 %v6440, 1.0
        %v6642 = vlog2.pop %v6641
        %v6643 = vmul.f32 %v6642, 0.6931472
        %v6644 = vmul.f32 -0.5, %v6440
        %v6645 = vadd.f32 %v6644, 1.0
        %v6646 = vmul.f32 %v6645, %v6440
        %v6647 = vand.u32 2147483647, %v6440
        %vm6648 = vcmp.lt.f32.partialorder %v6647, 0.0004427343
        %v6649 = vsel %vm6648, %v6646, %v6643
        %v6650 = vadd.f32 %v6442, 1.0
        %v6651 = vlog2.pop %v6650
        %v6652 = vmul.f32 %v6651, 0.6931472
        %v6653 = vmul.f32 -0.5, %v6442
        %v6654 = vadd.f32 %v6653, 1.0
        %v6655 = vmul.f32 %v6654, %v6442
        %v6656 = vand.u32 2147483647, %v6442
        %vm6657 = vcmp.lt.f32.partialorder %v6656, 0.0004427343
        %v6658 = vsel %vm6657, %v6655, %v6652
        %v6659 = vadd.f32 %v6444, 1.0
        %v6660 = vlog2.pop %v6659
        %v6661 = vmul.f32 %v6660, 0.6931472
        %v6662 = vmul.f32 -0.5, %v6444
        %v6663 = vadd.f32 %v6662, 1.0
        %v6664 = vmul.f32 %v6663, %v6444
        %v6665 = vand.u32 2147483647, %v6444
        %vm6666 = vcmp.lt.f32.partialorder %v6665, 0.0004427343
        %v6667 = vsel %vm6666, %v6664, %v6661
        %v6668 = vadd.f32 %v6446, 1.0
        %v6669 = vlog2.pop %v6668
        %v6670 = vmul.f32 %v6669, 0.6931472
        %v6671 = vmul.f32 -0.5, %v6446
        %v6672 = vadd.f32 %v6671, 1.0
        %v6673 = vmul.f32 %v6672, %v6446
        %v6674 = vand.u32 2147483647, %v6446
        %vm6675 = vcmp.lt.f32.partialorder %v6674, 0.0004427343
        %v6676 = vsel %vm6675, %v6673, %v6670
        %v6677 = vadd.f32 %v6448, 1.0
        %v6678 = vlog2.pop %v6677
        %v6679 = vmul.f32 %v6678, 0.6931472
        %v6680 = vmul.f32 -0.5, %v6448
        %v6681 = vadd.f32 %v6680, 1.0
        %v6682 = vmul.f32 %v6681, %v6448
        %v6683 = vand.u32 2147483647, %v6448
        %vm6684 = vcmp.lt.f32.partialorder %v6683, 0.0004427343
        %v6685 = vsel %vm6684, %v6682, %v6679
        %v6686 = vadd.f32 %v6450, 1.0
        %v6687 = vlog2.pop %v6686
        %v6688 = vmul.f32 %v6687, 0.6931472
        %v6689 = vmul.f32 -0.5, %v6450
        %v6690 = vadd.f32 %v6689, 1.0
        %v6691 = vmul.f32 %v6690, %v6450
        %v6692 = vand.u32 2147483647, %v6450
        %vm6693 = vcmp.lt.f32.partialorder %v6692, 0.0004427343
        %v6694 = vsel %vm6693, %v6691, %v6688
        %v6695 = vadd.f32 %v6452, 1.0
        %v6696 = vlog2.pop %v6695
        %v6697 = vmul.f32 %v6696, 0.6931472
        %v6698 = vmul.f32 -0.5, %v6452
        %v6699 = vadd.f32 %v6698, 1.0
        %v6700 = vmul.f32 %v6699, %v6452
        %v6701 = vand.u32 2147483647, %v6452
        %vm6702 = vcmp.lt.f32.partialorder %v6701, 0.0004427343
        %v6703 = vsel %vm6702, %v6700, %v6697
        %v6704 = vadd.f32 %v6454, 1.0
        %v6705 = vlog2.pop %v6704
        %v6706 = vmul.f32 %v6705, 0.6931472
        %v6707 = vmul.f32 -0.5, %v6454
        %v6708 = vadd.f32 %v6707, 1.0
        %v6709 = vmul.f32 %v6708, %v6454
        %v6710 = vand.u32 2147483647, %v6454
        %vm6711 = vcmp.lt.f32.partialorder %v6710, 0.0004427343
        %v6712 = vsel %vm6711, %v6709, %v6706
        %v6713 = vadd.f32 %v6456, 1.0
        %v6714 = vlog2.pop %v6713
        %v6715 = vmul.f32 %v6714, 0.6931472
        %v6716 = vmul.f32 -0.5, %v6456
        %v6717 = vadd.f32 %v6716, 1.0
        %v6718 = vmul.f32 %v6717, %v6456
        %v6719 = vand.u32 2147483647, %v6456
        %vm6720 = vcmp.lt.f32.partialorder %v6719, 0.0004427343
        %v6721 = vsel %vm6720, %v6718, %v6715
        %v6722 = vadd.f32 %v6458, 1.0
        %v6723 = vlog2.pop %v6722
        %v6724 = vmul.f32 %v6723, 0.6931472
        %v6725 = vmul.f32 -0.5, %v6458
        %v6726 = vadd.f32 %v6725, 1.0
        %v6727 = vmul.f32 %v6726, %v6458
        %v6728 = vand.u32 2147483647, %v6458
        %vm6729 = vcmp.lt.f32.partialorder %v6728, 0.0004427343
        %v6730 = vsel %vm6729, %v6727, %v6724
        %v6731 = vadd.f32 %v6460, 1.0
        %v6732 = vlog2.pop %v6731
        %v6733 = vmul.f32 %v6732, 0.6931472
        %v6734 = vmul.f32 -0.5, %v6460
        %v6735 = vadd.f32 %v6734, 1.0
        %v6736 = vmul.f32 %v6735, %v6460
        %v6737 = vand.u32 2147483647, %v6460
        %vm6738 = vcmp.lt.f32.partialorder %v6737, 0.0004427343
        %v6739 = vsel %vm6738, %v6736, %v6733
        %v6740 = vadd.f32 %v6462, 1.0
        %v6741 = vlog2.pop %v6740
        %v6742 = vmul.f32 %v6741, 0.6931472
        %v6743 = vmul.f32 -0.5, %v6462
        %v6744 = vadd.f32 %v6743, 1.0
        %v6745 = vmul.f32 %v6744, %v6462
        %v6746 = vand.u32 2147483647, %v6462
        %vm6747 = vcmp.lt.f32.partialorder %v6746, 0.0004427343
        %v6748 = vsel %vm6747, %v6745, %v6742
        %v6749 = vadd.f32 %v6464, 1.0
        %v6750 = vlog2.pop %v6749
        %v6751 = vmul.f32 %v6750, 0.6931472
        %v6752 = vmul.f32 -0.5, %v6464
        %v6753 = vadd.f32 %v6752, 1.0
        %v6754 = vmul.f32 %v6753, %v6464
        %v6755 = vand.u32 2147483647, %v6464
        %vm6756 = vcmp.lt.f32.partialorder %v6755, 0.0004427343
        %v6757 = vsel %vm6756, %v6754, %v6751
        %v6758 = vadd.f32 %v6466, 1.0
        %v6759 = vlog2.pop %v6758
        %v6760 = vmul.f32 %v6759, 0.6931472
        %v6761 = vmul.f32 -0.5, %v6466
        %v6762 = vadd.f32 %v6761, 1.0
        %v6763 = vmul.f32 %v6762, %v6466
        %v6764 = vand.u32 2147483647, %v6466
        %vm6765 = vcmp.lt.f32.partialorder %v6764, 0.0004427343
        %v6766 = vsel %vm6765, %v6763, %v6760
        %v6767 = vadd.f32 %v6468, 1.0
        %v6768 = vlog2.pop %v6767
        %v6769 = vmul.f32 %v6768, 0.6931472
        %v6770 = vmul.f32 -0.5, %v6468
        %v6771 = vadd.f32 %v6770, 1.0
        %v6772 = vmul.f32 %v6771, %v6468
        %v6773 = vand.u32 2147483647, %v6468
        %vm6774 = vcmp.lt.f32.partialorder %v6773, 0.0004427343
        %v6775 = vsel %vm6774, %v6772, %v6769
        %v6776 = vadd.f32 %v6470, 1.0
        %v6777 = vlog2.pop %v6776
        %v6778 = vmul.f32 %v6777, 0.6931472
        %v6779 = vmul.f32 -0.5, %v6470
        %v6780 = vadd.f32 %v6779, 1.0
        %v6781 = vmul.f32 %v6780, %v6470
        %v6782 = vand.u32 2147483647, %v6470
        %vm6783 = vcmp.lt.f32.partialorder %v6782, 0.0004427343
        %v6784 = vsel %vm6783, %v6781, %v6778
        %v6785 = vadd.f32 %v6472, 1.0
        %v6786 = vlog2.pop %v6785
        %v6787 = vmul.f32 %v6786, 0.6931472
        %v6788 = vmul.f32 -0.5, %v6472
        %v6789 = vadd.f32 %v6788, 1.0
        %v6790 = vmul.f32 %v6789, %v6472
        %v6791 = vand.u32 2147483647, %v6472
        %vm6792 = vcmp.lt.f32.partialorder %v6791, 0.0004427343
        %v6793 = vsel %vm6792, %v6790, %v6787
        %v6794 = vadd.f32 %v6474, 1.0
        %v6795 = vlog2.pop %v6794
        %v6796 = vmul.f32 %v6795, 0.6931472
        %v6797 = vmul.f32 -0.5, %v6474
        %v6798 = vadd.f32 %v6797, 1.0
        %v6799 = vmul.f32 %v6798, %v6474
        %v6800 = vand.u32 2147483647, %v6474
        %vm6801 = vcmp.lt.f32.partialorder %v6800, 0.0004427343
        %v6802 = vsel %vm6801, %v6799, %v6796
        %v6803 = vadd.f32 %v6476, 1.0
        %v6804 = vlog2.pop %v6803
        %v6805 = vmul.f32 %v6804, 0.6931472
        %v6806 = vmul.f32 -0.5, %v6476
        %v6807 = vadd.f32 %v6806, 1.0
        %v6808 = vmul.f32 %v6807, %v6476
        %v6809 = vand.u32 2147483647, %v6476
        %vm6810 = vcmp.lt.f32.partialorder %v6809, 0.0004427343
        %v6811 = vsel %vm6810, %v6808, %v6805
        %v6812 = vadd.f32 %v6478, 1.0
        %v6813 = vlog2.pop %v6812
        %v6814 = vmul.f32 %v6813, 0.6931472
        %v6815 = vmul.f32 -0.5, %v6478
        %v6816 = vadd.f32 %v6815, 1.0
        %v6817 = vmul.f32 %v6816, %v6478
        %v6818 = vand.u32 2147483647, %v6478
        %vm6819 = vcmp.lt.f32.partialorder %v6818, 0.0004427343
        %v6820 = vsel %vm6819, %v6817, %v6814
        %v6821 = vadd.f32 %v6480, 1.0
        %v6822 = vlog2.pop %v6821
        %v6823 = vmul.f32 %v6822, 0.6931472
        %v6824 = vmul.f32 -0.5, %v6480
        %v6825 = vadd.f32 %v6824, 1.0
        %v6826 = vmul.f32 %v6825, %v6480
        %v6827 = vand.u32 2147483647, %v6480
        %vm6828 = vcmp.lt.f32.partialorder %v6827, 0.0004427343
        %v6829 = vsel %vm6828, %v6826, %v6823
        %v6830 = vadd.f32 %v6482, 1.0
        %v6831 = vlog2.pop %v6830
        %v6832 = vmul.f32 %v6831, 0.6931472
        %v6833 = vmul.f32 -0.5, %v6482
        %v6834 = vadd.f32 %v6833, 1.0
        %v6835 = vmul.f32 %v6834, %v6482
        %v6836 = vand.u32 2147483647, %v6482
        %vm6837 = vcmp.lt.f32.partialorder %v6836, 0.0004427343
        %v6838 = vsel %vm6837, %v6835, %v6832
        %v6839 = vadd.f32 %v6484, 1.0
        %v6840 = vlog2.pop %v6839
        %v6841 = vmul.f32 %v6840, 0.6931472
        %v6842 = vmul.f32 -0.5, %v6484
        %v6843 = vadd.f32 %v6842, 1.0
        %v6844 = vmul.f32 %v6843, %v6484
        %v6845 = vand.u32 2147483647, %v6484
        %vm6846 = vcmp.lt.f32.partialorder %v6845, 0.0004427343
        %v6847 = vsel %vm6846, %v6844, %v6841
        %v6848 = vadd.f32 %v6486, 1.0
        %v6849 = vlog2.pop %v6848
        %v6850 = vmul.f32 %v6849, 0.6931472
        %v6851 = vmul.f32 -0.5, %v6486
        %v6852 = vadd.f32 %v6851, 1.0
        %v6853 = vmul.f32 %v6852, %v6486
        %v6854 = vand.u32 2147483647, %v6486
        %vm6855 = vcmp.lt.f32.partialorder %v6854, 0.0004427343
        %v6856 = vsel %vm6855, %v6853, %v6850
        %v6857 = vadd.f32 %v6488, 1.0
        %v6858 = vlog2.pop %v6857
        %v6859 = vmul.f32 %v6858, 0.6931472
        %v6860 = vmul.f32 -0.5, %v6488
        %v6861 = vadd.f32 %v6860, 1.0
        %v6862 = vmul.f32 %v6861, %v6488
        %v6863 = vand.u32 2147483647, %v6488
        %vm6864 = vcmp.lt.f32.partialorder %v6863, 0.0004427343
        %v6865 = vsel %vm6864, %v6862, %v6859
        %v6866 = vadd.f32 %v6490, 1.0
        %v6867 = vlog2.pop %v6866
        %v6868 = vmul.f32 %v6867, 0.6931472
        %v6869 = vmul.f32 -0.5, %v6490
        %v6870 = vadd.f32 %v6869, 1.0
        %v6871 = vmul.f32 %v6870, %v6490
        %v6872 = vand.u32 2147483647, %v6490
        %vm6873 = vcmp.lt.f32.partialorder %v6872, 0.0004427343
        %v6874 = vsel %vm6873, %v6871, %v6868
        %v6875 = vadd.f32 %v6492, 1.0
        %v6876 = vlog2.pop %v6875
        %v6877 = vmul.f32 %v6876, 0.6931472
        %v6878 = vmul.f32 -0.5, %v6492
        %v6879 = vadd.f32 %v6878, 1.0
        %v6880 = vmul.f32 %v6879, %v6492
        %v6881 = vand.u32 2147483647, %v6492
        %vm6882 = vcmp.lt.f32.partialorder %v6881, 0.0004427343
        %v6883 = vsel %vm6882, %v6880, %v6877
        %v6884 = vadd.f32 %v6494, 1.0
        %v6885 = vlog2.pop %v6884
        %v6886 = vmul.f32 %v6885, 0.6931472
        %v6887 = vmul.f32 -0.5, %v6494
        %v6888 = vadd.f32 %v6887, 1.0
        %v6889 = vmul.f32 %v6888, %v6494
        %v6890 = vand.u32 2147483647, %v6494
        %vm6891 = vcmp.lt.f32.partialorder %v6890, 0.0004427343
        %v6892 = vsel %vm6891, %v6889, %v6886
        %v6893 = vadd.f32 %v6496, 1.0
        %v6894 = vlog2.pop %v6893
        %v6895 = vmul.f32 %v6894, 0.6931472
        %v6896 = vmul.f32 -0.5, %v6496
        %v6897 = vadd.f32 %v6896, 1.0
        %v6898 = vmul.f32 %v6897, %v6496
        %v6899 = vand.u32 2147483647, %v6496
        %vm6900 = vcmp.lt.f32.partialorder %v6899, 0.0004427343
        %v6901 = vsel %vm6900, %v6898, %v6895
        %v6902 = vadd.f32 %v6498, 1.0
        %v6903 = vlog2.pop %v6902
        %v6904 = vmul.f32 %v6903, 0.6931472
        %v6905 = vmul.f32 -0.5, %v6498
        %v6906 = vadd.f32 %v6905, 1.0
        %v6907 = vmul.f32 %v6906, %v6498
        %v6908 = vand.u32 2147483647, %v6498
        %vm6909 = vcmp.lt.f32.partialorder %v6908, 0.0004427343
        %v6910 = vsel %vm6909, %v6907, %v6904
        %v6911 = vadd.f32 %v6500, 1.0
        %v6912 = vlog2.pop %v6911
        %v6913 = vmul.f32 %v6912, 0.6931472
        %v6914 = vmul.f32 -0.5, %v6500
        %v6915 = vadd.f32 %v6914, 1.0
        %v6916 = vmul.f32 %v6915, %v6500
        %v6917 = vand.u32 2147483647, %v6500
        %vm6918 = vcmp.lt.f32.partialorder %v6917, 0.0004427343
        %v6919 = vsel %vm6918, %v6916, %v6913
        %v6920 = vadd.f32 %v6502, 1.0
        %v6921 = vlog2.pop %v6920
        %v6922 = vmul.f32 %v6921, 0.6931472
        %v6923 = vmul.f32 -0.5, %v6502
        %v6924 = vadd.f32 %v6923, 1.0
        %v6925 = vmul.f32 %v6924, %v6502
        %v6926 = vand.u32 2147483647, %v6502
        %vm6927 = vcmp.lt.f32.partialorder %v6926, 0.0004427343
        %v6928 = vsel %vm6927, %v6925, %v6922
        %v6929 = vadd.f32 %v6504, 1.0
        %v6930 = vlog2.pop %v6929
        %v6931 = vmul.f32 %v6930, 0.6931472
        %v6932 = vmul.f32 -0.5, %v6504
        %v6933 = vadd.f32 %v6932, 1.0
        %v6934 = vmul.f32 %v6933, %v6504
        %v6935 = vand.u32 2147483647, %v6504
        %vm6936 = vcmp.lt.f32.partialorder %v6935, 0.0004427343
        %v6937 = vsel %vm6936, %v6934, %v6931
        %v6938 = vadd.f32 %v6506, 1.0
        %v6939 = vlog2.pop %v6938
        %v6940 = vmul.f32 %v6939, 0.6931472
        %v6941 = vmul.f32 -0.5, %v6506
        %v6942 = vadd.f32 %v6941, 1.0
        %v6943 = vmul.f32 %v6942, %v6506
        %v6944 = vand.u32 2147483647, %v6506
        %vm6945 = vcmp.lt.f32.partialorder %v6944, 0.0004427343
        %v6946 = vsel %vm6945, %v6943, %v6940
        %v6947 = vadd.f32 %v6508, 1.0
        %v6948 = vlog2.pop %v6947
        %v6949 = vmul.f32 %v6948, 0.6931472
        %v6950 = vmul.f32 -0.5, %v6508
        %v6951 = vadd.f32 %v6950, 1.0
        %v6952 = vmul.f32 %v6951, %v6508
        %v6953 = vand.u32 2147483647, %v6508
        %vm6954 = vcmp.lt.f32.partialorder %v6953, 0.0004427343
        %v6955 = vsel %vm6954, %v6952, %v6949
        %v6956 = vadd.f32 %v6510, 1.0
        %v6957 = vlog2.pop %v6956
        %v6958 = vmul.f32 %v6957, 0.6931472
        %v6959 = vmul.f32 -0.5, %v6510
        %v6960 = vadd.f32 %v6959, 1.0
        %v6961 = vmul.f32 %v6960, %v6510
        %v6962 = vand.u32 2147483647, %v6510
        %vm6963 = vcmp.lt.f32.partialorder %v6962, 0.0004427343
        %v6964 = vsel %vm6963, %v6961, %v6958
        %v6965 = vadd.f32 %v6512, 1.0
        %v6966 = vlog2.pop %v6965
        %v6967 = vmul.f32 %v6966, 0.6931472
        %v6968 = vmul.f32 -0.5, %v6512
        %v6969 = vadd.f32 %v6968, 1.0
        %v6970 = vmul.f32 %v6969, %v6512
        %v6971 = vand.u32 2147483647, %v6512
        %vm6972 = vcmp.lt.f32.partialorder %v6971, 0.0004427343
        %v6973 = vsel %vm6972, %v6970, %v6967
        %v6974 = vadd.f32 %v6514, 1.0
        %v6975 = vlog2.pop %v6974
        %v6976 = vmul.f32 %v6975, 0.6931472
        %v6977 = vmul.f32 -0.5, %v6514
        %v6978 = vadd.f32 %v6977, 1.0
        %v6979 = vmul.f32 %v6978, %v6514
        %v6980 = vand.u32 2147483647, %v6514
        %vm6981 = vcmp.lt.f32.partialorder %v6980, 0.0004427343
        %v6982 = vsel %vm6981, %v6979, %v6976
        %v6983 = vadd.f32 %v6516, 1.0
        %v6984 = vlog2.pop %v6983
        %v6985 = vmul.f32 %v6984, 0.6931472
        %v6986 = vmul.f32 -0.5, %v6516
        %v6987 = vadd.f32 %v6986, 1.0
        %v6988 = vmul.f32 %v6987, %v6516
        %v6989 = vand.u32 2147483647, %v6516
        %vm6990 = vcmp.lt.f32.partialorder %v6989, 0.0004427343
        %v6991 = vsel %vm6990, %v6988, %v6985
        %v6992 = vadd.f32 %v6518, 1.0
        %v6993 = vlog2.pop %v6992
        %v6994 = vmul.f32 %v6993, 0.6931472
        %v6995 = vmul.f32 -0.5, %v6518
        %v6996 = vadd.f32 %v6995, 1.0
        %v6997 = vmul.f32 %v6996, %v6518
        %v6998 = vand.u32 2147483647, %v6518
        %vm6999 = vcmp.lt.f32.partialorder %v6998, 0.0004427343
        %v7000 = vsel %vm6999, %v6997, %v6994
        %v7001 = vadd.f32 %v6520, 1.0
        %v7002 = vlog2.pop %v7001
        %v7003 = vmul.f32 %v7002, 0.6931472
        %v7004 = vmul.f32 -0.5, %v6520
        %v7005 = vadd.f32 %v7004, 1.0
        %v7006 = vmul.f32 %v7005, %v6520
        %v7007 = vand.u32 2147483647, %v6520
        %vm7008 = vcmp.lt.f32.partialorder %v7007, 0.0004427343
        %v7009 = vsel %vm7008, %v7006, %v7003
        %v7010 = vadd.f32 %v6522, 1.0
        %v7011 = vlog2.pop %v7010
        %v7012 = vmul.f32 %v7011, 0.6931472
        %v7013 = vmul.f32 -0.5, %v6522
        %v7014 = vadd.f32 %v7013, 1.0
        %v7015 = vmul.f32 %v7014, %v6522
        %v7016 = vand.u32 2147483647, %v6522
        %vm7017 = vcmp.lt.f32.partialorder %v7016, 0.0004427343
        %v7018 = vsel %vm7017, %v7015, %v7012
        %v7019 = vadd.f32 %v6524, 1.0
        %v7020 = vlog2.pop %v7019
        %v7021 = vmul.f32 %v7020, 0.6931472
        %v7022 = vmul.f32 -0.5, %v6524
        %v7023 = vadd.f32 %v7022, 1.0
        %v7024 = vmul.f32 %v7023, %v6524
        %v7025 = vand.u32 2147483647, %v6524
        %vm7026 = vcmp.lt.f32.partialorder %v7025, 0.0004427343
        %v7027 = vsel %vm7026, %v7024, %v7021
        %v7028 = vadd.f32 %v6526, 1.0
        %v7029 = vlog2.pop %v7028
        %v7030 = vmul.f32 %v7029, 0.6931472
        %v7031 = vmul.f32 -0.5, %v6526
        %v7032 = vadd.f32 %v7031, 1.0
        %v7033 = vmul.f32 %v7032, %v6526
        %v7034 = vand.u32 2147483647, %v6526
        %vm7035 = vcmp.lt.f32.partialorder %v7034, 0.0004427343
        %v7036 = vsel %vm7035, %v7033, %v7030
        %v7037 = vadd.f32 %v6528, 1.0
        %v7038 = vlog2.pop %v7037
        %v7039 = vmul.f32 %v7038, 0.6931472
        %v7040 = vmul.f32 -0.5, %v6528
        %v7041 = vadd.f32 %v7040, 1.0
        %v7042 = vmul.f32 %v7041, %v6528
        %v7043 = vand.u32 2147483647, %v6528
        %vm7044 = vcmp.lt.f32.partialorder %v7043, 0.0004427343
        %v7045 = vsel %vm7044, %v7042, %v7039
        %v7046 = vadd.f32 %v6530, 1.0
        %v7047 = vlog2.pop %v7046
        %v7048 = vmul.f32 %v7047, 0.6931472
        %v7049 = vmul.f32 -0.5, %v6530
        %v7050 = vadd.f32 %v7049, 1.0
        %v7051 = vmul.f32 %v7050, %v6530
        %v7052 = vand.u32 2147483647, %v6530
        %vm7053 = vcmp.lt.f32.partialorder %v7052, 0.0004427343
        %v7054 = vsel %vm7053, %v7051, %v7048
        %v7055 = vadd.f32 %v6532, 1.0
        %v7056 = vlog2.pop %v7055
        %v7057 = vmul.f32 %v7056, 0.6931472
        %v7058 = vmul.f32 -0.5, %v6532
        %v7059 = vadd.f32 %v7058, 1.0
        %v7060 = vmul.f32 %v7059, %v6532
        %v7061 = vand.u32 2147483647, %v6532
        %vm7062 = vcmp.lt.f32.partialorder %v7061, 0.0004427343
        %v7063 = vsel %vm7062, %v7060, %v7057
        %v7064 = vadd.f32 %v6534, 1.0
        %v7065 = vlog2.pop %v7064
        %v7066 = vmul.f32 %v7065, 0.6931472
        %v7067 = vmul.f32 -0.5, %v6534
        %v7068 = vadd.f32 %v7067, 1.0
        %v7069 = vmul.f32 %v7068, %v6534
        %v7070 = vand.u32 2147483647, %v6534
        %vm7071 = vcmp.lt.f32.partialorder %v7070, 0.0004427343
        %v7072 = vsel %vm7071, %v7069, %v7066
        %v7073 = vadd.f32 %v6536, 1.0
        %v7074 = vlog2.pop %v7073
        %v7075 = vmul.f32 %v7074, 0.6931472
        %v7076 = vmul.f32 -0.5, %v6536
        %v7077 = vadd.f32 %v7076, 1.0
        %v7078 = vmul.f32 %v7077, %v6536
        %v7079 = vand.u32 2147483647, %v6536
        %vm7080 = vcmp.lt.f32.partialorder %v7079, 0.0004427343
        %v7081 = vsel %vm7080, %v7078, %v7075
        %v7082 = vadd.f32 %v6538, 1.0
        %v7083 = vlog2.pop %v7082
        %v7084 = vmul.f32 %v7083, 0.6931472
        %v7085 = vmul.f32 -0.5, %v6538
        %v7086 = vadd.f32 %v7085, 1.0
        %v7087 = vmul.f32 %v7086, %v6538
        %v7088 = vand.u32 2147483647, %v6538
        %vm7089 = vcmp.lt.f32.partialorder %v7088, 0.0004427343
        %v7090 = vsel %vm7089, %v7087, %v7084
        %v7091 = vadd.f32 %v6540, 1.0
        %v7092 = vlog2.pop %v7091
        %v7093 = vmul.f32 %v7092, 0.6931472
        %v7094 = vmul.f32 -0.5, %v6540
        %v7095 = vadd.f32 %v7094, 1.0
        %v7096 = vmul.f32 %v7095, %v6540
        %v7097 = vand.u32 2147483647, %v6540
        %vm7098 = vcmp.lt.f32.partialorder %v7097, 0.0004427343
        %v7099 = vsel %vm7098, %v7096, %v7093
        %v7100 = vadd.f32 %v6542, 1.0
        %v7101 = vlog2.pop %v7100
        %v7102 = vmul.f32 %v7101, 0.6931472
        %v7103 = vmul.f32 -0.5, %v6542
        %v7104 = vadd.f32 %v7103, 1.0
        %v7105 = vmul.f32 %v7104, %v6542
        %v7106 = vand.u32 2147483647, %v6542
        %vm7107 = vcmp.lt.f32.partialorder %v7106, 0.0004427343
        %v7108 = vsel %vm7107, %v7105, %v7102
        %v7109 = vadd.f32 %v6544, 1.0
        %v7110 = vlog2.pop %v7109
        %v7111 = vmul.f32 %v7110, 0.6931472
        %v7112 = vmul.f32 -0.5, %v6544
        %v7113 = vadd.f32 %v7112, 1.0
        %v7114 = vmul.f32 %v7113, %v6544
        %v7115 = vand.u32 2147483647, %v6544
        %vm7116 = vcmp.lt.f32.partialorder %v7115, 0.0004427343
        %v7117 = vsel %vm7116, %v7114, %v7111
        %v7118 = vadd.f32 %v6546, 1.0
        %v7119 = vlog2.pop %v7118
        %v7120 = vmul.f32 %v7119, 0.6931472
        %v7121 = vmul.f32 -0.5, %v6546
        %v7122 = vadd.f32 %v7121, 1.0
        %v7123 = vmul.f32 %v7122, %v6546
        %v7124 = vand.u32 2147483647, %v6546
        %vm7125 = vcmp.lt.f32.partialorder %v7124, 0.0004427343
        %v7126 = vsel %vm7125, %v7123, %v7120
        %v7127 = vadd.f32 %v6548, 1.0
        %v7128 = vlog2.pop %v7127
        %v7129 = vmul.f32 %v7128, 0.6931472
        %v7130 = vmul.f32 -0.5, %v6548
        %v7131 = vadd.f32 %v7130, 1.0
        %v7132 = vmul.f32 %v7131, %v6548
        %v7133 = vand.u32 2147483647, %v6548
        %vm7134 = vcmp.lt.f32.partialorder %v7133, 0.0004427343
        %v7135 = vsel %vm7134, %v7132, %v7129
        %v7136 = vadd.f32 %v6550, 1.0
        %v7137 = vlog2.pop %v7136
        %v7138 = vmul.f32 %v7137, 0.6931472
        %v7139 = vmul.f32 -0.5, %v6550
        %v7140 = vadd.f32 %v7139, 1.0
        %v7141 = vmul.f32 %v7140, %v6550
        %v7142 = vand.u32 2147483647, %v6550
        %vm7143 = vcmp.lt.f32.partialorder %v7142, 0.0004427343
        %v7144 = vsel %vm7143, %v7141, %v7138
        %v7145 = vadd.f32 %v6552, 1.0
        %v7146 = vlog2.pop %v7145
        %v7147 = vmul.f32 %v7146, 0.6931472
        %v7148 = vmul.f32 -0.5, %v6552
        %v7149 = vadd.f32 %v7148, 1.0
        %v7150 = vmul.f32 %v7149, %v6552
        %v7151 = vand.u32 2147483647, %v6552
        %vm7152 = vcmp.lt.f32.partialorder %v7151, 0.0004427343
        %v7153 = vsel %vm7152, %v7150, %v7147
        %v7154 = vadd.f32 %v6554, 1.0
        %v7155 = vlog2.pop %v7154
        %v7156 = vmul.f32 %v7155, 0.6931472
        %v7157 = vmul.f32 -0.5, %v6554
        %v7158 = vadd.f32 %v7157, 1.0
        %v7159 = vmul.f32 %v7158, %v6554
        %v7160 = vand.u32 2147483647, %v6554
        %vm7161 = vcmp.lt.f32.partialorder %v7160, 0.0004427343
        %v7162 = vsel %vm7161, %v7159, %v7156
        %v7163 = vadd.f32 %v6556, 1.0
        %v7164 = vlog2.pop %v7163
        %v7165 = vmul.f32 %v7164, 0.6931472
        %v7166 = vmul.f32 -0.5, %v6556
        %v7167 = vadd.f32 %v7166, 1.0
        %v7168 = vmul.f32 %v7167, %v6556
        %v7169 = vand.u32 2147483647, %v6556
        %vm7170 = vcmp.lt.f32.partialorder %v7169, 0.0004427343
        %v7171 = vsel %vm7170, %v7168, %v7165
        %v7172 = vadd.f32 %v6558, 1.0
        %v7173 = vlog2.pop %v7172
        %v7174 = vmul.f32 %v7173, 0.6931472
        %v7175 = vmul.f32 -0.5, %v6558
        %v7176 = vadd.f32 %v7175, 1.0
        %v7177 = vmul.f32 %v7176, %v6558
        %v7178 = vand.u32 2147483647, %v6558
        %vm7179 = vcmp.lt.f32.partialorder %v7178, 0.0004427343
        %v7180 = vsel %vm7179, %v7177, %v7174
        %v7181 = vadd.f32 %v6560, 1.0
        %v7182 = vlog2.pop %v7181
        %v7183 = vmul.f32 %v7182, 0.6931472
        %v7184 = vmul.f32 -0.5, %v6560
        %v7185 = vadd.f32 %v7184, 1.0
        %v7186 = vmul.f32 %v7185, %v6560
        %v7187 = vand.u32 2147483647, %v6560
        %vm7188 = vcmp.lt.f32.partialorder %v7187, 0.0004427343
        %v7189 = vsel %vm7188, %v7186, %v7183
        %v7190 = vadd.f32 %v6562, 1.0
        %v7191 = vlog2.pop %v7190
        %v7192 = vmul.f32 %v7191, 0.6931472
        %v7193 = vmul.f32 -0.5, %v6562
        %v7194 = vadd.f32 %v7193, 1.0
        %v7195 = vmul.f32 %v7194, %v6562
        %v7196 = vand.u32 2147483647, %v6562
        %vm7197 = vcmp.lt.f32.partialorder %v7196, 0.0004427343
        %v7198 = vsel %vm7197, %v7195, %v7192
        %v7199 = vadd.f32 %v6564, 1.0
        %v7200 = vlog2.pop %v7199
        %v7201 = vmul.f32 %v7200, 0.6931472
        %v7202 = vmul.f32 -0.5, %v6564
        %v7203 = vadd.f32 %v7202, 1.0
        %v7204 = vmul.f32 %v7203, %v6564
        %v7205 = vand.u32 2147483647, %v6564
        %vm7206 = vcmp.lt.f32.partialorder %v7205, 0.0004427343
        %v7207 = vsel %vm7206, %v7204, %v7201
        %v7208 = vadd.f32 %v6566, 1.0
        %v7209 = vlog2.pop %v7208
        %v7210 = vmul.f32 %v7209, 0.6931472
        %v7211 = vmul.f32 -0.5, %v6566
        %v7212 = vadd.f32 %v7211, 1.0
        %v7213 = vmul.f32 %v7212, %v6566
        %v7214 = vand.u32 2147483647, %v6566
        %vm7215 = vcmp.lt.f32.partialorder %v7214, 0.0004427343
        %v7216 = vsel %vm7215, %v7213, %v7210
        %v7217 = vadd.f32 %v6568, 1.0
        %v7218 = vlog2.pop %v7217
        %v7219 = vmul.f32 %v7218, 0.6931472
        %v7220 = vmul.f32 -0.5, %v6568
        %v7221 = vadd.f32 %v7220, 1.0
        %v7222 = vmul.f32 %v7221, %v6568
        %v7223 = vand.u32 2147483647, %v6568
        %vm7224 = vcmp.lt.f32.partialorder %v7223, 0.0004427343
        %v7225 = vsel %vm7224, %v7222, %v7219
        %v7226 = vadd.f32 %v6570, 1.0
        %v7227 = vlog2.pop %v7226
        %v7228 = vmul.f32 %v7227, 0.6931472
        %v7229 = vmul.f32 -0.5, %v6570
        %v7230 = vadd.f32 %v7229, 1.0
        %v7231 = vmul.f32 %v7230, %v6570
        %v7232 = vand.u32 2147483647, %v6570
        %vm7233 = vcmp.lt.f32.partialorder %v7232, 0.0004427343
        %v7234 = vsel %vm7233, %v7231, %v7228
        %v7235 = vadd.f32 %v6572, 1.0
        %v7236 = vlog2.pop %v7235
        %v7237 = vmul.f32 %v7236, 0.6931472
        %v7238 = vmul.f32 -0.5, %v6572
        %v7239 = vadd.f32 %v7238, 1.0
        %v7240 = vmul.f32 %v7239, %v6572
        %v7241 = vand.u32 2147483647, %v6572
        %vm7242 = vcmp.lt.f32.partialorder %v7241, 0.0004427343
        %v7243 = vsel %vm7242, %v7240, %v7237
        %v7244 = vadd.f32 %v6574, 1.0
        %v7245 = vlog2.pop %v7244
        %v7246 = vmul.f32 %v7245, 0.6931472
        %v7247 = vmul.f32 -0.5, %v6574
        %v7248 = vadd.f32 %v7247, 1.0
        %v7249 = vmul.f32 %v7248, %v6574
        %v7250 = vand.u32 2147483647, %v6574
        %vm7251 = vcmp.lt.f32.partialorder %v7250, 0.0004427343
        %v7252 = vsel %vm7251, %v7249, %v7246
        %v7253 = vadd.f32 %v6576, 1.0
        %v7254 = vlog2.pop %v7253
        %v7255 = vmul.f32 %v7254, 0.6931472
        %v7256 = vmul.f32 -0.5, %v6576
        %v7257 = vadd.f32 %v7256, 1.0
        %v7258 = vmul.f32 %v7257, %v6576
        %v7259 = vand.u32 2147483647, %v6576
        %vm7260 = vcmp.lt.f32.partialorder %v7259, 0.0004427343
        %v7261 = vsel %vm7260, %v7258, %v7255
        %v7262 = vadd.f32 %v6578, 1.0
        %v7263 = vlog2.pop %v7262
        %v7264 = vmul.f32 %v7263, 0.6931472
        %v7265 = vmul.f32 -0.5, %v6578
        %v7266 = vadd.f32 %v7265, 1.0
        %v7267 = vmul.f32 %v7266, %v6578
        %v7268 = vand.u32 2147483647, %v6578
        %vm7269 = vcmp.lt.f32.partialorder %v7268, 0.0004427343
        %v7270 = vsel %vm7269, %v7267, %v7264
        %v7271 = vadd.f32 %v6580, 1.0
        %v7272 = vlog2.pop %v7271
        %v7273 = vmul.f32 %v7272, 0.6931472
        %v7274 = vmul.f32 -0.5, %v6580
        %v7275 = vadd.f32 %v7274, 1.0
        %v7276 = vmul.f32 %v7275, %v6580
        %v7277 = vand.u32 2147483647, %v6580
        %vm7278 = vcmp.lt.f32.partialorder %v7277, 0.0004427343
        %v7279 = vsel %vm7278, %v7276, %v7273
        %v7280 = vadd.f32 %v6582, 1.0
        %v7281 = vlog2.pop %v7280
        %v7282 = vmul.f32 %v7281, 0.6931472
        %v7283 = vmul.f32 -0.5, %v6582
        %v7284 = vadd.f32 %v7283, 1.0
        %v7285 = vmul.f32 %v7284, %v6582
        %v7286 = vand.u32 2147483647, %v6582
        %vm7287 = vcmp.lt.f32.partialorder %v7286, 0.0004427343
        %v7288 = vsel %vm7287, %v7285, %v7282
        %v7289 = vadd.f32 %v6584, 1.0
        %v7290 = vlog2.pop %v7289
        %v7291 = vmul.f32 %v7290, 0.6931472
        %v7292 = vmul.f32 -0.5, %v6584
        %v7293 = vadd.f32 %v7292, 1.0
        %v7294 = vmul.f32 %v7293, %v6584
        %v7295 = vand.u32 2147483647, %v6584
        %vm7296 = vcmp.lt.f32.partialorder %v7295, 0.0004427343
        %v7297 = vsel %vm7296, %v7294, %v7291
        %v7298 = vadd.f32 %v6586, 1.0
        %v7299 = vlog2.pop %v7298
        %v7300 = vmul.f32 %v7299, 0.6931472
        %v7301 = vmul.f32 -0.5, %v6586
        %v7302 = vadd.f32 %v7301, 1.0
        %v7303 = vmul.f32 %v7302, %v6586
        %v7304 = vand.u32 2147483647, %v6586
        %vm7305 = vcmp.lt.f32.partialorder %v7304, 0.0004427343
        %v7306 = vsel %vm7305, %v7303, %v7300
        %v7307 = vmax.f32 %v6187, 0.0
        %v7308 = vmax.f32 %v6188, 0.0
        %v7309 = vmax.f32 %v6189, 0.0
        %v7310 = vmax.f32 %v6190, 0.0
        %v7311 = vmax.f32 %v6191, 0.0
        %v7312 = vmax.f32 %v6192, 0.0
        %v7313 = vmax.f32 %v6193, 0.0
        %v7314 = vmax.f32 %v6194, 0.0
        %v7315 = vmax.f32 %v6195, 0.0
        %v7316 = vmax.f32 %v6196, 0.0
        %v7317 = vmax.f32 %v6197, 0.0
        %v7318 = vmax.f32 %v6198, 0.0
        %v7319 = vmax.f32 %v6199, 0.0
        %v7320 = vmax.f32 %v6200, 0.0
        %v7321 = vmax.f32 %v6201, 0.0
        %v7322 = vmax.f32 %v6202, 0.0
        %v7323 = vmax.f32 %v6203, 0.0
        %v7324 = vmax.f32 %v6204, 0.0
        %v7325 = vmax.f32 %v6205, 0.0
        %v7326 = vmax.f32 %v6206, 0.0
        %v7327 = vmax.f32 %v6207, 0.0
        %v7328 = vmax.f32 %v6208, 0.0
        %v7329 = vmax.f32 %v6209, 0.0
        %v7330 = vmax.f32 %v6210, 0.0
        %v7331 = vmax.f32 %v6211, 0.0
        %v7332 = vmax.f32 %v6212, 0.0
        %v7333 = vmax.f32 %v6213, 0.0
        %v7334 = vmax.f32 %v6214, 0.0
        %v7335 = vmax.f32 %v6215, 0.0
        %v7336 = vmax.f32 %v6216, 0.0
        %v7337 = vmax.f32 %v6217, 0.0
        %v7338 = vmax.f32 %v6218, 0.0
        %v7339 = vmax.f32 %v6219, 0.0
        %v7340 = vmax.f32 %v6220, 0.0
        %v7341 = vmax.f32 %v6221, 0.0
        %v7342 = vmax.f32 %v6222, 0.0
        %v7343 = vmax.f32 %v6223, 0.0
        %v7344 = vmax.f32 %v6224, 0.0
        %v7345 = vmax.f32 %v6225, 0.0
        %v7346 = vmax.f32 %v6226, 0.0
        %v7347 = vmax.f32 %v6227, 0.0
        %v7348 = vmax.f32 %v6228, 0.0
        %v7349 = vmax.f32 %v6229, 0.0
        %v7350 = vmax.f32 %v6230, 0.0
        %v7351 = vmax.f32 %v6231, 0.0
        %v7352 = vmax.f32 %v6232, 0.0
        %v7353 = vmax.f32 %v6233, 0.0
        %v7354 = vmax.f32 %v6234, 0.0
        %v7355 = vmax.f32 %v6235, 0.0
        %v7356 = vmax.f32 %v6236, 0.0
        %v7357 = vmax.f32 %v6237, 0.0
        %v7358 = vmax.f32 %v6238, 0.0
        %v7359 = vmax.f32 %v6239, 0.0
        %v7360 = vmax.f32 %v6240, 0.0
        %v7361 = vmax.f32 %v6241, 0.0
        %v7362 = vmax.f32 %v6242, 0.0
        %v7363 = vmax.f32 %v6243, 0.0
        %v7364 = vmax.f32 %v6244, 0.0
        %v7365 = vmax.f32 %v6245, 0.0
        %v7366 = vmax.f32 %v6246, 0.0
        %v7367 = vmax.f32 %v6247, 0.0
        %v7368 = vmax.f32 %v6248, 0.0
        %v7369 = vmax.f32 %v6249, 0.0
        %v7370 = vmax.f32 %v6250, 0.0
        %v7371 = vmax.f32 %v6251, 0.0
        %v7372 = vmax.f32 %v6252, 0.0
        %v7373 = vmax.f32 %v6253, 0.0
        %v7374 = vmax.f32 %v6254, 0.0
        %v7375 = vmax.f32 %v6255, 0.0
        %v7376 = vmax.f32 %v6256, 0.0
        %v7377 = vmax.f32 %v6257, 0.0
        %v7378 = vmax.f32 %v6258, 0.0
        %v7379 = vmax.f32 %v6259, 0.0
        %v7380 = vmax.f32 %v6260, 0.0
        %v7381 = vmax.f32 %v6261, 0.0
        %v7382 = vmax.f32 %v6262, 0.0
        %v7383 = vmax.f32 %v6263, 0.0
        %v7384 = vmax.f32 %v6264, 0.0
        %v7385 = vmax.f32 %v6265, 0.0
        %v7386 = vmax.f32 %v6266, 0.0
        %v7387 = vadd.f32 %v7307, %v6595
        %v7388 = vadd.f32 %v7308, %v6604
        %v7389 = vadd.f32 %v7309, %v6613
        %v7390 = vadd.f32 %v7310, %v6622
        %v7391 = vadd.f32 %v7311, %v6631
        %v7392 = vadd.f32 %v7312, %v6640
        %v7393 = vadd.f32 %v7313, %v6649
        %v7394 = vadd.f32 %v7314, %v6658
        %v7395 = vadd.f32 %v7315, %v6667
        %v7396 = vadd.f32 %v7316, %v6676
        %v7397 = vadd.f32 %v7317, %v6685
        %v7398 = vadd.f32 %v7318, %v6694
        %v7399 = vadd.f32 %v7319, %v6703
        %v7400 = vadd.f32 %v7320, %v6712
        %v7401 = vadd.f32 %v7321, %v6721
        %v7402 = vadd.f32 %v7322, %v6730
        %v7403 = vadd.f32 %v7323, %v6739
        %v7404 = vadd.f32 %v7324, %v6748
        %v7405 = vadd.f32 %v7325, %v6757
        %v7406 = vadd.f32 %v7326, %v6766
        %v7407 = vadd.f32 %v7327, %v6775
        %v7408 = vadd.f32 %v7328, %v6784
        %v7409 = vadd.f32 %v7329, %v6793
        %v7410 = vadd.f32 %v7330, %v6802
        %v7411 = vadd.f32 %v7331, %v6811
        %v7412 = vadd.f32 %v7332, %v6820
        %v7413 = vadd.f32 %v7333, %v6829
        %v7414 = vadd.f32 %v7334, %v6838
        %v7415 = vadd.f32 %v7335, %v6847
        %v7416 = vadd.f32 %v7336, %v6856
        %v7417 = vadd.f32 %v7337, %v6865
        %v7418 = vadd.f32 %v7338, %v6874
        %v7419 = vadd.f32 %v7339, %v6883
        %v7420 = vadd.f32 %v7340, %v6892
        %v7421 = vadd.f32 %v7341, %v6901
        %v7422 = vadd.f32 %v7342, %v6910
        %v7423 = vadd.f32 %v7343, %v6919
        %v7424 = vadd.f32 %v7344, %v6928
        %v7425 = vadd.f32 %v7345, %v6937
        %v7426 = vadd.f32 %v7346, %v6946
        %v7427 = vadd.f32 %v7347, %v6955
        %v7428 = vadd.f32 %v7348, %v6964
        %v7429 = vadd.f32 %v7349, %v6973
        %v7430 = vadd.f32 %v7350, %v6982
        %v7431 = vadd.f32 %v7351, %v6991
        %v7432 = vadd.f32 %v7352, %v7000
        %v7433 = vadd.f32 %v7353, %v7009
        %v7434 = vadd.f32 %v7354, %v7018
        %v7435 = vadd.f32 %v7355, %v7027
        %v7436 = vadd.f32 %v7356, %v7036
        %v7437 = vadd.f32 %v7357, %v7045
        %v7438 = vadd.f32 %v7358, %v7054
        %v7439 = vadd.f32 %v7359, %v7063
        %v7440 = vadd.f32 %v7360, %v7072
        %v7441 = vadd.f32 %v7361, %v7081
        %v7442 = vadd.f32 %v7362, %v7090
        %v7443 = vadd.f32 %v7363, %v7099
        %v7444 = vadd.f32 %v7364, %v7108
        %v7445 = vadd.f32 %v7365, %v7117
        %v7446 = vadd.f32 %v7366, %v7126
        %v7447 = vadd.f32 %v7367, %v7135
        %v7448 = vadd.f32 %v7368, %v7144
        %v7449 = vadd.f32 %v7369, %v7153
        %v7450 = vadd.f32 %v7370, %v7162
        %v7451 = vadd.f32 %v7371, %v7171
        %v7452 = vadd.f32 %v7372, %v7180
        %v7453 = vadd.f32 %v7373, %v7189
        %v7454 = vadd.f32 %v7374, %v7198
        %v7455 = vadd.f32 %v7375, %v7207
        %v7456 = vadd.f32 %v7376, %v7216
        %v7457 = vadd.f32 %v7377, %v7225
        %v7458 = vadd.f32 %v7378, %v7234
        %v7459 = vadd.f32 %v7379, %v7243
        %v7460 = vadd.f32 %v7380, %v7252
        %v7461 = vadd.f32 %v7381, %v7261
        %v7462 = vadd.f32 %v7382, %v7270
        %v7463 = vadd.f32 %v7383, %v7279
        %v7464 = vadd.f32 %v7384, %v7288
        %v7465 = vadd.f32 %v7385, %v7297
        %v7466 = vadd.f32 %v7386, %v7306
        %v7467 = vsel %vm5947, 0.25, 0.75
        %v7468 = vsel %vm5948, 0.25, 0.75
        %v7469 = vsel %vm5949, 0.25, 0.75
        %v7470 = vsel %vm5950, 0.25, 0.75
        %v7471 = vsel %vm5951, 0.25, 0.75
        %v7472 = vsel %vm5952, 0.25, 0.75
        %v7473 = vsel %vm5953, 0.25, 0.75
        %v7474 = vsel %vm5954, 0.25, 0.75
        %v7475 = vsel %vm5955, 0.25, 0.75
        %v7476 = vsel %vm5956, 0.25, 0.75
        %v7477 = vsel %vm5957, 0.25, 0.75
        %v7478 = vsel %vm5958, 0.25, 0.75
        %v7479 = vsel %vm5959, 0.25, 0.75
        %v7480 = vsel %vm5960, 0.25, 0.75
        %v7481 = vsel %vm5961, 0.25, 0.75
        %v7482 = vsel %vm5962, 0.25, 0.75
        %v7483 = vsel %vm5963, 0.25, 0.75
        %v7484 = vsel %vm5964, 0.25, 0.75
        %v7485 = vsel %vm5965, 0.25, 0.75
        %v7486 = vsel %vm5966, 0.25, 0.75
        %v7487 = vsel %vm5967, 0.25, 0.75
        %v7488 = vsel %vm5968, 0.25, 0.75
        %v7489 = vsel %vm5969, 0.25, 0.75
        %v7490 = vsel %vm5970, 0.25, 0.75
        %v7491 = vsel %vm5971, 0.25, 0.75
        %v7492 = vsel %vm5972, 0.25, 0.75
        %v7493 = vsel %vm5973, 0.25, 0.75
        %v7494 = vsel %vm5974, 0.25, 0.75
        %v7495 = vsel %vm5975, 0.25, 0.75
        %v7496 = vsel %vm5976, 0.25, 0.75
        %v7497 = vsel %vm5977, 0.25, 0.75
        %v7498 = vsel %vm5978, 0.25, 0.75
        %v7499 = vsel %vm5979, 0.25, 0.75
        %v7500 = vsel %vm5980, 0.25, 0.75
        %v7501 = vsel %vm5981, 0.25, 0.75
        %v7502 = vsel %vm5982, 0.25, 0.75
        %v7503 = vsel %vm5983, 0.25, 0.75
        %v7504 = vsel %vm5984, 0.25, 0.75
        %v7505 = vsel %vm5985, 0.25, 0.75
        %v7506 = vsel %vm5986, 0.25, 0.75
        %v7507 = vsel %vm5987, 0.25, 0.75
        %v7508 = vsel %vm5988, 0.25, 0.75
        %v7509 = vsel %vm5989, 0.25, 0.75
        %v7510 = vsel %vm5990, 0.25, 0.75
        %v7511 = vsel %vm5991, 0.25, 0.75
        %v7512 = vsel %vm5992, 0.25, 0.75
        %v7513 = vsel %vm5993, 0.25, 0.75
        %v7514 = vsel %vm5994, 0.25, 0.75
        %v7515 = vsel %vm5995, 0.25, 0.75
        %v7516 = vsel %vm5996, 0.25, 0.75
        %v7517 = vsel %vm5997, 0.25, 0.75
        %v7518 = vsel %vm5998, 0.25, 0.75
        %v7519 = vsel %vm5999, 0.25, 0.75
        %v7520 = vsel %vm6000, 0.25, 0.75
        %v7521 = vsel %vm6001, 0.25, 0.75
        %v7522 = vsel %vm6002, 0.25, 0.75
        %v7523 = vsel %vm6003, 0.25, 0.75
        %v7524 = vsel %vm6004, 0.25, 0.75
        %v7525 = vsel %vm6005, 0.25, 0.75
        %v7526 = vsel %vm6006, 0.25, 0.75
        %v7527 = vsel %vm6007, 0.25, 0.75
        %v7528 = vsel %vm6008, 0.25, 0.75
        %v7529 = vsel %vm6009, 0.25, 0.75
        %v7530 = vsel %vm6010, 0.25, 0.75
        %v7531 = vsel %vm6011, 0.25, 0.75
        %v7532 = vsel %vm6012, 0.25, 0.75
        %v7533 = vsel %vm6013, 0.25, 0.75
        %v7534 = vsel %vm6014, 0.25, 0.75
        %v7535 = vsel %vm6015, 0.25, 0.75
        %v7536 = vsel %vm6016, 0.25, 0.75
        %v7537 = vsel %vm6017, 0.25, 0.75
        %v7538 = vsel %vm6018, 0.25, 0.75
        %v7539 = vsel %vm6019, 0.25, 0.75
        %v7540 = vsel %vm6020, 0.25, 0.75
        %v7541 = vsel %vm6021, 0.25, 0.75
        %v7542 = vsel %vm6022, 0.25, 0.75
        %v7543 = vsel %vm6023, 0.25, 0.75
        %v7544 = vsel %vm6024, 0.25, 0.75
        %v7545 = vsel %vm6025, 0.25, 0.75
        %v7546 = vsel %vm6026, 0.25, 0.75
        %v7547 = vmax.f32 %v6107, 0.0
        %v7548 = vmax.f32 %v6108, 0.0
        %v7549 = vmax.f32 %v6109, 0.0
        %v7550 = vmax.f32 %v6110, 0.0
        %v7551 = vmax.f32 %v6111, 0.0
        %v7552 = vmax.f32 %v6112, 0.0
        %v7553 = vmax.f32 %v6113, 0.0
        %v7554 = vmax.f32 %v6114, 0.0
        %v7555 = vmax.f32 %v6115, 0.0
        %v7556 = vmax.f32 %v6116, 0.0
        %v7557 = vmax.f32 %v6117, 0.0
        %v7558 = vmax.f32 %v6118, 0.0
        %v7559 = vmax.f32 %v6119, 0.0
        %v7560 = vmax.f32 %v6120, 0.0
        %v7561 = vmax.f32 %v6121, 0.0
        %v7562 = vmax.f32 %v6122, 0.0
        %v7563 = vmax.f32 %v6123, 0.0
        %v7564 = vmax.f32 %v6124, 0.0
        %v7565 = vmax.f32 %v6125, 0.0
        %v7566 = vmax.f32 %v6126, 0.0
        %v7567 = vmax.f32 %v6127, 0.0
        %v7568 = vmax.f32 %v6128, 0.0
        %v7569 = vmax.f32 %v6129, 0.0
        %v7570 = vmax.f32 %v6130, 0.0
        %v7571 = vmax.f32 %v6131, 0.0
        %v7572 = vmax.f32 %v6132, 0.0
        %v7573 = vmax.f32 %v6133, 0.0
        %v7574 = vmax.f32 %v6134, 0.0
        %v7575 = vmax.f32 %v6135, 0.0
        %v7576 = vmax.f32 %v6136, 0.0
        %v7577 = vmax.f32 %v6137, 0.0
        %v7578 = vmax.f32 %v6138, 0.0
        %v7579 = vmax.f32 %v6139, 0.0
        %v7580 = vmax.f32 %v6140, 0.0
        %v7581 = vmax.f32 %v6141, 0.0
        %v7582 = vmax.f32 %v6142, 0.0
        %v7583 = vmax.f32 %v6143, 0.0
        %v7584 = vmax.f32 %v6144, 0.0
        %v7585 = vmax.f32 %v6145, 0.0
        %v7586 = vmax.f32 %v6146, 0.0
        %v7587 = vmax.f32 %v6147, 0.0
        %v7588 = vmax.f32 %v6148, 0.0
        %v7589 = vmax.f32 %v6149, 0.0
        %v7590 = vmax.f32 %v6150, 0.0
        %v7591 = vmax.f32 %v6151, 0.0
        %v7592 = vmax.f32 %v6152, 0.0
        %v7593 = vmax.f32 %v6153, 0.0
        %v7594 = vmax.f32 %v6154, 0.0
        %v7595 = vmax.f32 %v6155, 0.0
        %v7596 = vmax.f32 %v6156, 0.0
        %v7597 = vmax.f32 %v6157, 0.0
        %v7598 = vmax.f32 %v6158, 0.0
        %v7599 = vmax.f32 %v6159, 0.0
        %v7600 = vmax.f32 %v6160, 0.0
        %v7601 = vmax.f32 %v6161, 0.0
        %v7602 = vmax.f32 %v6162, 0.0
        %v7603 = vmax.f32 %v6163, 0.0
        %v7604 = vmax.f32 %v6164, 0.0
        %v7605 = vmax.f32 %v6165, 0.0
        %v7606 = vmax.f32 %v6166, 0.0
        %v7607 = vmax.f32 %v6167, 0.0
        %v7608 = vmax.f32 %v6168, 0.0
        %v7609 = vmax.f32 %v6169, 0.0
        %v7610 = vmax.f32 %v6170, 0.0
        %v7611 = vmax.f32 %v6171, 0.0
        %v7612 = vmax.f32 %v6172, 0.0
        %v7613 = vmax.f32 %v6173, 0.0
        %v7614 = vmax.f32 %v6174, 0.0
        %v7615 = vmax.f32 %v6175, 0.0
        %v7616 = vmax.f32 %v6176, 0.0
        %v7617 = vmax.f32 %v6177, 0.0
        %v7618 = vmax.f32 %v6178, 0.0
        %v7619 = vmax.f32 %v6179, 0.0
        %v7620 = vmax.f32 %v6180, 0.0
        %v7621 = vmax.f32 %v6181, 0.0
        %v7622 = vmax.f32 %v6182, 0.0
        %v7623 = vmax.f32 %v6183, 0.0
        %v7624 = vmax.f32 %v6184, 0.0
        %v7625 = vmax.f32 %v6185, 0.0
        %v7626 = vmax.f32 %v6186, 0.0
        %v7627 = vadd.f32 %v7547, %v6595
        %v7628 = vadd.f32 %v7548, %v6604
        %v7629 = vadd.f32 %v7549, %v6613
        %v7630 = vadd.f32 %v7550, %v6622
        %v7631 = vadd.f32 %v7551, %v6631
        %v7632 = vadd.f32 %v7552, %v6640
        %v7633 = vadd.f32 %v7553, %v6649
        %v7634 = vadd.f32 %v7554, %v6658
        %v7635 = vadd.f32 %v7555, %v6667
        %v7636 = vadd.f32 %v7556, %v6676
        %v7637 = vadd.f32 %v7557, %v6685
        %v7638 = vadd.f32 %v7558, %v6694
        %v7639 = vadd.f32 %v7559, %v6703
        %v7640 = vadd.f32 %v7560, %v6712
        %v7641 = vadd.f32 %v7561, %v6721
        %v7642 = vadd.f32 %v7562, %v6730
        %v7643 = vadd.f32 %v7563, %v6739
        %v7644 = vadd.f32 %v7564, %v6748
        %v7645 = vadd.f32 %v7565, %v6757
        %v7646 = vadd.f32 %v7566, %v6766
        %v7647 = vadd.f32 %v7567, %v6775
        %v7648 = vadd.f32 %v7568, %v6784
        %v7649 = vadd.f32 %v7569, %v6793
        %v7650 = vadd.f32 %v7570, %v6802
        %v7651 = vadd.f32 %v7571, %v6811
        %v7652 = vadd.f32 %v7572, %v6820
        %v7653 = vadd.f32 %v7573, %v6829
        %v7654 = vadd.f32 %v7574, %v6838
        %v7655 = vadd.f32 %v7575, %v6847
        %v7656 = vadd.f32 %v7576, %v6856
        %v7657 = vadd.f32 %v7577, %v6865
        %v7658 = vadd.f32 %v7578, %v6874
        %v7659 = vadd.f32 %v7579, %v6883
        %v7660 = vadd.f32 %v7580, %v6892
        %v7661 = vadd.f32 %v7581, %v6901
        %v7662 = vadd.f32 %v7582, %v6910
        %v7663 = vadd.f32 %v7583, %v6919
        %v7664 = vadd.f32 %v7584, %v6928
        %v7665 = vadd.f32 %v7585, %v6937
        %v7666 = vadd.f32 %v7586, %v6946
        %v7667 = vadd.f32 %v7587, %v6955
        %v7668 = vadd.f32 %v7588, %v6964
        %v7669 = vadd.f32 %v7589, %v6973
        %v7670 = vadd.f32 %v7590, %v6982
        %v7671 = vadd.f32 %v7591, %v6991
        %v7672 = vadd.f32 %v7592, %v7000
        %v7673 = vadd.f32 %v7593, %v7009
        %v7674 = vadd.f32 %v7594, %v7018
        %v7675 = vadd.f32 %v7595, %v7027
        %v7676 = vadd.f32 %v7596, %v7036
        %v7677 = vadd.f32 %v7597, %v7045
        %v7678 = vadd.f32 %v7598, %v7054
        %v7679 = vadd.f32 %v7599, %v7063
        %v7680 = vadd.f32 %v7600, %v7072
        %v7681 = vadd.f32 %v7601, %v7081
        %v7682 = vadd.f32 %v7602, %v7090
        %v7683 = vadd.f32 %v7603, %v7099
        %v7684 = vadd.f32 %v7604, %v7108
        %v7685 = vadd.f32 %v7605, %v7117
        %v7686 = vadd.f32 %v7606, %v7126
        %v7687 = vadd.f32 %v7607, %v7135
        %v7688 = vadd.f32 %v7608, %v7144
        %v7689 = vadd.f32 %v7609, %v7153
        %v7690 = vadd.f32 %v7610, %v7162
        %v7691 = vadd.f32 %v7611, %v7171
        %v7692 = vadd.f32 %v7612, %v7180
        %v7693 = vadd.f32 %v7613, %v7189
        %v7694 = vadd.f32 %v7614, %v7198
        %v7695 = vadd.f32 %v7615, %v7207
        %v7696 = vadd.f32 %v7616, %v7216
        %v7697 = vadd.f32 %v7617, %v7225
        %v7698 = vadd.f32 %v7618, %v7234
        %v7699 = vadd.f32 %v7619, %v7243
        %v7700 = vadd.f32 %v7620, %v7252
        %v7701 = vadd.f32 %v7621, %v7261
        %v7702 = vadd.f32 %v7622, %v7270
        %v7703 = vadd.f32 %v7623, %v7279
        %v7704 = vadd.f32 %v7624, %v7288
        %v7705 = vadd.f32 %v7625, %v7297
        %v7706 = vadd.f32 %v7626, %v7306
        %v7707 = vmul.f32 %v7627, -2.0
        %v7708 = vmul.f32 %v7628, -2.0
        %v7709 = vmul.f32 %v7629, -2.0
        %v7710 = vmul.f32 %v7630, -2.0
        %v7711 = vmul.f32 %v7631, -2.0
        %v7712 = vmul.f32 %v7632, -2.0
        %v7713 = vmul.f32 %v7633, -2.0
        %v7714 = vmul.f32 %v7634, -2.0
        %v7715 = vmul.f32 %v7635, -2.0
        %v7716 = vmul.f32 %v7636, -2.0
        %v7717 = vmul.f32 %v7637, -2.0
        %v7718 = vmul.f32 %v7638, -2.0
        %v7719 = vmul.f32 %v7639, -2.0
        %v7720 = vmul.f32 %v7640, -2.0
        %v7721 = vmul.f32 %v7641, -2.0
        %v7722 = vmul.f32 %v7642, -2.0
        %v7723 = vmul.f32 %v7643, -2.0
        %v7724 = vmul.f32 %v7644, -2.0
        %v7725 = vmul.f32 %v7645, -2.0
        %v7726 = vmul.f32 %v7646, -2.0
        %v7727 = vmul.f32 %v7647, -2.0
        %v7728 = vmul.f32 %v7648, -2.0
        %v7729 = vmul.f32 %v7649, -2.0
        %v7730 = vmul.f32 %v7650, -2.0
        %v7731 = vmul.f32 %v7651, -2.0
        %v7732 = vmul.f32 %v7652, -2.0
        %v7733 = vmul.f32 %v7653, -2.0
        %v7734 = vmul.f32 %v7654, -2.0
        %v7735 = vmul.f32 %v7655, -2.0
        %v7736 = vmul.f32 %v7656, -2.0
        %v7737 = vmul.f32 %v7657, -2.0
        %v7738 = vmul.f32 %v7658, -2.0
        %v7739 = vmul.f32 %v7659, -2.0
        %v7740 = vmul.f32 %v7660, -2.0
        %v7741 = vmul.f32 %v7661, -2.0
        %v7742 = vmul.f32 %v7662, -2.0
        %v7743 = vmul.f32 %v7663, -2.0
        %v7744 = vmul.f32 %v7664, -2.0
        %v7745 = vmul.f32 %v7665, -2.0
        %v7746 = vmul.f32 %v7666, -2.0
        %v7747 = vmul.f32 %v7667, -2.0
        %v7748 = vmul.f32 %v7668, -2.0
        %v7749 = vmul.f32 %v7669, -2.0
        %v7750 = vmul.f32 %v7670, -2.0
        %v7751 = vmul.f32 %v7671, -2.0
        %v7752 = vmul.f32 %v7672, -2.0
        %v7753 = vmul.f32 %v7673, -2.0
        %v7754 = vmul.f32 %v7674, -2.0
        %v7755 = vmul.f32 %v7675, -2.0
        %v7756 = vmul.f32 %v7676, -2.0
        %v7757 = vmul.f32 %v7677, -2.0
        %v7758 = vmul.f32 %v7678, -2.0
        %v7759 = vmul.f32 %v7679, -2.0
        %v7760 = vmul.f32 %v7680, -2.0
        %v7761 = vmul.f32 %v7681, -2.0
        %v7762 = vmul.f32 %v7682, -2.0
        %v7763 = vmul.f32 %v7683, -2.0
        %v7764 = vmul.f32 %v7684, -2.0
        %v7765 = vmul.f32 %v7685, -2.0
        %v7766 = vmul.f32 %v7686, -2.0
        %v7767 = vmul.f32 %v7687, -2.0
        %v7768 = vmul.f32 %v7688, -2.0
        %v7769 = vmul.f32 %v7689, -2.0
        %v7770 = vmul.f32 %v7690, -2.0
        %v7771 = vmul.f32 %v7691, -2.0
        %v7772 = vmul.f32 %v7692, -2.0
        %v7773 = vmul.f32 %v7693, -2.0
        %v7774 = vmul.f32 %v7694, -2.0
        %v7775 = vmul.f32 %v7695, -2.0
        %v7776 = vmul.f32 %v7696, -2.0
        %v7777 = vmul.f32 %v7697, -2.0
        %v7778 = vmul.f32 %v7698, -2.0
        %v7779 = vmul.f32 %v7699, -2.0
        %v7780 = vmul.f32 %v7700, -2.0
        %v7781 = vmul.f32 %v7701, -2.0
        %v7782 = vmul.f32 %v7702, -2.0
        %v7783 = vmul.f32 %v7703, -2.0
        %v7784 = vmul.f32 %v7704, -2.0
        %v7785 = vmul.f32 %v7705, -2.0
        %v7786 = vmul.f32 %v7706, -2.0
        %v7787 = vmul.f32 %v7707, 1.442695
        %v7788 = vpow.pop %v7787
        %v7789 = vmul.f32 %v7708, 1.442695
        %v7790 = vpow.pop %v7789
        %v7791 = vmul.f32 %v7709, 1.442695
        %v7792 = vpow.pop %v7791
        %v7793 = vmul.f32 %v7710, 1.442695
        %v7794 = vpow.pop %v7793
        %v7795 = vmul.f32 %v7711, 1.442695
        %v7796 = vpow.pop %v7795
        %v7797 = vmul.f32 %v7712, 1.442695
        %v7798 = vpow.pop %v7797
        %v7799 = vmul.f32 %v7713, 1.442695
        %v7800 = vpow.pop %v7799
        %v7801 = vmul.f32 %v7714, 1.442695
        %v7802 = vpow.pop %v7801
        %v7803 = vmul.f32 %v7715, 1.442695
        %v7804 = vpow.pop %v7803
        %v7805 = vmul.f32 %v7716, 1.442695
        %v7806 = vpow.pop %v7805
        %v7807 = vmul.f32 %v7717, 1.442695
        %v7808 = vpow.pop %v7807
        %v7809 = vmul.f32 %v7718, 1.442695
        %v7810 = vpow.pop %v7809
        %v7811 = vmul.f32 %v7719, 1.442695
        %v7812 = vpow.pop %v7811
        %v7813 = vmul.f32 %v7720, 1.442695
        %v7814 = vpow.pop %v7813
        %v7815 = vmul.f32 %v7721, 1.442695
        %v7816 = vpow.pop %v7815
        %v7817 = vmul.f32 %v7722, 1.442695
        %v7818 = vpow.pop %v7817
        %v7819 = vmul.f32 %v7723, 1.442695
        %v7820 = vpow.pop %v7819
        %v7821 = vmul.f32 %v7724, 1.442695
        %v7822 = vpow.pop %v7821
        %v7823 = vmul.f32 %v7725, 1.442695
        %v7824 = vpow.pop %v7823
        %v7825 = vmul.f32 %v7726, 1.442695
        %v7826 = vpow.pop %v7825
        %v7827 = vmul.f32 %v7727, 1.442695
        %v7828 = vpow.pop %v7827
        %v7829 = vmul.f32 %v7728, 1.442695
        %v7830 = vpow.pop %v7829
        %v7831 = vmul.f32 %v7729, 1.442695
        %v7832 = vpow.pop %v7831
        %v7833 = vmul.f32 %v7730, 1.442695
        %v7834 = vpow.pop %v7833
        %v7835 = vmul.f32 %v7731, 1.442695
        %v7836 = vpow.pop %v7835
        %v7837 = vmul.f32 %v7732, 1.442695
        %v7838 = vpow.pop %v7837
        %v7839 = vmul.f32 %v7733, 1.442695
        %v7840 = vpow.pop %v7839
        %v7841 = vmul.f32 %v7734, 1.442695
        %v7842 = vpow.pop %v7841
        %v7843 = vmul.f32 %v7735, 1.442695
        %v7844 = vpow.pop %v7843
        %v7845 = vmul.f32 %v7736, 1.442695
        %v7846 = vpow.pop %v7845
        %v7847 = vmul.f32 %v7737, 1.442695
        %v7848 = vpow.pop %v7847
        %v7849 = vmul.f32 %v7738, 1.442695
        %v7850 = vpow.pop %v7849
        %v7851 = vmul.f32 %v7739, 1.442695
        %v7852 = vpow.pop %v7851
        %v7853 = vmul.f32 %v7740, 1.442695
        %v7854 = vpow.pop %v7853
        %v7855 = vmul.f32 %v7741, 1.442695
        %v7856 = vpow.pop %v7855
        %v7857 = vmul.f32 %v7742, 1.442695
        %v7858 = vpow.pop %v7857
        %v7859 = vmul.f32 %v7743, 1.442695
        %v7860 = vpow.pop %v7859
        %v7861 = vmul.f32 %v7744, 1.442695
        %v7862 = vpow.pop %v7861
        %v7863 = vmul.f32 %v7745, 1.442695
        %v7864 = vpow.pop %v7863
        %v7865 = vmul.f32 %v7746, 1.442695
        %v7866 = vpow.pop %v7865
        %v7867 = vmul.f32 %v7747, 1.442695
        %v7868 = vpow.pop %v7867
        %v7869 = vmul.f32 %v7748, 1.442695
        %v7870 = vpow.pop %v7869
        %v7871 = vmul.f32 %v7749, 1.442695
        %v7872 = vpow.pop %v7871
        %v7873 = vmul.f32 %v7750, 1.442695
        %v7874 = vpow.pop %v7873
        %v7875 = vmul.f32 %v7751, 1.442695
        %v7876 = vpow.pop %v7875
        %v7877 = vmul.f32 %v7752, 1.442695
        %v7878 = vpow.pop %v7877
        %v7879 = vmul.f32 %v7753, 1.442695
        %v7880 = vpow.pop %v7879
        %v7881 = vmul.f32 %v7754, 1.442695
        %v7882 = vpow.pop %v7881
        %v7883 = vmul.f32 %v7755, 1.442695
        %v7884 = vpow.pop %v7883
        %v7885 = vmul.f32 %v7756, 1.442695
        %v7886 = vpow.pop %v7885
        %v7887 = vmul.f32 %v7757, 1.442695
        %v7888 = vpow.pop %v7887
        %v7889 = vmul.f32 %v7758, 1.442695
        %v7890 = vpow.pop %v7889
        %v7891 = vmul.f32 %v7759, 1.442695
        %v7892 = vpow.pop %v7891
        %v7893 = vmul.f32 %v7760, 1.442695
        %v7894 = vpow.pop %v7893
        %v7895 = vmul.f32 %v7761, 1.442695
        %v7896 = vpow.pop %v7895
        %v7897 = vmul.f32 %v7762, 1.442695
        %v7898 = vpow.pop %v7897
        %v7899 = vmul.f32 %v7763, 1.442695
        %v7900 = vpow.pop %v7899
        %v7901 = vmul.f32 %v7764, 1.442695
        %v7902 = vpow.pop %v7901
        %v7903 = vmul.f32 %v7765, 1.442695
        %v7904 = vpow.pop %v7903
        %v7905 = vmul.f32 %v7766, 1.442695
        %v7906 = vpow.pop %v7905
        %v7907 = vmul.f32 %v7767, 1.442695
        %v7908 = vpow.pop %v7907
        %v7909 = vmul.f32 %v7768, 1.442695
        %v7910 = vpow.pop %v7909
        %v7911 = vmul.f32 %v7769, 1.442695
        %v7912 = vpow.pop %v7911
        %v7913 = vmul.f32 %v7770, 1.442695
        %v7914 = vpow.pop %v7913
        %v7915 = vmul.f32 %v7771, 1.442695
        %v7916 = vpow.pop %v7915
        %v7917 = vmul.f32 %v7772, 1.442695
        %v7918 = vpow.pop %v7917
        %v7919 = vmul.f32 %v7773, 1.442695
        %v7920 = vpow.pop %v7919
        %v7921 = vmul.f32 %v7774, 1.442695
        %v7922 = vpow.pop %v7921
        %v7923 = vmul.f32 %v7775, 1.442695
        %v7924 = vpow.pop %v7923
        %v7925 = vmul.f32 %v7776, 1.442695
        %v7926 = vpow.pop %v7925
        %v7927 = vmul.f32 %v7777, 1.442695
        %v7928 = vpow.pop %v7927
        %v7929 = vmul.f32 %v7778, 1.442695
        %v7930 = vpow.pop %v7929
        %v7931 = vmul.f32 %v7779, 1.442695
        %v7932 = vpow.pop %v7931
        %v7933 = vmul.f32 %v7780, 1.442695
        %v7934 = vpow.pop %v7933
        %v7935 = vmul.f32 %v7781, 1.442695
        %v7936 = vpow.pop %v7935
        %v7937 = vmul.f32 %v7782, 1.442695
        %v7938 = vpow.pop %v7937
        %v7939 = vmul.f32 %v7783, 1.442695
        %v7940 = vpow.pop %v7939
        %v7941 = vmul.f32 %v7784, 1.442695
        %v7942 = vpow.pop %v7941
        %v7943 = vmul.f32 %v7785, 1.442695
        %v7944 = vpow.pop %v7943
        %v7945 = vmul.f32 %v7786, 1.442695
        %v7946 = vpow.pop %v7945
        %v7947 = vmul.f32 %v7467, %v7788
        %v7948 = vmul.f32 %v7468, %v7790
        %v7949 = vmul.f32 %v7469, %v7792
        %v7950 = vmul.f32 %v7470, %v7794
        %v7951 = vmul.f32 %v7471, %v7796
        %v7952 = vmul.f32 %v7472, %v7798
        %v7953 = vmul.f32 %v7473, %v7800
        %v7954 = vmul.f32 %v7474, %v7802
        %v7955 = vmul.f32 %v7475, %v7804
        %v7956 = vmul.f32 %v7476, %v7806
        %v7957 = vmul.f32 %v7477, %v7808
        %v7958 = vmul.f32 %v7478, %v7810
        %v7959 = vmul.f32 %v7479, %v7812
        %v7960 = vmul.f32 %v7480, %v7814
        %v7961 = vmul.f32 %v7481, %v7816
        %v7962 = vmul.f32 %v7482, %v7818
        %v7963 = vmul.f32 %v7483, %v7820
        %v7964 = vmul.f32 %v7484, %v7822
        %v7965 = vmul.f32 %v7485, %v7824
        %v7966 = vmul.f32 %v7486, %v7826
        %v7967 = vmul.f32 %v7487, %v7828
        %v7968 = vmul.f32 %v7488, %v7830
        %v7969 = vmul.f32 %v7489, %v7832
        %v7970 = vmul.f32 %v7490, %v7834
        %v7971 = vmul.f32 %v7491, %v7836
        %v7972 = vmul.f32 %v7492, %v7838
        %v7973 = vmul.f32 %v7493, %v7840
        %v7974 = vmul.f32 %v7494, %v7842
        %v7975 = vmul.f32 %v7495, %v7844
        %v7976 = vmul.f32 %v7496, %v7846
        %v7977 = vmul.f32 %v7497, %v7848
        %v7978 = vmul.f32 %v7498, %v7850
        %v7979 = vmul.f32 %v7499, %v7852
        %v7980 = vmul.f32 %v7500, %v7854
        %v7981 = vmul.f32 %v7501, %v7856
        %v7982 = vmul.f32 %v7502, %v7858
        %v7983 = vmul.f32 %v7503, %v7860
        %v7984 = vmul.f32 %v7504, %v7862
        %v7985 = vmul.f32 %v7505, %v7864
        %v7986 = vmul.f32 %v7506, %v7866
        %v7987 = vmul.f32 %v7507, %v7868
        %v7988 = vmul.f32 %v7508, %v7870
        %v7989 = vmul.f32 %v7509, %v7872
        %v7990 = vmul.f32 %v7510, %v7874
        %v7991 = vmul.f32 %v7511, %v7876
        %v7992 = vmul.f32 %v7512, %v7878
        %v7993 = vmul.f32 %v7513, %v7880
        %v7994 = vmul.f32 %v7514, %v7882
        %v7995 = vmul.f32 %v7515, %v7884
        %v7996 = vmul.f32 %v7516, %v7886
        %v7997 = vmul.f32 %v7517, %v7888
        %v7998 = vmul.f32 %v7518, %v7890
        %v7999 = vmul.f32 %v7519, %v7892
        %v8000 = vmul.f32 %v7520, %v7894
        %v8001 = vmul.f32 %v7521, %v7896
        %v8002 = vmul.f32 %v7522, %v7898
        %v8003 = vmul.f32 %v7523, %v7900
        %v8004 = vmul.f32 %v7524, %v7902
        %v8005 = vmul.f32 %v7525, %v7904
        %v8006 = vmul.f32 %v7526, %v7906
        %v8007 = vmul.f32 %v7527, %v7908
        %v8008 = vmul.f32 %v7528, %v7910
        %v8009 = vmul.f32 %v7529, %v7912
        %v8010 = vmul.f32 %v7530, %v7914
        %v8011 = vmul.f32 %v7531, %v7916
        %v8012 = vmul.f32 %v7532, %v7918
        %v8013 = vmul.f32 %v7533, %v7920
        %v8014 = vmul.f32 %v7534, %v7922
        %v8015 = vmul.f32 %v7535, %v7924
        %v8016 = vmul.f32 %v7536, %v7926
        %v8017 = vmul.f32 %v7537, %v7928
        %v8018 = vmul.f32 %v7538, %v7930
        %v8019 = vmul.f32 %v7539, %v7932
        %v8020 = vmul.f32 %v7540, %v7934
        %v8021 = vmul.f32 %v7541, %v7936
        %v8022 = vmul.f32 %v7542, %v7938
        %v8023 = vmul.f32 %v7543, %v7940
        %v8024 = vmul.f32 %v7544, %v7942
        %v8025 = vmul.f32 %v7545, %v7944
        %v8026 = vmul.f32 %v7546, %v7946
        %v8027 = vmul.f32 %v7947, %v7387
        %v8028 = vmul.f32 %v7948, %v7388
        %v8029 = vmul.f32 %v7949, %v7389
        %v8030 = vmul.f32 %v7950, %v7390
        %v8031 = vmul.f32 %v7951, %v7391
        %v8032 = vmul.f32 %v7952, %v7392
        %v8033 = vmul.f32 %v7953, %v7393
        %v8034 = vmul.f32 %v7954, %v7394
        %v8035 = vmul.f32 %v7955, %v7395
        %v8036 = vmul.f32 %v7956, %v7396
        %v8037 = vmul.f32 %v7957, %v7397
        %v8038 = vmul.f32 %v7958, %v7398
        %v8039 = vmul.f32 %v7959, %v7399
        %v8040 = vmul.f32 %v7960, %v7400
        %v8041 = vmul.f32 %v7961, %v7401
        %v8042 = vmul.f32 %v7962, %v7402
        %v8043 = vmul.f32 %v7963, %v7403
        %v8044 = vmul.f32 %v7964, %v7404
        %v8045 = vmul.f32 %v7965, %v7405
        %v8046 = vmul.f32 %v7966, %v7406
        %v8047 = vmul.f32 %v7967, %v7407
        %v8048 = vmul.f32 %v7968, %v7408
        %v8049 = vmul.f32 %v7969, %v7409
        %v8050 = vmul.f32 %v7970, %v7410
        %v8051 = vmul.f32 %v7971, %v7411
        %v8052 = vmul.f32 %v7972, %v7412
        %v8053 = vmul.f32 %v7973, %v7413
        %v8054 = vmul.f32 %v7974, %v7414
        %v8055 = vmul.f32 %v7975, %v7415
        %v8056 = vmul.f32 %v7976, %v7416
        %v8057 = vmul.f32 %v7977, %v7417
        %v8058 = vmul.f32 %v7978, %v7418
        %v8059 = vmul.f32 %v7979, %v7419
        %v8060 = vmul.f32 %v7980, %v7420
        %v8061 = vmul.f32 %v7981, %v7421
        %v8062 = vmul.f32 %v7982, %v7422
        %v8063 = vmul.f32 %v7983, %v7423
        %v8064 = vmul.f32 %v7984, %v7424
        %v8065 = vmul.f32 %v7985, %v7425
        %v8066 = vmul.f32 %v7986, %v7426
        %v8067 = vmul.f32 %v7987, %v7427
        %v8068 = vmul.f32 %v7988, %v7428
        %v8069 = vmul.f32 %v7989, %v7429
        %v8070 = vmul.f32 %v7990, %v7430
        %v8071 = vmul.f32 %v7991, %v7431
        %v8072 = vmul.f32 %v7992, %v7432
        %v8073 = vmul.f32 %v7993, %v7433
        %v8074 = vmul.f32 %v7994, %v7434
        %v8075 = vmul.f32 %v7995, %v7435
        %v8076 = vmul.f32 %v7996, %v7436
        %v8077 = vmul.f32 %v7997, %v7437
        %v8078 = vmul.f32 %v7998, %v7438
        %v8079 = vmul.f32 %v7999, %v7439
        %v8080 = vmul.f32 %v8000, %v7440
        %v8081 = vmul.f32 %v8001, %v7441
        %v8082 = vmul.f32 %v8002, %v7442
        %v8083 = vmul.f32 %v8003, %v7443
        %v8084 = vmul.f32 %v8004, %v7444
        %v8085 = vmul.f32 %v8005, %v7445
        %v8086 = vmul.f32 %v8006, %v7446
        %v8087 = vmul.f32 %v8007, %v7447
        %v8088 = vmul.f32 %v8008, %v7448
        %v8089 = vmul.f32 %v8009, %v7449
        %v8090 = vmul.f32 %v8010, %v7450
        %v8091 = vmul.f32 %v8011, %v7451
        %v8092 = vmul.f32 %v8012, %v7452
        %v8093 = vmul.f32 %v8013, %v7453
        %v8094 = vmul.f32 %v8014, %v7454
        %v8095 = vmul.f32 %v8015, %v7455
        %v8096 = vmul.f32 %v8016, %v7456
        %v8097 = vmul.f32 %v8017, %v7457
        %v8098 = vmul.f32 %v8018, %v7458
        %v8099 = vmul.f32 %v8019, %v7459
        %v8100 = vmul.f32 %v8020, %v7460
        %v8101 = vmul.f32 %v8021, %v7461
        %v8102 = vmul.f32 %v8022, %v7462
        %v8103 = vmul.f32 %v8023, %v7463
        %v8104 = vmul.f32 %v8024, %v7464
        %v8105 = vmul.f32 %v8025, %v7465
        %v8106 = vmul.f32 %v8026, %v7466
        %v8107 = vadd.f32 %v8027, %v8035
        %v8108 = vadd.f32 %v8107, %v8043
        %v8109 = vadd.f32 %v8108, %v8051
        %v8110 = vadd.f32 %v8109, %v8059
        %v8111 = vadd.f32 %v8110, %v8067
        %v8112 = vadd.f32 %v8111, %v8075
        %v8113 = vadd.f32 %v8112, %v8083
        %v8114 = vadd.f32 %v8113, %v8091
        %v8115 = vadd.f32 %v8114, %v8099
        %v8116 = vrot.slane %v8115, 4
        %v8117 = vadd.f32 %v8115, %v8116
        %v8118 = vrot.slane %v8117, 2
        %v8119 = vadd.f32 %v8117, %v8118
        %v8120 = vrot.slane %v8119, 1
        %v8121 = vadd.f32 %v8119, %v8120
        %v8122 = vadd.f32 %v8028, %v8036
        %v8123 = vadd.f32 %v8122, %v8044
        %v8124 = vadd.f32 %v8123, %v8052
        %v8125 = vadd.f32 %v8124, %v8060
        %v8126 = vadd.f32 %v8125, %v8068
        %v8127 = vadd.f32 %v8126, %v8076
        %v8128 = vadd.f32 %v8127, %v8084
        %v8129 = vadd.f32 %v8128, %v8092
        %v8130 = vadd.f32 %v8129, %v8100
        %v8131 = vrot.slane %v8130, 4
        %v8132 = vadd.f32 %v8130, %v8131
        %v8133 = vrot.slane %v8132, 2
        %v8134 = vadd.f32 %v8132, %v8133
        %v8135 = vrot.slane %v8134, 1
        %v8136 = vadd.f32 %v8134, %v8135
        %v8137 = vadd.f32 %v8029, %v8037
        %v8138 = vadd.f32 %v8137, %v8045
        %v8139 = vadd.f32 %v8138, %v8053
        %v8140 = vadd.f32 %v8139, %v8061
        %v8141 = vadd.f32 %v8140, %v8069
        %v8142 = vadd.f32 %v8141, %v8077
        %v8143 = vadd.f32 %v8142, %v8085
        %v8144 = vadd.f32 %v8143, %v8093
        %v8145 = vadd.f32 %v8144, %v8101
        %v8146 = vrot.slane %v8145, 4
        %v8147 = vadd.f32 %v8145, %v8146
        %v8148 = vrot.slane %v8147, 2
        %v8149 = vadd.f32 %v8147, %v8148
        %v8150 = vrot.slane %v8149, 1
        %v8151 = vadd.f32 %v8149, %v8150
        %v8152 = vadd.f32 %v8030, %v8038
        %v8153 = vadd.f32 %v8152, %v8046
        %v8154 = vadd.f32 %v8153, %v8054
        %v8155 = vadd.f32 %v8154, %v8062
        %v8156 = vadd.f32 %v8155, %v8070
        %v8157 = vadd.f32 %v8156, %v8078
        %v8158 = vadd.f32 %v8157, %v8086
        %v8159 = vadd.f32 %v8158, %v8094
        %v8160 = vadd.f32 %v8159, %v8102
        %v8161 = vrot.slane %v8160, 4
        %v8162 = vadd.f32 %v8160, %v8161
        %v8163 = vrot.slane %v8162, 2
        %v8164 = vadd.f32 %v8162, %v8163
        %v8165 = vrot.slane %v8164, 1
        %v8166 = vadd.f32 %v8164, %v8165
        %v8167 = vadd.f32 %v8031, %v8039
        %v8168 = vadd.f32 %v8167, %v8047
        %v8169 = vadd.f32 %v8168, %v8055
        %v8170 = vadd.f32 %v8169, %v8063
        %v8171 = vadd.f32 %v8170, %v8071
        %v8172 = vadd.f32 %v8171, %v8079
        %v8173 = vadd.f32 %v8172, %v8087
        %v8174 = vadd.f32 %v8173, %v8095
        %v8175 = vadd.f32 %v8174, %v8103
        %v8176 = vrot.slane %v8175, 4
        %v8177 = vadd.f32 %v8175, %v8176
        %v8178 = vrot.slane %v8177, 2
        %v8179 = vadd.f32 %v8177, %v8178
        %v8180 = vrot.slane %v8179, 1
        %v8181 = vadd.f32 %v8179, %v8180
        %v8182 = vadd.f32 %v8032, %v8040
        %v8183 = vadd.f32 %v8182, %v8048
        %v8184 = vadd.f32 %v8183, %v8056
        %v8185 = vadd.f32 %v8184, %v8064
        %v8186 = vadd.f32 %v8185, %v8072
        %v8187 = vadd.f32 %v8186, %v8080
        %v8188 = vadd.f32 %v8187, %v8088
        %v8189 = vadd.f32 %v8188, %v8096
        %v8190 = vadd.f32 %v8189, %v8104
        %v8191 = vrot.slane %v8190, 4
        %v8192 = vadd.f32 %v8190, %v8191
        %v8193 = vrot.slane %v8192, 2
        %v8194 = vadd.f32 %v8192, %v8193
        %v8195 = vrot.slane %v8194, 1
        %v8196 = vadd.f32 %v8194, %v8195
        %v8197 = vadd.f32 %v8033, %v8041
        %v8198 = vadd.f32 %v8197, %v8049
        %v8199 = vadd.f32 %v8198, %v8057
        %v8200 = vadd.f32 %v8199, %v8065
        %v8201 = vadd.f32 %v8200, %v8073
        %v8202 = vadd.f32 %v8201, %v8081
        %v8203 = vadd.f32 %v8202, %v8089
        %v8204 = vadd.f32 %v8203, %v8097
        %v8205 = vadd.f32 %v8204, %v8105
        %v8206 = vrot.slane %v8205, 4
        %v8207 = vadd.f32 %v8205, %v8206
        %v8208 = vrot.slane %v8207, 2
        %v8209 = vadd.f32 %v8207, %v8208
        %v8210 = vrot.slane %v8209, 1
        %v8211 = vadd.f32 %v8209, %v8210
        %v8212 = vadd.f32 %v8034, %v8042
        %v8213 = vadd.f32 %v8212, %v8050
        %v8214 = vadd.f32 %v8213, %v8058
        %v8215 = vadd.f32 %v8214, %v8066
        %v8216 = vadd.f32 %v8215, %v8074
        %v8217 = vadd.f32 %v8216, %v8082
        %v8218 = vadd.f32 %v8217, %v8090
        %v8219 = vadd.f32 %v8218, %v8098
        %v8220 = vadd.f32 %v8219, %v8106
        %v8221 = vrot.slane %v8220, 4
        %v8222 = vadd.f32 %v8220, %v8221
        %v8223 = vrot.slane %v8222, 2
        %v8224 = vadd.f32 %v8222, %v8223
        %v8225 = vrot.slane %v8224, 1
        %v8226 = vadd.f32 %v8224, %v8225
        %v8235 = vrot.slane %v8136, 7
        %v8236 = vrot.slane %v8151, 6
        %v8237 = vrot.slane %v8166, 5
        %v8238 = vrot.slane %v8181, 4
        %v8239 = vrot.slane %v8196, 3
        %v8240 = vrot.slane %v8211, 2
        %v8241 = vrot.slane %v8226, 1
        %v8242 = vsel %vm254, %v8121, %v8235
        %vm8243 = vcmask 1042434
        %v8244 = vsel %vm8243, %v8236, %v8237
        %vm8245 = vcmask 1041408
        %v8246 = vsel %vm8245, %v8242, %v8244
        %vm8247 = vcmask 1044484
        %v8248 = vsel %vm8247, %v8238, %v8239
        %vm8249 = vcmask 1046534
        %v8250 = vsel %vm8249, %v8240, %v8241
        %vm8251 = vcmask 1045508
        %v8252 = vsel %vm8251, %v8248, %v8250
        %vm8253 = vcmask 1043456
        %v8254 = vsel %vm8253, %v8246, %v8252
        %v8256 = vsel %vm234, %v8254, 0.0
        %v8258 = vperm.slane %v8256, 0
        %v8259 = vperm.slane %v8256, 1
        %v8260 = vperm.slane %v8256, 2
        %v8261 = vperm.slane %v8256, 3
        %v8262 = vperm.slane %v8256, 4
        %v8263 = vperm.slane %v8256, 5
        %v8264 = vperm.slane %v8256, 6
        %v8265 = vperm.slane %v8256, 7
        %v8274 = vsel %vm254, %v8258, 0.0
        %v8275 = vsel %vm254, %v8259, 0.0
        %v8276 = vadd.f32 %v8274, %v8275
        %v8277 = vsel %vm254, %v8260, 0.0
        %v8278 = vadd.f32 %v8276, %v8277
        %v8279 = vsel %vm254, %v8261, 0.0
        %v8280 = vadd.f32 %v8278, %v8279
        %v8281 = vsel %vm254, %v8262, 0.0
        %v8282 = vadd.f32 %v8280, %v8281
        %v8283 = vsel %vm254, %v8263, 0.0
        %v8284 = vadd.f32 %v8282, %v8283
        %v8285 = vsel %vm254, %v8264, 0.0
        %v8286 = vadd.f32 %v8284, %v8285
        %v8287 = vsel %vm254, %v8265, 0.0
        %v8288 = vadd.f32 %v8286, %v8287
        %8289 = vadd.xlane.f32.xlu0 %v8288
        %v8290 = vpop.xlane.xlu0 %8289
        %v8291 = vrot.slane %v8290, 4
        %v8292 = vadd.f32 %v8290, %v8291
        %v8293 = vrot.slane %v8292, 2
        %v8294 = vadd.f32 %v8292, %v8293
        %v8295 = vrot.slane %v8294, 1
        %v8296 = vadd.f32 %v8294, %v8295
        %s8297 = vtos %v8296
        %vm8298 = vcmp.eq.s32.totalorder %v521, 0
        %vm8299 = vcmp.eq.s32.totalorder %v532, 0
        %vm8300 = vmand %vm8298, %vm8299
        %v8301 = vstv %s391
        %v8302 = vsel %vm8300, %v8301, 0.0
        %vm8303 = vcmp.eq.s32.totalorder %v532, 1
        %vm8304 = vmand %vm8298, %vm8303
        %v8305 = vstv %s8297
        %v8306 = vsel %vm8304, %v8305, %v8302
        %vm8307 = vcmp.eq.s32.totalorder %v532, 2
        %vm8308 = vmand %vm8298, %vm8307
        %v8309 = vstv %s278
        %v8310 = vsel %vm8308, %v8309, %v8306
        %8311 = vst [vmem:[%s206] sm:$0xff] %v8310
        %s8312 = sand.u32 %s103, 1
        %s8313 = scalar_lea.sflag [#allocation3], %s8312
        %s8314 = sand.u32 %s103, 1
        %s8315 = smul.addr %s8314, 8
        %s8316 = scalar_lea.vmem [#allocation2], %s8315
        // Predicated region
        $region33: #{tpu_custom_call.1} parent=31 // pred_check
          %p8317 = pneg %p113
        $region34: #{tpu_custom_call.1} parent=31 // pred_check_branch
          %8319 = sbr.rel (%p8317) target = $region36
        $region35: #{tpu_custom_call.1} parent=31 // pred_region
          %8321 = vsyncadd %s8313, 0
          %s8322 = smul.addr %s17, 8
          %s8323 = scalar_lea.hbm %s3, %s8322
          %s8325 = sshll.u32 %s8316, 4
          %s8326 = int_to_ptr.vmem [resolvable:$true] %s8325
          %s8327 = sshll.u32 %s8323, 4
          %s8328 = int_to_ptr.hbm [resolvable:$true] %s8327
          %8330 = dma.vmem_to_hbm [thread:$0]  %s8326, 128, %s8328, %s8313
        $region36: #{tpu_custom_call.1} parent=31 // pred_fallthru
          _
      $region32: #{tpu_custom_call.1} parent=5 // pred_fallthru
        _
      %p8331 = scmp.le.s32.totalorder 2, %s12
      // Predicated region
      $region37: #{tpu_custom_call.1} parent=5 // pred_check
        %p8332 = pneg %p8331
      $region38: #{tpu_custom_call.1} parent=5 // pred_check_branch
        %8334 = sbr.rel (%p8332) target = $region40
      $region39: #{tpu_custom_call.1} parent=5 // pred_region
        %s8335 = ssub.s32 %s12, 2
        // Predicated region
        $region41: #{tpu_custom_call.1} parent=39 // pred_check
          %p8336 = pneg %p119
        $region42: #{tpu_custom_call.1} parent=39 // pred_check_branch
          %8338 = sbr.rel (%p8336) target = $region44
        $region43: #{tpu_custom_call.1} parent=39 // pred_region
          %s8339 = sand.u32 %s104, 1
          %s8340 = scalar_lea.sflag [#allocation3], %s8339
          %s8341 = sand.u32 %s104, 1
          %s8342 = smul.addr %s8341, 8
          %s8343 = scalar_lea.vmem [#allocation2], %s8342
          %8345 = dma.done %s8340, 128
        $region44: #{tpu_custom_call.1} parent=39 // pred_fallthru
          _
      $region40: #{tpu_custom_call.1} parent=5 // pred_fallthru
        _
    $region6: #{tpu_custom_call.1} parent=1 // loop_footer
      %s16 = sadd.s32 1, %s12
    $region7: #{tpu_custom_call.1} parent=1 // loop_footer_branch
      %11 = sbr.rel target = $region3
    $region8: #{tpu_custom_call.1} parent=1 // loop_exit
      _
    %8346 = vsyncpa [#allocation3], 1
    %s8347 = scalar_lea.sflag [#allocation3], 1
    %8348 = vsyncpa %s8347, 1

</llo_original>
